<compile_context>
chip_gen: v5e
topology: v5e:2x2
jax: 0.10.0
libtpu: 0.0.40
codegen_flags: <defaults>
</compile_context>

<pallas_src>
import math

import jax
import jax.numpy as jnp
from jax.experimental import pallas as pl
from jax.experimental.pallas import tpu as pltpu

LEAKY_SLOPE = 0.2
PRELU_INIT = 0.25
N_PRELU = 6          # r1, r3_0..r3_3, r5


def _rup(v, m):
    return (v + m - 1) // m * m


# ---------------------------------------------------------------------------
# Static description of the 14 convolutions of DDense_block(c, k).
#   slots  : number of channel groups in the input (dense-block concatenation)
#   slot_c : real channels per group (c, or 2c for conv0)
#   kk, d  : kernel size / dilation ("same" padding = d*(kk-1)//2)
#   act    : "leaky" (0.2) or "prelu" (learnable alpha selected by pidx)
# ---------------------------------------------------------------------------
def _conv_defs(c, k):
    defs = [dict(name="conv0", slots=1, slot_c=2 * c, cout=c, kk=k, d=1,
                 act="leaky", pidx=-1),
            dict(name="r1_a", slots=1, slot_c=c, cout=c, kk=1, d=1,
                 act="leaky", pidx=-1),
            dict(name="r1_b", slots=1, slot_c=c, cout=c, kk=k, d=1,
                 act="prelu", pidx=0)]
    for u in range(4):
        defs.append(dict(name=f"r3_{u}_a", slots=u + 1, slot_c=c, cout=c,
                         kk=k, d=1, act="leaky", pidx=-1))
        defs.append(dict(name=f"r3_{u}_b", slots=1, slot_c=c, cout=c,
                         kk=k, d=3, act="prelu", pidx=1 + u))
    defs += [dict(name="r5_a", slots=1, slot_c=c, cout=c, kk=5, d=1,
                  act="leaky", pidx=-1),
             dict(name="r5_b", slots=1, slot_c=c, cout=c, kk=k, d=5,
                  act="prelu", pidx=5),
             dict(name="conv_k1", slots=7, slot_c=c, cout=2 * c, kk=1, d=1,
                  act="leaky", pidx=-1)]
    return defs


def init_ddense_block(key, c, k):
    """PyTorch-Conv2d-style uniform init; weights stored as (kh, kw, Cin, Cout)."""
    defs = _conv_defs(c, k)
    keys = jax.random.split(key, 2 * len(defs))
    params = {}
    for i, d in enumerate(defs):
        kk, cin, cout = d["kk"], d["slots"] * d["slot_c"], d["cout"]
        bound = 1.0 / math.sqrt(cin * kk * kk)
        w = jax.random.uniform(keys[2 * i], (kk, kk, cin, cout), jnp.float32,
                               -bound, bound)
        b = jax.random.uniform(keys[2 * i + 1], (cout,), jnp.float32,
                               -bound, bound)
        params[d["name"]] = (w, b)
    params["prelu_alpha"] = jnp.full((N_PRELU,), PRELU_INIT, jnp.float32)
    return params


# ---------------------------------------------------------------------------
# The fused kernel (one batch element per grid step; everything VMEM-resident)
# ---------------------------------------------------------------------------
def _make_kernel(convs, CP, Wp, HWp, Lp):

    def kernel(x_ref, w_ref, b_ref, al_ref, m_ref, o_ref, slab_ref, cat_ref):
        mask = m_ref[...]                      # (1, Lp): 1.0 at data pixels
        alphas = al_ref[...]                   # (NP_pad, 1): PReLU slopes
        x = x_ref[...]                         # (C2P, Lp), guards already zero

        def conv(p, a, *, mask_out=True):
            coutp, ncol = p["coutp"], p["ncol"]
            cin_rows, kk, dil, pad = p["cin_rows"], p["kk"], p["d"], p["pad"]
            wk = w_ref[p["off"]:p["off"] + coutp, 0:ncol]      # (coutp, ncol)
            bk = b_ref[p["off"]:p["off"] + coutp, :]           # (coutp, 1)
            if kk == 1:
                y = jnp.dot(wk, a, preferred_element_type=jnp.float32)
            else:
                # Build the im2col slab: one rolled copy of the input per tap.
                # Guard columns / tail zeros provide the "same" zero padding.
                for i in range(kk):
                    for j in range(kk):
                        s = (i * dil - pad) * Wp + (j * dil - pad)
                        r = a if s == 0 else pltpu.roll(a, shift=(-s) % Lp,
                                                        axis=1)
                        t = i * kk + j
                        slab_ref[t * cin_rows:(t + 1) * cin_rows, :] = r
                y = jnp.dot(wk, slab_ref[0:ncol, :],
                            preferred_element_type=jnp.float32)
            y = y + bk
            if p["act"] == "leaky":
                y = jnp.where(y >= 0.0, y, LEAKY_SLOPE * y)
            else:
                alpha = alphas[p["pidx"], 0]
                y = jnp.where(y >= 0.0, y, alpha * y)
            # Re-zero guard columns/tail so the next conv's rolls see zeros.
            return y * mask if mask_out else y

        # conv0: Conv_S(2c, c, k) + LeakyReLU(0.2)
        f0 = conv(convs[0], x)                            # (CP, Lp)
        cat_ref[CP:2 * CP, :] = f0                        # dense-chain slot 0
        # DConv_r1 (cat_input=False)
        cat_ref[0:CP, :] = conv(convs[2], conv(convs[1], f0))
        # DConv_r3: 4 dense units, each output appended after f0
        for u in range(4):
            h = cat_ref[CP:(2 + u) * CP, :]               # [f0, f1, ..., f_u]
            f = conv(convs[4 + 2 * u], conv(convs[3 + 2 * u], h))
            cat_ref[(2 + u) * CP:(3 + u) * CP, :] = f
        # DConv_r5 (cat_input=False)
        cat_ref[6 * CP:7 * CP, :] = conv(convs[12], conv(convs[11], f0))
        # conv_k1 on f_cat = [f_r1 | f0..f4 | f_r5], then residual add
        o_ref[...] = conv(convs[13], cat_ref[...], mask_out=False) + x

    return kernel


# ---------------------------------------------------------------------------
# Wrapper: layout plumbing, weight packing, pallas_call
# ---------------------------------------------------------------------------
def ddense_block_forward(x, params, *, c, k):
    """x: (N, 2c, H, W) float32 (NCHW, same layout as the PyTorch reference)."""
    N, C2, H, W = x.shape
    assert C2 == 2 * c
    defs = _conv_defs(c, k)
    assert all(d["kk"] % 2 == 1 for d in defs), "same-padding assumes odd k"

    CP = _rup(c, 8)                    # sublane-aligned channel slot
    C2P = _rup(2 * c, 8)

    PAD = max(d["d"] * (d["kk"] - 1) // 2 for d in defs)   # global guard width
    Wp = W + 2 * PAD                   # width-padded image row
    HWp = H * Wp
    smax = PAD * Wp + PAD              # largest |flat tap offset|
    Lp = _rup(HWp + smax, 128)         # lane extent: data + tail guard >= smax

    # ---- pack all conv weights / biases into single resident arrays --------
    convs, w_blocks, b_blocks = [], [], []
    row_off, max_ncol, flops = 0, 0, 0
    for d in defs:
        kk, dil, slots, slot_c, cout = d["kk"], d["d"], d["slots"], d["slot_c"], d["cout"]
        pad = dil * (kk - 1) // 2
        srows = _rup(slot_c, 8)                 # rows per input slot
        cin_rows = slots * srows
        cin = slots * slot_c
        coutp = _rup(cout, 8)
        ncol = cin_rows * kk * kk
        max_ncol = max(max_ncol, ncol)

        w, b = params[d["name"]]                # (kk, kk, cin, cout), (cout,)
        wt = jnp.transpose(w, (3, 0, 1, 2)).reshape(cout, kk * kk, cin)
        wp = jnp.zeros((coutp, kk * kk, cin_rows), jnp.float32)
        for s in range(slots):                  # place real channels per slot
            wp = wp.at[:cout, :, s * srows:s * srows + slot_c].set(
                wt[:, :, s * slot_c:(s + 1) * slot_c])
        w_blocks.append(wp.reshape(coutp, ncol))
        b_blocks.append(jnp.zeros((coutp,), jnp.float32).at[:cout].set(b))

        convs.append(dict(off=row_off, coutp=coutp, ncol=ncol,
                          cin_rows=cin_rows, kk=kk, d=dil, pad=pad,
                          act=d["act"], pidx=d["pidx"]))
        row_off += coutp
        flops += 2 * N * H * W * cin * cout * kk * kk

    TOT = row_off
    WCOLS = _rup(max_ncol, 128)
    w_packed = jnp.zeros((TOT, WCOLS), jnp.float32)
    b_packed = jnp.zeros((TOT, 1), jnp.float32)
    for cv, wb, bb in zip(convs, w_blocks, b_blocks):
        w_packed = w_packed.at[cv["off"]:cv["off"] + cv["coutp"], :cv["ncol"]].set(wb)
        b_packed = b_packed.at[cv["off"]:cv["off"] + cv["coutp"], 0].set(bb)

    NPpad = _rup(N_PRELU, 8)
    alphas = jnp.zeros((NPpad, 1), jnp.float32).at[:N_PRELU, 0].set(
        params["prelu_alpha"])

    # ---- width-padded, zero-guarded input + output guard mask --------------
    x_p = jnp.pad(x, ((0, 0), (0, C2P - 2 * c), (0, 0), (PAD, PAD)))
    x_p = x_p.reshape(N, C2P, HWp)
    x_p = jnp.pad(x_p, ((0, 0), (0, 0), (0, Lp - HWp)))     # (N, C2P, Lp)

    q = jnp.arange(Lp, dtype=jnp.int32)
    col = q % Wp
    mask = ((q < HWp) & (col >= PAD) & (col < PAD + W)
            ).astype(jnp.float32).reshape(1, Lp)

    slab_rows = _rup(max(cv["cin_rows"] * cv["kk"] * cv["kk"]
                         for cv in convs if cv["kk"] > 1), 8)

    # ---- VMEM budget (scratch + double-buffered I/O blocks) -----------------
    vmem_bytes = 4 * (slab_rows * Lp + 7 * CP * Lp
                      + 2 * (C2P * Lp + TOT * WCOLS + TOT * 128
                             + NPpad * 128 + 8 * Lp)
                      + 2 * (C2P * Lp))
    vmem_limit = int(min(64 << 20, max(32 << 20, 2 * vmem_bytes)))

    bytes_accessed = 4 * (x_p.size + w_packed.size + b_packed.size
                          + alphas.size + mask.size + N * C2P * Lp)

    out_p = pl.pallas_call(
        _make_kernel(convs, CP, Wp, HWp, Lp),
        out_shape=jax.ShapeDtypeStruct((N, C2P, Lp), jnp.float32),
        grid=(N,),
        in_specs=[
            pl.BlockSpec((None, C2P, Lp), lambda i: (i, 0, 0)),   # x (padded)
            pl.BlockSpec((TOT, WCOLS), lambda i: (0, 0)),         # packed W
            pl.BlockSpec((TOT, 1), lambda i: (0, 0)),             # packed b
            pl.BlockSpec((NPpad, 1), lambda i: (0, 0)),           # PReLU alphas
            pl.BlockSpec((1, Lp), lambda i: (0, 0)),              # guard mask
        ],
        out_specs=pl.BlockSpec((None, C2P, Lp), lambda i: (i, 0, 0)),
        scratch_shapes=[pltpu.VMEM((slab_rows, Lp), jnp.float32),  # im2col slab
                        pltpu.VMEM((7 * CP, Lp), jnp.float32)],    # f_cat
        compiler_params=pltpu.CompilerParams(
            dimension_semantics=("parallel",),
            vmem_limit_bytes=vmem_limit),
        cost_estimate=pl.CostEstimate(flops=flops, transcendentals=0,
                                      bytes_accessed=bytes_accessed),
    )(x_p, w_packed, b_packed, alphas, mask)

    # Strip channel / spatial guards back to NCHW.
    out = out_p[:, :2 * c, :HWp].reshape(N, 2 * c, H, Wp)[:, :, :, PAD:PAD + W]
    return out


if __name__ == "__main__":
    c, k = 4, 3
    N, H, W = 2, 16, 16

    key = jax.random.PRNGKey(0)
    kx, kp = jax.random.split(key)
    # NCHW input, matching the PyTorch reference: (N, 2c, H, W).
    x = jax.random.normal(kx, (N, 2 * c, H, W), dtype=jnp.float32)
    params = init_ddense_block(kp, c, k)

    out = ddense_block_forward(x, params, c=c, k=k)
    out = jax.block_until_ready(out)
    assert out.shape == (N, 2 * c, H, W)
    assert bool(jnp.all(jnp.isfinite(out)))
    print("KERNEL_OK")
</pallas_src>

<mosaic_0001>
module attributes {stable_mosaic.version = 11 : i64} {
  func.func @kernel(%arg0: i32, %arg1: memref<1x8x640xf32, #tpu.memory_space<vmem>>, %arg2: memref<112x384xf32, #tpu.memory_space<vmem>>, %arg3: memref<112x1xf32, #tpu.memory_space<vmem>>, %arg4: memref<8x1xf32, #tpu.memory_space<vmem>>, %arg5: memref<1x640xf32, #tpu.memory_space<vmem>>, %arg6: memref<1x8x640xf32, #tpu.memory_space<vmem>>, %arg7: memref<288x640xf32, #tpu.memory_space<vmem>>, %arg8: memref<56x640xf32, #tpu.memory_space<vmem>>) attributes {dimension_semantics = [#tpu.dimension_semantics<parallel>], iteration_bounds = array<i64: 2>, scalar_prefetch = 0 : i64, scratch_operands = 2 : i64, tpu.core_type = #tpu.core_type<tc>, window_params = [{transform_indices = @transform_0, window_bounds = array<i64: 1, 8, 640>}, {pipeline_mode = #tpu.pipeline_mode<synchronous>, transform_indices = @transform_1, window_bounds = array<i64: 112, 384>}, {pipeline_mode = #tpu.pipeline_mode<synchronous>, transform_indices = @transform_2, window_bounds = array<i64: 112, 1>}, {pipeline_mode = #tpu.pipeline_mode<synchronous>, transform_indices = @transform_3, window_bounds = array<i64: 8, 1>}, {pipeline_mode = #tpu.pipeline_mode<synchronous>, transform_indices = @transform_4, window_bounds = array<i64: 1, 640>}, {transform_indices = @transform_5, window_bounds = array<i64: 1, 8, 640>}]} {
    %c0 = arith.constant 0 : index
    %c0_0 = arith.constant 0 : index
    %0 = vector.load %arg5[%c0, %c0_0] : memref<1x640xf32, #tpu.memory_space<vmem>>, vector<1x640xf32>
    %c0_1 = arith.constant 0 : index
    %c0_2 = arith.constant 0 : index
    %1 = vector.load %arg4[%c0_1, %c0_2] : memref<8x1xf32, #tpu.memory_space<vmem>>, vector<8x1xf32>
    %c0_3 = arith.constant 0 : index
    %c0_4 = arith.constant 0 : index
    %c0_5 = arith.constant 0 : index
    %2 = vector.load %arg1[%c0_3, %c0_4, %c0_5] : memref<1x8x640xf32, #tpu.memory_space<vmem>>, vector<1x8x640xf32>
    %3 = vector.shape_cast %2 : vector<1x8x640xf32> to vector<8x640xf32>
    %c0_6 = arith.constant 0 : index
    %c0_7 = arith.constant 0 : index
    %4 = vector.load %arg2[%c0_6, %c0_7] : memref<112x384xf32, #tpu.memory_space<vmem>>, vector<8x72xf32>
    %c0_8 = arith.constant 0 : index
    %c0_9 = arith.constant 0 : index
    %5 = vector.load %arg3[%c0_8, %c0_9] : memref<112x1xf32, #tpu.memory_space<vmem>>, vector<8x1xf32>
    %c27_i32 = arith.constant 27 : i32
    %6 = tpu.dynamic_rotate %3 by %c27_i32 dim 1 : vector<8x640xf32>, i32 -> vector<8x640xf32>
    %c0_10 = arith.constant 0 : index
    %c0_11 = arith.constant 0 : index
    %7 = vector.load %arg7[%c0_10, %c0_11] : memref<288x640xf32, #tpu.memory_space<vmem>>, vector<8x640xf32>
    tpu.vector_store %arg7[%c0_10, %c0_11], %6 {strides = array<i32>} : memref<288x640xf32, #tpu.memory_space<vmem>>, vector<8x640xf32>,
    %c26_i32 = arith.constant 26 : i32
    %8 = tpu.dynamic_rotate %3 by %c26_i32 dim 1 : vector<8x640xf32>, i32 -> vector<8x640xf32>
    %c8 = arith.constant 8 : index
    %c0_12 = arith.constant 0 : index
    %9 = vector.load %arg7[%c8, %c0_12] : memref<288x640xf32, #tpu.memory_space<vmem>>, vector<8x640xf32>
    tpu.vector_store %arg7[%c8, %c0_12], %8 {strides = array<i32>} : memref<288x640xf32, #tpu.memory_space<vmem>>, vector<8x640xf32>,
    %c25_i32 = arith.constant 25 : i32
    %10 = tpu.dynamic_rotate %3 by %c25_i32 dim 1 : vector<8x640xf32>, i32 -> vector<8x640xf32>
    %c16 = arith.constant 16 : index
    %c0_13 = arith.constant 0 : index
    %11 = vector.load %arg7[%c16, %c0_13] : memref<288x640xf32, #tpu.memory_space<vmem>>, vector<8x640xf32>
    tpu.vector_store %arg7[%c16, %c0_13], %10 {strides = array<i32>} : memref<288x640xf32, #tpu.memory_space<vmem>>, vector<8x640xf32>,
    %c1_i32 = arith.constant 1 : i32
    %12 = tpu.dynamic_rotate %3 by %c1_i32 dim 1 : vector<8x640xf32>, i32 -> vector<8x640xf32>
    %c24 = arith.constant 24 : index
    %c0_14 = arith.constant 0 : index
    %13 = vector.load %arg7[%c24, %c0_14] : memref<288x640xf32, #tpu.memory_space<vmem>>, vector<8x640xf32>
    tpu.vector_store %arg7[%c24, %c0_14], %12 {strides = array<i32>} : memref<288x640xf32, #tpu.memory_space<vmem>>, vector<8x640xf32>,
    %c32 = arith.constant 32 : index
    %c0_15 = arith.constant 0 : index
    %14 = vector.load %arg7[%c32, %c0_15] : memref<288x640xf32, #tpu.memory_space<vmem>>, vector<8x640xf32>
    tpu.vector_store %arg7[%c32, %c0_15], %3 {strides = array<i32>} : memref<288x640xf32, #tpu.memory_space<vmem>>, vector<8x640xf32>,
    %c639_i32 = arith.constant 639 : i32
    %15 = tpu.dynamic_rotate %3 by %c639_i32 dim 1 : vector<8x640xf32>, i32 -> vector<8x640xf32>
    %c40 = arith.constant 40 : index
    %c0_16 = arith.constant 0 : index
    %16 = vector.load %arg7[%c40, %c0_16] : memref<288x640xf32, #tpu.memory_space<vmem>>, vector<8x640xf32>
    tpu.vector_store %arg7[%c40, %c0_16], %15 {strides = array<i32>} : memref<288x640xf32, #tpu.memory_space<vmem>>, vector<8x640xf32>,
    %c615_i32 = arith.constant 615 : i32
    %17 = tpu.dynamic_rotate %3 by %c615_i32 dim 1 : vector<8x640xf32>, i32 -> vector<8x640xf32>
    %c48 = arith.constant 48 : index
    %c0_17 = arith.constant 0 : index
    %18 = vector.load %arg7[%c48, %c0_17] : memref<288x640xf32, #tpu.memory_space<vmem>>, vector<8x640xf32>
    tpu.vector_store %arg7[%c48, %c0_17], %17 {strides = array<i32>} : memref<288x640xf32, #tpu.memory_space<vmem>>, vector<8x640xf32>,
    %c614_i32 = arith.constant 614 : i32
    %19 = tpu.dynamic_rotate %3 by %c614_i32 dim 1 : vector<8x640xf32>, i32 -> vector<8x640xf32>
    %c56 = arith.constant 56 : index
    %c0_18 = arith.constant 0 : index
    %20 = vector.load %arg7[%c56, %c0_18] : memref<288x640xf32, #tpu.memory_space<vmem>>, vector<8x640xf32>
    tpu.vector_store %arg7[%c56, %c0_18], %19 {strides = array<i32>} : memref<288x640xf32, #tpu.memory_space<vmem>>, vector<8x640xf32>,
    %c613_i32 = arith.constant 613 : i32
    %21 = tpu.dynamic_rotate %3 by %c613_i32 dim 1 : vector<8x640xf32>, i32 -> vector<8x640xf32>
    %c64 = arith.constant 64 : index
    %c0_19 = arith.constant 0 : index
    %22 = vector.load %arg7[%c64, %c0_19] : memref<288x640xf32, #tpu.memory_space<vmem>>, vector<8x640xf32>
    tpu.vector_store %arg7[%c64, %c0_19], %21 {strides = array<i32>} : memref<288x640xf32, #tpu.memory_space<vmem>>, vector<8x640xf32>,
    %c0_20 = arith.constant 0 : index
    %c0_21 = arith.constant 0 : index
    %23 = vector.load %arg7[%c0_20, %c0_21] : memref<288x640xf32, #tpu.memory_space<vmem>>, vector<72x640xf32>
    %cst = arith.constant dense<0.000000e+00> : vector<8x640xf32>
    %24 = tpu.matmul %4, %23, %cst {dimension_numbers = #tpu.dot_dimension_numbers<[1], [0], [0], [1], [0, 0, 1, 1], [], []>} : vector<8x72xf32>, vector<72x640xf32>, vector<8x640xf32> -> vector<8x640xf32>
    %25 = vector.broadcast %5 : vector<8x1xf32> to vector<8x640xf32>
    %26 = arith.addf %24, %25 : vector<8x640xf32>
    %cst_22 = arith.constant 0.000000e+00 : f32
    %27 = vector.broadcast %cst_22 : f32 to vector<8x640xf32>
    %28 = arith.cmpf oge, %26, %27 : vector<8x640xf32>
    %cst_23 = arith.constant 2.000000e-01 : f32
    %29 = vector.broadcast %cst_23 : f32 to vector<8x640xf32>
    %30 = arith.mulf %29, %26 : vector<8x640xf32>
    %31 = arith.select %28, %26, %30 : vector<8x640xi1>, vector<8x640xf32>
    %32 = vector.broadcast %0 : vector<1x640xf32> to vector<8x640xf32>
    %33 = arith.mulf %31, %32 : vector<8x640xf32>
    %c8_24 = arith.constant 8 : index
    %c0_25 = arith.constant 0 : index
    %34 = vector.load %arg8[%c8_24, %c0_25] : memref<56x640xf32, #tpu.memory_space<vmem>>, vector<8x640xf32>
    tpu.vector_store %arg8[%c8_24, %c0_25], %33 {strides = array<i32>} : memref<56x640xf32, #tpu.memory_space<vmem>>, vector<8x640xf32>,
    %c8_26 = arith.constant 8 : index
    %c0_27 = arith.constant 0 : index
    %35 = vector.load %arg2[%c8_26, %c0_27] : memref<112x384xf32, #tpu.memory_space<vmem>>, vector<8x8xf32>
    %c8_28 = arith.constant 8 : index
    %c0_29 = arith.constant 0 : index
    %36 = vector.load %arg3[%c8_28, %c0_29] : memref<112x1xf32, #tpu.memory_space<vmem>>, vector<8x1xf32>
    %cst_30 = arith.constant dense<0.000000e+00> : vector<8x640xf32>
    %37 = tpu.matmul %35, %33, %cst_30 {dimension_numbers = #tpu.dot_dimension_numbers<[1], [0], [0], [1], [0, 0, 1, 1], [], []>} : vector<8x8xf32>, vector<8x640xf32>, vector<8x640xf32> -> vector<8x640xf32>
    %38 = vector.broadcast %36 : vector<8x1xf32> to vector<8x640xf32>
    %39 = arith.addf %37, %38 : vector<8x640xf32>
    %cst_31 = arith.constant 0.000000e+00 : f32
    %40 = vector.broadcast %cst_31 : f32 to vector<8x640xf32>
    %41 = arith.cmpf oge, %39, %40 : vector<8x640xf32>
    %cst_32 = arith.constant 2.000000e-01 : f32
    %42 = vector.broadcast %cst_32 : f32 to vector<8x640xf32>
    %43 = arith.mulf %42, %39 : vector<8x640xf32>
    %44 = arith.select %41, %39, %43 : vector<8x640xi1>, vector<8x640xf32>
    %45 = vector.broadcast %0 : vector<1x640xf32> to vector<8x640xf32>
    %46 = arith.mulf %44, %45 : vector<8x640xf32>
    %c16_33 = arith.constant 16 : index
    %c0_34 = arith.constant 0 : index
    %47 = vector.load %arg2[%c16_33, %c0_34] : memref<112x384xf32, #tpu.memory_space<vmem>>, vector<8x72xf32>
    %c16_35 = arith.constant 16 : index
    %c0_36 = arith.constant 0 : index
    %48 = vector.load %arg3[%c16_35, %c0_36] : memref<112x1xf32, #tpu.memory_space<vmem>>, vector<8x1xf32>
    %c27_i32_37 = arith.constant 27 : i32
    %49 = tpu.dynamic_rotate %46 by %c27_i32_37 dim 1 : vector<8x640xf32>, i32 -> vector<8x640xf32>
    %c0_38 = arith.constant 0 : index
    %c0_39 = arith.constant 0 : index
    %50 = vector.load %arg7[%c0_38, %c0_39] : memref<288x640xf32, #tpu.memory_space<vmem>>, vector<8x640xf32>
    tpu.vector_store %arg7[%c0_38, %c0_39], %49 {strides = array<i32>} : memref<288x640xf32, #tpu.memory_space<vmem>>, vector<8x640xf32>,
    %c26_i32_40 = arith.constant 26 : i32
    %51 = tpu.dynamic_rotate %46 by %c26_i32_40 dim 1 : vector<8x640xf32>, i32 -> vector<8x640xf32>
    %c8_41 = arith.constant 8 : index
    %c0_42 = arith.constant 0 : index
    %52 = vector.load %arg7[%c8_41, %c0_42] : memref<288x640xf32, #tpu.memory_space<vmem>>, vector<8x640xf32>
    tpu.vector_store %arg7[%c8_41, %c0_42], %51 {strides = array<i32>} : memref<288x640xf32, #tpu.memory_space<vmem>>, vector<8x640xf32>,
    %c25_i32_43 = arith.constant 25 : i32
    %53 = tpu.dynamic_rotate %46 by %c25_i32_43 dim 1 : vector<8x640xf32>, i32 -> vector<8x640xf32>
    %c16_44 = arith.constant 16 : index
    %c0_45 = arith.constant 0 : index
    %54 = vector.load %arg7[%c16_44, %c0_45] : memref<288x640xf32, #tpu.memory_space<vmem>>, vector<8x640xf32>
    tpu.vector_store %arg7[%c16_44, %c0_45], %53 {strides = array<i32>} : memref<288x640xf32, #tpu.memory_space<vmem>>, vector<8x640xf32>,
    %c1_i32_46 = arith.constant 1 : i32
    %55 = tpu.dynamic_rotate %46 by %c1_i32_46 dim 1 : vector<8x640xf32>, i32 -> vector<8x640xf32>
    %c24_47 = arith.constant 24 : index
    %c0_48 = arith.constant 0 : index
    %56 = vector.load %arg7[%c24_47, %c0_48] : memref<288x640xf32, #tpu.memory_space<vmem>>, vector<8x640xf32>
    tpu.vector_store %arg7[%c24_47, %c0_48], %55 {strides = array<i32>} : memref<288x640xf32, #tpu.memory_space<vmem>>, vector<8x640xf32>,
    %c32_49 = arith.constant 32 : index
    %c0_50 = arith.constant 0 : index
    %57 = vector.load %arg7[%c32_49, %c0_50] : memref<288x640xf32, #tpu.memory_space<vmem>>, vector<8x640xf32>
    tpu.vector_store %arg7[%c32_49, %c0_50], %46 {strides = array<i32>} : memref<288x640xf32, #tpu.memory_space<vmem>>, vector<8x640xf32>,
    %c639_i32_51 = arith.constant 639 : i32
    %58 = tpu.dynamic_rotate %46 by %c639_i32_51 dim 1 : vector<8x640xf32>, i32 -> vector<8x640xf32>
    %c40_52 = arith.constant 40 : index
    %c0_53 = arith.constant 0 : index
    %59 = vector.load %arg7[%c40_52, %c0_53] : memref<288x640xf32, #tpu.memory_space<vmem>>, vector<8x640xf32>
    tpu.vector_store %arg7[%c40_52, %c0_53], %58 {strides = array<i32>} : memref<288x640xf32, #tpu.memory_space<vmem>>, vector<8x640xf32>,
    %c615_i32_54 = arith.constant 615 : i32
    %60 = tpu.dynamic_rotate %46 by %c615_i32_54 dim 1 : vector<8x640xf32>, i32 -> vector<8x640xf32>
    %c48_55 = arith.constant 48 : index
    %c0_56 = arith.constant 0 : index
    %61 = vector.load %arg7[%c48_55, %c0_56] : memref<288x640xf32, #tpu.memory_space<vmem>>, vector<8x640xf32>
    tpu.vector_store %arg7[%c48_55, %c0_56], %60 {strides = array<i32>} : memref<288x640xf32, #tpu.memory_space<vmem>>, vector<8x640xf32>,
    %c614_i32_57 = arith.constant 614 : i32
    %62 = tpu.dynamic_rotate %46 by %c614_i32_57 dim 1 : vector<8x640xf32>, i32 -> vector<8x640xf32>
    %c56_58 = arith.constant 56 : index
    %c0_59 = arith.constant 0 : index
    %63 = vector.load %arg7[%c56_58, %c0_59] : memref<288x640xf32, #tpu.memory_space<vmem>>, vector<8x640xf32>
    tpu.vector_store %arg7[%c56_58, %c0_59], %62 {strides = array<i32>} : memref<288x640xf32, #tpu.memory_space<vmem>>, vector<8x640xf32>,
    %c613_i32_60 = arith.constant 613 : i32
    %64 = tpu.dynamic_rotate %46 by %c613_i32_60 dim 1 : vector<8x640xf32>, i32 -> vector<8x640xf32>
    %c64_61 = arith.constant 64 : index
    %c0_62 = arith.constant 0 : index
    %65 = vector.load %arg7[%c64_61, %c0_62] : memref<288x640xf32, #tpu.memory_space<vmem>>, vector<8x640xf32>
    tpu.vector_store %arg7[%c64_61, %c0_62], %64 {strides = array<i32>} : memref<288x640xf32, #tpu.memory_space<vmem>>, vector<8x640xf32>,
    %c0_63 = arith.constant 0 : index
    %c0_64 = arith.constant 0 : index
    %66 = vector.load %arg7[%c0_63, %c0_64] : memref<288x640xf32, #tpu.memory_space<vmem>>, vector<72x640xf32>
    %cst_65 = arith.constant dense<0.000000e+00> : vector<8x640xf32>
    %67 = tpu.matmul %47, %66, %cst_65 {dimension_numbers = #tpu.dot_dimension_numbers<[1], [0], [0], [1], [0, 0, 1, 1], [], []>} : vector<8x72xf32>, vector<72x640xf32>, vector<8x640xf32> -> vector<8x640xf32>
    %68 = vector.broadcast %48 : vector<8x1xf32> to vector<8x640xf32>
    %69 = arith.addf %67, %68 : vector<8x640xf32>
    %70 = vector.extract_strided_slice %1 {offsets = [0, 0], sizes = [1, 1], strides = [1, 1]} : vector<8x1xf32> to vector<1x1xf32>
    %71 = vector.extract %70[0, 0] : f32 from vector<1x1xf32>
    %cst_66 = arith.constant 0.000000e+00 : f32
    %72 = vector.broadcast %cst_66 : f32 to vector<8x640xf32>
    %73 = arith.cmpf oge, %69, %72 : vector<8x640xf32>
    %74 = vector.broadcast %71 : f32 to vector<8x640xf32>
    %75 = arith.mulf %74, %69 : vector<8x640xf32>
    %76 = arith.select %73, %69, %75 : vector<8x640xi1>, vector<8x640xf32>
    %77 = vector.broadcast %0 : vector<1x640xf32> to vector<8x640xf32>
    %78 = arith.mulf %76, %77 : vector<8x640xf32>
    %c0_67 = arith.constant 0 : index
    %c0_68 = arith.constant 0 : index
    %79 = vector.load %arg8[%c0_67, %c0_68] : memref<56x640xf32, #tpu.memory_space<vmem>>, vector<8x640xf32>
    tpu.vector_store %arg8[%c0_67, %c0_68], %78 {strides = array<i32>} : memref<56x640xf32, #tpu.memory_space<vmem>>, vector<8x640xf32>,
    %c8_69 = arith.constant 8 : index
    %c0_70 = arith.constant 0 : index
    %80 = vector.load %arg8[%c8_69, %c0_70] : memref<56x640xf32, #tpu.memory_space<vmem>>, vector<8x640xf32>
    %c24_71 = arith.constant 24 : index
    %c0_72 = arith.constant 0 : index
    %81 = vector.load %arg2[%c24_71, %c0_72] : memref<112x384xf32, #tpu.memory_space<vmem>>, vector<8x72xf32>
    %c24_73 = arith.constant 24 : index
    %c0_74 = arith.constant 0 : index
    %82 = vector.load %arg3[%c24_73, %c0_74] : memref<112x1xf32, #tpu.memory_space<vmem>>, vector<8x1xf32>
    %c27_i32_75 = arith.constant 27 : i32
    %83 = tpu.dynamic_rotate %80 by %c27_i32_75 dim 1 : vector<8x640xf32>, i32 -> vector<8x640xf32>
    %c0_76 = arith.constant 0 : index
    %c0_77 = arith.constant 0 : index
    %84 = vector.load %arg7[%c0_76, %c0_77] : memref<288x640xf32, #tpu.memory_space<vmem>>, vector<8x640xf32>
    tpu.vector_store %arg7[%c0_76, %c0_77], %83 {strides = array<i32>} : memref<288x640xf32, #tpu.memory_space<vmem>>, vector<8x640xf32>,
    %c26_i32_78 = arith.constant 26 : i32
    %85 = tpu.dynamic_rotate %80 by %c26_i32_78 dim 1 : vector<8x640xf32>, i32 -> vector<8x640xf32>
    %c8_79 = arith.constant 8 : index
    %c0_80 = arith.constant 0 : index
    %86 = vector.load %arg7[%c8_79, %c0_80] : memref<288x640xf32, #tpu.memory_space<vmem>>, vector<8x640xf32>
    tpu.vector_store %arg7[%c8_79, %c0_80], %85 {strides = array<i32>} : memref<288x640xf32, #tpu.memory_space<vmem>>, vector<8x640xf32>,
    %c25_i32_81 = arith.constant 25 : i32
    %87 = tpu.dynamic_rotate %80 by %c25_i32_81 dim 1 : vector<8x640xf32>, i32 -> vector<8x640xf32>
    %c16_82 = arith.constant 16 : index
    %c0_83 = arith.constant 0 : index
    %88 = vector.load %arg7[%c16_82, %c0_83] : memref<288x640xf32, #tpu.memory_space<vmem>>, vector<8x640xf32>
    tpu.vector_store %arg7[%c16_82, %c0_83], %87 {strides = array<i32>} : memref<288x640xf32, #tpu.memory_space<vmem>>, vector<8x640xf32>,
    %c1_i32_84 = arith.constant 1 : i32
    %89 = tpu.dynamic_rotate %80 by %c1_i32_84 dim 1 : vector<8x640xf32>, i32 -> vector<8x640xf32>
    %c24_85 = arith.constant 24 : index
    %c0_86 = arith.constant 0 : index
    %90 = vector.load %arg7[%c24_85, %c0_86] : memref<288x640xf32, #tpu.memory_space<vmem>>, vector<8x640xf32>
    tpu.vector_store %arg7[%c24_85, %c0_86], %89 {strides = array<i32>} : memref<288x640xf32, #tpu.memory_space<vmem>>, vector<8x640xf32>,
    %c32_87 = arith.constant 32 : index
    %c0_88 = arith.constant 0 : index
    %91 = vector.load %arg7[%c32_87, %c0_88] : memref<288x640xf32, #tpu.memory_space<vmem>>, vector<8x640xf32>
    tpu.vector_store %arg7[%c32_87, %c0_88], %80 {strides = array<i32>} : memref<288x640xf32, #tpu.memory_space<vmem>>, vector<8x640xf32>,
    %c639_i32_89 = arith.constant 639 : i32
    %92 = tpu.dynamic_rotate %80 by %c639_i32_89 dim 1 : vector<8x640xf32>, i32 -> vector<8x640xf32>
    %c40_90 = arith.constant 40 : index
    %c0_91 = arith.constant 0 : index
    %93 = vector.load %arg7[%c40_90, %c0_91] : memref<288x640xf32, #tpu.memory_space<vmem>>, vector<8x640xf32>
    tpu.vector_store %arg7[%c40_90, %c0_91], %92 {strides = array<i32>} : memref<288x640xf32, #tpu.memory_space<vmem>>, vector<8x640xf32>,
    %c615_i32_92 = arith.constant 615 : i32
    %94 = tpu.dynamic_rotate %80 by %c615_i32_92 dim 1 : vector<8x640xf32>, i32 -> vector<8x640xf32>
    %c48_93 = arith.constant 48 : index
    %c0_94 = arith.constant 0 : index
    %95 = vector.load %arg7[%c48_93, %c0_94] : memref<288x640xf32, #tpu.memory_space<vmem>>, vector<8x640xf32>
    tpu.vector_store %arg7[%c48_93, %c0_94], %94 {strides = array<i32>} : memref<288x640xf32, #tpu.memory_space<vmem>>, vector<8x640xf32>,
    %c614_i32_95 = arith.constant 614 : i32
    %96 = tpu.dynamic_rotate %80 by %c614_i32_95 dim 1 : vector<8x640xf32>, i32 -> vector<8x640xf32>
    %c56_96 = arith.constant 56 : index
    %c0_97 = arith.constant 0 : index
    %97 = vector.load %arg7[%c56_96, %c0_97] : memref<288x640xf32, #tpu.memory_space<vmem>>, vector<8x640xf32>
    tpu.vector_store %arg7[%c56_96, %c0_97], %96 {strides = array<i32>} : memref<288x640xf32, #tpu.memory_space<vmem>>, vector<8x640xf32>,
    %c613_i32_98 = arith.constant 613 : i32
    %98 = tpu.dynamic_rotate %80 by %c613_i32_98 dim 1 : vector<8x640xf32>, i32 -> vector<8x640xf32>
    %c64_99 = arith.constant 64 : index
    %c0_100 = arith.constant 0 : index
    %99 = vector.load %arg7[%c64_99, %c0_100] : memref<288x640xf32, #tpu.memory_space<vmem>>, vector<8x640xf32>
    tpu.vector_store %arg7[%c64_99, %c0_100], %98 {strides = array<i32>} : memref<288x640xf32, #tpu.memory_space<vmem>>, vector<8x640xf32>,
    %c0_101 = arith.constant 0 : index
    %c0_102 = arith.constant 0 : index
    %100 = vector.load %arg7[%c0_101, %c0_102] : memref<288x640xf32, #tpu.memory_space<vmem>>, vector<72x640xf32>
    %cst_103 = arith.constant dense<0.000000e+00> : vector<8x640xf32>
    %101 = tpu.matmul %81, %100, %cst_103 {dimension_numbers = #tpu.dot_dimension_numbers<[1], [0], [0], [1], [0, 0, 1, 1], [], []>} : vector<8x72xf32>, vector<72x640xf32>, vector<8x640xf32> -> vector<8x640xf32>
    %102 = vector.broadcast %82 : vector<8x1xf32> to vector<8x640xf32>
    %103 = arith.addf %101, %102 : vector<8x640xf32>
    %cst_104 = arith.constant 0.000000e+00 : f32
    %104 = vector.broadcast %cst_104 : f32 to vector<8x640xf32>
    %105 = arith.cmpf oge, %103, %104 : vector<8x640xf32>
    %cst_105 = arith.constant 2.000000e-01 : f32
    %106 = vector.broadcast %cst_105 : f32 to vector<8x640xf32>
    %107 = arith.mulf %106, %103 : vector<8x640xf32>
    %108 = arith.select %105, %103, %107 : vector<8x640xi1>, vector<8x640xf32>
    %109 = vector.broadcast %0 : vector<1x640xf32> to vector<8x640xf32>
    %110 = arith.mulf %108, %109 : vector<8x640xf32>
    %c32_106 = arith.constant 32 : index
    %c0_107 = arith.constant 0 : index
    %111 = vector.load %arg2[%c32_106, %c0_107] : memref<112x384xf32, #tpu.memory_space<vmem>>, vector<8x72xf32>
    %c32_108 = arith.constant 32 : index
    %c0_109 = arith.constant 0 : index
    %112 = vector.load %arg3[%c32_108, %c0_109] : memref<112x1xf32, #tpu.memory_space<vmem>>, vector<8x1xf32>
    %c81_i32 = arith.constant 81 : i32
    %113 = tpu.dynamic_rotate %110 by %c81_i32 dim 1 : vector<8x640xf32>, i32 -> vector<8x640xf32>
    %c0_110 = arith.constant 0 : index
    %c0_111 = arith.constant 0 : index
    %114 = vector.load %arg7[%c0_110, %c0_111] : memref<288x640xf32, #tpu.memory_space<vmem>>, vector<8x640xf32>
    tpu.vector_store %arg7[%c0_110, %c0_111], %113 {strides = array<i32>} : memref<288x640xf32, #tpu.memory_space<vmem>>, vector<8x640xf32>,
    %c78_i32 = arith.constant 78 : i32
    %115 = tpu.dynamic_rotate %110 by %c78_i32 dim 1 : vector<8x640xf32>, i32 -> vector<8x640xf32>
    %c8_112 = arith.constant 8 : index
    %c0_113 = arith.constant 0 : index
    %116 = vector.load %arg7[%c8_112, %c0_113] : memref<288x640xf32, #tpu.memory_space<vmem>>, vector<8x640xf32>
    tpu.vector_store %arg7[%c8_112, %c0_113], %115 {strides = array<i32>} : memref<288x640xf32, #tpu.memory_space<vmem>>, vector<8x640xf32>,
    %c75_i32 = arith.constant 75 : i32
    %117 = tpu.dynamic_rotate %110 by %c75_i32 dim 1 : vector<8x640xf32>, i32 -> vector<8x640xf32>
    %c16_114 = arith.constant 16 : index
    %c0_115 = arith.constant 0 : index
    %118 = vector.load %arg7[%c16_114, %c0_115] : memref<288x640xf32, #tpu.memory_space<vmem>>, vector<8x640xf32>
    tpu.vector_store %arg7[%c16_114, %c0_115], %117 {strides = array<i32>} : memref<288x640xf32, #tpu.memory_space<vmem>>, vector<8x640xf32>,
    %c3_i32 = arith.constant 3 : i32
    %119 = tpu.dynamic_rotate %110 by %c3_i32 dim 1 : vector<8x640xf32>, i32 -> vector<8x640xf32>
    %c24_116 = arith.constant 24 : index
    %c0_117 = arith.constant 0 : index
    %120 = vector.load %arg7[%c24_116, %c0_117] : memref<288x640xf32, #tpu.memory_space<vmem>>, vector<8x640xf32>
    tpu.vector_store %arg7[%c24_116, %c0_117], %119 {strides = array<i32>} : memref<288x640xf32, #tpu.memory_space<vmem>>, vector<8x640xf32>,
    %c32_118 = arith.constant 32 : index
    %c0_119 = arith.constant 0 : index
    %121 = vector.load %arg7[%c32_118, %c0_119] : memref<288x640xf32, #tpu.memory_space<vmem>>, vector<8x640xf32>
    tpu.vector_store %arg7[%c32_118, %c0_119], %110 {strides = array<i32>} : memref<288x640xf32, #tpu.memory_space<vmem>>, vector<8x640xf32>,
    %c637_i32 = arith.constant 637 : i32
    %122 = tpu.dynamic_rotate %110 by %c637_i32 dim 1 : vector<8x640xf32>, i32 -> vector<8x640xf32>
    %c40_120 = arith.constant 40 : index
    %c0_121 = arith.constant 0 : index
    %123 = vector.load %arg7[%c40_120, %c0_121] : memref<288x640xf32, #tpu.memory_space<vmem>>, vector<8x640xf32>
    tpu.vector_store %arg7[%c40_120, %c0_121], %122 {strides = array<i32>} : memref<288x640xf32, #tpu.memory_space<vmem>>, vector<8x640xf32>,
    %c565_i32 = arith.constant 565 : i32
    %124 = tpu.dynamic_rotate %110 by %c565_i32 dim 1 : vector<8x640xf32>, i32 -> vector<8x640xf32>
    %c48_122 = arith.constant 48 : index
    %c0_123 = arith.constant 0 : index
    %125 = vector.load %arg7[%c48_122, %c0_123] : memref<288x640xf32, #tpu.memory_space<vmem>>, vector<8x640xf32>
    tpu.vector_store %arg7[%c48_122, %c0_123], %124 {strides = array<i32>} : memref<288x640xf32, #tpu.memory_space<vmem>>, vector<8x640xf32>,
    %c562_i32 = arith.constant 562 : i32
    %126 = tpu.dynamic_rotate %110 by %c562_i32 dim 1 : vector<8x640xf32>, i32 -> vector<8x640xf32>
    %c56_124 = arith.constant 56 : index
    %c0_125 = arith.constant 0 : index
    %127 = vector.load %arg7[%c56_124, %c0_125] : memref<288x640xf32, #tpu.memory_space<vmem>>, vector<8x640xf32>
    tpu.vector_store %arg7[%c56_124, %c0_125], %126 {strides = array<i32>} : memref<288x640xf32, #tpu.memory_space<vmem>>, vector<8x640xf32>,
    %c559_i32 = arith.constant 559 : i32
    %128 = tpu.dynamic_rotate %110 by %c559_i32 dim 1 : vector<8x640xf32>, i32 -> vector<8x640xf32>
    %c64_126 = arith.constant 64 : index
    %c0_127 = arith.constant 0 : index
    %129 = vector.load %arg7[%c64_126, %c0_127] : memref<288x640xf32, #tpu.memory_space<vmem>>, vector<8x640xf32>
    tpu.vector_store %arg7[%c64_126, %c0_127], %128 {strides = array<i32>} : memref<288x640xf32, #tpu.memory_space<vmem>>, vector<8x640xf32>,
    %c0_128 = arith.constant 0 : index
    %c0_129 = arith.constant 0 : index
    %130 = vector.load %arg7[%c0_128, %c0_129] : memref<288x640xf32, #tpu.memory_space<vmem>>, vector<72x640xf32>
    %cst_130 = arith.constant dense<0.000000e+00> : vector<8x640xf32>
    %131 = tpu.matmul %111, %130, %cst_130 {dimension_numbers = #tpu.dot_dimension_numbers<[1], [0], [0], [1], [0, 0, 1, 1], [], []>} : vector<8x72xf32>, vector<72x640xf32>, vector<8x640xf32> -> vector<8x640xf32>
    %132 = vector.broadcast %112 : vector<8x1xf32> to vector<8x640xf32>
    %133 = arith.addf %131, %132 : vector<8x640xf32>
    %134 = vector.extract_strided_slice %1 {offsets = [1, 0], sizes = [1, 1], strides = [1, 1]} : vector<8x1xf32> to vector<1x1xf32>
    %135 = vector.extract %134[0, 0] : f32 from vector<1x1xf32>
    %cst_131 = arith.constant 0.000000e+00 : f32
    %136 = vector.broadcast %cst_131 : f32 to vector<8x640xf32>
    %137 = arith.cmpf oge, %133, %136 : vector<8x640xf32>
    %138 = vector.broadcast %135 : f32 to vector<8x640xf32>
    %139 = arith.mulf %138, %133 : vector<8x640xf32>
    %140 = arith.select %137, %133, %139 : vector<8x640xi1>, vector<8x640xf32>
    %141 = vector.broadcast %0 : vector<1x640xf32> to vector<8x640xf32>
    %142 = arith.mulf %140, %141 : vector<8x640xf32>
    %c16_132 = arith.constant 16 : index
    %c0_133 = arith.constant 0 : index
    %143 = vector.load %arg8[%c16_132, %c0_133] : memref<56x640xf32, #tpu.memory_space<vmem>>, vector<8x640xf32>
    tpu.vector_store %arg8[%c16_132, %c0_133], %142 {strides = array<i32>} : memref<56x640xf32, #tpu.memory_space<vmem>>, vector<8x640xf32>,
    %c8_134 = arith.constant 8 : index
    %c0_135 = arith.constant 0 : index
    %144 = vector.load %arg8[%c8_134, %c0_135] : memref<56x640xf32, #tpu.memory_space<vmem>>, vector<16x640xf32>
    %c40_136 = arith.constant 40 : index
    %c0_137 = arith.constant 0 : index
    %145 = vector.load %arg2[%c40_136, %c0_137] : memref<112x384xf32, #tpu.memory_space<vmem>>, vector<8x144xf32>
    %c40_138 = arith.constant 40 : index
    %c0_139 = arith.constant 0 : index
    %146 = vector.load %arg3[%c40_138, %c0_139] : memref<112x1xf32, #tpu.memory_space<vmem>>, vector<8x1xf32>
    %c27_i32_140 = arith.constant 27 : i32
    %147 = tpu.dynamic_rotate %144 by %c27_i32_140 dim 1 : vector<16x640xf32>, i32 -> vector<16x640xf32>
    %c0_141 = arith.constant 0 : index
    %c0_142 = arith.constant 0 : index
    %148 = vector.load %arg7[%c0_141, %c0_142] : memref<288x640xf32, #tpu.memory_space<vmem>>, vector<16x640xf32>
    tpu.vector_store %arg7[%c0_141, %c0_142], %147 {strides = array<i32>} : memref<288x640xf32, #tpu.memory_space<vmem>>, vector<16x640xf32>,
    %c26_i32_143 = arith.constant 26 : i32
    %149 = tpu.dynamic_rotate %144 by %c26_i32_143 dim 1 : vector<16x640xf32>, i32 -> vector<16x640xf32>
    %c16_144 = arith.constant 16 : index
    %c0_145 = arith.constant 0 : index
    %150 = vector.load %arg7[%c16_144, %c0_145] : memref<288x640xf32, #tpu.memory_space<vmem>>, vector<16x640xf32>
    tpu.vector_store %arg7[%c16_144, %c0_145], %149 {strides = array<i32>} : memref<288x640xf32, #tpu.memory_space<vmem>>, vector<16x640xf32>,
    %c25_i32_146 = arith.constant 25 : i32
    %151 = tpu.dynamic_rotate %144 by %c25_i32_146 dim 1 : vector<16x640xf32>, i32 -> vector<16x640xf32>
    %c32_147 = arith.constant 32 : index
    %c0_148 = arith.constant 0 : index
    %152 = vector.load %arg7[%c32_147, %c0_148] : memref<288x640xf32, #tpu.memory_space<vmem>>, vector<16x640xf32>
    tpu.vector_store %arg7[%c32_147, %c0_148], %151 {strides = array<i32>} : memref<288x640xf32, #tpu.memory_space<vmem>>, vector<16x640xf32>,
    %c1_i32_149 = arith.constant 1 : i32
    %153 = tpu.dynamic_rotate %144 by %c1_i32_149 dim 1 : vector<16x640xf32>, i32 -> vector<16x640xf32>
    %c48_150 = arith.constant 48 : index
    %c0_151 = arith.constant 0 : index
    %154 = vector.load %arg7[%c48_150, %c0_151] : memref<288x640xf32, #tpu.memory_space<vmem>>, vector<16x640xf32>
    tpu.vector_store %arg7[%c48_150, %c0_151], %153 {strides = array<i32>} : memref<288x640xf32, #tpu.memory_space<vmem>>, vector<16x640xf32>,
    %c64_152 = arith.constant 64 : index
    %c0_153 = arith.constant 0 : index
    %155 = vector.load %arg7[%c64_152, %c0_153] : memref<288x640xf32, #tpu.memory_space<vmem>>, vector<16x640xf32>
    tpu.vector_store %arg7[%c64_152, %c0_153], %144 {strides = array<i32>} : memref<288x640xf32, #tpu.memory_space<vmem>>, vector<16x640xf32>,
    %c639_i32_154 = arith.constant 639 : i32
    %156 = tpu.dynamic_rotate %144 by %c639_i32_154 dim 1 : vector<16x640xf32>, i32 -> vector<16x640xf32>
    %c80 = arith.constant 80 : index
    %c0_155 = arith.constant 0 : index
    %157 = vector.load %arg7[%c80, %c0_155] : memref<288x640xf32, #tpu.memory_space<vmem>>, vector<16x640xf32>
    tpu.vector_store %arg7[%c80, %c0_155], %156 {strides = array<i32>} : memref<288x640xf32, #tpu.memory_space<vmem>>, vector<16x640xf32>,
    %c615_i32_156 = arith.constant 615 : i32
    %158 = tpu.dynamic_rotate %144 by %c615_i32_156 dim 1 : vector<16x640xf32>, i32 -> vector<16x640xf32>
    %c96 = arith.constant 96 : index
    %c0_157 = arith.constant 0 : index
    %159 = vector.load %arg7[%c96, %c0_157] : memref<288x640xf32, #tpu.memory_space<vmem>>, vector<16x640xf32>
    tpu.vector_store %arg7[%c96, %c0_157], %158 {strides = array<i32>} : memref<288x640xf32, #tpu.memory_space<vmem>>, vector<16x640xf32>,
    %c614_i32_158 = arith.constant 614 : i32
    %160 = tpu.dynamic_rotate %144 by %c614_i32_158 dim 1 : vector<16x640xf32>, i32 -> vector<16x640xf32>
    %c112 = arith.constant 112 : index
    %c0_159 = arith.constant 0 : index
    %161 = vector.load %arg7[%c112, %c0_159] : memref<288x640xf32, #tpu.memory_space<vmem>>, vector<16x640xf32>
    tpu.vector_store %arg7[%c112, %c0_159], %160 {strides = array<i32>} : memref<288x640xf32, #tpu.memory_space<vmem>>, vector<16x640xf32>,
    %c613_i32_160 = arith.constant 613 : i32
    %162 = tpu.dynamic_rotate %144 by %c613_i32_160 dim 1 : vector<16x640xf32>, i32 -> vector<16x640xf32>
    %c128 = arith.constant 128 : index
    %c0_161 = arith.constant 0 : index
    %163 = vector.load %arg7[%c128, %c0_161] : memref<288x640xf32, #tpu.memory_space<vmem>>, vector<16x640xf32>
    tpu.vector_store %arg7[%c128, %c0_161], %162 {strides = array<i32>} : memref<288x640xf32, #tpu.memory_space<vmem>>, vector<16x640xf32>,
    %c0_162 = arith.constant 0 : index
    %c0_163 = arith.constant 0 : index
    %164 = vector.load %arg7[%c0_162, %c0_163] : memref<288x640xf32, #tpu.memory_space<vmem>>, vector<144x640xf32>
    %cst_164 = arith.constant dense<0.000000e+00> : vector<8x640xf32>
    %165 = tpu.matmul %145, %164, %cst_164 {dimension_numbers = #tpu.dot_dimension_numbers<[1], [0], [0], [1], [0, 0, 1, 1], [], []>} : vector<8x144xf32>, vector<144x640xf32>, vector<8x640xf32> -> vector<8x640xf32>
    %166 = vector.broadcast %146 : vector<8x1xf32> to vector<8x640xf32>
    %167 = arith.addf %165, %166 : vector<8x640xf32>
    %cst_165 = arith.constant 0.000000e+00 : f32
    %168 = vector.broadcast %cst_165 : f32 to vector<8x640xf32>
    %169 = arith.cmpf oge, %167, %168 : vector<8x640xf32>
    %cst_166 = arith.constant 2.000000e-01 : f32
    %170 = vector.broadcast %cst_166 : f32 to vector<8x640xf32>
    %171 = arith.mulf %170, %167 : vector<8x640xf32>
    %172 = arith.select %169, %167, %171 : vector<8x640xi1>, vector<8x640xf32>
    %173 = vector.broadcast %0 : vector<1x640xf32> to vector<8x640xf32>
    %174 = arith.mulf %172, %173 : vector<8x640xf32>
    %c48_167 = arith.constant 48 : index
    %c0_168 = arith.constant 0 : index
    %175 = vector.load %arg2[%c48_167, %c0_168] : memref<112x384xf32, #tpu.memory_space<vmem>>, vector<8x72xf32>
    %c48_169 = arith.constant 48 : index
    %c0_170 = arith.constant 0 : index
    %176 = vector.load %arg3[%c48_169, %c0_170] : memref<112x1xf32, #tpu.memory_space<vmem>>, vector<8x1xf32>
    %c81_i32_171 = arith.constant 81 : i32
    %177 = tpu.dynamic_rotate %174 by %c81_i32_171 dim 1 : vector<8x640xf32>, i32 -> vector<8x640xf32>
    %c0_172 = arith.constant 0 : index
    %c0_173 = arith.constant 0 : index
    %178 = vector.load %arg7[%c0_172, %c0_173] : memref<288x640xf32, #tpu.memory_space<vmem>>, vector<8x640xf32>
    tpu.vector_store %arg7[%c0_172, %c0_173], %177 {strides = array<i32>} : memref<288x640xf32, #tpu.memory_space<vmem>>, vector<8x640xf32>,
    %c78_i32_174 = arith.constant 78 : i32
    %179 = tpu.dynamic_rotate %174 by %c78_i32_174 dim 1 : vector<8x640xf32>, i32 -> vector<8x640xf32>
    %c8_175 = arith.constant 8 : index
    %c0_176 = arith.constant 0 : index
    %180 = vector.load %arg7[%c8_175, %c0_176] : memref<288x640xf32, #tpu.memory_space<vmem>>, vector<8x640xf32>
    tpu.vector_store %arg7[%c8_175, %c0_176], %179 {strides = array<i32>} : memref<288x640xf32, #tpu.memory_space<vmem>>, vector<8x640xf32>,
    %c75_i32_177 = arith.constant 75 : i32
    %181 = tpu.dynamic_rotate %174 by %c75_i32_177 dim 1 : vector<8x640xf32>, i32 -> vector<8x640xf32>
    %c16_178 = arith.constant 16 : index
    %c0_179 = arith.constant 0 : index
    %182 = vector.load %arg7[%c16_178, %c0_179] : memref<288x640xf32, #tpu.memory_space<vmem>>, vector<8x640xf32>
    tpu.vector_store %arg7[%c16_178, %c0_179], %181 {strides = array<i32>} : memref<288x640xf32, #tpu.memory_space<vmem>>, vector<8x640xf32>,
    %c3_i32_180 = arith.constant 3 : i32
    %183 = tpu.dynamic_rotate %174 by %c3_i32_180 dim 1 : vector<8x640xf32>, i32 -> vector<8x640xf32>
    %c24_181 = arith.constant 24 : index
    %c0_182 = arith.constant 0 : index
    %184 = vector.load %arg7[%c24_181, %c0_182] : memref<288x640xf32, #tpu.memory_space<vmem>>, vector<8x640xf32>
    tpu.vector_store %arg7[%c24_181, %c0_182], %183 {strides = array<i32>} : memref<288x640xf32, #tpu.memory_space<vmem>>, vector<8x640xf32>,
    %c32_183 = arith.constant 32 : index
    %c0_184 = arith.constant 0 : index
    %185 = vector.load %arg7[%c32_183, %c0_184] : memref<288x640xf32, #tpu.memory_space<vmem>>, vector<8x640xf32>
    tpu.vector_store %arg7[%c32_183, %c0_184], %174 {strides = array<i32>} : memref<288x640xf32, #tpu.memory_space<vmem>>, vector<8x640xf32>,
    %c637_i32_185 = arith.constant 637 : i32
    %186 = tpu.dynamic_rotate %174 by %c637_i32_185 dim 1 : vector<8x640xf32>, i32 -> vector<8x640xf32>
    %c40_186 = arith.constant 40 : index
    %c0_187 = arith.constant 0 : index
    %187 = vector.load %arg7[%c40_186, %c0_187] : memref<288x640xf32, #tpu.memory_space<vmem>>, vector<8x640xf32>
    tpu.vector_store %arg7[%c40_186, %c0_187], %186 {strides = array<i32>} : memref<288x640xf32, #tpu.memory_space<vmem>>, vector<8x640xf32>,
    %c565_i32_188 = arith.constant 565 : i32
    %188 = tpu.dynamic_rotate %174 by %c565_i32_188 dim 1 : vector<8x640xf32>, i32 -> vector<8x640xf32>
    %c48_189 = arith.constant 48 : index
    %c0_190 = arith.constant 0 : index
    %189 = vector.load %arg7[%c48_189, %c0_190] : memref<288x640xf32, #tpu.memory_space<vmem>>, vector<8x640xf32>
    tpu.vector_store %arg7[%c48_189, %c0_190], %188 {strides = array<i32>} : memref<288x640xf32, #tpu.memory_space<vmem>>, vector<8x640xf32>,
    %c562_i32_191 = arith.constant 562 : i32
    %190 = tpu.dynamic_rotate %174 by %c562_i32_191 dim 1 : vector<8x640xf32>, i32 -> vector<8x640xf32>
    %c56_192 = arith.constant 56 : index
    %c0_193 = arith.constant 0 : index
    %191 = vector.load %arg7[%c56_192, %c0_193] : memref<288x640xf32, #tpu.memory_space<vmem>>, vector<8x640xf32>
    tpu.vector_store %arg7[%c56_192, %c0_193], %190 {strides = array<i32>} : memref<288x640xf32, #tpu.memory_space<vmem>>, vector<8x640xf32>,
    %c559_i32_194 = arith.constant 559 : i32
    %192 = tpu.dynamic_rotate %174 by %c559_i32_194 dim 1 : vector<8x640xf32>, i32 -> vector<8x640xf32>
    %c64_195 = arith.constant 64 : index
    %c0_196 = arith.constant 0 : index
    %193 = vector.load %arg7[%c64_195, %c0_196] : memref<288x640xf32, #tpu.memory_space<vmem>>, vector<8x640xf32>
    tpu.vector_store %arg7[%c64_195, %c0_196], %192 {strides = array<i32>} : memref<288x640xf32, #tpu.memory_space<vmem>>, vector<8x640xf32>,
    %c0_197 = arith.constant 0 : index
    %c0_198 = arith.constant 0 : index
    %194 = vector.load %arg7[%c0_197, %c0_198] : memref<288x640xf32, #tpu.memory_space<vmem>>, vector<72x640xf32>
    %cst_199 = arith.constant dense<0.000000e+00> : vector<8x640xf32>
    %195 = tpu.matmul %175, %194, %cst_199 {dimension_numbers = #tpu.dot_dimension_numbers<[1], [0], [0], [1], [0, 0, 1, 1], [], []>} : vector<8x72xf32>, vector<72x640xf32>, vector<8x640xf32> -> vector<8x640xf32>
    %196 = vector.broadcast %176 : vector<8x1xf32> to vector<8x640xf32>
    %197 = arith.addf %195, %196 : vector<8x640xf32>
    %198 = vector.extract_strided_slice %1 {offsets = [2, 0], sizes = [1, 1], strides = [1, 1]} : vector<8x1xf32> to vector<1x1xf32>
    %199 = vector.extract %198[0, 0] : f32 from vector<1x1xf32>
    %cst_200 = arith.constant 0.000000e+00 : f32
    %200 = vector.broadcast %cst_200 : f32 to vector<8x640xf32>
    %201 = arith.cmpf oge, %197, %200 : vector<8x640xf32>
    %202 = vector.broadcast %199 : f32 to vector<8x640xf32>
    %203 = arith.mulf %202, %197 : vector<8x640xf32>
    %204 = arith.select %201, %197, %203 : vector<8x640xi1>, vector<8x640xf32>
    %205 = vector.broadcast %0 : vector<1x640xf32> to vector<8x640xf32>
    %206 = arith.mulf %204, %205 : vector<8x640xf32>
    %c24_201 = arith.constant 24 : index
    %c0_202 = arith.constant 0 : index
    %207 = vector.load %arg8[%c24_201, %c0_202] : memref<56x640xf32, #tpu.memory_space<vmem>>, vector<8x640xf32>
    tpu.vector_store %arg8[%c24_201, %c0_202], %206 {strides = array<i32>} : memref<56x640xf32, #tpu.memory_space<vmem>>, vector<8x640xf32>,
    %c8_203 = arith.constant 8 : index
    %c0_204 = arith.constant 0 : index
    %208 = vector.load %arg8[%c8_203, %c0_204] : memref<56x640xf32, #tpu.memory_space<vmem>>, vector<24x640xf32>
    %c56_205 = arith.constant 56 : index
    %c0_206 = arith.constant 0 : index
    %209 = vector.load %arg2[%c56_205, %c0_206] : memref<112x384xf32, #tpu.memory_space<vmem>>, vector<8x216xf32>
    %c56_207 = arith.constant 56 : index
    %c0_208 = arith.constant 0 : index
    %210 = vector.load %arg3[%c56_207, %c0_208] : memref<112x1xf32, #tpu.memory_space<vmem>>, vector<8x1xf32>
    %c27_i32_209 = arith.constant 27 : i32
    %211 = tpu.dynamic_rotate %208 by %c27_i32_209 dim 1 : vector<24x640xf32>, i32 -> vector<24x640xf32>
    %c0_210 = arith.constant 0 : index
    %c0_211 = arith.constant 0 : index
    %212 = vector.load %arg7[%c0_210, %c0_211] : memref<288x640xf32, #tpu.memory_space<vmem>>, vector<24x640xf32>
    tpu.vector_store %arg7[%c0_210, %c0_211], %211 {strides = array<i32>} : memref<288x640xf32, #tpu.memory_space<vmem>>, vector<24x640xf32>,
    %c26_i32_212 = arith.constant 26 : i32
    %213 = tpu.dynamic_rotate %208 by %c26_i32_212 dim 1 : vector<24x640xf32>, i32 -> vector<24x640xf32>
    %c24_213 = arith.constant 24 : index
    %c0_214 = arith.constant 0 : index
    %214 = vector.load %arg7[%c24_213, %c0_214] : memref<288x640xf32, #tpu.memory_space<vmem>>, vector<24x640xf32>
    tpu.vector_store %arg7[%c24_213, %c0_214], %213 {strides = array<i32>} : memref<288x640xf32, #tpu.memory_space<vmem>>, vector<24x640xf32>,
    %c25_i32_215 = arith.constant 25 : i32
    %215 = tpu.dynamic_rotate %208 by %c25_i32_215 dim 1 : vector<24x640xf32>, i32 -> vector<24x640xf32>
    %c48_216 = arith.constant 48 : index
    %c0_217 = arith.constant 0 : index
    %216 = vector.load %arg7[%c48_216, %c0_217] : memref<288x640xf32, #tpu.memory_space<vmem>>, vector<24x640xf32>
    tpu.vector_store %arg7[%c48_216, %c0_217], %215 {strides = array<i32>} : memref<288x640xf32, #tpu.memory_space<vmem>>, vector<24x640xf32>,
    %c1_i32_218 = arith.constant 1 : i32
    %217 = tpu.dynamic_rotate %208 by %c1_i32_218 dim 1 : vector<24x640xf32>, i32 -> vector<24x640xf32>
    %c72 = arith.constant 72 : index
    %c0_219 = arith.constant 0 : index
    %218 = vector.load %arg7[%c72, %c0_219] : memref<288x640xf32, #tpu.memory_space<vmem>>, vector<24x640xf32>
    tpu.vector_store %arg7[%c72, %c0_219], %217 {strides = array<i32>} : memref<288x640xf32, #tpu.memory_space<vmem>>, vector<24x640xf32>,
    %c96_220 = arith.constant 96 : index
    %c0_221 = arith.constant 0 : index
    %219 = vector.load %arg7[%c96_220, %c0_221] : memref<288x640xf32, #tpu.memory_space<vmem>>, vector<24x640xf32>
    tpu.vector_store %arg7[%c96_220, %c0_221], %208 {strides = array<i32>} : memref<288x640xf32, #tpu.memory_space<vmem>>, vector<24x640xf32>,
    %c639_i32_222 = arith.constant 639 : i32
    %220 = tpu.dynamic_rotate %208 by %c639_i32_222 dim 1 : vector<24x640xf32>, i32 -> vector<24x640xf32>
    %c120 = arith.constant 120 : index
    %c0_223 = arith.constant 0 : index
    %221 = vector.load %arg7[%c120, %c0_223] : memref<288x640xf32, #tpu.memory_space<vmem>>, vector<24x640xf32>
    tpu.vector_store %arg7[%c120, %c0_223], %220 {strides = array<i32>} : memref<288x640xf32, #tpu.memory_space<vmem>>, vector<24x640xf32>,
    %c615_i32_224 = arith.constant 615 : i32
    %222 = tpu.dynamic_rotate %208 by %c615_i32_224 dim 1 : vector<24x640xf32>, i32 -> vector<24x640xf32>
    %c144 = arith.constant 144 : index
    %c0_225 = arith.constant 0 : index
    %223 = vector.load %arg7[%c144, %c0_225] : memref<288x640xf32, #tpu.memory_space<vmem>>, vector<24x640xf32>
    tpu.vector_store %arg7[%c144, %c0_225], %222 {strides = array<i32>} : memref<288x640xf32, #tpu.memory_space<vmem>>, vector<24x640xf32>,
    %c614_i32_226 = arith.constant 614 : i32
    %224 = tpu.dynamic_rotate %208 by %c614_i32_226 dim 1 : vector<24x640xf32>, i32 -> vector<24x640xf32>
    %c168 = arith.constant 168 : index
    %c0_227 = arith.constant 0 : index
    %225 = vector.load %arg7[%c168, %c0_227] : memref<288x640xf32, #tpu.memory_space<vmem>>, vector<24x640xf32>
    tpu.vector_store %arg7[%c168, %c0_227], %224 {strides = array<i32>} : memref<288x640xf32, #tpu.memory_space<vmem>>, vector<24x640xf32>,
    %c613_i32_228 = arith.constant 613 : i32
    %226 = tpu.dynamic_rotate %208 by %c613_i32_228 dim 1 : vector<24x640xf32>, i32 -> vector<24x640xf32>
    %c192 = arith.constant 192 : index
    %c0_229 = arith.constant 0 : index
    %227 = vector.load %arg7[%c192, %c0_229] : memref<288x640xf32, #tpu.memory_space<vmem>>, vector<24x640xf32>
    tpu.vector_store %arg7[%c192, %c0_229], %226 {strides = array<i32>} : memref<288x640xf32, #tpu.memory_space<vmem>>, vector<24x640xf32>,
    %c0_230 = arith.constant 0 : index
    %c0_231 = arith.constant 0 : index
    %228 = vector.load %arg7[%c0_230, %c0_231] : memref<288x640xf32, #tpu.memory_space<vmem>>, vector<216x640xf32>
    %cst_232 = arith.constant dense<0.000000e+00> : vector<8x640xf32>
    %229 = tpu.matmul %209, %228, %cst_232 {dimension_numbers = #tpu.dot_dimension_numbers<[1], [0], [0], [1], [0, 0, 1, 1], [], []>} : vector<8x216xf32>, vector<216x640xf32>, vector<8x640xf32> -> vector<8x640xf32>
    %230 = vector.broadcast %210 : vector<8x1xf32> to vector<8x640xf32>
    %231 = arith.addf %229, %230 : vector<8x640xf32>
    %cst_233 = arith.constant 0.000000e+00 : f32
    %232 = vector.broadcast %cst_233 : f32 to vector<8x640xf32>
    %233 = arith.cmpf oge, %231, %232 : vector<8x640xf32>
    %cst_234 = arith.constant 2.000000e-01 : f32
    %234 = vector.broadcast %cst_234 : f32 to vector<8x640xf32>
    %235 = arith.mulf %234, %231 : vector<8x640xf32>
    %236 = arith.select %233, %231, %235 : vector<8x640xi1>, vector<8x640xf32>
    %237 = vector.broadcast %0 : vector<1x640xf32> to vector<8x640xf32>
    %238 = arith.mulf %236, %237 : vector<8x640xf32>
    %c64_235 = arith.constant 64 : index
    %c0_236 = arith.constant 0 : index
    %239 = vector.load %arg2[%c64_235, %c0_236] : memref<112x384xf32, #tpu.memory_space<vmem>>, vector<8x72xf32>
    %c64_237 = arith.constant 64 : index
    %c0_238 = arith.constant 0 : index
    %240 = vector.load %arg3[%c64_237, %c0_238] : memref<112x1xf32, #tpu.memory_space<vmem>>, vector<8x1xf32>
    %c81_i32_239 = arith.constant 81 : i32
    %241 = tpu.dynamic_rotate %238 by %c81_i32_239 dim 1 : vector<8x640xf32>, i32 -> vector<8x640xf32>
    %c0_240 = arith.constant 0 : index
    %c0_241 = arith.constant 0 : index
    %242 = vector.load %arg7[%c0_240, %c0_241] : memref<288x640xf32, #tpu.memory_space<vmem>>, vector<8x640xf32>
    tpu.vector_store %arg7[%c0_240, %c0_241], %241 {strides = array<i32>} : memref<288x640xf32, #tpu.memory_space<vmem>>, vector<8x640xf32>,
    %c78_i32_242 = arith.constant 78 : i32
    %243 = tpu.dynamic_rotate %238 by %c78_i32_242 dim 1 : vector<8x640xf32>, i32 -> vector<8x640xf32>
    %c8_243 = arith.constant 8 : index
    %c0_244 = arith.constant 0 : index
    %244 = vector.load %arg7[%c8_243, %c0_244] : memref<288x640xf32, #tpu.memory_space<vmem>>, vector<8x640xf32>
    tpu.vector_store %arg7[%c8_243, %c0_244], %243 {strides = array<i32>} : memref<288x640xf32, #tpu.memory_space<vmem>>, vector<8x640xf32>,
    %c75_i32_245 = arith.constant 75 : i32
    %245 = tpu.dynamic_rotate %238 by %c75_i32_245 dim 1 : vector<8x640xf32>, i32 -> vector<8x640xf32>
    %c16_246 = arith.constant 16 : index
    %c0_247 = arith.constant 0 : index
    %246 = vector.load %arg7[%c16_246, %c0_247] : memref<288x640xf32, #tpu.memory_space<vmem>>, vector<8x640xf32>
    tpu.vector_store %arg7[%c16_246, %c0_247], %245 {strides = array<i32>} : memref<288x640xf32, #tpu.memory_space<vmem>>, vector<8x640xf32>,
    %c3_i32_248 = arith.constant 3 : i32
    %247 = tpu.dynamic_rotate %238 by %c3_i32_248 dim 1 : vector<8x640xf32>, i32 -> vector<8x640xf32>
    %c24_249 = arith.constant 24 : index
    %c0_250 = arith.constant 0 : index
    %248 = vector.load %arg7[%c24_249, %c0_250] : memref<288x640xf32, #tpu.memory_space<vmem>>, vector<8x640xf32>
    tpu.vector_store %arg7[%c24_249, %c0_250], %247 {strides = array<i32>} : memref<288x640xf32, #tpu.memory_space<vmem>>, vector<8x640xf32>,
    %c32_251 = arith.constant 32 : index
    %c0_252 = arith.constant 0 : index
    %249 = vector.load %arg7[%c32_251, %c0_252] : memref<288x640xf32, #tpu.memory_space<vmem>>, vector<8x640xf32>
    tpu.vector_store %arg7[%c32_251, %c0_252], %238 {strides = array<i32>} : memref<288x640xf32, #tpu.memory_space<vmem>>, vector<8x640xf32>,
    %c637_i32_253 = arith.constant 637 : i32
    %250 = tpu.dynamic_rotate %238 by %c637_i32_253 dim 1 : vector<8x640xf32>, i32 -> vector<8x640xf32>
    %c40_254 = arith.constant 40 : index
    %c0_255 = arith.constant 0 : index
    %251 = vector.load %arg7[%c40_254, %c0_255] : memref<288x640xf32, #tpu.memory_space<vmem>>, vector<8x640xf32>
    tpu.vector_store %arg7[%c40_254, %c0_255], %250 {strides = array<i32>} : memref<288x640xf32, #tpu.memory_space<vmem>>, vector<8x640xf32>,
    %c565_i32_256 = arith.constant 565 : i32
    %252 = tpu.dynamic_rotate %238 by %c565_i32_256 dim 1 : vector<8x640xf32>, i32 -> vector<8x640xf32>
    %c48_257 = arith.constant 48 : index
    %c0_258 = arith.constant 0 : index
    %253 = vector.load %arg7[%c48_257, %c0_258] : memref<288x640xf32, #tpu.memory_space<vmem>>, vector<8x640xf32>
    tpu.vector_store %arg7[%c48_257, %c0_258], %252 {strides = array<i32>} : memref<288x640xf32, #tpu.memory_space<vmem>>, vector<8x640xf32>,
    %c562_i32_259 = arith.constant 562 : i32
    %254 = tpu.dynamic_rotate %238 by %c562_i32_259 dim 1 : vector<8x640xf32>, i32 -> vector<8x640xf32>
    %c56_260 = arith.constant 56 : index
    %c0_261 = arith.constant 0 : index
    %255 = vector.load %arg7[%c56_260, %c0_261] : memref<288x640xf32, #tpu.memory_space<vmem>>, vector<8x640xf32>
    tpu.vector_store %arg7[%c56_260, %c0_261], %254 {strides = array<i32>} : memref<288x640xf32, #tpu.memory_space<vmem>>, vector<8x640xf32>,
    %c559_i32_262 = arith.constant 559 : i32
    %256 = tpu.dynamic_rotate %238 by %c559_i32_262 dim 1 : vector<8x640xf32>, i32 -> vector<8x640xf32>
    %c64_263 = arith.constant 64 : index
    %c0_264 = arith.constant 0 : index
    %257 = vector.load %arg7[%c64_263, %c0_264] : memref<288x640xf32, #tpu.memory_space<vmem>>, vector<8x640xf32>
    tpu.vector_store %arg7[%c64_263, %c0_264], %256 {strides = array<i32>} : memref<288x640xf32, #tpu.memory_space<vmem>>, vector<8x640xf32>,
    %c0_265 = arith.constant 0 : index
    %c0_266 = arith.constant 0 : index
    %258 = vector.load %arg7[%c0_265, %c0_266] : memref<288x640xf32, #tpu.memory_space<vmem>>, vector<72x640xf32>
    %cst_267 = arith.constant dense<0.000000e+00> : vector<8x640xf32>
    %259 = tpu.matmul %239, %258, %cst_267 {dimension_numbers = #tpu.dot_dimension_numbers<[1], [0], [0], [1], [0, 0, 1, 1], [], []>} : vector<8x72xf32>, vector<72x640xf32>, vector<8x640xf32> -> vector<8x640xf32>
    %260 = vector.broadcast %240 : vector<8x1xf32> to vector<8x640xf32>
    %261 = arith.addf %259, %260 : vector<8x640xf32>
    %262 = vector.extract_strided_slice %1 {offsets = [3, 0], sizes = [1, 1], strides = [1, 1]} : vector<8x1xf32> to vector<1x1xf32>
    %263 = vector.extract %262[0, 0] : f32 from vector<1x1xf32>
    %cst_268 = arith.constant 0.000000e+00 : f32
    %264 = vector.broadcast %cst_268 : f32 to vector<8x640xf32>
    %265 = arith.cmpf oge, %261, %264 : vector<8x640xf32>
    %266 = vector.broadcast %263 : f32 to vector<8x640xf32>
    %267 = arith.mulf %266, %261 : vector<8x640xf32>
    %268 = arith.select %265, %261, %267 : vector<8x640xi1>, vector<8x640xf32>
    %269 = vector.broadcast %0 : vector<1x640xf32> to vector<8x640xf32>
    %270 = arith.mulf %268, %269 : vector<8x640xf32>
    %c32_269 = arith.constant 32 : index
    %c0_270 = arith.constant 0 : index
    %271 = vector.load %arg8[%c32_269, %c0_270] : memref<56x640xf32, #tpu.memory_space<vmem>>, vector<8x640xf32>
    tpu.vector_store %arg8[%c32_269, %c0_270], %270 {strides = array<i32>} : memref<56x640xf32, #tpu.memory_space<vmem>>, vector<8x640xf32>,
    %c8_271 = arith.constant 8 : index
    %c0_272 = arith.constant 0 : index
    %272 = vector.load %arg8[%c8_271, %c0_272] : memref<56x640xf32, #tpu.memory_space<vmem>>, vector<32x640xf32>
    %c72_273 = arith.constant 72 : index
    %c0_274 = arith.constant 0 : index
    %273 = vector.load %arg2[%c72_273, %c0_274] : memref<112x384xf32, #tpu.memory_space<vmem>>, vector<8x288xf32>
    %c72_275 = arith.constant 72 : index
    %c0_276 = arith.constant 0 : index
    %274 = vector.load %arg3[%c72_275, %c0_276] : memref<112x1xf32, #tpu.memory_space<vmem>>, vector<8x1xf32>
    %c27_i32_277 = arith.constant 27 : i32
    %275 = tpu.dynamic_rotate %272 by %c27_i32_277 dim 1 : vector<32x640xf32>, i32 -> vector<32x640xf32>
    %c0_278 = arith.constant 0 : index
    %c0_279 = arith.constant 0 : index
    %276 = vector.load %arg7[%c0_278, %c0_279] : memref<288x640xf32, #tpu.memory_space<vmem>>, vector<32x640xf32>
    tpu.vector_store %arg7[%c0_278, %c0_279], %275 {strides = array<i32>} : memref<288x640xf32, #tpu.memory_space<vmem>>, vector<32x640xf32>,
    %c26_i32_280 = arith.constant 26 : i32
    %277 = tpu.dynamic_rotate %272 by %c26_i32_280 dim 1 : vector<32x640xf32>, i32 -> vector<32x640xf32>
    %c32_281 = arith.constant 32 : index
    %c0_282 = arith.constant 0 : index
    %278 = vector.load %arg7[%c32_281, %c0_282] : memref<288x640xf32, #tpu.memory_space<vmem>>, vector<32x640xf32>
    tpu.vector_store %arg7[%c32_281, %c0_282], %277 {strides = array<i32>} : memref<288x640xf32, #tpu.memory_space<vmem>>, vector<32x640xf32>,
    %c25_i32_283 = arith.constant 25 : i32
    %279 = tpu.dynamic_rotate %272 by %c25_i32_283 dim 1 : vector<32x640xf32>, i32 -> vector<32x640xf32>
    %c64_284 = arith.constant 64 : index
    %c0_285 = arith.constant 0 : index
    %280 = vector.load %arg7[%c64_284, %c0_285] : memref<288x640xf32, #tpu.memory_space<vmem>>, vector<32x640xf32>
    tpu.vector_store %arg7[%c64_284, %c0_285], %279 {strides = array<i32>} : memref<288x640xf32, #tpu.memory_space<vmem>>, vector<32x640xf32>,
    %c1_i32_286 = arith.constant 1 : i32
    %281 = tpu.dynamic_rotate %272 by %c1_i32_286 dim 1 : vector<32x640xf32>, i32 -> vector<32x640xf32>
    %c96_287 = arith.constant 96 : index
    %c0_288 = arith.constant 0 : index
    %282 = vector.load %arg7[%c96_287, %c0_288] : memref<288x640xf32, #tpu.memory_space<vmem>>, vector<32x640xf32>
    tpu.vector_store %arg7[%c96_287, %c0_288], %281 {strides = array<i32>} : memref<288x640xf32, #tpu.memory_space<vmem>>, vector<32x640xf32>,
    %c128_289 = arith.constant 128 : index
    %c0_290 = arith.constant 0 : index
    %283 = vector.load %arg7[%c128_289, %c0_290] : memref<288x640xf32, #tpu.memory_space<vmem>>, vector<32x640xf32>
    tpu.vector_store %arg7[%c128_289, %c0_290], %272 {strides = array<i32>} : memref<288x640xf32, #tpu.memory_space<vmem>>, vector<32x640xf32>,
    %c639_i32_291 = arith.constant 639 : i32
    %284 = tpu.dynamic_rotate %272 by %c639_i32_291 dim 1 : vector<32x640xf32>, i32 -> vector<32x640xf32>
    %c160 = arith.constant 160 : index
    %c0_292 = arith.constant 0 : index
    %285 = vector.load %arg7[%c160, %c0_292] : memref<288x640xf32, #tpu.memory_space<vmem>>, vector<32x640xf32>
    tpu.vector_store %arg7[%c160, %c0_292], %284 {strides = array<i32>} : memref<288x640xf32, #tpu.memory_space<vmem>>, vector<32x640xf32>,
    %c615_i32_293 = arith.constant 615 : i32
    %286 = tpu.dynamic_rotate %272 by %c615_i32_293 dim 1 : vector<32x640xf32>, i32 -> vector<32x640xf32>
    %c192_294 = arith.constant 192 : index
    %c0_295 = arith.constant 0 : index
    %287 = vector.load %arg7[%c192_294, %c0_295] : memref<288x640xf32, #tpu.memory_space<vmem>>, vector<32x640xf32>
    tpu.vector_store %arg7[%c192_294, %c0_295], %286 {strides = array<i32>} : memref<288x640xf32, #tpu.memory_space<vmem>>, vector<32x640xf32>,
    %c614_i32_296 = arith.constant 614 : i32
    %288 = tpu.dynamic_rotate %272 by %c614_i32_296 dim 1 : vector<32x640xf32>, i32 -> vector<32x640xf32>
    %c224 = arith.constant 224 : index
    %c0_297 = arith.constant 0 : index
    %289 = vector.load %arg7[%c224, %c0_297] : memref<288x640xf32, #tpu.memory_space<vmem>>, vector<32x640xf32>
    tpu.vector_store %arg7[%c224, %c0_297], %288 {strides = array<i32>} : memref<288x640xf32, #tpu.memory_space<vmem>>, vector<32x640xf32>,
    %c613_i32_298 = arith.constant 613 : i32
    %290 = tpu.dynamic_rotate %272 by %c613_i32_298 dim 1 : vector<32x640xf32>, i32 -> vector<32x640xf32>
    %c256 = arith.constant 256 : index
    %c0_299 = arith.constant 0 : index
    %291 = vector.load %arg7[%c256, %c0_299] : memref<288x640xf32, #tpu.memory_space<vmem>>, vector<32x640xf32>
    tpu.vector_store %arg7[%c256, %c0_299], %290 {strides = array<i32>} : memref<288x640xf32, #tpu.memory_space<vmem>>, vector<32x640xf32>,
    %c0_300 = arith.constant 0 : index
    %c0_301 = arith.constant 0 : index
    %292 = vector.load %arg7[%c0_300, %c0_301] : memref<288x640xf32, #tpu.memory_space<vmem>>, vector<288x640xf32>
    %cst_302 = arith.constant dense<0.000000e+00> : vector<8x640xf32>
    %293 = tpu.matmul %273, %292, %cst_302 {dimension_numbers = #tpu.dot_dimension_numbers<[1], [0], [0], [1], [0, 0, 1, 1], [], []>} : vector<8x288xf32>, vector<288x640xf32>, vector<8x640xf32> -> vector<8x640xf32>
    %294 = vector.broadcast %274 : vector<8x1xf32> to vector<8x640xf32>
    %295 = arith.addf %293, %294 : vector<8x640xf32>
    %cst_303 = arith.constant 0.000000e+00 : f32
    %296 = vector.broadcast %cst_303 : f32 to vector<8x640xf32>
    %297 = arith.cmpf oge, %295, %296 : vector<8x640xf32>
    %cst_304 = arith.constant 2.000000e-01 : f32
    %298 = vector.broadcast %cst_304 : f32 to vector<8x640xf32>
    %299 = arith.mulf %298, %295 : vector<8x640xf32>
    %300 = arith.select %297, %295, %299 : vector<8x640xi1>, vector<8x640xf32>
    %301 = vector.broadcast %0 : vector<1x640xf32> to vector<8x640xf32>
    %302 = arith.mulf %300, %301 : vector<8x640xf32>
    %c80_305 = arith.constant 80 : index
    %c0_306 = arith.constant 0 : index
    %303 = vector.load %arg2[%c80_305, %c0_306] : memref<112x384xf32, #tpu.memory_space<vmem>>, vector<8x72xf32>
    %c80_307 = arith.constant 80 : index
    %c0_308 = arith.constant 0 : index
    %304 = vector.load %arg3[%c80_307, %c0_308] : memref<112x1xf32, #tpu.memory_space<vmem>>, vector<8x1xf32>
    %c81_i32_309 = arith.constant 81 : i32
    %305 = tpu.dynamic_rotate %302 by %c81_i32_309 dim 1 : vector<8x640xf32>, i32 -> vector<8x640xf32>
    %c0_310 = arith.constant 0 : index
    %c0_311 = arith.constant 0 : index
    %306 = vector.load %arg7[%c0_310, %c0_311] : memref<288x640xf32, #tpu.memory_space<vmem>>, vector<8x640xf32>
    tpu.vector_store %arg7[%c0_310, %c0_311], %305 {strides = array<i32>} : memref<288x640xf32, #tpu.memory_space<vmem>>, vector<8x640xf32>,
    %c78_i32_312 = arith.constant 78 : i32
    %307 = tpu.dynamic_rotate %302 by %c78_i32_312 dim 1 : vector<8x640xf32>, i32 -> vector<8x640xf32>
    %c8_313 = arith.constant 8 : index
    %c0_314 = arith.constant 0 : index
    %308 = vector.load %arg7[%c8_313, %c0_314] : memref<288x640xf32, #tpu.memory_space<vmem>>, vector<8x640xf32>
    tpu.vector_store %arg7[%c8_313, %c0_314], %307 {strides = array<i32>} : memref<288x640xf32, #tpu.memory_space<vmem>>, vector<8x640xf32>,
    %c75_i32_315 = arith.constant 75 : i32
    %309 = tpu.dynamic_rotate %302 by %c75_i32_315 dim 1 : vector<8x640xf32>, i32 -> vector<8x640xf32>
    %c16_316 = arith.constant 16 : index
    %c0_317 = arith.constant 0 : index
    %310 = vector.load %arg7[%c16_316, %c0_317] : memref<288x640xf32, #tpu.memory_space<vmem>>, vector<8x640xf32>
    tpu.vector_store %arg7[%c16_316, %c0_317], %309 {strides = array<i32>} : memref<288x640xf32, #tpu.memory_space<vmem>>, vector<8x640xf32>,
    %c3_i32_318 = arith.constant 3 : i32
    %311 = tpu.dynamic_rotate %302 by %c3_i32_318 dim 1 : vector<8x640xf32>, i32 -> vector<8x640xf32>
    %c24_319 = arith.constant 24 : index
    %c0_320 = arith.constant 0 : index
    %312 = vector.load %arg7[%c24_319, %c0_320] : memref<288x640xf32, #tpu.memory_space<vmem>>, vector<8x640xf32>
    tpu.vector_store %arg7[%c24_319, %c0_320], %311 {strides = array<i32>} : memref<288x640xf32, #tpu.memory_space<vmem>>, vector<8x640xf32>,
    %c32_321 = arith.constant 32 : index
    %c0_322 = arith.constant 0 : index
    %313 = vector.load %arg7[%c32_321, %c0_322] : memref<288x640xf32, #tpu.memory_space<vmem>>, vector<8x640xf32>
    tpu.vector_store %arg7[%c32_321, %c0_322], %302 {strides = array<i32>} : memref<288x640xf32, #tpu.memory_space<vmem>>, vector<8x640xf32>,
    %c637_i32_323 = arith.constant 637 : i32
    %314 = tpu.dynamic_rotate %302 by %c637_i32_323 dim 1 : vector<8x640xf32>, i32 -> vector<8x640xf32>
    %c40_324 = arith.constant 40 : index
    %c0_325 = arith.constant 0 : index
    %315 = vector.load %arg7[%c40_324, %c0_325] : memref<288x640xf32, #tpu.memory_space<vmem>>, vector<8x640xf32>
    tpu.vector_store %arg7[%c40_324, %c0_325], %314 {strides = array<i32>} : memref<288x640xf32, #tpu.memory_space<vmem>>, vector<8x640xf32>,
    %c565_i32_326 = arith.constant 565 : i32
    %316 = tpu.dynamic_rotate %302 by %c565_i32_326 dim 1 : vector<8x640xf32>, i32 -> vector<8x640xf32>
    %c48_327 = arith.constant 48 : index
    %c0_328 = arith.constant 0 : index
    %317 = vector.load %arg7[%c48_327, %c0_328] : memref<288x640xf32, #tpu.memory_space<vmem>>, vector<8x640xf32>
    tpu.vector_store %arg7[%c48_327, %c0_328], %316 {strides = array<i32>} : memref<288x640xf32, #tpu.memory_space<vmem>>, vector<8x640xf32>,
    %c562_i32_329 = arith.constant 562 : i32
    %318 = tpu.dynamic_rotate %302 by %c562_i32_329 dim 1 : vector<8x640xf32>, i32 -> vector<8x640xf32>
    %c56_330 = arith.constant 56 : index
    %c0_331 = arith.constant 0 : index
    %319 = vector.load %arg7[%c56_330, %c0_331] : memref<288x640xf32, #tpu.memory_space<vmem>>, vector<8x640xf32>
    tpu.vector_store %arg7[%c56_330, %c0_331], %318 {strides = array<i32>} : memref<288x640xf32, #tpu.memory_space<vmem>>, vector<8x640xf32>,
    %c559_i32_332 = arith.constant 559 : i32
    %320 = tpu.dynamic_rotate %302 by %c559_i32_332 dim 1 : vector<8x640xf32>, i32 -> vector<8x640xf32>
    %c64_333 = arith.constant 64 : index
    %c0_334 = arith.constant 0 : index
    %321 = vector.load %arg7[%c64_333, %c0_334] : memref<288x640xf32, #tpu.memory_space<vmem>>, vector<8x640xf32>
    tpu.vector_store %arg7[%c64_333, %c0_334], %320 {strides = array<i32>} : memref<288x640xf32, #tpu.memory_space<vmem>>, vector<8x640xf32>,
    %c0_335 = arith.constant 0 : index
    %c0_336 = arith.constant 0 : index
    %322 = vector.load %arg7[%c0_335, %c0_336] : memref<288x640xf32, #tpu.memory_space<vmem>>, vector<72x640xf32>
    %cst_337 = arith.constant dense<0.000000e+00> : vector<8x640xf32>
    %323 = tpu.matmul %303, %322, %cst_337 {dimension_numbers = #tpu.dot_dimension_numbers<[1], [0], [0], [1], [0, 0, 1, 1], [], []>} : vector<8x72xf32>, vector<72x640xf32>, vector<8x640xf32> -> vector<8x640xf32>
    %324 = vector.broadcast %304 : vector<8x1xf32> to vector<8x640xf32>
    %325 = arith.addf %323, %324 : vector<8x640xf32>
    %326 = vector.extract_strided_slice %1 {offsets = [4, 0], sizes = [1, 1], strides = [1, 1]} : vector<8x1xf32> to vector<1x1xf32>
    %327 = vector.extract %326[0, 0] : f32 from vector<1x1xf32>
    %cst_338 = arith.constant 0.000000e+00 : f32
    %328 = vector.broadcast %cst_338 : f32 to vector<8x640xf32>
    %329 = arith.cmpf oge, %325, %328 : vector<8x640xf32>
    %330 = vector.broadcast %327 : f32 to vector<8x640xf32>
    %331 = arith.mulf %330, %325 : vector<8x640xf32>
    %332 = arith.select %329, %325, %331 : vector<8x640xi1>, vector<8x640xf32>
    %333 = vector.broadcast %0 : vector<1x640xf32> to vector<8x640xf32>
    %334 = arith.mulf %332, %333 : vector<8x640xf32>
    %c40_339 = arith.constant 40 : index
    %c0_340 = arith.constant 0 : index
    %335 = vector.load %arg8[%c40_339, %c0_340] : memref<56x640xf32, #tpu.memory_space<vmem>>, vector<8x640xf32>
    tpu.vector_store %arg8[%c40_339, %c0_340], %334 {strides = array<i32>} : memref<56x640xf32, #tpu.memory_space<vmem>>, vector<8x640xf32>,
    %c88 = arith.constant 88 : index
    %c0_341 = arith.constant 0 : index
    %336 = vector.load %arg2[%c88, %c0_341] : memref<112x384xf32, #tpu.memory_space<vmem>>, vector<8x200xf32>
    %c88_342 = arith.constant 88 : index
    %c0_343 = arith.constant 0 : index
    %337 = vector.load %arg3[%c88_342, %c0_343] : memref<112x1xf32, #tpu.memory_space<vmem>>, vector<8x1xf32>
    %c54_i32 = arith.constant 54 : i32
    %338 = tpu.dynamic_rotate %33 by %c54_i32 dim 1 : vector<8x640xf32>, i32 -> vector<8x640xf32>
    %c0_344 = arith.constant 0 : index
    %c0_345 = arith.constant 0 : index
    %339 = vector.load %arg7[%c0_344, %c0_345] : memref<288x640xf32, #tpu.memory_space<vmem>>, vector<8x640xf32>
    tpu.vector_store %arg7[%c0_344, %c0_345], %338 {strides = array<i32>} : memref<288x640xf32, #tpu.memory_space<vmem>>, vector<8x640xf32>,
    %c53_i32 = arith.constant 53 : i32
    %340 = tpu.dynamic_rotate %33 by %c53_i32 dim 1 : vector<8x640xf32>, i32 -> vector<8x640xf32>
    %c8_346 = arith.constant 8 : index
    %c0_347 = arith.constant 0 : index
    %341 = vector.load %arg7[%c8_346, %c0_347] : memref<288x640xf32, #tpu.memory_space<vmem>>, vector<8x640xf32>
    tpu.vector_store %arg7[%c8_346, %c0_347], %340 {strides = array<i32>} : memref<288x640xf32, #tpu.memory_space<vmem>>, vector<8x640xf32>,
    %c52_i32 = arith.constant 52 : i32
    %342 = tpu.dynamic_rotate %33 by %c52_i32 dim 1 : vector<8x640xf32>, i32 -> vector<8x640xf32>
    %c16_348 = arith.constant 16 : index
    %c0_349 = arith.constant 0 : index
    %343 = vector.load %arg7[%c16_348, %c0_349] : memref<288x640xf32, #tpu.memory_space<vmem>>, vector<8x640xf32>
    tpu.vector_store %arg7[%c16_348, %c0_349], %342 {strides = array<i32>} : memref<288x640xf32, #tpu.memory_space<vmem>>, vector<8x640xf32>,
    %c51_i32 = arith.constant 51 : i32
    %344 = tpu.dynamic_rotate %33 by %c51_i32 dim 1 : vector<8x640xf32>, i32 -> vector<8x640xf32>
    %c24_350 = arith.constant 24 : index
    %c0_351 = arith.constant 0 : index
    %345 = vector.load %arg7[%c24_350, %c0_351] : memref<288x640xf32, #tpu.memory_space<vmem>>, vector<8x640xf32>
    tpu.vector_store %arg7[%c24_350, %c0_351], %344 {strides = array<i32>} : memref<288x640xf32, #tpu.memory_space<vmem>>, vector<8x640xf32>,
    %c50_i32 = arith.constant 50 : i32
    %346 = tpu.dynamic_rotate %33 by %c50_i32 dim 1 : vector<8x640xf32>, i32 -> vector<8x640xf32>
    %c32_352 = arith.constant 32 : index
    %c0_353 = arith.constant 0 : index
    %347 = vector.load %arg7[%c32_352, %c0_353] : memref<288x640xf32, #tpu.memory_space<vmem>>, vector<8x640xf32>
    tpu.vector_store %arg7[%c32_352, %c0_353], %346 {strides = array<i32>} : memref<288x640xf32, #tpu.memory_space<vmem>>, vector<8x640xf32>,
    %c28_i32 = arith.constant 28 : i32
    %348 = tpu.dynamic_rotate %33 by %c28_i32 dim 1 : vector<8x640xf32>, i32 -> vector<8x640xf32>
    %c40_354 = arith.constant 40 : index
    %c0_355 = arith.constant 0 : index
    %349 = vector.load %arg7[%c40_354, %c0_355] : memref<288x640xf32, #tpu.memory_space<vmem>>, vector<8x640xf32>
    tpu.vector_store %arg7[%c40_354, %c0_355], %348 {strides = array<i32>} : memref<288x640xf32, #tpu.memory_space<vmem>>, vector<8x640xf32>,
    %c27_i32_356 = arith.constant 27 : i32
    %350 = tpu.dynamic_rotate %33 by %c27_i32_356 dim 1 : vector<8x640xf32>, i32 -> vector<8x640xf32>
    %c48_357 = arith.constant 48 : index
    %c0_358 = arith.constant 0 : index
    %351 = vector.load %arg7[%c48_357, %c0_358] : memref<288x640xf32, #tpu.memory_space<vmem>>, vector<8x640xf32>
    tpu.vector_store %arg7[%c48_357, %c0_358], %350 {strides = array<i32>} : memref<288x640xf32, #tpu.memory_space<vmem>>, vector<8x640xf32>,
    %c26_i32_359 = arith.constant 26 : i32
    %352 = tpu.dynamic_rotate %33 by %c26_i32_359 dim 1 : vector<8x640xf32>, i32 -> vector<8x640xf32>
    %c56_360 = arith.constant 56 : index
    %c0_361 = arith.constant 0 : index
    %353 = vector.load %arg7[%c56_360, %c0_361] : memref<288x640xf32, #tpu.memory_space<vmem>>, vector<8x640xf32>
    tpu.vector_store %arg7[%c56_360, %c0_361], %352 {strides = array<i32>} : memref<288x640xf32, #tpu.memory_space<vmem>>, vector<8x640xf32>,
    %c25_i32_362 = arith.constant 25 : i32
    %354 = tpu.dynamic_rotate %33 by %c25_i32_362 dim 1 : vector<8x640xf32>, i32 -> vector<8x640xf32>
    %c64_363 = arith.constant 64 : index
    %c0_364 = arith.constant 0 : index
    %355 = vector.load %arg7[%c64_363, %c0_364] : memref<288x640xf32, #tpu.memory_space<vmem>>, vector<8x640xf32>
    tpu.vector_store %arg7[%c64_363, %c0_364], %354 {strides = array<i32>} : memref<288x640xf32, #tpu.memory_space<vmem>>, vector<8x640xf32>,
    %c24_i32 = arith.constant 24 : i32
    %356 = tpu.dynamic_rotate %33 by %c24_i32 dim 1 : vector<8x640xf32>, i32 -> vector<8x640xf32>
    %c72_365 = arith.constant 72 : index
    %c0_366 = arith.constant 0 : index
    %357 = vector.load %arg7[%c72_365, %c0_366] : memref<288x640xf32, #tpu.memory_space<vmem>>, vector<8x640xf32>
    tpu.vector_store %arg7[%c72_365, %c0_366], %356 {strides = array<i32>} : memref<288x640xf32, #tpu.memory_space<vmem>>, vector<8x640xf32>,
    %c2_i32 = arith.constant 2 : i32
    %358 = tpu.dynamic_rotate %33 by %c2_i32 dim 1 : vector<8x640xf32>, i32 -> vector<8x640xf32>
    %c80_367 = arith.constant 80 : index
    %c0_368 = arith.constant 0 : index
    %359 = vector.load %arg7[%c80_367, %c0_368] : memref<288x640xf32, #tpu.memory_space<vmem>>, vector<8x640xf32>
    tpu.vector_store %arg7[%c80_367, %c0_368], %358 {strides = array<i32>} : memref<288x640xf32, #tpu.memory_space<vmem>>, vector<8x640xf32>,
    %c1_i32_369 = arith.constant 1 : i32
    %360 = tpu.dynamic_rotate %33 by %c1_i32_369 dim 1 : vector<8x640xf32>, i32 -> vector<8x640xf32>
    %c88_370 = arith.constant 88 : index
    %c0_371 = arith.constant 0 : index
    %361 = vector.load %arg7[%c88_370, %c0_371] : memref<288x640xf32, #tpu.memory_space<vmem>>, vector<8x640xf32>
    tpu.vector_store %arg7[%c88_370, %c0_371], %360 {strides = array<i32>} : memref<288x640xf32, #tpu.memory_space<vmem>>, vector<8x640xf32>,
    %c96_372 = arith.constant 96 : index
    %c0_373 = arith.constant 0 : index
    %362 = vector.load %arg7[%c96_372, %c0_373] : memref<288x640xf32, #tpu.memory_space<vmem>>, vector<8x640xf32>
    tpu.vector_store %arg7[%c96_372, %c0_373], %33 {strides = array<i32>} : memref<288x640xf32, #tpu.memory_space<vmem>>, vector<8x640xf32>,
    %c639_i32_374 = arith.constant 639 : i32
    %363 = tpu.dynamic_rotate %33 by %c639_i32_374 dim 1 : vector<8x640xf32>, i32 -> vector<8x640xf32>
    %c104 = arith.constant 104 : index
    %c0_375 = arith.constant 0 : index
    %364 = vector.load %arg7[%c104, %c0_375] : memref<288x640xf32, #tpu.memory_space<vmem>>, vector<8x640xf32>
    tpu.vector_store %arg7[%c104, %c0_375], %363 {strides = array<i32>} : memref<288x640xf32, #tpu.memory_space<vmem>>, vector<8x640xf32>,
    %c638_i32 = arith.constant 638 : i32
    %365 = tpu.dynamic_rotate %33 by %c638_i32 dim 1 : vector<8x640xf32>, i32 -> vector<8x640xf32>
    %c112_376 = arith.constant 112 : index
    %c0_377 = arith.constant 0 : index
    %366 = vector.load %arg7[%c112_376, %c0_377] : memref<288x640xf32, #tpu.memory_space<vmem>>, vector<8x640xf32>
    tpu.vector_store %arg7[%c112_376, %c0_377], %365 {strides = array<i32>} : memref<288x640xf32, #tpu.memory_space<vmem>>, vector<8x640xf32>,
    %c616_i32 = arith.constant 616 : i32
    %367 = tpu.dynamic_rotate %33 by %c616_i32 dim 1 : vector<8x640xf32>, i32 -> vector<8x640xf32>
    %c120_378 = arith.constant 120 : index
    %c0_379 = arith.constant 0 : index
    %368 = vector.load %arg7[%c120_378, %c0_379] : memref<288x640xf32, #tpu.memory_space<vmem>>, vector<8x640xf32>
    tpu.vector_store %arg7[%c120_378, %c0_379], %367 {strides = array<i32>} : memref<288x640xf32, #tpu.memory_space<vmem>>, vector<8x640xf32>,
    %c615_i32_380 = arith.constant 615 : i32
    %369 = tpu.dynamic_rotate %33 by %c615_i32_380 dim 1 : vector<8x640xf32>, i32 -> vector<8x640xf32>
    %c128_381 = arith.constant 128 : index
    %c0_382 = arith.constant 0 : index
    %370 = vector.load %arg7[%c128_381, %c0_382] : memref<288x640xf32, #tpu.memory_space<vmem>>, vector<8x640xf32>
    tpu.vector_store %arg7[%c128_381, %c0_382], %369 {strides = array<i32>} : memref<288x640xf32, #tpu.memory_space<vmem>>, vector<8x640xf32>,
    %c614_i32_383 = arith.constant 614 : i32
    %371 = tpu.dynamic_rotate %33 by %c614_i32_383 dim 1 : vector<8x640xf32>, i32 -> vector<8x640xf32>
    %c136 = arith.constant 136 : index
    %c0_384 = arith.constant 0 : index
    %372 = vector.load %arg7[%c136, %c0_384] : memref<288x640xf32, #tpu.memory_space<vmem>>, vector<8x640xf32>
    tpu.vector_store %arg7[%c136, %c0_384], %371 {strides = array<i32>} : memref<288x640xf32, #tpu.memory_space<vmem>>, vector<8x640xf32>,
    %c613_i32_385 = arith.constant 613 : i32
    %373 = tpu.dynamic_rotate %33 by %c613_i32_385 dim 1 : vector<8x640xf32>, i32 -> vector<8x640xf32>
    %c144_386 = arith.constant 144 : index
    %c0_387 = arith.constant 0 : index
    %374 = vector.load %arg7[%c144_386, %c0_387] : memref<288x640xf32, #tpu.memory_space<vmem>>, vector<8x640xf32>
    tpu.vector_store %arg7[%c144_386, %c0_387], %373 {strides = array<i32>} : memref<288x640xf32, #tpu.memory_space<vmem>>, vector<8x640xf32>,
    %c612_i32 = arith.constant 612 : i32
    %375 = tpu.dynamic_rotate %33 by %c612_i32 dim 1 : vector<8x640xf32>, i32 -> vector<8x640xf32>
    %c152 = arith.constant 152 : index
    %c0_388 = arith.constant 0 : index
    %376 = vector.load %arg7[%c152, %c0_388] : memref<288x640xf32, #tpu.memory_space<vmem>>, vector<8x640xf32>
    tpu.vector_store %arg7[%c152, %c0_388], %375 {strides = array<i32>} : memref<288x640xf32, #tpu.memory_space<vmem>>, vector<8x640xf32>,
    %c590_i32 = arith.constant 590 : i32
    %377 = tpu.dynamic_rotate %33 by %c590_i32 dim 1 : vector<8x640xf32>, i32 -> vector<8x640xf32>
    %c160_389 = arith.constant 160 : index
    %c0_390 = arith.constant 0 : index
    %378 = vector.load %arg7[%c160_389, %c0_390] : memref<288x640xf32, #tpu.memory_space<vmem>>, vector<8x640xf32>
    tpu.vector_store %arg7[%c160_389, %c0_390], %377 {strides = array<i32>} : memref<288x640xf32, #tpu.memory_space<vmem>>, vector<8x640xf32>,
    %c589_i32 = arith.constant 589 : i32
    %379 = tpu.dynamic_rotate %33 by %c589_i32 dim 1 : vector<8x640xf32>, i32 -> vector<8x640xf32>
    %c168_391 = arith.constant 168 : index
    %c0_392 = arith.constant 0 : index
    %380 = vector.load %arg7[%c168_391, %c0_392] : memref<288x640xf32, #tpu.memory_space<vmem>>, vector<8x640xf32>
    tpu.vector_store %arg7[%c168_391, %c0_392], %379 {strides = array<i32>} : memref<288x640xf32, #tpu.memory_space<vmem>>, vector<8x640xf32>,
    %c588_i32 = arith.constant 588 : i32
    %381 = tpu.dynamic_rotate %33 by %c588_i32 dim 1 : vector<8x640xf32>, i32 -> vector<8x640xf32>
    %c176 = arith.constant 176 : index
    %c0_393 = arith.constant 0 : index
    %382 = vector.load %arg7[%c176, %c0_393] : memref<288x640xf32, #tpu.memory_space<vmem>>, vector<8x640xf32>
    tpu.vector_store %arg7[%c176, %c0_393], %381 {strides = array<i32>} : memref<288x640xf32, #tpu.memory_space<vmem>>, vector<8x640xf32>,
    %c587_i32 = arith.constant 587 : i32
    %383 = tpu.dynamic_rotate %33 by %c587_i32 dim 1 : vector<8x640xf32>, i32 -> vector<8x640xf32>
    %c184 = arith.constant 184 : index
    %c0_394 = arith.constant 0 : index
    %384 = vector.load %arg7[%c184, %c0_394] : memref<288x640xf32, #tpu.memory_space<vmem>>, vector<8x640xf32>
    tpu.vector_store %arg7[%c184, %c0_394], %383 {strides = array<i32>} : memref<288x640xf32, #tpu.memory_space<vmem>>, vector<8x640xf32>,
    %c586_i32 = arith.constant 586 : i32
    %385 = tpu.dynamic_rotate %33 by %c586_i32 dim 1 : vector<8x640xf32>, i32 -> vector<8x640xf32>
    %c192_395 = arith.constant 192 : index
    %c0_396 = arith.constant 0 : index
    %386 = vector.load %arg7[%c192_395, %c0_396] : memref<288x640xf32, #tpu.memory_space<vmem>>, vector<8x640xf32>
    tpu.vector_store %arg7[%c192_395, %c0_396], %385 {strides = array<i32>} : memref<288x640xf32, #tpu.memory_space<vmem>>, vector<8x640xf32>,
    %c0_397 = arith.constant 0 : index
    %c0_398 = arith.constant 0 : index
    %387 = vector.load %arg7[%c0_397, %c0_398] : memref<288x640xf32, #tpu.memory_space<vmem>>, vector<200x640xf32>
    %cst_399 = arith.constant dense<0.000000e+00> : vector<8x640xf32>
    %388 = tpu.matmul %336, %387, %cst_399 {dimension_numbers = #tpu.dot_dimension_numbers<[1], [0], [0], [1], [0, 0, 1, 1], [], []>} : vector<8x200xf32>, vector<200x640xf32>, vector<8x640xf32> -> vector<8x640xf32>
    %389 = vector.broadcast %337 : vector<8x1xf32> to vector<8x640xf32>
    %390 = arith.addf %388, %389 : vector<8x640xf32>
    %cst_400 = arith.constant 0.000000e+00 : f32
    %391 = vector.broadcast %cst_400 : f32 to vector<8x640xf32>
    %392 = arith.cmpf oge, %390, %391 : vector<8x640xf32>
    %cst_401 = arith.constant 2.000000e-01 : f32
    %393 = vector.broadcast %cst_401 : f32 to vector<8x640xf32>
    %394 = arith.mulf %393, %390 : vector<8x640xf32>
    %395 = arith.select %392, %390, %394 : vector<8x640xi1>, vector<8x640xf32>
    %396 = vector.broadcast %0 : vector<1x640xf32> to vector<8x640xf32>
    %397 = arith.mulf %395, %396 : vector<8x640xf32>
    %c96_402 = arith.constant 96 : index
    %c0_403 = arith.constant 0 : index
    %398 = vector.load %arg2[%c96_402, %c0_403] : memref<112x384xf32, #tpu.memory_space<vmem>>, vector<8x72xf32>
    %c96_404 = arith.constant 96 : index
    %c0_405 = arith.constant 0 : index
    %399 = vector.load %arg3[%c96_404, %c0_405] : memref<112x1xf32, #tpu.memory_space<vmem>>, vector<8x1xf32>
    %c135_i32 = arith.constant 135 : i32
    %400 = tpu.dynamic_rotate %397 by %c135_i32 dim 1 : vector<8x640xf32>, i32 -> vector<8x640xf32>
    %c0_406 = arith.constant 0 : index
    %c0_407 = arith.constant 0 : index
    %401 = vector.load %arg7[%c0_406, %c0_407] : memref<288x640xf32, #tpu.memory_space<vmem>>, vector<8x640xf32>
    tpu.vector_store %arg7[%c0_406, %c0_407], %400 {strides = array<i32>} : memref<288x640xf32, #tpu.memory_space<vmem>>, vector<8x640xf32>,
    %c130_i32 = arith.constant 130 : i32
    %402 = tpu.dynamic_rotate %397 by %c130_i32 dim 1 : vector<8x640xf32>, i32 -> vector<8x640xf32>
    %c8_408 = arith.constant 8 : index
    %c0_409 = arith.constant 0 : index
    %403 = vector.load %arg7[%c8_408, %c0_409] : memref<288x640xf32, #tpu.memory_space<vmem>>, vector<8x640xf32>
    tpu.vector_store %arg7[%c8_408, %c0_409], %402 {strides = array<i32>} : memref<288x640xf32, #tpu.memory_space<vmem>>, vector<8x640xf32>,
    %c125_i32 = arith.constant 125 : i32
    %404 = tpu.dynamic_rotate %397 by %c125_i32 dim 1 : vector<8x640xf32>, i32 -> vector<8x640xf32>
    %c16_410 = arith.constant 16 : index
    %c0_411 = arith.constant 0 : index
    %405 = vector.load %arg7[%c16_410, %c0_411] : memref<288x640xf32, #tpu.memory_space<vmem>>, vector<8x640xf32>
    tpu.vector_store %arg7[%c16_410, %c0_411], %404 {strides = array<i32>} : memref<288x640xf32, #tpu.memory_space<vmem>>, vector<8x640xf32>,
    %c5_i32 = arith.constant 5 : i32
    %406 = tpu.dynamic_rotate %397 by %c5_i32 dim 1 : vector<8x640xf32>, i32 -> vector<8x640xf32>
    %c24_412 = arith.constant 24 : index
    %c0_413 = arith.constant 0 : index
    %407 = vector.load %arg7[%c24_412, %c0_413] : memref<288x640xf32, #tpu.memory_space<vmem>>, vector<8x640xf32>
    tpu.vector_store %arg7[%c24_412, %c0_413], %406 {strides = array<i32>} : memref<288x640xf32, #tpu.memory_space<vmem>>, vector<8x640xf32>,
    %c32_414 = arith.constant 32 : index
    %c0_415 = arith.constant 0 : index
    %408 = vector.load %arg7[%c32_414, %c0_415] : memref<288x640xf32, #tpu.memory_space<vmem>>, vector<8x640xf32>
    tpu.vector_store %arg7[%c32_414, %c0_415], %397 {strides = array<i32>} : memref<288x640xf32, #tpu.memory_space<vmem>>, vector<8x640xf32>,
    %c635_i32 = arith.constant 635 : i32
    %409 = tpu.dynamic_rotate %397 by %c635_i32 dim 1 : vector<8x640xf32>, i32 -> vector<8x640xf32>
    %c40_416 = arith.constant 40 : index
    %c0_417 = arith.constant 0 : index
    %410 = vector.load %arg7[%c40_416, %c0_417] : memref<288x640xf32, #tpu.memory_space<vmem>>, vector<8x640xf32>
    tpu.vector_store %arg7[%c40_416, %c0_417], %409 {strides = array<i32>} : memref<288x640xf32, #tpu.memory_space<vmem>>, vector<8x640xf32>,
    %c515_i32 = arith.constant 515 : i32
    %411 = tpu.dynamic_rotate %397 by %c515_i32 dim 1 : vector<8x640xf32>, i32 -> vector<8x640xf32>
    %c48_418 = arith.constant 48 : index
    %c0_419 = arith.constant 0 : index
    %412 = vector.load %arg7[%c48_418, %c0_419] : memref<288x640xf32, #tpu.memory_space<vmem>>, vector<8x640xf32>
    tpu.vector_store %arg7[%c48_418, %c0_419], %411 {strides = array<i32>} : memref<288x640xf32, #tpu.memory_space<vmem>>, vector<8x640xf32>,
    %c510_i32 = arith.constant 510 : i32
    %413 = tpu.dynamic_rotate %397 by %c510_i32 dim 1 : vector<8x640xf32>, i32 -> vector<8x640xf32>
    %c56_420 = arith.constant 56 : index
    %c0_421 = arith.constant 0 : index
    %414 = vector.load %arg7[%c56_420, %c0_421] : memref<288x640xf32, #tpu.memory_space<vmem>>, vector<8x640xf32>
    tpu.vector_store %arg7[%c56_420, %c0_421], %413 {strides = array<i32>} : memref<288x640xf32, #tpu.memory_space<vmem>>, vector<8x640xf32>,
    %c505_i32 = arith.constant 505 : i32
    %415 = tpu.dynamic_rotate %397 by %c505_i32 dim 1 : vector<8x640xf32>, i32 -> vector<8x640xf32>
    %c64_422 = arith.constant 64 : index
    %c0_423 = arith.constant 0 : index
    %416 = vector.load %arg7[%c64_422, %c0_423] : memref<288x640xf32, #tpu.memory_space<vmem>>, vector<8x640xf32>
    tpu.vector_store %arg7[%c64_422, %c0_423], %415 {strides = array<i32>} : memref<288x640xf32, #tpu.memory_space<vmem>>, vector<8x640xf32>,
    %c0_424 = arith.constant 0 : index
    %c0_425 = arith.constant 0 : index
    %417 = vector.load %arg7[%c0_424, %c0_425] : memref<288x640xf32, #tpu.memory_space<vmem>>, vector<72x640xf32>
    %cst_426 = arith.constant dense<0.000000e+00> : vector<8x640xf32>
    %418 = tpu.matmul %398, %417, %cst_426 {dimension_numbers = #tpu.dot_dimension_numbers<[1], [0], [0], [1], [0, 0, 1, 1], [], []>} : vector<8x72xf32>, vector<72x640xf32>, vector<8x640xf32> -> vector<8x640xf32>
    %419 = vector.broadcast %399 : vector<8x1xf32> to vector<8x640xf32>
    %420 = arith.addf %418, %419 : vector<8x640xf32>
    %421 = vector.extract_strided_slice %1 {offsets = [5, 0], sizes = [1, 1], strides = [1, 1]} : vector<8x1xf32> to vector<1x1xf32>
    %422 = vector.extract %421[0, 0] : f32 from vector<1x1xf32>
    %cst_427 = arith.constant 0.000000e+00 : f32
    %423 = vector.broadcast %cst_427 : f32 to vector<8x640xf32>
    %424 = arith.cmpf oge, %420, %423 : vector<8x640xf32>
    %425 = vector.broadcast %422 : f32 to vector<8x640xf32>
    %426 = arith.mulf %425, %420 : vector<8x640xf32>
    %427 = arith.select %424, %420, %426 : vector<8x640xi1>, vector<8x640xf32>
    %428 = vector.broadcast %0 : vector<1x640xf32> to vector<8x640xf32>
    %429 = arith.mulf %427, %428 : vector<8x640xf32>
    %c48_428 = arith.constant 48 : index
    %c0_429 = arith.constant 0 : index
    %430 = vector.load %arg8[%c48_428, %c0_429] : memref<56x640xf32, #tpu.memory_space<vmem>>, vector<8x640xf32>
    tpu.vector_store %arg8[%c48_428, %c0_429], %429 {strides = array<i32>} : memref<56x640xf32, #tpu.memory_space<vmem>>, vector<8x640xf32>,
    %c0_430 = arith.constant 0 : index
    %c0_431 = arith.constant 0 : index
    %431 = vector.load %arg8[%c0_430, %c0_431] : memref<56x640xf32, #tpu.memory_space<vmem>>, vector<56x640xf32>
    %c104_432 = arith.constant 104 : index
    %c0_433 = arith.constant 0 : index
    %432 = vector.load %arg2[%c104_432, %c0_433] : memref<112x384xf32, #tpu.memory_space<vmem>>, vector<8x56xf32>
    %c104_434 = arith.constant 104 : index
    %c0_435 = arith.constant 0 : index
    %433 = vector.load %arg3[%c104_434, %c0_435] : memref<112x1xf32, #tpu.memory_space<vmem>>, vector<8x1xf32>
    %cst_436 = arith.constant dense<0.000000e+00> : vector<8x640xf32>
    %434 = tpu.matmul %432, %431, %cst_436 {dimension_numbers = #tpu.dot_dimension_numbers<[1], [0], [0], [1], [0, 0, 1, 1], [], []>} : vector<8x56xf32>, vector<56x640xf32>, vector<8x640xf32> -> vector<8x640xf32>
    %435 = vector.broadcast %433 : vector<8x1xf32> to vector<8x640xf32>
    %436 = arith.addf %434, %435 : vector<8x640xf32>
    %cst_437 = arith.constant 0.000000e+00 : f32
    %437 = vector.broadcast %cst_437 : f32 to vector<8x640xf32>
    %438 = arith.cmpf oge, %436, %437 : vector<8x640xf32>
    %cst_438 = arith.constant 2.000000e-01 : f32
    %439 = vector.broadcast %cst_438 : f32 to vector<8x640xf32>
    %440 = arith.mulf %439, %436 : vector<8x640xf32>
    %441 = arith.select %438, %436, %440 : vector<8x640xi1>, vector<8x640xf32>
    %442 = arith.addf %441, %3 : vector<8x640xf32>
    %c0_439 = arith.constant 0 : index
    %c0_440 = arith.constant 0 : index
    %c0_441 = arith.constant 0 : index
    %443 = vector.load %arg6[%c0_439, %c0_440, %c0_441] : memref<1x8x640xf32, #tpu.memory_space<vmem>>, vector<1x8x640xf32>
    %444 = vector.shape_cast %443 : vector<1x8x640xf32> to vector<8x640xf32>
    %445 = vector.shape_cast %442 : vector<8x640xf32> to vector<1x8x640xf32>
    tpu.vector_store %arg6[%c0_439, %c0_440, %c0_441], %445 {strides = array<i32>} : memref<1x8x640xf32, #tpu.memory_space<vmem>>, vector<1x8x640xf32>,
    return
  }
  func.func @transform_0(%arg0: i32) -> (i32, i32, i32) {
    %c0_i32 = arith.constant 0 : i32
    %c0_i32_0 = arith.constant 0 : i32
    %c0_i32_1 = arith.constant 0 : i32
    return %arg0, %c0_i32, %c0_i32_0 : i32, i32, i32
  }
  func.func @transform_1(%arg0: i32) -> (i32, i32) {
    %c0_i32 = arith.constant 0 : i32
    %c0_i32_0 = arith.constant 0 : i32
    %c0_i32_1 = arith.constant 0 : i32
    return %c0_i32, %c0_i32_0 : i32, i32
  }
  func.func @transform_2(%arg0: i32) -> (i32, i32) {
    %c0_i32 = arith.constant 0 : i32
    %c0_i32_0 = arith.constant 0 : i32
    %c0_i32_1 = arith.constant 0 : i32
    return %c0_i32, %c0_i32_0 : i32, i32
  }
  func.func @transform_3(%arg0: i32) -> (i32, i32) {
    %c0_i32 = arith.constant 0 : i32
    %c0_i32_0 = arith.constant 0 : i32
    %c0_i32_1 = arith.constant 0 : i32
    return %c0_i32, %c0_i32_0 : i32, i32
  }
  func.func @transform_4(%arg0: i32) -> (i32, i32) {
    %c0_i32 = arith.constant 0 : i32
    %c0_i32_0 = arith.constant 0 : i32
    %c0_i32_1 = arith.constant 0 : i32
    return %c0_i32, %c0_i32_0 : i32, i32
  }
  func.func @transform_5(%arg0: i32) -> (i32, i32, i32) {
    %c0_i32 = arith.constant 0 : i32
    %c0_i32_0 = arith.constant 0 : i32
    %c0_i32_1 = arith.constant 0 : i32
    return %arg0, %c0_i32, %c0_i32_0 : i32, i32, i32
  }
}

</mosaic_0001>

<llo_original>
// kernel: tpu_custom_call.1
$region0: #{tpu_custom_call.1}
  #allocation0 [shape = 'u32[]', space=smem, size = 0x4, offset = 0x4, fixed_abs, tag = 'smem constant byte address 0x4 - core index']
  #allocation1 [shape = 'u32[72,128]{1,0:T(1,128)}', space=vmem, size = 0x9000, scoped, tag = 'internal scratch']
  #allocation2 [shape = 'f32[288,640]{1,0:T(8,128)}', space=vmem, size = 0xb4000, scoped, tag = 'scratch operand']
  #allocation3 [shape = 'f32[56,640]{1,0:T(8,128)}', space=vmem, size = 0x23000, scoped, tag = 'scratch operand']
  %s0 = inlined_call_operand.vmem [shape: f32[2,8,640], index: 0, kind: input, shape index: {}]
  %s1 = inlined_call_operand.hbm [shape: f32[112,384], index: 1, kind: input, shape index: {}]
  %s2 = inlined_call_operand.vmem [shape: f32[112,1], index: 2, kind: input, shape index: {}]
  %s3 = inlined_call_operand.vmem [shape: f32[8,1], index: 3, kind: input, shape index: {}]
  %s4 = inlined_call_operand.vmem [shape: f32[1,640], index: 4, kind: input, shape index: {}]
  %s5 = inlined_call_operand.hbm [shape: f32[2,8,640], index: 5, kind: output, shape index: {}]
  %s6 = sld [smem:[#allocation0]]
  $region57: #{tpu_custom_call.1} parent=0
    _
  %s8 = ssub.s32 1, %s6
  %s9 = scalar_select 0, %s8, %s6
  $region1: #{tpu_custom_call.1} parent=0
    #allocation4 [shape = 'u8[172032]{0}', space=vmem, size = 0x2a000, scoped, tag = 'input window, operand 1, single buffered']
    #allocation5 [shape = 's32[2]{0}', space=sflag, size = 0x8, scoped, tag = 'scoped memory for tpu_custom_call.1']
    #allocation6 [shape = 's32[2]{0}', space=sflag, size = 0x8, scoped, tag = 'scoped memory for tpu_custom_call.1']
    #allocation7 [shape = 'u8[40960]{0}', space=vmem, size = 0xa000, scoped, tag = 'output window, operand 0']
    %10 = vsyncpa [#allocation5], 0
    %11 = vsyncpa [#allocation6], 0
    %s12 = scalar_lea.sflag [#allocation6], 1
    %13 = vsyncpa %s12, 0
    loop: start=0, step=1, limit=4
    $region2: #{tpu_custom_call.1} parent=1 // loop_pre_header
      _
    $region3: #{tpu_custom_call.1} parent=1 // loop_header
      %s15 = sphi 0, %s19
      %p16 = scmp.ge.s32.totalorder %s15, 4
      %s25 = sphi 0, %s27
      %s28 = sphi 0, %s25
      %s29 = sphi 0, %s28
      %s45 = sphi 0, %s29
      %s49 = sphi 0, %s49
      %s51 = sphi 0, %s49
      %s52 = sphi 0, %s51
      %s66 = sphi 0, %s52
      %s70 = sphi 0, %s70
      %s72 = sphi 0, %s70
      %s73 = sphi 0, %s72
      %s87 = sphi 0, %s73
      %s91 = sphi 0, %s91
      %s93 = sphi 0, %s91
      %s94 = sphi 0, %s93
      %s108 = sphi 0, %s94
      %s112 = sphi 0, %s112
      %s114 = sphi 0, %s112
      %s115 = sphi 0, %s114
      %s129 = sphi 0, %s115
      %s135 = sphi 0, %s137
      %s138 = sphi 0, %s135
      %s139 = sphi 0, %s138
      %s155 = sphi 0, %s139
    $region4: #{tpu_custom_call.1} parent=1 // loop_header_branch
      %18 = sbr.rel (%p16) target = $region8
    $region5: #{tpu_custom_call.1} parent=1 // loop_body
      %s20 = ssub.s32 %s15, 1
      %s21 = ssub.s32 %s15, 2
      %s22 = sadd.s32 %s15, 1
      %s23 = ssub.s32 %s15, %s22
      %p24 = scmp.eq.s32.totalorder %s23, 0
      %s26 = sadd.s32 %s25, 1
      %s27 = scalar_select %p24, %s25, %s26
      %p30 = pneg %p24
      %p31 = scmp.eq.s32.totalorder %s15, 1
      %p32 = por %p30, %p31
      %p33 = scmp.ne.s32.totalorder %s25, %s28
      %p34 = scmp.eq.s32.totalorder %s15, 0
      %p35 = por %p33, %p34
      %p36 = scmp.ne.s32.totalorder %s25, %s28
      %p37 = scmp.eq.s32.totalorder %s20, 1
      %p38 = por %p36, %p37
      %p39 = scmp.ne.s32.totalorder %s28, %s29
      %p40 = scmp.eq.s32.totalorder %s20, 0
      %p41 = por %p39, %p40
      %p42 = scmp.ne.s32.totalorder %s28, %s29
      %p43 = scmp.eq.s32.totalorder %s21, 1
      %p44 = por %p42, %p43
      %p46 = scmp.ne.s32.totalorder %s29, %s45
      %p47 = scmp.eq.s32.totalorder %s21, 0
      %p48 = por %p46, %p47
      %s50 = sadd.s32 %s49, 1
      %p53 = scmp.eq.s32.totalorder %s15, 1
      %p54 = scmp.ne.s32.totalorder %s49, %s51
      %p55 = scmp.eq.s32.totalorder %s15, 0
      %p56 = por %p54, %p55
      %p57 = scmp.ne.s32.totalorder %s49, %s51
      %p58 = scmp.eq.s32.totalorder %s20, 1
      %p59 = por %p57, %p58
      %p60 = scmp.ne.s32.totalorder %s51, %s52
      %p61 = scmp.eq.s32.totalorder %s20, 0
      %p62 = por %p60, %p61
      %p63 = scmp.ne.s32.totalorder %s51, %s52
      %p64 = scmp.eq.s32.totalorder %s21, 1
      %p65 = por %p63, %p64
      %p67 = scmp.ne.s32.totalorder %s52, %s66
      %p68 = scmp.eq.s32.totalorder %s21, 0
      %p69 = por %p67, %p68
      %s71 = sadd.s32 %s70, 1
      %p74 = scmp.eq.s32.totalorder %s15, 1
      %p75 = scmp.ne.s32.totalorder %s70, %s72
      %p76 = scmp.eq.s32.totalorder %s15, 0
      %p77 = por %p75, %p76
      %p78 = scmp.ne.s32.totalorder %s70, %s72
      %p79 = scmp.eq.s32.totalorder %s20, 1
      %p80 = por %p78, %p79
      %p81 = scmp.ne.s32.totalorder %s72, %s73
      %p82 = scmp.eq.s32.totalorder %s20, 0
      %p83 = por %p81, %p82
      %p84 = scmp.ne.s32.totalorder %s72, %s73
      %p85 = scmp.eq.s32.totalorder %s21, 1
      %p86 = por %p84, %p85
      %p88 = scmp.ne.s32.totalorder %s73, %s87
      %p89 = scmp.eq.s32.totalorder %s21, 0
      %p90 = por %p88, %p89
      %s92 = sadd.s32 %s91, 1
      %p95 = scmp.eq.s32.totalorder %s15, 1
      %p96 = scmp.ne.s32.totalorder %s91, %s93
      %p97 = scmp.eq.s32.totalorder %s15, 0
      %p98 = por %p96, %p97
      %p99 = scmp.ne.s32.totalorder %s91, %s93
      %p100 = scmp.eq.s32.totalorder %s20, 1
      %p101 = por %p99, %p100
      %p102 = scmp.ne.s32.totalorder %s93, %s94
      %p103 = scmp.eq.s32.totalorder %s20, 0
      %p104 = por %p102, %p103
      %p105 = scmp.ne.s32.totalorder %s93, %s94
      %p106 = scmp.eq.s32.totalorder %s21, 1
      %p107 = por %p105, %p106
      %p109 = scmp.ne.s32.totalorder %s94, %s108
      %p110 = scmp.eq.s32.totalorder %s21, 0
      %p111 = por %p109, %p110
      %s113 = sadd.s32 %s112, 1
      %p116 = scmp.eq.s32.totalorder %s15, 1
      %p117 = scmp.ne.s32.totalorder %s112, %s114
      %p118 = scmp.eq.s32.totalorder %s15, 0
      %p119 = por %p117, %p118
      %p120 = scmp.ne.s32.totalorder %s112, %s114
      %p121 = scmp.eq.s32.totalorder %s20, 1
      %p122 = por %p120, %p121
      %p123 = scmp.ne.s32.totalorder %s114, %s115
      %p124 = scmp.eq.s32.totalorder %s20, 0
      %p125 = por %p123, %p124
      %p126 = scmp.ne.s32.totalorder %s114, %s115
      %p127 = scmp.eq.s32.totalorder %s21, 1
      %p128 = por %p126, %p127
      %p130 = scmp.ne.s32.totalorder %s115, %s129
      %p131 = scmp.eq.s32.totalorder %s21, 0
      %p132 = por %p130, %p131
      %s133 = ssub.s32 %s15, %s22
      %p134 = scmp.eq.s32.totalorder %s133, 0
      %s136 = sadd.s32 %s135, 1
      %s137 = scalar_select %p134, %s135, %s136
      %p140 = pneg %p134
      %p141 = scmp.eq.s32.totalorder %s15, 1
      %p142 = por %p140, %p141
      %p143 = scmp.ne.s32.totalorder %s135, %s138
      %p144 = scmp.eq.s32.totalorder %s15, 0
      %p145 = por %p143, %p144
      %p146 = scmp.ne.s32.totalorder %s135, %s138
      %p147 = scmp.eq.s32.totalorder %s20, 1
      %p148 = por %p146, %p147
      %p149 = scmp.ne.s32.totalorder %s138, %s139
      %p150 = scmp.eq.s32.totalorder %s20, 0
      %p151 = por %p149, %p150
      %p152 = scmp.ne.s32.totalorder %s138, %s139
      %p153 = scmp.eq.s32.totalorder %s21, 1
      %p154 = por %p152, %p153
      %p156 = scmp.ne.s32.totalorder %s139, %s155
      %p157 = scmp.eq.s32.totalorder %s21, 0
      %p158 = por %p156, %p157
      %p159 = scmp.le.s32.totalorder 1, %s15
      %p160 = scmp.lt.s32.totalorder %s15, 3
      %p161 = pnand %p159, %p160
      %p162 = pneg %p161
      // Predicated region
      $region9: #{tpu_custom_call.1} parent=5 // pred_check
        _
      $region10: #{tpu_custom_call.1} parent=5 // pred_check_branch
        %164 = sbr.rel (%p161) target = $region12
      $region11: #{tpu_custom_call.1} parent=5 // pred_region
        %s165 = ssub.s32 %s15, 1
        // Predicated region
        $region13: #{tpu_custom_call.1} parent=11 // pred_check
          %p166 = pneg %p62
        $region14: #{tpu_custom_call.1} parent=11 // pred_check_branch
          %168 = sbr.rel (%p166) target = $region16
        $region15: #{tpu_custom_call.1} parent=11 // pred_region
          %170 = vsyncadd [#allocation5], 0
          %s171 = sshll.u32 %s1, 4
          %s172 = int_to_ptr.hbm [resolvable:$true] %s171
          %s173 = sshll.u32 [#allocation4], 4
          %s174 = int_to_ptr.vmem [resolvable:$true] %s173
          %179 = dma.hbm_to_vmem [thread:$0]  %s172, 5376, %s174, [#allocation5], 384, 384, 24
        $region16: #{tpu_custom_call.1} parent=11 // pred_fallthru
          _
        // Predicated region
        $region17: #{tpu_custom_call.1} parent=11 // pred_check
          %p180 = pneg %p83
        $region18: #{tpu_custom_call.1} parent=11 // pred_check_branch
          %182 = sbr.rel (%p180) target = $region20
        $region19: #{tpu_custom_call.1} parent=11 // pred_region
          _
        $region20: #{tpu_custom_call.1} parent=11 // pred_fallthru
          _
        // Predicated region
        $region21: #{tpu_custom_call.1} parent=11 // pred_check
          %p183 = pneg %p104
        $region22: #{tpu_custom_call.1} parent=11 // pred_check_branch
          %185 = sbr.rel (%p183) target = $region24
        $region23: #{tpu_custom_call.1} parent=11 // pred_region
          _
        $region24: #{tpu_custom_call.1} parent=11 // pred_fallthru
          _
        // Predicated region
        $region25: #{tpu_custom_call.1} parent=11 // pred_check
          %p186 = pneg %p125
        $region26: #{tpu_custom_call.1} parent=11 // pred_check_branch
          %188 = sbr.rel (%p186) target = $region28
        $region27: #{tpu_custom_call.1} parent=11 // pred_region
          _
        $region28: #{tpu_custom_call.1} parent=11 // pred_fallthru
          _
      $region12: #{tpu_custom_call.1} parent=5 // pred_fallthru
        _
      %p189 = scmp.lt.s32.totalorder %s15, 2
      // Predicated region
      $region29: #{tpu_custom_call.1} parent=5 // pred_check
        %p190 = pneg %p189
      $region30: #{tpu_custom_call.1} parent=5 // pred_check_branch
        %192 = sbr.rel (%p190) target = $region32
      $region31: #{tpu_custom_call.1} parent=5 // pred_region
        // Predicated region
        $region33: #{tpu_custom_call.1} parent=31 // pred_check
          %p193 = pneg %p35
        $region34: #{tpu_custom_call.1} parent=31 // pred_check_branch
          %195 = sbr.rel (%p193) target = $region36
        $region35: #{tpu_custom_call.1} parent=31 // pred_region
          %p196 = scmp.lt.s32.totalorder %s15, 1
          %s197 = scalar_select %p196, %s15, 1
          %s198 = smul.addr %s197, 5
          %s199 = smul.addr %s198, 8
          %s200 = scalar_lea.vmem %s0, %s199
        $region36: #{tpu_custom_call.1} parent=31 // pred_fallthru
          _
      $region32: #{tpu_custom_call.1} parent=5 // pred_fallthru
        _
      %p201 = scmp.le.s32.totalorder 1, %s15
      %p202 = scmp.lt.s32.totalorder %s15, 3
      %p203 = pnand %p201, %p202
      %p204 = pneg %p203
      // Predicated region
      $region37: #{tpu_custom_call.1} parent=5 // pred_check
        _
      $region38: #{tpu_custom_call.1} parent=5 // pred_check_branch
        %206 = sbr.rel (%p203) target = $region40
      $region39: #{tpu_custom_call.1} parent=5 // pred_region
        %s207 = ssub.s32 %s15, 1
        // Predicated region
        $region41: #{tpu_custom_call.1} parent=39 // pred_check
          %p208 = pneg %p62
        $region42: #{tpu_custom_call.1} parent=39 // pred_check_branch
          %210 = sbr.rel (%p208) target = $region44
        $region43: #{tpu_custom_call.1} parent=39 // pred_region
          %212 = dma.done [#allocation5], 5376
        $region44: #{tpu_custom_call.1} parent=39 // pred_fallthru
          _
        %p213 = scmp.lt.s32.totalorder %s20, 1
        %s214 = scalar_select %p213, %s20, 1
        %s215 = smul.addr %s214, 5
        %s216 = smul.addr %s215, 8
        %s217 = scalar_lea.vmem %s0, %s216
        %p218 = pneg %p41
        %p219 = pneg %p38
        %p220 = pneg %p62
        %p221 = pneg %p59
        %p222 = pneg %p83
        %p223 = pneg %p80
        %p224 = pneg %p104
        %p225 = pneg %p101
        %p226 = pneg %p125
        %p227 = pneg %p122
        %p228 = pneg %p151
        %p229 = pneg %p148
        %s230 = sand.u32 %s138, 1
        %s231 = scalar_lea.sflag [#allocation6], %s230
        %s232 = sand.u32 %s138, 1
        %s233 = smul.addr %s232, 40
        %s234 = scalar_lea.vmem [#allocation7], %s233
        %p235 = scmp.lt.s32.totalorder %s20, 1
        %s236 = scalar_select %p235, %s20, 1
        %s237 = smul.addr %s236, 5
        %s238 = smul.addr %s237, 8
        %s239 = scalar_lea.vmem %s0, %s238
        %v240 = vld [vmem:[%s4] sm:$0x1f]
        %v241 = vld [vmem:[%s3] sm:$0xff]
        %v242 = vld [vmem:[%s239] sm:$0xff]
        %v243 = vld [vmem:[%s239 + $0x8] sm:$0xff]
        %v244 = vld [vmem:[%s239 + $0x10] sm:$0xff]
        %v245 = vld [vmem:[%s239 + $0x18] sm:$0xff]
        %v246 = vld [vmem:[%s239 + $0x20] sm:$0xff]
        %v247 = vld [vmem:[#allocation4] sm:$0xff]
        %v248 = vld [vmem:[%s2] sm:$0xff]
        %249 = vrot.lane.b32.xlu0 %v242, 27
        %v250 = vpop.permute.xlu0 %249
        %251 = vrot.lane.b32.xlu0 %v243, 27
        %v252 = vpop.permute.xlu0 %251
        %253 = vrot.lane.b32.xlu0 %v244, 27
        %v254 = vpop.permute.xlu0 %253
        %255 = vrot.lane.b32.xlu0 %v245, 27
        %v256 = vpop.permute.xlu0 %255
        %257 = vrot.lane.b32.xlu0 %v246, 27
        %v258 = vpop.permute.xlu0 %257
        %v259 = vlaneseq
        %v260 = vand.u32 %v259, 127
        %vm261 = vcmp.lt.s32.totalorder %v260, 27
        %v262 = vsel %vm261, %v256, %v258
        %v263 = vsel %vm261, %v254, %v256
        %v264 = vsel %vm261, %v252, %v254
        %v265 = vsel %vm261, %v250, %v252
        %v266 = vsel %vm261, %v258, %v250
        %267 = vst [vmem:[#allocation2] sm:$0xff] %v266
        %268 = vst [vmem:[#allocation2 + $0x8] sm:$0xff] %v265
        %269 = vst [vmem:[#allocation2 + $0x10] sm:$0xff] %v264
        %270 = vst [vmem:[#allocation2 + $0x18] sm:$0xff] %v263
        %271 = vst [vmem:[#allocation2 + $0x20] sm:$0xff] %v262
        %272 = vrot.lane.b32.xlu0 %v242, 26
        %v273 = vpop.permute.xlu0 %272
        %274 = vrot.lane.b32.xlu0 %v243, 26
        %v275 = vpop.permute.xlu0 %274
        %276 = vrot.lane.b32.xlu0 %v244, 26
        %v277 = vpop.permute.xlu0 %276
        %278 = vrot.lane.b32.xlu0 %v245, 26
        %v279 = vpop.permute.xlu0 %278
        %280 = vrot.lane.b32.xlu0 %v246, 26
        %v281 = vpop.permute.xlu0 %280
        %vm282 = vcmp.lt.s32.totalorder %v260, 26
        %v283 = vsel %vm282, %v279, %v281
        %v284 = vsel %vm282, %v277, %v279
        %v285 = vsel %vm282, %v275, %v277
        %v286 = vsel %vm282, %v273, %v275
        %v287 = vsel %vm282, %v281, %v273
        %288 = vst [vmem:[#allocation2 + $0x28] sm:$0xff] %v287
        %289 = vst [vmem:[#allocation2 + $0x30] sm:$0xff] %v286
        %290 = vst [vmem:[#allocation2 + $0x38] sm:$0xff] %v285
        %291 = vst [vmem:[#allocation2 + $0x40] sm:$0xff] %v284
        %292 = vst [vmem:[#allocation2 + $0x48] sm:$0xff] %v283
        %293 = vrot.lane.b32.xlu0 %v242, 25
        %v294 = vpop.permute.xlu0 %293
        %295 = vrot.lane.b32.xlu0 %v243, 25
        %v296 = vpop.permute.xlu0 %295
        %297 = vrot.lane.b32.xlu0 %v244, 25
        %v298 = vpop.permute.xlu0 %297
        %299 = vrot.lane.b32.xlu0 %v245, 25
        %v300 = vpop.permute.xlu0 %299
        %301 = vrot.lane.b32.xlu0 %v246, 25
        %v302 = vpop.permute.xlu0 %301
        %vm303 = vcmp.lt.s32.totalorder %v260, 25
        %v304 = vsel %vm303, %v300, %v302
        %v305 = vsel %vm303, %v298, %v300
        %v306 = vsel %vm303, %v296, %v298
        %v307 = vsel %vm303, %v294, %v296
        %v308 = vsel %vm303, %v302, %v294
        %309 = vst [vmem:[#allocation2 + $0x50] sm:$0xff] %v308
        %310 = vst [vmem:[#allocation2 + $0x58] sm:$0xff] %v307
        %311 = vst [vmem:[#allocation2 + $0x60] sm:$0xff] %v306
        %312 = vst [vmem:[#allocation2 + $0x68] sm:$0xff] %v305
        %313 = vst [vmem:[#allocation2 + $0x70] sm:$0xff] %v304
        %314 = vrot.lane.b32.xlu0 %v242, 1
        %v315 = vpop.permute.xlu0 %314
        %316 = vrot.lane.b32.xlu0 %v243, 1
        %v317 = vpop.permute.xlu0 %316
        %318 = vrot.lane.b32.xlu0 %v244, 1
        %v319 = vpop.permute.xlu0 %318
        %320 = vrot.lane.b32.xlu0 %v245, 1
        %v321 = vpop.permute.xlu0 %320
        %322 = vrot.lane.b32.xlu0 %v246, 1
        %v323 = vpop.permute.xlu0 %322
        %vm324 = vcmp.lt.s32.totalorder %v260, 1
        %v325 = vsel %vm324, %v321, %v323
        %v326 = vsel %vm324, %v319, %v321
        %v327 = vsel %vm324, %v317, %v319
        %v328 = vsel %vm324, %v315, %v317
        %v329 = vsel %vm324, %v323, %v315
        %330 = vst [vmem:[#allocation2 + $0x78] sm:$0xff] %v329
        %331 = vst [vmem:[#allocation2 + $0x80] sm:$0xff] %v328
        %332 = vst [vmem:[#allocation2 + $0x88] sm:$0xff] %v327
        %333 = vst [vmem:[#allocation2 + $0x90] sm:$0xff] %v326
        %334 = vst [vmem:[#allocation2 + $0x98] sm:$0xff] %v325
        %335 = vst [vmem:[#allocation2 + $0xa0] sm:$0xff] %v242
        %336 = vst [vmem:[#allocation2 + $0xa8] sm:$0xff] %v243
        %337 = vst [vmem:[#allocation2 + $0xb0] sm:$0xff] %v244
        %338 = vst [vmem:[#allocation2 + $0xb8] sm:$0xff] %v245
        %339 = vst [vmem:[#allocation2 + $0xc0] sm:$0xff] %v246
        %340 = vrot.lane.b32.xlu0 %v242, 127
        %v341 = vpop.permute.xlu0 %340
        %342 = vrot.lane.b32.xlu0 %v243, 127
        %v343 = vpop.permute.xlu0 %342
        %344 = vrot.lane.b32.xlu0 %v244, 127
        %v345 = vpop.permute.xlu0 %344
        %346 = vrot.lane.b32.xlu0 %v245, 127
        %v347 = vpop.permute.xlu0 %346
        %348 = vrot.lane.b32.xlu0 %v246, 127
        %v349 = vpop.permute.xlu0 %348
        %vm350 = vcmp.lt.s32.totalorder %v260, 127
        %v351 = vsel %vm350, %v347, %v349
        %v352 = vsel %vm350, %v345, %v347
        %v353 = vsel %vm350, %v343, %v345
        %v354 = vsel %vm350, %v341, %v343
        %v355 = vsel %vm350, %v349, %v341
        %356 = vst [vmem:[#allocation2 + $0xc8] sm:$0xff] %v354
        %357 = vst [vmem:[#allocation2 + $0xd0] sm:$0xff] %v353
        %358 = vst [vmem:[#allocation2 + $0xd8] sm:$0xff] %v352
        %359 = vst [vmem:[#allocation2 + $0xe0] sm:$0xff] %v351
        %360 = vst [vmem:[#allocation2 + $0xe8] sm:$0xff] %v355
        %361 = vrot.lane.b32.xlu0 %v242, 103
        %v362 = vpop.permute.xlu0 %361
        %363 = vrot.lane.b32.xlu0 %v243, 103
        %v364 = vpop.permute.xlu0 %363
        %365 = vrot.lane.b32.xlu0 %v244, 103
        %v366 = vpop.permute.xlu0 %365
        %367 = vrot.lane.b32.xlu0 %v245, 103
        %v368 = vpop.permute.xlu0 %367
        %369 = vrot.lane.b32.xlu0 %v246, 103
        %v370 = vpop.permute.xlu0 %369
        %vm371 = vcmp.lt.s32.totalorder %v260, 103
        %v372 = vsel %vm371, %v368, %v370
        %v373 = vsel %vm371, %v366, %v368
        %v374 = vsel %vm371, %v364, %v366
        %v375 = vsel %vm371, %v362, %v364
        %v376 = vsel %vm371, %v370, %v362
        %377 = vst [vmem:[#allocation2 + $0xf0] sm:$0xff] %v375
        %378 = vst [vmem:[#allocation2 + $0xf8] sm:$0xff] %v374
        %379 = vst [vmem:[#allocation2 + $0x100] sm:$0xff] %v373
        %380 = vst [vmem:[#allocation2 + $0x108] sm:$0xff] %v372
        %381 = vst [vmem:[#allocation2 + $0x110] sm:$0xff] %v376
        %382 = vrot.lane.b32.xlu0 %v242, 102
        %v383 = vpop.permute.xlu0 %382
        %384 = vrot.lane.b32.xlu0 %v243, 102
        %v385 = vpop.permute.xlu0 %384
        %386 = vrot.lane.b32.xlu0 %v244, 102
        %v387 = vpop.permute.xlu0 %386
        %388 = vrot.lane.b32.xlu0 %v245, 102
        %v389 = vpop.permute.xlu0 %388
        %390 = vrot.lane.b32.xlu0 %v246, 102
        %v391 = vpop.permute.xlu0 %390
        %vm392 = vcmp.lt.s32.totalorder %v260, 102
        %v393 = vsel %vm392, %v389, %v391
        %v394 = vsel %vm392, %v387, %v389
        %v395 = vsel %vm392, %v385, %v387
        %v396 = vsel %vm392, %v383, %v385
        %v397 = vsel %vm392, %v391, %v383
        %398 = vst [vmem:[#allocation2 + $0x118] sm:$0xff] %v396
        %399 = vst [vmem:[#allocation2 + $0x120] sm:$0xff] %v395
        %400 = vst [vmem:[#allocation2 + $0x128] sm:$0xff] %v394
        %401 = vst [vmem:[#allocation2 + $0x130] sm:$0xff] %v393
        %402 = vst [vmem:[#allocation2 + $0x138] sm:$0xff] %v397
        %403 = vrot.lane.b32.xlu0 %v242, 101
        %v404 = vpop.permute.xlu0 %403
        %405 = vrot.lane.b32.xlu0 %v243, 101
        %v406 = vpop.permute.xlu0 %405
        %407 = vrot.lane.b32.xlu0 %v244, 101
        %v408 = vpop.permute.xlu0 %407
        %409 = vrot.lane.b32.xlu0 %v245, 101
        %v410 = vpop.permute.xlu0 %409
        %411 = vrot.lane.b32.xlu0 %v246, 101
        %v412 = vpop.permute.xlu0 %411
        %vm413 = vcmp.lt.s32.totalorder %v260, 101
        %v414 = vsel %vm413, %v410, %v412
        %v415 = vsel %vm413, %v408, %v410
        %v416 = vsel %vm413, %v406, %v408
        %v417 = vsel %vm413, %v404, %v406
        %v418 = vsel %vm413, %v412, %v404
        %419 = vst [vmem:[#allocation2 + $0x140] sm:$0xff] %v417
        %420 = vst [vmem:[#allocation2 + $0x148] sm:$0xff] %v416
        %421 = vst [vmem:[#allocation2 + $0x150] sm:$0xff] %v415
        %422 = vst [vmem:[#allocation2 + $0x158] sm:$0xff] %v414
        %423 = vst [vmem:[#allocation2 + $0x160] sm:$0xff] %v418
        %v424 = vld [vmem:[#allocation2] sm:$0xff]
        %v425 = vld [vmem:[#allocation2 + $0x8] sm:$0xff]
        %v426 = vld [vmem:[#allocation2 + $0x10] sm:$0xff]
        %v427 = vld [vmem:[#allocation2 + $0x18] sm:$0xff]
        %v428 = vld [vmem:[#allocation2 + $0x20] sm:$0xff]
        %v429 = vld [vmem:[#allocation2 + $0x28] sm:$0xff]
        %v430 = vld [vmem:[#allocation2 + $0x30] sm:$0xff]
        %v431 = vld [vmem:[#allocation2 + $0x38] sm:$0xff]
        %v432 = vld [vmem:[#allocation2 + $0x40] sm:$0xff]
        %v433 = vld [vmem:[#allocation2 + $0x48] sm:$0xff]
        %v434 = vld [vmem:[#allocation2 + $0x50] sm:$0xff]
        %v435 = vld [vmem:[#allocation2 + $0x58] sm:$0xff]
        %v436 = vld [vmem:[#allocation2 + $0x60] sm:$0xff]
        %v437 = vld [vmem:[#allocation2 + $0x68] sm:$0xff]
        %v438 = vld [vmem:[#allocation2 + $0x70] sm:$0xff]
        %v439 = vld [vmem:[#allocation2 + $0x78] sm:$0xff]
        %v440 = vld [vmem:[#allocation2 + $0x80] sm:$0xff]
        %v441 = vld [vmem:[#allocation2 + $0x88] sm:$0xff]
        %v442 = vld [vmem:[#allocation2 + $0x90] sm:$0xff]
        %v443 = vld [vmem:[#allocation2 + $0x98] sm:$0xff]
        %v444 = vld [vmem:[#allocation2 + $0xa0] sm:$0xff]
        %v445 = vld [vmem:[#allocation2 + $0xa8] sm:$0xff]
        %v446 = vld [vmem:[#allocation2 + $0xb0] sm:$0xff]
        %v447 = vld [vmem:[#allocation2 + $0xb8] sm:$0xff]
        %v448 = vld [vmem:[#allocation2 + $0xc0] sm:$0xff]
        %v449 = vld [vmem:[#allocation2 + $0xc8] sm:$0xff]
        %v450 = vld [vmem:[#allocation2 + $0xd0] sm:$0xff]
        %v451 = vld [vmem:[#allocation2 + $0xd8] sm:$0xff]
        %v452 = vld [vmem:[#allocation2 + $0xe0] sm:$0xff]
        %v453 = vld [vmem:[#allocation2 + $0xe8] sm:$0xff]
        %v454 = vld [vmem:[#allocation2 + $0xf0] sm:$0xff]
        %v455 = vld [vmem:[#allocation2 + $0xf8] sm:$0xff]
        %v456 = vld [vmem:[#allocation2 + $0x100] sm:$0xff]
        %v457 = vld [vmem:[#allocation2 + $0x108] sm:$0xff]
        %v458 = vld [vmem:[#allocation2 + $0x110] sm:$0xff]
        %v459 = vld [vmem:[#allocation2 + $0x118] sm:$0xff]
        %v460 = vld [vmem:[#allocation2 + $0x120] sm:$0xff]
        %v461 = vld [vmem:[#allocation2 + $0x128] sm:$0xff]
        %v462 = vld [vmem:[#allocation2 + $0x130] sm:$0xff]
        %v463 = vld [vmem:[#allocation2 + $0x138] sm:$0xff]
        %v464 = vld [vmem:[#allocation2 + $0x140] sm:$0xff]
        %v465 = vld [vmem:[#allocation2 + $0x148] sm:$0xff]
        %v466 = vld [vmem:[#allocation2 + $0x150] sm:$0xff]
        %v467 = vld [vmem:[#allocation2 + $0x158] sm:$0xff]
        %v468 = vld [vmem:[#allocation2 + $0x160] sm:$0xff]
        %470 = vset.pattern.permute.xlu0 0
        %471 = vperm.xlu0 %470, %v248
        %v472 = vpop.permute.xlu0 %471
        %vm474 = vcmask 588800
        %v476 = vsel %vm474, %v247, 0
        %478 = vmatpush.msra.mxu0 0.0
        %479 = vmatpush.msra.mxu0 0.0
        %480 = vmatpush.msra.mxu0 0.0
        %481 = vmatpush.msra.mxu0 0.0
        %482 = vmatpush.msra.mxu0 0.0
        %483 = vmatpush.msra.mxu0 0.0
        %484 = vmatpush.msra.mxu0 0.0
        %485 = vmatpush.msra.mxu0 %v464
        %486 = vmatpush.msra.mxu0 %v459
        %487 = vmatpush.msra.mxu0 %v454
        %488 = vmatpush.msra.mxu0 %v449
        %489 = vmatpush.msra.mxu0 %v444
        %490 = vmatpush.msra.mxu0 %v439
        %491 = vmatpush.msra.mxu0 %v434
        %492 = vmatpush.msra.mxu0 %v429
        %493 = vmatpush.msra.mxu0 %v424
        %494 = vmatmul.f32.gmra.mxu0 %v476
        %v495 = vpop.f32.mrf.mxu0
        %v496 = vadd.f32 %v472, %v495
        %497 = vdwg.mxu0
        %498 = vmatpush.msra.mxu0 0.0
        %499 = vmatpush.msra.mxu0 0.0
        %500 = vmatpush.msra.mxu0 0.0
        %501 = vmatpush.msra.mxu0 0.0
        %502 = vmatpush.msra.mxu0 0.0
        %503 = vmatpush.msra.mxu0 0.0
        %504 = vmatpush.msra.mxu0 0.0
        %505 = vmatpush.msra.mxu0 %v465
        %506 = vmatpush.msra.mxu0 %v460
        %507 = vmatpush.msra.mxu0 %v455
        %508 = vmatpush.msra.mxu0 %v450
        %509 = vmatpush.msra.mxu0 %v445
        %510 = vmatpush.msra.mxu0 %v440
        %511 = vmatpush.msra.mxu0 %v435
        %512 = vmatpush.msra.mxu0 %v430
        %513 = vmatpush.msra.mxu0 %v425
        %514 = vmatmul.f32.gmra.mxu0 %v476
        %v515 = vpop.f32.mrf.mxu0
        %v516 = vadd.f32 %v472, %v515
        %517 = vdwg.mxu0
        %518 = vmatpush.msra.mxu0 0.0
        %519 = vmatpush.msra.mxu0 0.0
        %520 = vmatpush.msra.mxu0 0.0
        %521 = vmatpush.msra.mxu0 0.0
        %522 = vmatpush.msra.mxu0 0.0
        %523 = vmatpush.msra.mxu0 0.0
        %524 = vmatpush.msra.mxu0 0.0
        %525 = vmatpush.msra.mxu0 %v466
        %526 = vmatpush.msra.mxu0 %v461
        %527 = vmatpush.msra.mxu0 %v456
        %528 = vmatpush.msra.mxu0 %v451
        %529 = vmatpush.msra.mxu0 %v446
        %530 = vmatpush.msra.mxu0 %v441
        %531 = vmatpush.msra.mxu0 %v436
        %532 = vmatpush.msra.mxu0 %v431
        %533 = vmatpush.msra.mxu0 %v426
        %534 = vmatmul.f32.gmra.mxu0 %v476
        %v535 = vpop.f32.mrf.mxu0
        %v536 = vadd.f32 %v472, %v535
        %537 = vdwg.mxu0
        %538 = vmatpush.msra.mxu0 0.0
        %539 = vmatpush.msra.mxu0 0.0
        %540 = vmatpush.msra.mxu0 0.0
        %541 = vmatpush.msra.mxu0 0.0
        %542 = vmatpush.msra.mxu0 0.0
        %543 = vmatpush.msra.mxu0 0.0
        %544 = vmatpush.msra.mxu0 0.0
        %545 = vmatpush.msra.mxu0 %v467
        %546 = vmatpush.msra.mxu0 %v462
        %547 = vmatpush.msra.mxu0 %v457
        %548 = vmatpush.msra.mxu0 %v452
        %549 = vmatpush.msra.mxu0 %v447
        %550 = vmatpush.msra.mxu0 %v442
        %551 = vmatpush.msra.mxu0 %v437
        %552 = vmatpush.msra.mxu0 %v432
        %553 = vmatpush.msra.mxu0 %v427
        %554 = vmatmul.f32.gmra.mxu0 %v476
        %v555 = vpop.f32.mrf.mxu0
        %v556 = vadd.f32 %v472, %v555
        %557 = vdwg.mxu0
        %558 = vmatpush.msra.mxu0 0.0
        %559 = vmatpush.msra.mxu0 0.0
        %560 = vmatpush.msra.mxu0 0.0
        %561 = vmatpush.msra.mxu0 0.0
        %562 = vmatpush.msra.mxu0 0.0
        %563 = vmatpush.msra.mxu0 0.0
        %564 = vmatpush.msra.mxu0 0.0
        %565 = vmatpush.msra.mxu0 %v468
        %566 = vmatpush.msra.mxu0 %v463
        %567 = vmatpush.msra.mxu0 %v458
        %568 = vmatpush.msra.mxu0 %v453
        %569 = vmatpush.msra.mxu0 %v448
        %570 = vmatpush.msra.mxu0 %v443
        %571 = vmatpush.msra.mxu0 %v438
        %572 = vmatpush.msra.mxu0 %v433
        %573 = vmatpush.msra.mxu0 %v428
        %574 = vmatmul.f32.gmra.mxu0 %v476
        %v575 = vpop.f32.mrf.mxu0
        %v576 = vadd.f32 %v472, %v575
        %577 = vdwg.mxu0
        %vm578 = vcmp.ge.f32.partialorder %v496, 0.0
        %vm579 = vcmp.ge.f32.partialorder %v516, 0.0
        %vm580 = vcmp.ge.f32.partialorder %v536, 0.0
        %vm581 = vcmp.ge.f32.partialorder %v556, 0.0
        %vm582 = vcmp.ge.f32.partialorder %v576, 0.0
        %v583 = vmul.f32 %v496, 0.2
        %v584 = vmul.f32 %v516, 0.2
        %v585 = vmul.f32 %v536, 0.2
        %v586 = vmul.f32 %v556, 0.2
        %v587 = vmul.f32 %v576, 0.2
        %v588 = vsel %vm578, %v496, %v583
        %v589 = vsel %vm579, %v516, %v584
        %v590 = vsel %vm580, %v536, %v585
        %v591 = vsel %vm581, %v556, %v586
        %v592 = vsel %vm582, %v576, %v587
        %v594 = vperm.slane %v240, 0
        %v595 = vperm.slane %v240, 1
        %v596 = vperm.slane %v240, 2
        %v597 = vperm.slane %v240, 3
        %v598 = vperm.slane %v240, 4
        %v604 = vmul.f32 %v588, %v594
        %v605 = vmul.f32 %v589, %v595
        %v606 = vmul.f32 %v590, %v596
        %v607 = vmul.f32 %v591, %v597
        %v608 = vmul.f32 %v592, %v598
        %609 = vst [vmem:[#allocation3 + $0x28] sm:$0xff] %v604
        %610 = vst [vmem:[#allocation3 + $0x30] sm:$0xff] %v605
        %611 = vst [vmem:[#allocation3 + $0x38] sm:$0xff] %v606
        %612 = vst [vmem:[#allocation3 + $0x40] sm:$0xff] %v607
        %613 = vst [vmem:[#allocation3 + $0x48] sm:$0xff] %v608
        %v614 = vld [vmem:[#allocation4 + $0x18] sm:$0xff]
        %v615 = vld [vmem:[%s2 + $0x8] sm:$0xff]
        %617 = vset.pattern.permute.xlu0 0
        %618 = vperm.xlu0 %617, %v615
        %v619 = vpop.permute.xlu0 %618
        %vm621 = vcmask 64512
        %v623 = vsel %vm621, %v614, 0
        %625 = vmatpush.msra.mxu0 0.0
        %626 = vmatpush.msra.mxu0 0.0
        %627 = vmatpush.msra.mxu0 0.0
        %628 = vmatpush.msra.mxu0 0.0
        %629 = vmatpush.msra.mxu0 0.0
        %630 = vmatpush.msra.mxu0 0.0
        %631 = vmatpush.msra.mxu0 0.0
        %632 = vmatpush.msra.mxu0 0.0
        %633 = vmatpush.msra.mxu0 0.0
        %634 = vmatpush.msra.mxu0 0.0
        %635 = vmatpush.msra.mxu0 0.0
        %636 = vmatpush.msra.mxu0 0.0
        %637 = vmatpush.msra.mxu0 0.0
        %638 = vmatpush.msra.mxu0 0.0
        %639 = vmatpush.msra.mxu0 0.0
        %640 = vmatpush.msra.mxu0 %v604
        %641 = vmatmul.f32.gmra.mxu0 %v623
        %v642 = vpop.f32.mrf.mxu0
        %v643 = vadd.f32 %v619, %v642
        %644 = vdwg.mxu0
        %645 = vmatpush.msra.mxu0 0.0
        %646 = vmatpush.msra.mxu0 0.0
        %647 = vmatpush.msra.mxu0 0.0
        %648 = vmatpush.msra.mxu0 0.0
        %649 = vmatpush.msra.mxu0 0.0
        %650 = vmatpush.msra.mxu0 0.0
        %651 = vmatpush.msra.mxu0 0.0
        %652 = vmatpush.msra.mxu0 0.0
        %653 = vmatpush.msra.mxu0 0.0
        %654 = vmatpush.msra.mxu0 0.0
        %655 = vmatpush.msra.mxu0 0.0
        %656 = vmatpush.msra.mxu0 0.0
        %657 = vmatpush.msra.mxu0 0.0
        %658 = vmatpush.msra.mxu0 0.0
        %659 = vmatpush.msra.mxu0 0.0
        %660 = vmatpush.msra.mxu0 %v605
        %661 = vmatmul.f32.gmra.mxu0 %v623
        %v662 = vpop.f32.mrf.mxu0
        %v663 = vadd.f32 %v619, %v662
        %664 = vdwg.mxu0
        %665 = vmatpush.msra.mxu0 0.0
        %666 = vmatpush.msra.mxu0 0.0
        %667 = vmatpush.msra.mxu0 0.0
        %668 = vmatpush.msra.mxu0 0.0
        %669 = vmatpush.msra.mxu0 0.0
        %670 = vmatpush.msra.mxu0 0.0
        %671 = vmatpush.msra.mxu0 0.0
        %672 = vmatpush.msra.mxu0 0.0
        %673 = vmatpush.msra.mxu0 0.0
        %674 = vmatpush.msra.mxu0 0.0
        %675 = vmatpush.msra.mxu0 0.0
        %676 = vmatpush.msra.mxu0 0.0
        %677 = vmatpush.msra.mxu0 0.0
        %678 = vmatpush.msra.mxu0 0.0
        %679 = vmatpush.msra.mxu0 0.0
        %680 = vmatpush.msra.mxu0 %v606
        %681 = vmatmul.f32.gmra.mxu0 %v623
        %v682 = vpop.f32.mrf.mxu0
        %v683 = vadd.f32 %v619, %v682
        %684 = vdwg.mxu0
        %685 = vmatpush.msra.mxu0 0.0
        %686 = vmatpush.msra.mxu0 0.0
        %687 = vmatpush.msra.mxu0 0.0
        %688 = vmatpush.msra.mxu0 0.0
        %689 = vmatpush.msra.mxu0 0.0
        %690 = vmatpush.msra.mxu0 0.0
        %691 = vmatpush.msra.mxu0 0.0
        %692 = vmatpush.msra.mxu0 0.0
        %693 = vmatpush.msra.mxu0 0.0
        %694 = vmatpush.msra.mxu0 0.0
        %695 = vmatpush.msra.mxu0 0.0
        %696 = vmatpush.msra.mxu0 0.0
        %697 = vmatpush.msra.mxu0 0.0
        %698 = vmatpush.msra.mxu0 0.0
        %699 = vmatpush.msra.mxu0 0.0
        %700 = vmatpush.msra.mxu0 %v607
        %701 = vmatmul.f32.gmra.mxu0 %v623
        %v702 = vpop.f32.mrf.mxu0
        %v703 = vadd.f32 %v619, %v702
        %704 = vdwg.mxu0
        %705 = vmatpush.msra.mxu0 0.0
        %706 = vmatpush.msra.mxu0 0.0
        %707 = vmatpush.msra.mxu0 0.0
        %708 = vmatpush.msra.mxu0 0.0
        %709 = vmatpush.msra.mxu0 0.0
        %710 = vmatpush.msra.mxu0 0.0
        %711 = vmatpush.msra.mxu0 0.0
        %712 = vmatpush.msra.mxu0 0.0
        %713 = vmatpush.msra.mxu0 0.0
        %714 = vmatpush.msra.mxu0 0.0
        %715 = vmatpush.msra.mxu0 0.0
        %716 = vmatpush.msra.mxu0 0.0
        %717 = vmatpush.msra.mxu0 0.0
        %718 = vmatpush.msra.mxu0 0.0
        %719 = vmatpush.msra.mxu0 0.0
        %720 = vmatpush.msra.mxu0 %v608
        %721 = vmatmul.f32.gmra.mxu0 %v623
        %v722 = vpop.f32.mrf.mxu0
        %v723 = vadd.f32 %v619, %v722
        %724 = vdwg.mxu0
        %vm725 = vcmp.ge.f32.partialorder %v643, 0.0
        %vm726 = vcmp.ge.f32.partialorder %v663, 0.0
        %vm727 = vcmp.ge.f32.partialorder %v683, 0.0
        %vm728 = vcmp.ge.f32.partialorder %v703, 0.0
        %vm729 = vcmp.ge.f32.partialorder %v723, 0.0
        %v730 = vmul.f32 %v643, 0.2
        %v731 = vmul.f32 %v663, 0.2
        %v732 = vmul.f32 %v683, 0.2
        %v733 = vmul.f32 %v703, 0.2
        %v734 = vmul.f32 %v723, 0.2
        %v735 = vsel %vm725, %v643, %v730
        %v736 = vsel %vm726, %v663, %v731
        %v737 = vsel %vm727, %v683, %v732
        %v738 = vsel %vm728, %v703, %v733
        %v739 = vsel %vm729, %v723, %v734
        %v740 = vmul.f32 %v735, %v594
        %v741 = vmul.f32 %v736, %v595
        %v742 = vmul.f32 %v737, %v596
        %v743 = vmul.f32 %v738, %v597
        %v744 = vmul.f32 %v739, %v598
        %v745 = vld [vmem:[#allocation4 + $0x30] sm:$0xff]
        %v746 = vld [vmem:[%s2 + $0x10] sm:$0xff]
        %747 = vrot.lane.b32.xlu0 %v740, 27
        %v748 = vpop.permute.xlu0 %747
        %749 = vrot.lane.b32.xlu0 %v741, 27
        %v750 = vpop.permute.xlu0 %749
        %751 = vrot.lane.b32.xlu0 %v742, 27
        %v752 = vpop.permute.xlu0 %751
        %753 = vrot.lane.b32.xlu0 %v743, 27
        %v754 = vpop.permute.xlu0 %753
        %755 = vrot.lane.b32.xlu0 %v744, 27
        %v756 = vpop.permute.xlu0 %755
        %v757 = vsel %vm261, %v754, %v756
        %v758 = vsel %vm261, %v752, %v754
        %v759 = vsel %vm261, %v750, %v752
        %v760 = vsel %vm261, %v748, %v750
        %v761 = vsel %vm261, %v756, %v748
        %762 = vst [vmem:[#allocation2] sm:$0xff] %v761
        %763 = vst [vmem:[#allocation2 + $0x8] sm:$0xff] %v760
        %764 = vst [vmem:[#allocation2 + $0x10] sm:$0xff] %v759
        %765 = vst [vmem:[#allocation2 + $0x18] sm:$0xff] %v758
        %766 = vst [vmem:[#allocation2 + $0x20] sm:$0xff] %v757
        %767 = vrot.lane.b32.xlu0 %v740, 26
        %v768 = vpop.permute.xlu0 %767
        %769 = vrot.lane.b32.xlu0 %v741, 26
        %v770 = vpop.permute.xlu0 %769
        %771 = vrot.lane.b32.xlu0 %v742, 26
        %v772 = vpop.permute.xlu0 %771
        %773 = vrot.lane.b32.xlu0 %v743, 26
        %v774 = vpop.permute.xlu0 %773
        %775 = vrot.lane.b32.xlu0 %v744, 26
        %v776 = vpop.permute.xlu0 %775
        %v777 = vsel %vm282, %v774, %v776
        %v778 = vsel %vm282, %v772, %v774
        %v779 = vsel %vm282, %v770, %v772
        %v780 = vsel %vm282, %v768, %v770
        %v781 = vsel %vm282, %v776, %v768
        %782 = vst [vmem:[#allocation2 + $0x28] sm:$0xff] %v781
        %783 = vst [vmem:[#allocation2 + $0x30] sm:$0xff] %v780
        %784 = vst [vmem:[#allocation2 + $0x38] sm:$0xff] %v779
        %785 = vst [vmem:[#allocation2 + $0x40] sm:$0xff] %v778
        %786 = vst [vmem:[#allocation2 + $0x48] sm:$0xff] %v777
        %787 = vrot.lane.b32.xlu0 %v740, 25
        %v788 = vpop.permute.xlu0 %787
        %789 = vrot.lane.b32.xlu0 %v741, 25
        %v790 = vpop.permute.xlu0 %789
        %791 = vrot.lane.b32.xlu0 %v742, 25
        %v792 = vpop.permute.xlu0 %791
        %793 = vrot.lane.b32.xlu0 %v743, 25
        %v794 = vpop.permute.xlu0 %793
        %795 = vrot.lane.b32.xlu0 %v744, 25
        %v796 = vpop.permute.xlu0 %795
        %v797 = vsel %vm303, %v794, %v796
        %v798 = vsel %vm303, %v792, %v794
        %v799 = vsel %vm303, %v790, %v792
        %v800 = vsel %vm303, %v788, %v790
        %v801 = vsel %vm303, %v796, %v788
        %802 = vst [vmem:[#allocation2 + $0x50] sm:$0xff] %v801
        %803 = vst [vmem:[#allocation2 + $0x58] sm:$0xff] %v800
        %804 = vst [vmem:[#allocation2 + $0x60] sm:$0xff] %v799
        %805 = vst [vmem:[#allocation2 + $0x68] sm:$0xff] %v798
        %806 = vst [vmem:[#allocation2 + $0x70] sm:$0xff] %v797
        %807 = vrot.lane.b32.xlu0 %v740, 1
        %v808 = vpop.permute.xlu0 %807
        %809 = vrot.lane.b32.xlu0 %v741, 1
        %v810 = vpop.permute.xlu0 %809
        %811 = vrot.lane.b32.xlu0 %v742, 1
        %v812 = vpop.permute.xlu0 %811
        %813 = vrot.lane.b32.xlu0 %v743, 1
        %v814 = vpop.permute.xlu0 %813
        %815 = vrot.lane.b32.xlu0 %v744, 1
        %v816 = vpop.permute.xlu0 %815
        %v817 = vsel %vm324, %v814, %v816
        %v818 = vsel %vm324, %v812, %v814
        %v819 = vsel %vm324, %v810, %v812
        %v820 = vsel %vm324, %v808, %v810
        %v821 = vsel %vm324, %v816, %v808
        %822 = vst [vmem:[#allocation2 + $0x78] sm:$0xff] %v821
        %823 = vst [vmem:[#allocation2 + $0x80] sm:$0xff] %v820
        %824 = vst [vmem:[#allocation2 + $0x88] sm:$0xff] %v819
        %825 = vst [vmem:[#allocation2 + $0x90] sm:$0xff] %v818
        %826 = vst [vmem:[#allocation2 + $0x98] sm:$0xff] %v817
        %827 = vst [vmem:[#allocation2 + $0xa0] sm:$0xff] %v740
        %828 = vst [vmem:[#allocation2 + $0xa8] sm:$0xff] %v741
        %829 = vst [vmem:[#allocation2 + $0xb0] sm:$0xff] %v742
        %830 = vst [vmem:[#allocation2 + $0xb8] sm:$0xff] %v743
        %831 = vst [vmem:[#allocation2 + $0xc0] sm:$0xff] %v744
        %832 = vrot.lane.b32.xlu0 %v740, 127
        %v833 = vpop.permute.xlu0 %832
        %834 = vrot.lane.b32.xlu0 %v741, 127
        %v835 = vpop.permute.xlu0 %834
        %836 = vrot.lane.b32.xlu0 %v742, 127
        %v837 = vpop.permute.xlu0 %836
        %838 = vrot.lane.b32.xlu0 %v743, 127
        %v839 = vpop.permute.xlu0 %838
        %840 = vrot.lane.b32.xlu0 %v744, 127
        %v841 = vpop.permute.xlu0 %840
        %v842 = vsel %vm350, %v839, %v841
        %v843 = vsel %vm350, %v837, %v839
        %v844 = vsel %vm350, %v835, %v837
        %v845 = vsel %vm350, %v833, %v835
        %v846 = vsel %vm350, %v841, %v833
        %847 = vst [vmem:[#allocation2 + $0xc8] sm:$0xff] %v845
        %848 = vst [vmem:[#allocation2 + $0xd0] sm:$0xff] %v844
        %849 = vst [vmem:[#allocation2 + $0xd8] sm:$0xff] %v843
        %850 = vst [vmem:[#allocation2 + $0xe0] sm:$0xff] %v842
        %851 = vst [vmem:[#allocation2 + $0xe8] sm:$0xff] %v846
        %852 = vrot.lane.b32.xlu0 %v740, 103
        %v853 = vpop.permute.xlu0 %852
        %854 = vrot.lane.b32.xlu0 %v741, 103
        %v855 = vpop.permute.xlu0 %854
        %856 = vrot.lane.b32.xlu0 %v742, 103
        %v857 = vpop.permute.xlu0 %856
        %858 = vrot.lane.b32.xlu0 %v743, 103
        %v859 = vpop.permute.xlu0 %858
        %860 = vrot.lane.b32.xlu0 %v744, 103
        %v861 = vpop.permute.xlu0 %860
        %v862 = vsel %vm371, %v859, %v861
        %v863 = vsel %vm371, %v857, %v859
        %v864 = vsel %vm371, %v855, %v857
        %v865 = vsel %vm371, %v853, %v855
        %v866 = vsel %vm371, %v861, %v853
        %867 = vst [vmem:[#allocation2 + $0xf0] sm:$0xff] %v865
        %868 = vst [vmem:[#allocation2 + $0xf8] sm:$0xff] %v864
        %869 = vst [vmem:[#allocation2 + $0x100] sm:$0xff] %v863
        %870 = vst [vmem:[#allocation2 + $0x108] sm:$0xff] %v862
        %871 = vst [vmem:[#allocation2 + $0x110] sm:$0xff] %v866
        %872 = vrot.lane.b32.xlu0 %v740, 102
        %v873 = vpop.permute.xlu0 %872
        %874 = vrot.lane.b32.xlu0 %v741, 102
        %v875 = vpop.permute.xlu0 %874
        %876 = vrot.lane.b32.xlu0 %v742, 102
        %v877 = vpop.permute.xlu0 %876
        %878 = vrot.lane.b32.xlu0 %v743, 102
        %v879 = vpop.permute.xlu0 %878
        %880 = vrot.lane.b32.xlu0 %v744, 102
        %v881 = vpop.permute.xlu0 %880
        %v882 = vsel %vm392, %v879, %v881
        %v883 = vsel %vm392, %v877, %v879
        %v884 = vsel %vm392, %v875, %v877
        %v885 = vsel %vm392, %v873, %v875
        %v886 = vsel %vm392, %v881, %v873
        %887 = vst [vmem:[#allocation2 + $0x118] sm:$0xff] %v885
        %888 = vst [vmem:[#allocation2 + $0x120] sm:$0xff] %v884
        %889 = vst [vmem:[#allocation2 + $0x128] sm:$0xff] %v883
        %890 = vst [vmem:[#allocation2 + $0x130] sm:$0xff] %v882
        %891 = vst [vmem:[#allocation2 + $0x138] sm:$0xff] %v886
        %892 = vrot.lane.b32.xlu0 %v740, 101
        %v893 = vpop.permute.xlu0 %892
        %894 = vrot.lane.b32.xlu0 %v741, 101
        %v895 = vpop.permute.xlu0 %894
        %896 = vrot.lane.b32.xlu0 %v742, 101
        %v897 = vpop.permute.xlu0 %896
        %898 = vrot.lane.b32.xlu0 %v743, 101
        %v899 = vpop.permute.xlu0 %898
        %900 = vrot.lane.b32.xlu0 %v744, 101
        %v901 = vpop.permute.xlu0 %900
        %v902 = vsel %vm413, %v899, %v901
        %v903 = vsel %vm413, %v897, %v899
        %v904 = vsel %vm413, %v895, %v897
        %v905 = vsel %vm413, %v893, %v895
        %v906 = vsel %vm413, %v901, %v893
        %907 = vst [vmem:[#allocation2 + $0x140] sm:$0xff] %v905
        %908 = vst [vmem:[#allocation2 + $0x148] sm:$0xff] %v904
        %909 = vst [vmem:[#allocation2 + $0x150] sm:$0xff] %v903
        %910 = vst [vmem:[#allocation2 + $0x158] sm:$0xff] %v902
        %911 = vst [vmem:[#allocation2 + $0x160] sm:$0xff] %v906
        %v912 = vld [vmem:[#allocation2] sm:$0xff]
        %v913 = vld [vmem:[#allocation2 + $0x8] sm:$0xff]
        %v914 = vld [vmem:[#allocation2 + $0x10] sm:$0xff]
        %v915 = vld [vmem:[#allocation2 + $0x18] sm:$0xff]
        %v916 = vld [vmem:[#allocation2 + $0x20] sm:$0xff]
        %v917 = vld [vmem:[#allocation2 + $0x28] sm:$0xff]
        %v918 = vld [vmem:[#allocation2 + $0x30] sm:$0xff]
        %v919 = vld [vmem:[#allocation2 + $0x38] sm:$0xff]
        %v920 = vld [vmem:[#allocation2 + $0x40] sm:$0xff]
        %v921 = vld [vmem:[#allocation2 + $0x48] sm:$0xff]
        %v922 = vld [vmem:[#allocation2 + $0x50] sm:$0xff]
        %v923 = vld [vmem:[#allocation2 + $0x58] sm:$0xff]
        %v924 = vld [vmem:[#allocation2 + $0x60] sm:$0xff]
        %v925 = vld [vmem:[#allocation2 + $0x68] sm:$0xff]
        %v926 = vld [vmem:[#allocation2 + $0x70] sm:$0xff]
        %v927 = vld [vmem:[#allocation2 + $0x78] sm:$0xff]
        %v928 = vld [vmem:[#allocation2 + $0x80] sm:$0xff]
        %v929 = vld [vmem:[#allocation2 + $0x88] sm:$0xff]
        %v930 = vld [vmem:[#allocation2 + $0x90] sm:$0xff]
        %v931 = vld [vmem:[#allocation2 + $0x98] sm:$0xff]
        %v932 = vld [vmem:[#allocation2 + $0xa0] sm:$0xff]
        %v933 = vld [vmem:[#allocation2 + $0xa8] sm:$0xff]
        %v934 = vld [vmem:[#allocation2 + $0xb0] sm:$0xff]
        %v935 = vld [vmem:[#allocation2 + $0xb8] sm:$0xff]
        %v936 = vld [vmem:[#allocation2 + $0xc0] sm:$0xff]
        %v937 = vld [vmem:[#allocation2 + $0xc8] sm:$0xff]
        %v938 = vld [vmem:[#allocation2 + $0xd0] sm:$0xff]
        %v939 = vld [vmem:[#allocation2 + $0xd8] sm:$0xff]
        %v940 = vld [vmem:[#allocation2 + $0xe0] sm:$0xff]
        %v941 = vld [vmem:[#allocation2 + $0xe8] sm:$0xff]
        %v942 = vld [vmem:[#allocation2 + $0xf0] sm:$0xff]
        %v943 = vld [vmem:[#allocation2 + $0xf8] sm:$0xff]
        %v944 = vld [vmem:[#allocation2 + $0x100] sm:$0xff]
        %v945 = vld [vmem:[#allocation2 + $0x108] sm:$0xff]
        %v946 = vld [vmem:[#allocation2 + $0x110] sm:$0xff]
        %v947 = vld [vmem:[#allocation2 + $0x118] sm:$0xff]
        %v948 = vld [vmem:[#allocation2 + $0x120] sm:$0xff]
        %v949 = vld [vmem:[#allocation2 + $0x128] sm:$0xff]
        %v950 = vld [vmem:[#allocation2 + $0x130] sm:$0xff]
        %v951 = vld [vmem:[#allocation2 + $0x138] sm:$0xff]
        %v952 = vld [vmem:[#allocation2 + $0x140] sm:$0xff]
        %v953 = vld [vmem:[#allocation2 + $0x148] sm:$0xff]
        %v954 = vld [vmem:[#allocation2 + $0x150] sm:$0xff]
        %v955 = vld [vmem:[#allocation2 + $0x158] sm:$0xff]
        %v956 = vld [vmem:[#allocation2 + $0x160] sm:$0xff]
        %958 = vset.pattern.permute.xlu0 0
        %959 = vperm.xlu0 %958, %v746
        %v960 = vpop.permute.xlu0 %959
        %v963 = vsel %vm474, %v745, 0
        %965 = vmatpush.msra.mxu0 0.0
        %966 = vmatpush.msra.mxu0 0.0
        %967 = vmatpush.msra.mxu0 0.0
        %968 = vmatpush.msra.mxu0 0.0
        %969 = vmatpush.msra.mxu0 0.0
        %970 = vmatpush.msra.mxu0 0.0
        %971 = vmatpush.msra.mxu0 0.0
        %972 = vmatpush.msra.mxu0 %v952
        %973 = vmatpush.msra.mxu0 %v947
        %974 = vmatpush.msra.mxu0 %v942
        %975 = vmatpush.msra.mxu0 %v937
        %976 = vmatpush.msra.mxu0 %v932
        %977 = vmatpush.msra.mxu0 %v927
        %978 = vmatpush.msra.mxu0 %v922
        %979 = vmatpush.msra.mxu0 %v917
        %980 = vmatpush.msra.mxu0 %v912
        %981 = vmatmul.f32.gmra.mxu0 %v963
        %v982 = vpop.f32.mrf.mxu0
        %v983 = vadd.f32 %v960, %v982
        %984 = vdwg.mxu0
        %985 = vmatpush.msra.mxu0 0.0
        %986 = vmatpush.msra.mxu0 0.0
        %987 = vmatpush.msra.mxu0 0.0
        %988 = vmatpush.msra.mxu0 0.0
        %989 = vmatpush.msra.mxu0 0.0
        %990 = vmatpush.msra.mxu0 0.0
        %991 = vmatpush.msra.mxu0 0.0
        %992 = vmatpush.msra.mxu0 %v953
        %993 = vmatpush.msra.mxu0 %v948
        %994 = vmatpush.msra.mxu0 %v943
        %995 = vmatpush.msra.mxu0 %v938
        %996 = vmatpush.msra.mxu0 %v933
        %997 = vmatpush.msra.mxu0 %v928
        %998 = vmatpush.msra.mxu0 %v923
        %999 = vmatpush.msra.mxu0 %v918
        %1000 = vmatpush.msra.mxu0 %v913
        %1001 = vmatmul.f32.gmra.mxu0 %v963
        %v1002 = vpop.f32.mrf.mxu0
        %v1003 = vadd.f32 %v960, %v1002
        %1004 = vdwg.mxu0
        %1005 = vmatpush.msra.mxu0 0.0
        %1006 = vmatpush.msra.mxu0 0.0
        %1007 = vmatpush.msra.mxu0 0.0
        %1008 = vmatpush.msra.mxu0 0.0
        %1009 = vmatpush.msra.mxu0 0.0
        %1010 = vmatpush.msra.mxu0 0.0
        %1011 = vmatpush.msra.mxu0 0.0
        %1012 = vmatpush.msra.mxu0 %v954
        %1013 = vmatpush.msra.mxu0 %v949
        %1014 = vmatpush.msra.mxu0 %v944
        %1015 = vmatpush.msra.mxu0 %v939
        %1016 = vmatpush.msra.mxu0 %v934
        %1017 = vmatpush.msra.mxu0 %v929
        %1018 = vmatpush.msra.mxu0 %v924
        %1019 = vmatpush.msra.mxu0 %v919
        %1020 = vmatpush.msra.mxu0 %v914
        %1021 = vmatmul.f32.gmra.mxu0 %v963
        %v1022 = vpop.f32.mrf.mxu0
        %v1023 = vadd.f32 %v960, %v1022
        %1024 = vdwg.mxu0
        %1025 = vmatpush.msra.mxu0 0.0
        %1026 = vmatpush.msra.mxu0 0.0
        %1027 = vmatpush.msra.mxu0 0.0
        %1028 = vmatpush.msra.mxu0 0.0
        %1029 = vmatpush.msra.mxu0 0.0
        %1030 = vmatpush.msra.mxu0 0.0
        %1031 = vmatpush.msra.mxu0 0.0
        %1032 = vmatpush.msra.mxu0 %v955
        %1033 = vmatpush.msra.mxu0 %v950
        %1034 = vmatpush.msra.mxu0 %v945
        %1035 = vmatpush.msra.mxu0 %v940
        %1036 = vmatpush.msra.mxu0 %v935
        %1037 = vmatpush.msra.mxu0 %v930
        %1038 = vmatpush.msra.mxu0 %v925
        %1039 = vmatpush.msra.mxu0 %v920
        %1040 = vmatpush.msra.mxu0 %v915
        %1041 = vmatmul.f32.gmra.mxu0 %v963
        %v1042 = vpop.f32.mrf.mxu0
        %v1043 = vadd.f32 %v960, %v1042
        %1044 = vdwg.mxu0
        %1045 = vmatpush.msra.mxu0 0.0
        %1046 = vmatpush.msra.mxu0 0.0
        %1047 = vmatpush.msra.mxu0 0.0
        %1048 = vmatpush.msra.mxu0 0.0
        %1049 = vmatpush.msra.mxu0 0.0
        %1050 = vmatpush.msra.mxu0 0.0
        %1051 = vmatpush.msra.mxu0 0.0
        %1052 = vmatpush.msra.mxu0 %v956
        %1053 = vmatpush.msra.mxu0 %v951
        %1054 = vmatpush.msra.mxu0 %v946
        %1055 = vmatpush.msra.mxu0 %v941
        %1056 = vmatpush.msra.mxu0 %v936
        %1057 = vmatpush.msra.mxu0 %v931
        %1058 = vmatpush.msra.mxu0 %v926
        %1059 = vmatpush.msra.mxu0 %v921
        %1060 = vmatpush.msra.mxu0 %v916
        %1061 = vmatmul.f32.gmra.mxu0 %v963
        %v1062 = vpop.f32.mrf.mxu0
        %v1063 = vadd.f32 %v960, %v1062
        %1064 = vdwg.mxu0
        %s1065 = vtos %v241
        %vm1066 = vcmp.ge.f32.partialorder %v983, 0.0
        %vm1067 = vcmp.ge.f32.partialorder %v1003, 0.0
        %vm1068 = vcmp.ge.f32.partialorder %v1023, 0.0
        %vm1069 = vcmp.ge.f32.partialorder %v1043, 0.0
        %vm1070 = vcmp.ge.f32.partialorder %v1063, 0.0
        %v1071 = vstv %s1065
        %v1072 = vmul.f32 %v1071, %v983
        %v1073 = vmul.f32 %v1071, %v1003
        %v1074 = vmul.f32 %v1071, %v1023
        %v1075 = vmul.f32 %v1071, %v1043
        %v1076 = vmul.f32 %v1071, %v1063
        %v1077 = vsel %vm1066, %v983, %v1072
        %v1078 = vsel %vm1067, %v1003, %v1073
        %v1079 = vsel %vm1068, %v1023, %v1074
        %v1080 = vsel %vm1069, %v1043, %v1075
        %v1081 = vsel %vm1070, %v1063, %v1076
        %v1082 = vmul.f32 %v1077, %v594
        %v1083 = vmul.f32 %v1078, %v595
        %v1084 = vmul.f32 %v1079, %v596
        %v1085 = vmul.f32 %v1080, %v597
        %v1086 = vmul.f32 %v1081, %v598
        %1087 = vst [vmem:[#allocation3] sm:$0xff] %v1082
        %1088 = vst [vmem:[#allocation3 + $0x8] sm:$0xff] %v1083
        %1089 = vst [vmem:[#allocation3 + $0x10] sm:$0xff] %v1084
        %1090 = vst [vmem:[#allocation3 + $0x18] sm:$0xff] %v1085
        %1091 = vst [vmem:[#allocation3 + $0x20] sm:$0xff] %v1086
        %v1092 = vld [vmem:[#allocation3 + $0x28] sm:$0xff]
        %v1093 = vld [vmem:[#allocation3 + $0x30] sm:$0xff]
        %v1094 = vld [vmem:[#allocation3 + $0x38] sm:$0xff]
        %v1095 = vld [vmem:[#allocation3 + $0x40] sm:$0xff]
        %v1096 = vld [vmem:[#allocation3 + $0x48] sm:$0xff]
        %v1097 = vld [vmem:[#allocation4 + $0x48] sm:$0xff]
        %v1098 = vld [vmem:[%s2 + $0x18] sm:$0xff]
        %1099 = vrot.lane.b32.xlu0 %v1092, 27
        %v1100 = vpop.permute.xlu0 %1099
        %1101 = vrot.lane.b32.xlu0 %v1093, 27
        %v1102 = vpop.permute.xlu0 %1101
        %1103 = vrot.lane.b32.xlu0 %v1094, 27
        %v1104 = vpop.permute.xlu0 %1103
        %1105 = vrot.lane.b32.xlu0 %v1095, 27
        %v1106 = vpop.permute.xlu0 %1105
        %1107 = vrot.lane.b32.xlu0 %v1096, 27
        %v1108 = vpop.permute.xlu0 %1107
        %v1109 = vsel %vm261, %v1106, %v1108
        %v1110 = vsel %vm261, %v1104, %v1106
        %v1111 = vsel %vm261, %v1102, %v1104
        %v1112 = vsel %vm261, %v1100, %v1102
        %v1113 = vsel %vm261, %v1108, %v1100
        %1114 = vst [vmem:[#allocation2] sm:$0xff] %v1113
        %1115 = vst [vmem:[#allocation2 + $0x8] sm:$0xff] %v1112
        %1116 = vst [vmem:[#allocation2 + $0x10] sm:$0xff] %v1111
        %1117 = vst [vmem:[#allocation2 + $0x18] sm:$0xff] %v1110
        %1118 = vst [vmem:[#allocation2 + $0x20] sm:$0xff] %v1109
        %1119 = vrot.lane.b32.xlu0 %v1092, 26
        %v1120 = vpop.permute.xlu0 %1119
        %1121 = vrot.lane.b32.xlu0 %v1093, 26
        %v1122 = vpop.permute.xlu0 %1121
        %1123 = vrot.lane.b32.xlu0 %v1094, 26
        %v1124 = vpop.permute.xlu0 %1123
        %1125 = vrot.lane.b32.xlu0 %v1095, 26
        %v1126 = vpop.permute.xlu0 %1125
        %1127 = vrot.lane.b32.xlu0 %v1096, 26
        %v1128 = vpop.permute.xlu0 %1127
        %v1129 = vsel %vm282, %v1126, %v1128
        %v1130 = vsel %vm282, %v1124, %v1126
        %v1131 = vsel %vm282, %v1122, %v1124
        %v1132 = vsel %vm282, %v1120, %v1122
        %v1133 = vsel %vm282, %v1128, %v1120
        %1134 = vst [vmem:[#allocation2 + $0x28] sm:$0xff] %v1133
        %1135 = vst [vmem:[#allocation2 + $0x30] sm:$0xff] %v1132
        %1136 = vst [vmem:[#allocation2 + $0x38] sm:$0xff] %v1131
        %1137 = vst [vmem:[#allocation2 + $0x40] sm:$0xff] %v1130
        %1138 = vst [vmem:[#allocation2 + $0x48] sm:$0xff] %v1129
        %1139 = vrot.lane.b32.xlu0 %v1092, 25
        %v1140 = vpop.permute.xlu0 %1139
        %1141 = vrot.lane.b32.xlu0 %v1093, 25
        %v1142 = vpop.permute.xlu0 %1141
        %1143 = vrot.lane.b32.xlu0 %v1094, 25
        %v1144 = vpop.permute.xlu0 %1143
        %1145 = vrot.lane.b32.xlu0 %v1095, 25
        %v1146 = vpop.permute.xlu0 %1145
        %1147 = vrot.lane.b32.xlu0 %v1096, 25
        %v1148 = vpop.permute.xlu0 %1147
        %v1149 = vsel %vm303, %v1146, %v1148
        %v1150 = vsel %vm303, %v1144, %v1146
        %v1151 = vsel %vm303, %v1142, %v1144
        %v1152 = vsel %vm303, %v1140, %v1142
        %v1153 = vsel %vm303, %v1148, %v1140
        %1154 = vst [vmem:[#allocation2 + $0x50] sm:$0xff] %v1153
        %1155 = vst [vmem:[#allocation2 + $0x58] sm:$0xff] %v1152
        %1156 = vst [vmem:[#allocation2 + $0x60] sm:$0xff] %v1151
        %1157 = vst [vmem:[#allocation2 + $0x68] sm:$0xff] %v1150
        %1158 = vst [vmem:[#allocation2 + $0x70] sm:$0xff] %v1149
        %1159 = vrot.lane.b32.xlu0 %v1092, 1
        %v1160 = vpop.permute.xlu0 %1159
        %1161 = vrot.lane.b32.xlu0 %v1093, 1
        %v1162 = vpop.permute.xlu0 %1161
        %1163 = vrot.lane.b32.xlu0 %v1094, 1
        %v1164 = vpop.permute.xlu0 %1163
        %1165 = vrot.lane.b32.xlu0 %v1095, 1
        %v1166 = vpop.permute.xlu0 %1165
        %1167 = vrot.lane.b32.xlu0 %v1096, 1
        %v1168 = vpop.permute.xlu0 %1167
        %v1169 = vsel %vm324, %v1166, %v1168
        %v1170 = vsel %vm324, %v1164, %v1166
        %v1171 = vsel %vm324, %v1162, %v1164
        %v1172 = vsel %vm324, %v1160, %v1162
        %v1173 = vsel %vm324, %v1168, %v1160
        %1174 = vst [vmem:[#allocation2 + $0x78] sm:$0xff] %v1173
        %1175 = vst [vmem:[#allocation2 + $0x80] sm:$0xff] %v1172
        %1176 = vst [vmem:[#allocation2 + $0x88] sm:$0xff] %v1171
        %1177 = vst [vmem:[#allocation2 + $0x90] sm:$0xff] %v1170
        %1178 = vst [vmem:[#allocation2 + $0x98] sm:$0xff] %v1169
        %1179 = vst [vmem:[#allocation2 + $0xa0] sm:$0xff] %v1092
        %1180 = vst [vmem:[#allocation2 + $0xa8] sm:$0xff] %v1093
        %1181 = vst [vmem:[#allocation2 + $0xb0] sm:$0xff] %v1094
        %1182 = vst [vmem:[#allocation2 + $0xb8] sm:$0xff] %v1095
        %1183 = vst [vmem:[#allocation2 + $0xc0] sm:$0xff] %v1096
        %1184 = vrot.lane.b32.xlu0 %v1092, 127
        %v1185 = vpop.permute.xlu0 %1184
        %1186 = vrot.lane.b32.xlu0 %v1093, 127
        %v1187 = vpop.permute.xlu0 %1186
        %1188 = vrot.lane.b32.xlu0 %v1094, 127
        %v1189 = vpop.permute.xlu0 %1188
        %1190 = vrot.lane.b32.xlu0 %v1095, 127
        %v1191 = vpop.permute.xlu0 %1190
        %1192 = vrot.lane.b32.xlu0 %v1096, 127
        %v1193 = vpop.permute.xlu0 %1192
        %v1194 = vsel %vm350, %v1191, %v1193
        %v1195 = vsel %vm350, %v1189, %v1191
        %v1196 = vsel %vm350, %v1187, %v1189
        %v1197 = vsel %vm350, %v1185, %v1187
        %v1198 = vsel %vm350, %v1193, %v1185
        %1199 = vst [vmem:[#allocation2 + $0xc8] sm:$0xff] %v1197
        %1200 = vst [vmem:[#allocation2 + $0xd0] sm:$0xff] %v1196
        %1201 = vst [vmem:[#allocation2 + $0xd8] sm:$0xff] %v1195
        %1202 = vst [vmem:[#allocation2 + $0xe0] sm:$0xff] %v1194
        %1203 = vst [vmem:[#allocation2 + $0xe8] sm:$0xff] %v1198
        %1204 = vrot.lane.b32.xlu0 %v1092, 103
        %v1205 = vpop.permute.xlu0 %1204
        %1206 = vrot.lane.b32.xlu0 %v1093, 103
        %v1207 = vpop.permute.xlu0 %1206
        %1208 = vrot.lane.b32.xlu0 %v1094, 103
        %v1209 = vpop.permute.xlu0 %1208
        %1210 = vrot.lane.b32.xlu0 %v1095, 103
        %v1211 = vpop.permute.xlu0 %1210
        %1212 = vrot.lane.b32.xlu0 %v1096, 103
        %v1213 = vpop.permute.xlu0 %1212
        %v1214 = vsel %vm371, %v1211, %v1213
        %v1215 = vsel %vm371, %v1209, %v1211
        %v1216 = vsel %vm371, %v1207, %v1209
        %v1217 = vsel %vm371, %v1205, %v1207
        %v1218 = vsel %vm371, %v1213, %v1205
        %1219 = vst [vmem:[#allocation2 + $0xf0] sm:$0xff] %v1217
        %1220 = vst [vmem:[#allocation2 + $0xf8] sm:$0xff] %v1216
        %1221 = vst [vmem:[#allocation2 + $0x100] sm:$0xff] %v1215
        %1222 = vst [vmem:[#allocation2 + $0x108] sm:$0xff] %v1214
        %1223 = vst [vmem:[#allocation2 + $0x110] sm:$0xff] %v1218
        %1224 = vrot.lane.b32.xlu0 %v1092, 102
        %v1225 = vpop.permute.xlu0 %1224
        %1226 = vrot.lane.b32.xlu0 %v1093, 102
        %v1227 = vpop.permute.xlu0 %1226
        %1228 = vrot.lane.b32.xlu0 %v1094, 102
        %v1229 = vpop.permute.xlu0 %1228
        %1230 = vrot.lane.b32.xlu0 %v1095, 102
        %v1231 = vpop.permute.xlu0 %1230
        %1232 = vrot.lane.b32.xlu0 %v1096, 102
        %v1233 = vpop.permute.xlu0 %1232
        %v1234 = vsel %vm392, %v1231, %v1233
        %v1235 = vsel %vm392, %v1229, %v1231
        %v1236 = vsel %vm392, %v1227, %v1229
        %v1237 = vsel %vm392, %v1225, %v1227
        %v1238 = vsel %vm392, %v1233, %v1225
        %1239 = vst [vmem:[#allocation2 + $0x118] sm:$0xff] %v1237
        %1240 = vst [vmem:[#allocation2 + $0x120] sm:$0xff] %v1236
        %1241 = vst [vmem:[#allocation2 + $0x128] sm:$0xff] %v1235
        %1242 = vst [vmem:[#allocation2 + $0x130] sm:$0xff] %v1234
        %1243 = vst [vmem:[#allocation2 + $0x138] sm:$0xff] %v1238
        %1244 = vrot.lane.b32.xlu0 %v1092, 101
        %v1245 = vpop.permute.xlu0 %1244
        %1246 = vrot.lane.b32.xlu0 %v1093, 101
        %v1247 = vpop.permute.xlu0 %1246
        %1248 = vrot.lane.b32.xlu0 %v1094, 101
        %v1249 = vpop.permute.xlu0 %1248
        %1250 = vrot.lane.b32.xlu0 %v1095, 101
        %v1251 = vpop.permute.xlu0 %1250
        %1252 = vrot.lane.b32.xlu0 %v1096, 101
        %v1253 = vpop.permute.xlu0 %1252
        %v1254 = vsel %vm413, %v1251, %v1253
        %v1255 = vsel %vm413, %v1249, %v1251
        %v1256 = vsel %vm413, %v1247, %v1249
        %v1257 = vsel %vm413, %v1245, %v1247
        %v1258 = vsel %vm413, %v1253, %v1245
        %1259 = vst [vmem:[#allocation2 + $0x140] sm:$0xff] %v1257
        %1260 = vst [vmem:[#allocation2 + $0x148] sm:$0xff] %v1256
        %1261 = vst [vmem:[#allocation2 + $0x150] sm:$0xff] %v1255
        %1262 = vst [vmem:[#allocation2 + $0x158] sm:$0xff] %v1254
        %1263 = vst [vmem:[#allocation2 + $0x160] sm:$0xff] %v1258
        %v1264 = vld [vmem:[#allocation2] sm:$0xff]
        %v1265 = vld [vmem:[#allocation2 + $0x8] sm:$0xff]
        %v1266 = vld [vmem:[#allocation2 + $0x10] sm:$0xff]
        %v1267 = vld [vmem:[#allocation2 + $0x18] sm:$0xff]
        %v1268 = vld [vmem:[#allocation2 + $0x20] sm:$0xff]
        %v1269 = vld [vmem:[#allocation2 + $0x28] sm:$0xff]
        %v1270 = vld [vmem:[#allocation2 + $0x30] sm:$0xff]
        %v1271 = vld [vmem:[#allocation2 + $0x38] sm:$0xff]
        %v1272 = vld [vmem:[#allocation2 + $0x40] sm:$0xff]
        %v1273 = vld [vmem:[#allocation2 + $0x48] sm:$0xff]
        %v1274 = vld [vmem:[#allocation2 + $0x50] sm:$0xff]
        %v1275 = vld [vmem:[#allocation2 + $0x58] sm:$0xff]
        %v1276 = vld [vmem:[#allocation2 + $0x60] sm:$0xff]
        %v1277 = vld [vmem:[#allocation2 + $0x68] sm:$0xff]
        %v1278 = vld [vmem:[#allocation2 + $0x70] sm:$0xff]
        %v1279 = vld [vmem:[#allocation2 + $0x78] sm:$0xff]
        %v1280 = vld [vmem:[#allocation2 + $0x80] sm:$0xff]
        %v1281 = vld [vmem:[#allocation2 + $0x88] sm:$0xff]
        %v1282 = vld [vmem:[#allocation2 + $0x90] sm:$0xff]
        %v1283 = vld [vmem:[#allocation2 + $0x98] sm:$0xff]
        %v1284 = vld [vmem:[#allocation2 + $0xa0] sm:$0xff]
        %v1285 = vld [vmem:[#allocation2 + $0xa8] sm:$0xff]
        %v1286 = vld [vmem:[#allocation2 + $0xb0] sm:$0xff]
        %v1287 = vld [vmem:[#allocation2 + $0xb8] sm:$0xff]
        %v1288 = vld [vmem:[#allocation2 + $0xc0] sm:$0xff]
        %v1289 = vld [vmem:[#allocation2 + $0xc8] sm:$0xff]
        %v1290 = vld [vmem:[#allocation2 + $0xd0] sm:$0xff]
        %v1291 = vld [vmem:[#allocation2 + $0xd8] sm:$0xff]
        %v1292 = vld [vmem:[#allocation2 + $0xe0] sm:$0xff]
        %v1293 = vld [vmem:[#allocation2 + $0xe8] sm:$0xff]
        %v1294 = vld [vmem:[#allocation2 + $0xf0] sm:$0xff]
        %v1295 = vld [vmem:[#allocation2 + $0xf8] sm:$0xff]
        %v1296 = vld [vmem:[#allocation2 + $0x100] sm:$0xff]
        %v1297 = vld [vmem:[#allocation2 + $0x108] sm:$0xff]
        %v1298 = vld [vmem:[#allocation2 + $0x110] sm:$0xff]
        %v1299 = vld [vmem:[#allocation2 + $0x118] sm:$0xff]
        %v1300 = vld [vmem:[#allocation2 + $0x120] sm:$0xff]
        %v1301 = vld [vmem:[#allocation2 + $0x128] sm:$0xff]
        %v1302 = vld [vmem:[#allocation2 + $0x130] sm:$0xff]
        %v1303 = vld [vmem:[#allocation2 + $0x138] sm:$0xff]
        %v1304 = vld [vmem:[#allocation2 + $0x140] sm:$0xff]
        %v1305 = vld [vmem:[#allocation2 + $0x148] sm:$0xff]
        %v1306 = vld [vmem:[#allocation2 + $0x150] sm:$0xff]
        %v1307 = vld [vmem:[#allocation2 + $0x158] sm:$0xff]
        %v1308 = vld [vmem:[#allocation2 + $0x160] sm:$0xff]
        %1310 = vset.pattern.permute.xlu0 0
        %1311 = vperm.xlu0 %1310, %v1098
        %v1312 = vpop.permute.xlu0 %1311
        %v1315 = vsel %vm474, %v1097, 0
        %1317 = vmatpush.msra.mxu0 0.0
        %1318 = vmatpush.msra.mxu0 0.0
        %1319 = vmatpush.msra.mxu0 0.0
        %1320 = vmatpush.msra.mxu0 0.0
        %1321 = vmatpush.msra.mxu0 0.0
        %1322 = vmatpush.msra.mxu0 0.0
        %1323 = vmatpush.msra.mxu0 0.0
        %1324 = vmatpush.msra.mxu0 %v1304
        %1325 = vmatpush.msra.mxu0 %v1299
        %1326 = vmatpush.msra.mxu0 %v1294
        %1327 = vmatpush.msra.mxu0 %v1289
        %1328 = vmatpush.msra.mxu0 %v1284
        %1329 = vmatpush.msra.mxu0 %v1279
        %1330 = vmatpush.msra.mxu0 %v1274
        %1331 = vmatpush.msra.mxu0 %v1269
        %1332 = vmatpush.msra.mxu0 %v1264
        %1333 = vmatmul.f32.gmra.mxu0 %v1315
        %v1334 = vpop.f32.mrf.mxu0
        %v1335 = vadd.f32 %v1312, %v1334
        %1336 = vdwg.mxu0
        %1337 = vmatpush.msra.mxu0 0.0
        %1338 = vmatpush.msra.mxu0 0.0
        %1339 = vmatpush.msra.mxu0 0.0
        %1340 = vmatpush.msra.mxu0 0.0
        %1341 = vmatpush.msra.mxu0 0.0
        %1342 = vmatpush.msra.mxu0 0.0
        %1343 = vmatpush.msra.mxu0 0.0
        %1344 = vmatpush.msra.mxu0 %v1305
        %1345 = vmatpush.msra.mxu0 %v1300
        %1346 = vmatpush.msra.mxu0 %v1295
        %1347 = vmatpush.msra.mxu0 %v1290
        %1348 = vmatpush.msra.mxu0 %v1285
        %1349 = vmatpush.msra.mxu0 %v1280
        %1350 = vmatpush.msra.mxu0 %v1275
        %1351 = vmatpush.msra.mxu0 %v1270
        %1352 = vmatpush.msra.mxu0 %v1265
        %1353 = vmatmul.f32.gmra.mxu0 %v1315
        %v1354 = vpop.f32.mrf.mxu0
        %v1355 = vadd.f32 %v1312, %v1354
        %1356 = vdwg.mxu0
        %1357 = vmatpush.msra.mxu0 0.0
        %1358 = vmatpush.msra.mxu0 0.0
        %1359 = vmatpush.msra.mxu0 0.0
        %1360 = vmatpush.msra.mxu0 0.0
        %1361 = vmatpush.msra.mxu0 0.0
        %1362 = vmatpush.msra.mxu0 0.0
        %1363 = vmatpush.msra.mxu0 0.0
        %1364 = vmatpush.msra.mxu0 %v1306
        %1365 = vmatpush.msra.mxu0 %v1301
        %1366 = vmatpush.msra.mxu0 %v1296
        %1367 = vmatpush.msra.mxu0 %v1291
        %1368 = vmatpush.msra.mxu0 %v1286
        %1369 = vmatpush.msra.mxu0 %v1281
        %1370 = vmatpush.msra.mxu0 %v1276
        %1371 = vmatpush.msra.mxu0 %v1271
        %1372 = vmatpush.msra.mxu0 %v1266
        %1373 = vmatmul.f32.gmra.mxu0 %v1315
        %v1374 = vpop.f32.mrf.mxu0
        %v1375 = vadd.f32 %v1312, %v1374
        %1376 = vdwg.mxu0
        %1377 = vmatpush.msra.mxu0 0.0
        %1378 = vmatpush.msra.mxu0 0.0
        %1379 = vmatpush.msra.mxu0 0.0
        %1380 = vmatpush.msra.mxu0 0.0
        %1381 = vmatpush.msra.mxu0 0.0
        %1382 = vmatpush.msra.mxu0 0.0
        %1383 = vmatpush.msra.mxu0 0.0
        %1384 = vmatpush.msra.mxu0 %v1307
        %1385 = vmatpush.msra.mxu0 %v1302
        %1386 = vmatpush.msra.mxu0 %v1297
        %1387 = vmatpush.msra.mxu0 %v1292
        %1388 = vmatpush.msra.mxu0 %v1287
        %1389 = vmatpush.msra.mxu0 %v1282
        %1390 = vmatpush.msra.mxu0 %v1277
        %1391 = vmatpush.msra.mxu0 %v1272
        %1392 = vmatpush.msra.mxu0 %v1267
        %1393 = vmatmul.f32.gmra.mxu0 %v1315
        %v1394 = vpop.f32.mrf.mxu0
        %v1395 = vadd.f32 %v1312, %v1394
        %1396 = vdwg.mxu0
        %1397 = vmatpush.msra.mxu0 0.0
        %1398 = vmatpush.msra.mxu0 0.0
        %1399 = vmatpush.msra.mxu0 0.0
        %1400 = vmatpush.msra.mxu0 0.0
        %1401 = vmatpush.msra.mxu0 0.0
        %1402 = vmatpush.msra.mxu0 0.0
        %1403 = vmatpush.msra.mxu0 0.0
        %1404 = vmatpush.msra.mxu0 %v1308
        %1405 = vmatpush.msra.mxu0 %v1303
        %1406 = vmatpush.msra.mxu0 %v1298
        %1407 = vmatpush.msra.mxu0 %v1293
        %1408 = vmatpush.msra.mxu0 %v1288
        %1409 = vmatpush.msra.mxu0 %v1283
        %1410 = vmatpush.msra.mxu0 %v1278
        %1411 = vmatpush.msra.mxu0 %v1273
        %1412 = vmatpush.msra.mxu0 %v1268
        %1413 = vmatmul.f32.gmra.mxu0 %v1315
        %v1414 = vpop.f32.mrf.mxu0
        %v1415 = vadd.f32 %v1312, %v1414
        %1416 = vdwg.mxu0
        %vm1417 = vcmp.ge.f32.partialorder %v1335, 0.0
        %vm1418 = vcmp.ge.f32.partialorder %v1355, 0.0
        %vm1419 = vcmp.ge.f32.partialorder %v1375, 0.0
        %vm1420 = vcmp.ge.f32.partialorder %v1395, 0.0
        %vm1421 = vcmp.ge.f32.partialorder %v1415, 0.0
        %v1422 = vmul.f32 %v1335, 0.2
        %v1423 = vmul.f32 %v1355, 0.2
        %v1424 = vmul.f32 %v1375, 0.2
        %v1425 = vmul.f32 %v1395, 0.2
        %v1426 = vmul.f32 %v1415, 0.2
        %v1427 = vsel %vm1417, %v1335, %v1422
        %v1428 = vsel %vm1418, %v1355, %v1423
        %v1429 = vsel %vm1419, %v1375, %v1424
        %v1430 = vsel %vm1420, %v1395, %v1425
        %v1431 = vsel %vm1421, %v1415, %v1426
        %v1432 = vmul.f32 %v1427, %v594
        %v1433 = vmul.f32 %v1428, %v595
        %v1434 = vmul.f32 %v1429, %v596
        %v1435 = vmul.f32 %v1430, %v597
        %v1436 = vmul.f32 %v1431, %v598
        %v1437 = vld [vmem:[#allocation4 + $0x60] sm:$0xff]
        %v1438 = vld [vmem:[%s2 + $0x20] sm:$0xff]
        %1439 = vrot.lane.b32.xlu0 %v1432, 81
        %v1440 = vpop.permute.xlu0 %1439
        %1441 = vrot.lane.b32.xlu0 %v1433, 81
        %v1442 = vpop.permute.xlu0 %1441
        %1443 = vrot.lane.b32.xlu0 %v1434, 81
        %v1444 = vpop.permute.xlu0 %1443
        %1445 = vrot.lane.b32.xlu0 %v1435, 81
        %v1446 = vpop.permute.xlu0 %1445
        %1447 = vrot.lane.b32.xlu0 %v1436, 81
        %v1448 = vpop.permute.xlu0 %1447
        %vm1449 = vcmp.lt.s32.totalorder %v260, 81
        %v1450 = vsel %vm1449, %v1446, %v1448
        %v1451 = vsel %vm1449, %v1444, %v1446
        %v1452 = vsel %vm1449, %v1442, %v1444
        %v1453 = vsel %vm1449, %v1440, %v1442
        %v1454 = vsel %vm1449, %v1448, %v1440
        %1455 = vst [vmem:[#allocation2] sm:$0xff] %v1454
        %1456 = vst [vmem:[#allocation2 + $0x8] sm:$0xff] %v1453
        %1457 = vst [vmem:[#allocation2 + $0x10] sm:$0xff] %v1452
        %1458 = vst [vmem:[#allocation2 + $0x18] sm:$0xff] %v1451
        %1459 = vst [vmem:[#allocation2 + $0x20] sm:$0xff] %v1450
        %1460 = vrot.lane.b32.xlu0 %v1432, 78
        %v1461 = vpop.permute.xlu0 %1460
        %1462 = vrot.lane.b32.xlu0 %v1433, 78
        %v1463 = vpop.permute.xlu0 %1462
        %1464 = vrot.lane.b32.xlu0 %v1434, 78
        %v1465 = vpop.permute.xlu0 %1464
        %1466 = vrot.lane.b32.xlu0 %v1435, 78
        %v1467 = vpop.permute.xlu0 %1466
        %1468 = vrot.lane.b32.xlu0 %v1436, 78
        %v1469 = vpop.permute.xlu0 %1468
        %vm1470 = vcmp.lt.s32.totalorder %v260, 78
        %v1471 = vsel %vm1470, %v1467, %v1469
        %v1472 = vsel %vm1470, %v1465, %v1467
        %v1473 = vsel %vm1470, %v1463, %v1465
        %v1474 = vsel %vm1470, %v1461, %v1463
        %v1475 = vsel %vm1470, %v1469, %v1461
        %1476 = vst [vmem:[#allocation2 + $0x28] sm:$0xff] %v1475
        %1477 = vst [vmem:[#allocation2 + $0x30] sm:$0xff] %v1474
        %1478 = vst [vmem:[#allocation2 + $0x38] sm:$0xff] %v1473
        %1479 = vst [vmem:[#allocation2 + $0x40] sm:$0xff] %v1472
        %1480 = vst [vmem:[#allocation2 + $0x48] sm:$0xff] %v1471
        %1481 = vrot.lane.b32.xlu0 %v1432, 75
        %v1482 = vpop.permute.xlu0 %1481
        %1483 = vrot.lane.b32.xlu0 %v1433, 75
        %v1484 = vpop.permute.xlu0 %1483
        %1485 = vrot.lane.b32.xlu0 %v1434, 75
        %v1486 = vpop.permute.xlu0 %1485
        %1487 = vrot.lane.b32.xlu0 %v1435, 75
        %v1488 = vpop.permute.xlu0 %1487
        %1489 = vrot.lane.b32.xlu0 %v1436, 75
        %v1490 = vpop.permute.xlu0 %1489
        %vm1491 = vcmp.lt.s32.totalorder %v260, 75
        %v1492 = vsel %vm1491, %v1488, %v1490
        %v1493 = vsel %vm1491, %v1486, %v1488
        %v1494 = vsel %vm1491, %v1484, %v1486
        %v1495 = vsel %vm1491, %v1482, %v1484
        %v1496 = vsel %vm1491, %v1490, %v1482
        %1497 = vst [vmem:[#allocation2 + $0x50] sm:$0xff] %v1496
        %1498 = vst [vmem:[#allocation2 + $0x58] sm:$0xff] %v1495
        %1499 = vst [vmem:[#allocation2 + $0x60] sm:$0xff] %v1494
        %1500 = vst [vmem:[#allocation2 + $0x68] sm:$0xff] %v1493
        %1501 = vst [vmem:[#allocation2 + $0x70] sm:$0xff] %v1492
        %1502 = vrot.lane.b32.xlu0 %v1432, 3
        %v1503 = vpop.permute.xlu0 %1502
        %1504 = vrot.lane.b32.xlu0 %v1433, 3
        %v1505 = vpop.permute.xlu0 %1504
        %1506 = vrot.lane.b32.xlu0 %v1434, 3
        %v1507 = vpop.permute.xlu0 %1506
        %1508 = vrot.lane.b32.xlu0 %v1435, 3
        %v1509 = vpop.permute.xlu0 %1508
        %1510 = vrot.lane.b32.xlu0 %v1436, 3
        %v1511 = vpop.permute.xlu0 %1510
        %vm1512 = vcmp.lt.s32.totalorder %v260, 3
        %v1513 = vsel %vm1512, %v1509, %v1511
        %v1514 = vsel %vm1512, %v1507, %v1509
        %v1515 = vsel %vm1512, %v1505, %v1507
        %v1516 = vsel %vm1512, %v1503, %v1505
        %v1517 = vsel %vm1512, %v1511, %v1503
        %1518 = vst [vmem:[#allocation2 + $0x78] sm:$0xff] %v1517
        %1519 = vst [vmem:[#allocation2 + $0x80] sm:$0xff] %v1516
        %1520 = vst [vmem:[#allocation2 + $0x88] sm:$0xff] %v1515
        %1521 = vst [vmem:[#allocation2 + $0x90] sm:$0xff] %v1514
        %1522 = vst [vmem:[#allocation2 + $0x98] sm:$0xff] %v1513
        %1523 = vst [vmem:[#allocation2 + $0xa0] sm:$0xff] %v1432
        %1524 = vst [vmem:[#allocation2 + $0xa8] sm:$0xff] %v1433
        %1525 = vst [vmem:[#allocation2 + $0xb0] sm:$0xff] %v1434
        %1526 = vst [vmem:[#allocation2 + $0xb8] sm:$0xff] %v1435
        %1527 = vst [vmem:[#allocation2 + $0xc0] sm:$0xff] %v1436
        %1528 = vrot.lane.b32.xlu0 %v1432, 125
        %v1529 = vpop.permute.xlu0 %1528
        %1530 = vrot.lane.b32.xlu0 %v1433, 125
        %v1531 = vpop.permute.xlu0 %1530
        %1532 = vrot.lane.b32.xlu0 %v1434, 125
        %v1533 = vpop.permute.xlu0 %1532
        %1534 = vrot.lane.b32.xlu0 %v1435, 125
        %v1535 = vpop.permute.xlu0 %1534
        %1536 = vrot.lane.b32.xlu0 %v1436, 125
        %v1537 = vpop.permute.xlu0 %1536
        %vm1538 = vcmp.lt.s32.totalorder %v260, 125
        %v1539 = vsel %vm1538, %v1535, %v1537
        %v1540 = vsel %vm1538, %v1533, %v1535
        %v1541 = vsel %vm1538, %v1531, %v1533
        %v1542 = vsel %vm1538, %v1529, %v1531
        %v1543 = vsel %vm1538, %v1537, %v1529
        %1544 = vst [vmem:[#allocation2 + $0xc8] sm:$0xff] %v1542
        %1545 = vst [vmem:[#allocation2 + $0xd0] sm:$0xff] %v1541
        %1546 = vst [vmem:[#allocation2 + $0xd8] sm:$0xff] %v1540
        %1547 = vst [vmem:[#allocation2 + $0xe0] sm:$0xff] %v1539
        %1548 = vst [vmem:[#allocation2 + $0xe8] sm:$0xff] %v1543
        %1549 = vrot.lane.b32.xlu0 %v1432, 53
        %v1550 = vpop.permute.xlu0 %1549
        %1551 = vrot.lane.b32.xlu0 %v1433, 53
        %v1552 = vpop.permute.xlu0 %1551
        %1553 = vrot.lane.b32.xlu0 %v1434, 53
        %v1554 = vpop.permute.xlu0 %1553
        %1555 = vrot.lane.b32.xlu0 %v1435, 53
        %v1556 = vpop.permute.xlu0 %1555
        %1557 = vrot.lane.b32.xlu0 %v1436, 53
        %v1558 = vpop.permute.xlu0 %1557
        %vm1559 = vcmp.lt.s32.totalorder %v260, 53
        %v1560 = vsel %vm1559, %v1556, %v1558
        %v1561 = vsel %vm1559, %v1554, %v1556
        %v1562 = vsel %vm1559, %v1552, %v1554
        %v1563 = vsel %vm1559, %v1550, %v1552
        %v1564 = vsel %vm1559, %v1558, %v1550
        %1565 = vst [vmem:[#allocation2 + $0xf0] sm:$0xff] %v1563
        %1566 = vst [vmem:[#allocation2 + $0xf8] sm:$0xff] %v1562
        %1567 = vst [vmem:[#allocation2 + $0x100] sm:$0xff] %v1561
        %1568 = vst [vmem:[#allocation2 + $0x108] sm:$0xff] %v1560
        %1569 = vst [vmem:[#allocation2 + $0x110] sm:$0xff] %v1564
        %1570 = vrot.lane.b32.xlu0 %v1432, 50
        %v1571 = vpop.permute.xlu0 %1570
        %1572 = vrot.lane.b32.xlu0 %v1433, 50
        %v1573 = vpop.permute.xlu0 %1572
        %1574 = vrot.lane.b32.xlu0 %v1434, 50
        %v1575 = vpop.permute.xlu0 %1574
        %1576 = vrot.lane.b32.xlu0 %v1435, 50
        %v1577 = vpop.permute.xlu0 %1576
        %1578 = vrot.lane.b32.xlu0 %v1436, 50
        %v1579 = vpop.permute.xlu0 %1578
        %vm1580 = vcmp.lt.s32.totalorder %v260, 50
        %v1581 = vsel %vm1580, %v1577, %v1579
        %v1582 = vsel %vm1580, %v1575, %v1577
        %v1583 = vsel %vm1580, %v1573, %v1575
        %v1584 = vsel %vm1580, %v1571, %v1573
        %v1585 = vsel %vm1580, %v1579, %v1571
        %1586 = vst [vmem:[#allocation2 + $0x118] sm:$0xff] %v1584
        %1587 = vst [vmem:[#allocation2 + $0x120] sm:$0xff] %v1583
        %1588 = vst [vmem:[#allocation2 + $0x128] sm:$0xff] %v1582
        %1589 = vst [vmem:[#allocation2 + $0x130] sm:$0xff] %v1581
        %1590 = vst [vmem:[#allocation2 + $0x138] sm:$0xff] %v1585
        %1591 = vrot.lane.b32.xlu0 %v1432, 47
        %v1592 = vpop.permute.xlu0 %1591
        %1593 = vrot.lane.b32.xlu0 %v1433, 47
        %v1594 = vpop.permute.xlu0 %1593
        %1595 = vrot.lane.b32.xlu0 %v1434, 47
        %v1596 = vpop.permute.xlu0 %1595
        %1597 = vrot.lane.b32.xlu0 %v1435, 47
        %v1598 = vpop.permute.xlu0 %1597
        %1599 = vrot.lane.b32.xlu0 %v1436, 47
        %v1600 = vpop.permute.xlu0 %1599
        %vm1601 = vcmp.lt.s32.totalorder %v260, 47
        %v1602 = vsel %vm1601, %v1598, %v1600
        %v1603 = vsel %vm1601, %v1596, %v1598
        %v1604 = vsel %vm1601, %v1594, %v1596
        %v1605 = vsel %vm1601, %v1592, %v1594
        %v1606 = vsel %vm1601, %v1600, %v1592
        %1607 = vst [vmem:[#allocation2 + $0x140] sm:$0xff] %v1605
        %1608 = vst [vmem:[#allocation2 + $0x148] sm:$0xff] %v1604
        %1609 = vst [vmem:[#allocation2 + $0x150] sm:$0xff] %v1603
        %1610 = vst [vmem:[#allocation2 + $0x158] sm:$0xff] %v1602
        %1611 = vst [vmem:[#allocation2 + $0x160] sm:$0xff] %v1606
        %v1612 = vld [vmem:[#allocation2] sm:$0xff]
        %v1613 = vld [vmem:[#allocation2 + $0x8] sm:$0xff]
        %v1614 = vld [vmem:[#allocation2 + $0x10] sm:$0xff]
        %v1615 = vld [vmem:[#allocation2 + $0x18] sm:$0xff]
        %v1616 = vld [vmem:[#allocation2 + $0x20] sm:$0xff]
        %v1617 = vld [vmem:[#allocation2 + $0x28] sm:$0xff]
        %v1618 = vld [vmem:[#allocation2 + $0x30] sm:$0xff]
        %v1619 = vld [vmem:[#allocation2 + $0x38] sm:$0xff]
        %v1620 = vld [vmem:[#allocation2 + $0x40] sm:$0xff]
        %v1621 = vld [vmem:[#allocation2 + $0x48] sm:$0xff]
        %v1622 = vld [vmem:[#allocation2 + $0x50] sm:$0xff]
        %v1623 = vld [vmem:[#allocation2 + $0x58] sm:$0xff]
        %v1624 = vld [vmem:[#allocation2 + $0x60] sm:$0xff]
        %v1625 = vld [vmem:[#allocation2 + $0x68] sm:$0xff]
        %v1626 = vld [vmem:[#allocation2 + $0x70] sm:$0xff]
        %v1627 = vld [vmem:[#allocation2 + $0x78] sm:$0xff]
        %v1628 = vld [vmem:[#allocation2 + $0x80] sm:$0xff]
        %v1629 = vld [vmem:[#allocation2 + $0x88] sm:$0xff]
        %v1630 = vld [vmem:[#allocation2 + $0x90] sm:$0xff]
        %v1631 = vld [vmem:[#allocation2 + $0x98] sm:$0xff]
        %v1632 = vld [vmem:[#allocation2 + $0xa0] sm:$0xff]
        %v1633 = vld [vmem:[#allocation2 + $0xa8] sm:$0xff]
        %v1634 = vld [vmem:[#allocation2 + $0xb0] sm:$0xff]
        %v1635 = vld [vmem:[#allocation2 + $0xb8] sm:$0xff]
        %v1636 = vld [vmem:[#allocation2 + $0xc0] sm:$0xff]
        %v1637 = vld [vmem:[#allocation2 + $0xc8] sm:$0xff]
        %v1638 = vld [vmem:[#allocation2 + $0xd0] sm:$0xff]
        %v1639 = vld [vmem:[#allocation2 + $0xd8] sm:$0xff]
        %v1640 = vld [vmem:[#allocation2 + $0xe0] sm:$0xff]
        %v1641 = vld [vmem:[#allocation2 + $0xe8] sm:$0xff]
        %v1642 = vld [vmem:[#allocation2 + $0xf0] sm:$0xff]
        %v1643 = vld [vmem:[#allocation2 + $0xf8] sm:$0xff]
        %v1644 = vld [vmem:[#allocation2 + $0x100] sm:$0xff]
        %v1645 = vld [vmem:[#allocation2 + $0x108] sm:$0xff]
        %v1646 = vld [vmem:[#allocation2 + $0x110] sm:$0xff]
        %v1647 = vld [vmem:[#allocation2 + $0x118] sm:$0xff]
        %v1648 = vld [vmem:[#allocation2 + $0x120] sm:$0xff]
        %v1649 = vld [vmem:[#allocation2 + $0x128] sm:$0xff]
        %v1650 = vld [vmem:[#allocation2 + $0x130] sm:$0xff]
        %v1651 = vld [vmem:[#allocation2 + $0x138] sm:$0xff]
        %v1652 = vld [vmem:[#allocation2 + $0x140] sm:$0xff]
        %v1653 = vld [vmem:[#allocation2 + $0x148] sm:$0xff]
        %v1654 = vld [vmem:[#allocation2 + $0x150] sm:$0xff]
        %v1655 = vld [vmem:[#allocation2 + $0x158] sm:$0xff]
        %v1656 = vld [vmem:[#allocation2 + $0x160] sm:$0xff]
        %1658 = vset.pattern.permute.xlu0 0
        %1659 = vperm.xlu0 %1658, %v1438
        %v1660 = vpop.permute.xlu0 %1659
        %v1663 = vsel %vm474, %v1437, 0
        %1665 = vmatpush.msra.mxu0 0.0
        %1666 = vmatpush.msra.mxu0 0.0
        %1667 = vmatpush.msra.mxu0 0.0
        %1668 = vmatpush.msra.mxu0 0.0
        %1669 = vmatpush.msra.mxu0 0.0
        %1670 = vmatpush.msra.mxu0 0.0
        %1671 = vmatpush.msra.mxu0 0.0
        %1672 = vmatpush.msra.mxu0 %v1652
        %1673 = vmatpush.msra.mxu0 %v1647
        %1674 = vmatpush.msra.mxu0 %v1642
        %1675 = vmatpush.msra.mxu0 %v1637
        %1676 = vmatpush.msra.mxu0 %v1632
        %1677 = vmatpush.msra.mxu0 %v1627
        %1678 = vmatpush.msra.mxu0 %v1622
        %1679 = vmatpush.msra.mxu0 %v1617
        %1680 = vmatpush.msra.mxu0 %v1612
        %1681 = vmatmul.f32.gmra.mxu0 %v1663
        %v1682 = vpop.f32.mrf.mxu0
        %v1683 = vadd.f32 %v1660, %v1682
        %1684 = vdwg.mxu0
        %1685 = vmatpush.msra.mxu0 0.0
        %1686 = vmatpush.msra.mxu0 0.0
        %1687 = vmatpush.msra.mxu0 0.0
        %1688 = vmatpush.msra.mxu0 0.0
        %1689 = vmatpush.msra.mxu0 0.0
        %1690 = vmatpush.msra.mxu0 0.0
        %1691 = vmatpush.msra.mxu0 0.0
        %1692 = vmatpush.msra.mxu0 %v1653
        %1693 = vmatpush.msra.mxu0 %v1648
        %1694 = vmatpush.msra.mxu0 %v1643
        %1695 = vmatpush.msra.mxu0 %v1638
        %1696 = vmatpush.msra.mxu0 %v1633
        %1697 = vmatpush.msra.mxu0 %v1628
        %1698 = vmatpush.msra.mxu0 %v1623
        %1699 = vmatpush.msra.mxu0 %v1618
        %1700 = vmatpush.msra.mxu0 %v1613
        %1701 = vmatmul.f32.gmra.mxu0 %v1663
        %v1702 = vpop.f32.mrf.mxu0
        %v1703 = vadd.f32 %v1660, %v1702
        %1704 = vdwg.mxu0
        %1705 = vmatpush.msra.mxu0 0.0
        %1706 = vmatpush.msra.mxu0 0.0
        %1707 = vmatpush.msra.mxu0 0.0
        %1708 = vmatpush.msra.mxu0 0.0
        %1709 = vmatpush.msra.mxu0 0.0
        %1710 = vmatpush.msra.mxu0 0.0
        %1711 = vmatpush.msra.mxu0 0.0
        %1712 = vmatpush.msra.mxu0 %v1654
        %1713 = vmatpush.msra.mxu0 %v1649
        %1714 = vmatpush.msra.mxu0 %v1644
        %1715 = vmatpush.msra.mxu0 %v1639
        %1716 = vmatpush.msra.mxu0 %v1634
        %1717 = vmatpush.msra.mxu0 %v1629
        %1718 = vmatpush.msra.mxu0 %v1624
        %1719 = vmatpush.msra.mxu0 %v1619
        %1720 = vmatpush.msra.mxu0 %v1614
        %1721 = vmatmul.f32.gmra.mxu0 %v1663
        %v1722 = vpop.f32.mrf.mxu0
        %v1723 = vadd.f32 %v1660, %v1722
        %1724 = vdwg.mxu0
        %1725 = vmatpush.msra.mxu0 0.0
        %1726 = vmatpush.msra.mxu0 0.0
        %1727 = vmatpush.msra.mxu0 0.0
        %1728 = vmatpush.msra.mxu0 0.0
        %1729 = vmatpush.msra.mxu0 0.0
        %1730 = vmatpush.msra.mxu0 0.0
        %1731 = vmatpush.msra.mxu0 0.0
        %1732 = vmatpush.msra.mxu0 %v1655
        %1733 = vmatpush.msra.mxu0 %v1650
        %1734 = vmatpush.msra.mxu0 %v1645
        %1735 = vmatpush.msra.mxu0 %v1640
        %1736 = vmatpush.msra.mxu0 %v1635
        %1737 = vmatpush.msra.mxu0 %v1630
        %1738 = vmatpush.msra.mxu0 %v1625
        %1739 = vmatpush.msra.mxu0 %v1620
        %1740 = vmatpush.msra.mxu0 %v1615
        %1741 = vmatmul.f32.gmra.mxu0 %v1663
        %v1742 = vpop.f32.mrf.mxu0
        %v1743 = vadd.f32 %v1660, %v1742
        %1744 = vdwg.mxu0
        %1745 = vmatpush.msra.mxu0 0.0
        %1746 = vmatpush.msra.mxu0 0.0
        %1747 = vmatpush.msra.mxu0 0.0
        %1748 = vmatpush.msra.mxu0 0.0
        %1749 = vmatpush.msra.mxu0 0.0
        %1750 = vmatpush.msra.mxu0 0.0
        %1751 = vmatpush.msra.mxu0 0.0
        %1752 = vmatpush.msra.mxu0 %v1656
        %1753 = vmatpush.msra.mxu0 %v1651
        %1754 = vmatpush.msra.mxu0 %v1646
        %1755 = vmatpush.msra.mxu0 %v1641
        %1756 = vmatpush.msra.mxu0 %v1636
        %1757 = vmatpush.msra.mxu0 %v1631
        %1758 = vmatpush.msra.mxu0 %v1626
        %1759 = vmatpush.msra.mxu0 %v1621
        %1760 = vmatpush.msra.mxu0 %v1616
        %1761 = vmatmul.f32.gmra.mxu0 %v1663
        %v1762 = vpop.f32.mrf.mxu0
        %v1763 = vadd.f32 %v1660, %v1762
        %1764 = vdwg.mxu0
        %v1765 = vrot.slane %v241, 1
        %s1766 = vtos %v1765
        %vm1767 = vcmp.ge.f32.partialorder %v1683, 0.0
        %vm1768 = vcmp.ge.f32.partialorder %v1703, 0.0
        %vm1769 = vcmp.ge.f32.partialorder %v1723, 0.0
        %vm1770 = vcmp.ge.f32.partialorder %v1743, 0.0
        %vm1771 = vcmp.ge.f32.partialorder %v1763, 0.0
        %v1772 = vstv %s1766
        %v1773 = vmul.f32 %v1772, %v1683
        %v1774 = vmul.f32 %v1772, %v1703
        %v1775 = vmul.f32 %v1772, %v1723
        %v1776 = vmul.f32 %v1772, %v1743
        %v1777 = vmul.f32 %v1772, %v1763
        %v1778 = vsel %vm1767, %v1683, %v1773
        %v1779 = vsel %vm1768, %v1703, %v1774
        %v1780 = vsel %vm1769, %v1723, %v1775
        %v1781 = vsel %vm1770, %v1743, %v1776
        %v1782 = vsel %vm1771, %v1763, %v1777
        %v1783 = vmul.f32 %v1778, %v594
        %v1784 = vmul.f32 %v1779, %v595
        %v1785 = vmul.f32 %v1780, %v596
        %v1786 = vmul.f32 %v1781, %v597
        %v1787 = vmul.f32 %v1782, %v598
        %1788 = vst [vmem:[#allocation3 + $0x50] sm:$0xff] %v1783
        %1789 = vst [vmem:[#allocation3 + $0x58] sm:$0xff] %v1784
        %1790 = vst [vmem:[#allocation3 + $0x60] sm:$0xff] %v1785
        %1791 = vst [vmem:[#allocation3 + $0x68] sm:$0xff] %v1786
        %1792 = vst [vmem:[#allocation3 + $0x70] sm:$0xff] %v1787
        %v1793 = vld [vmem:[#allocation3 + $0x28] sm:$0xff]
        %v1794 = vld [vmem:[#allocation3 + $0x30] sm:$0xff]
        %v1795 = vld [vmem:[#allocation3 + $0x38] sm:$0xff]
        %v1796 = vld [vmem:[#allocation3 + $0x40] sm:$0xff]
        %v1797 = vld [vmem:[#allocation3 + $0x48] sm:$0xff]
        %v1798 = vld [vmem:[#allocation3 + $0x50] sm:$0xff]
        %v1799 = vld [vmem:[#allocation3 + $0x58] sm:$0xff]
        %v1800 = vld [vmem:[#allocation3 + $0x60] sm:$0xff]
        %v1801 = vld [vmem:[#allocation3 + $0x68] sm:$0xff]
        %v1802 = vld [vmem:[#allocation3 + $0x70] sm:$0xff]
        %v1803 = vld [vmem:[#allocation4 + $0x78] sm:$0xff]
        %v1804 = vld [vmem:[#allocation4 + $0x80] sm:$0xff]
        %v1805 = vld [vmem:[%s2 + $0x28] sm:$0xff]
        %1806 = vrot.lane.b32.xlu0 %v1793, 27
        %v1807 = vpop.permute.xlu0 %1806
        %1808 = vrot.lane.b32.xlu0 %v1798, 27
        %v1809 = vpop.permute.xlu0 %1808
        %1810 = vrot.lane.b32.xlu0 %v1794, 27
        %v1811 = vpop.permute.xlu0 %1810
        %1812 = vrot.lane.b32.xlu0 %v1799, 27
        %v1813 = vpop.permute.xlu0 %1812
        %1814 = vrot.lane.b32.xlu0 %v1795, 27
        %v1815 = vpop.permute.xlu0 %1814
        %1816 = vrot.lane.b32.xlu0 %v1800, 27
        %v1817 = vpop.permute.xlu0 %1816
        %1818 = vrot.lane.b32.xlu0 %v1796, 27
        %v1819 = vpop.permute.xlu0 %1818
        %1820 = vrot.lane.b32.xlu0 %v1801, 27
        %v1821 = vpop.permute.xlu0 %1820
        %1822 = vrot.lane.b32.xlu0 %v1797, 27
        %v1823 = vpop.permute.xlu0 %1822
        %1824 = vrot.lane.b32.xlu0 %v1802, 27
        %v1825 = vpop.permute.xlu0 %1824
        %v1826 = vsel %vm261, %v1819, %v1823
        %v1827 = vsel %vm261, %v1821, %v1825
        %v1828 = vsel %vm261, %v1815, %v1819
        %v1829 = vsel %vm261, %v1817, %v1821
        %v1830 = vsel %vm261, %v1811, %v1815
        %v1831 = vsel %vm261, %v1813, %v1817
        %v1832 = vsel %vm261, %v1807, %v1811
        %v1833 = vsel %vm261, %v1809, %v1813
        %v1834 = vsel %vm261, %v1823, %v1807
        %v1835 = vsel %vm261, %v1825, %v1809
        %1836 = vst [vmem:[#allocation2] sm:$0xff] %v1834
        %1837 = vst [vmem:[#allocation2 + $0x8] sm:$0xff] %v1832
        %1838 = vst [vmem:[#allocation2 + $0x10] sm:$0xff] %v1830
        %1839 = vst [vmem:[#allocation2 + $0x18] sm:$0xff] %v1828
        %1840 = vst [vmem:[#allocation2 + $0x20] sm:$0xff] %v1826
        %1841 = vst [vmem:[#allocation2 + $0x28] sm:$0xff] %v1835
        %1842 = vst [vmem:[#allocation2 + $0x30] sm:$0xff] %v1833
        %1843 = vst [vmem:[#allocation2 + $0x38] sm:$0xff] %v1831
        %1844 = vst [vmem:[#allocation2 + $0x40] sm:$0xff] %v1829
        %1845 = vst [vmem:[#allocation2 + $0x48] sm:$0xff] %v1827
        %1846 = vrot.lane.b32.xlu0 %v1793, 26
        %v1847 = vpop.permute.xlu0 %1846
        %1848 = vrot.lane.b32.xlu0 %v1798, 26
        %v1849 = vpop.permute.xlu0 %1848
        %1850 = vrot.lane.b32.xlu0 %v1794, 26
        %v1851 = vpop.permute.xlu0 %1850
        %1852 = vrot.lane.b32.xlu0 %v1799, 26
        %v1853 = vpop.permute.xlu0 %1852
        %1854 = vrot.lane.b32.xlu0 %v1795, 26
        %v1855 = vpop.permute.xlu0 %1854
        %1856 = vrot.lane.b32.xlu0 %v1800, 26
        %v1857 = vpop.permute.xlu0 %1856
        %1858 = vrot.lane.b32.xlu0 %v1796, 26
        %v1859 = vpop.permute.xlu0 %1858
        %1860 = vrot.lane.b32.xlu0 %v1801, 26
        %v1861 = vpop.permute.xlu0 %1860
        %1862 = vrot.lane.b32.xlu0 %v1797, 26
        %v1863 = vpop.permute.xlu0 %1862
        %1864 = vrot.lane.b32.xlu0 %v1802, 26
        %v1865 = vpop.permute.xlu0 %1864
        %v1866 = vsel %vm282, %v1859, %v1863
        %v1867 = vsel %vm282, %v1861, %v1865
        %v1868 = vsel %vm282, %v1855, %v1859
        %v1869 = vsel %vm282, %v1857, %v1861
        %v1870 = vsel %vm282, %v1851, %v1855
        %v1871 = vsel %vm282, %v1853, %v1857
        %v1872 = vsel %vm282, %v1847, %v1851
        %v1873 = vsel %vm282, %v1849, %v1853
        %v1874 = vsel %vm282, %v1863, %v1847
        %v1875 = vsel %vm282, %v1865, %v1849
        %1876 = vst [vmem:[#allocation2 + $0x50] sm:$0xff] %v1874
        %1877 = vst [vmem:[#allocation2 + $0x58] sm:$0xff] %v1872
        %1878 = vst [vmem:[#allocation2 + $0x60] sm:$0xff] %v1870
        %1879 = vst [vmem:[#allocation2 + $0x68] sm:$0xff] %v1868
        %1880 = vst [vmem:[#allocation2 + $0x70] sm:$0xff] %v1866
        %1881 = vst [vmem:[#allocation2 + $0x78] sm:$0xff] %v1875
        %1882 = vst [vmem:[#allocation2 + $0x80] sm:$0xff] %v1873
        %1883 = vst [vmem:[#allocation2 + $0x88] sm:$0xff] %v1871
        %1884 = vst [vmem:[#allocation2 + $0x90] sm:$0xff] %v1869
        %1885 = vst [vmem:[#allocation2 + $0x98] sm:$0xff] %v1867
        %1886 = vrot.lane.b32.xlu0 %v1793, 25
        %v1887 = vpop.permute.xlu0 %1886
        %1888 = vrot.lane.b32.xlu0 %v1798, 25
        %v1889 = vpop.permute.xlu0 %1888
        %1890 = vrot.lane.b32.xlu0 %v1794, 25
        %v1891 = vpop.permute.xlu0 %1890
        %1892 = vrot.lane.b32.xlu0 %v1799, 25
        %v1893 = vpop.permute.xlu0 %1892
        %1894 = vrot.lane.b32.xlu0 %v1795, 25
        %v1895 = vpop.permute.xlu0 %1894
        %1896 = vrot.lane.b32.xlu0 %v1800, 25
        %v1897 = vpop.permute.xlu0 %1896
        %1898 = vrot.lane.b32.xlu0 %v1796, 25
        %v1899 = vpop.permute.xlu0 %1898
        %1900 = vrot.lane.b32.xlu0 %v1801, 25
        %v1901 = vpop.permute.xlu0 %1900
        %1902 = vrot.lane.b32.xlu0 %v1797, 25
        %v1903 = vpop.permute.xlu0 %1902
        %1904 = vrot.lane.b32.xlu0 %v1802, 25
        %v1905 = vpop.permute.xlu0 %1904
        %v1906 = vsel %vm303, %v1899, %v1903
        %v1907 = vsel %vm303, %v1901, %v1905
        %v1908 = vsel %vm303, %v1895, %v1899
        %v1909 = vsel %vm303, %v1897, %v1901
        %v1910 = vsel %vm303, %v1891, %v1895
        %v1911 = vsel %vm303, %v1893, %v1897
        %v1912 = vsel %vm303, %v1887, %v1891
        %v1913 = vsel %vm303, %v1889, %v1893
        %v1914 = vsel %vm303, %v1903, %v1887
        %v1915 = vsel %vm303, %v1905, %v1889
        %1916 = vst [vmem:[#allocation2 + $0xa0] sm:$0xff] %v1914
        %1917 = vst [vmem:[#allocation2 + $0xa8] sm:$0xff] %v1912
        %1918 = vst [vmem:[#allocation2 + $0xb0] sm:$0xff] %v1910
        %1919 = vst [vmem:[#allocation2 + $0xb8] sm:$0xff] %v1908
        %1920 = vst [vmem:[#allocation2 + $0xc0] sm:$0xff] %v1906
        %1921 = vst [vmem:[#allocation2 + $0xc8] sm:$0xff] %v1915
        %1922 = vst [vmem:[#allocation2 + $0xd0] sm:$0xff] %v1913
        %1923 = vst [vmem:[#allocation2 + $0xd8] sm:$0xff] %v1911
        %1924 = vst [vmem:[#allocation2 + $0xe0] sm:$0xff] %v1909
        %1925 = vst [vmem:[#allocation2 + $0xe8] sm:$0xff] %v1907
        %1926 = vrot.lane.b32.xlu0 %v1793, 1
        %v1927 = vpop.permute.xlu0 %1926
        %1928 = vrot.lane.b32.xlu0 %v1798, 1
        %v1929 = vpop.permute.xlu0 %1928
        %1930 = vrot.lane.b32.xlu0 %v1794, 1
        %v1931 = vpop.permute.xlu0 %1930
        %1932 = vrot.lane.b32.xlu0 %v1799, 1
        %v1933 = vpop.permute.xlu0 %1932
        %1934 = vrot.lane.b32.xlu0 %v1795, 1
        %v1935 = vpop.permute.xlu0 %1934
        %1936 = vrot.lane.b32.xlu0 %v1800, 1
        %v1937 = vpop.permute.xlu0 %1936
        %1938 = vrot.lane.b32.xlu0 %v1796, 1
        %v1939 = vpop.permute.xlu0 %1938
        %1940 = vrot.lane.b32.xlu0 %v1801, 1
        %v1941 = vpop.permute.xlu0 %1940
        %1942 = vrot.lane.b32.xlu0 %v1797, 1
        %v1943 = vpop.permute.xlu0 %1942
        %1944 = vrot.lane.b32.xlu0 %v1802, 1
        %v1945 = vpop.permute.xlu0 %1944
        %v1946 = vsel %vm324, %v1939, %v1943
        %v1947 = vsel %vm324, %v1941, %v1945
        %v1948 = vsel %vm324, %v1935, %v1939
        %v1949 = vsel %vm324, %v1937, %v1941
        %v1950 = vsel %vm324, %v1931, %v1935
        %v1951 = vsel %vm324, %v1933, %v1937
        %v1952 = vsel %vm324, %v1927, %v1931
        %v1953 = vsel %vm324, %v1929, %v1933
        %v1954 = vsel %vm324, %v1943, %v1927
        %v1955 = vsel %vm324, %v1945, %v1929
        %1956 = vst [vmem:[#allocation2 + $0xf0] sm:$0xff] %v1954
        %1957 = vst [vmem:[#allocation2 + $0xf8] sm:$0xff] %v1952
        %1958 = vst [vmem:[#allocation2 + $0x100] sm:$0xff] %v1950
        %1959 = vst [vmem:[#allocation2 + $0x108] sm:$0xff] %v1948
        %1960 = vst [vmem:[#allocation2 + $0x110] sm:$0xff] %v1946
        %1961 = vst [vmem:[#allocation2 + $0x118] sm:$0xff] %v1955
        %1962 = vst [vmem:[#allocation2 + $0x120] sm:$0xff] %v1953
        %1963 = vst [vmem:[#allocation2 + $0x128] sm:$0xff] %v1951
        %1964 = vst [vmem:[#allocation2 + $0x130] sm:$0xff] %v1949
        %1965 = vst [vmem:[#allocation2 + $0x138] sm:$0xff] %v1947
        %1966 = vst [vmem:[#allocation2 + $0x140] sm:$0xff] %v1793
        %1967 = vst [vmem:[#allocation2 + $0x148] sm:$0xff] %v1794
        %1968 = vst [vmem:[#allocation2 + $0x150] sm:$0xff] %v1795
        %1969 = vst [vmem:[#allocation2 + $0x158] sm:$0xff] %v1796
        %1970 = vst [vmem:[#allocation2 + $0x160] sm:$0xff] %v1797
        %1971 = vst [vmem:[#allocation2 + $0x168] sm:$0xff] %v1798
        %1972 = vst [vmem:[#allocation2 + $0x170] sm:$0xff] %v1799
        %1973 = vst [vmem:[#allocation2 + $0x178] sm:$0xff] %v1800
        %1974 = vst [vmem:[#allocation2 + $0x180] sm:$0xff] %v1801
        %1975 = vst [vmem:[#allocation2 + $0x188] sm:$0xff] %v1802
        %1976 = vrot.lane.b32.xlu0 %v1793, 127
        %v1977 = vpop.permute.xlu0 %1976
        %1978 = vrot.lane.b32.xlu0 %v1798, 127
        %v1979 = vpop.permute.xlu0 %1978
        %1980 = vrot.lane.b32.xlu0 %v1794, 127
        %v1981 = vpop.permute.xlu0 %1980
        %1982 = vrot.lane.b32.xlu0 %v1799, 127
        %v1983 = vpop.permute.xlu0 %1982
        %1984 = vrot.lane.b32.xlu0 %v1795, 127
        %v1985 = vpop.permute.xlu0 %1984
        %1986 = vrot.lane.b32.xlu0 %v1800, 127
        %v1987 = vpop.permute.xlu0 %1986
        %1988 = vrot.lane.b32.xlu0 %v1796, 127
        %v1989 = vpop.permute.xlu0 %1988
        %1990 = vrot.lane.b32.xlu0 %v1801, 127
        %v1991 = vpop.permute.xlu0 %1990
        %1992 = vrot.lane.b32.xlu0 %v1797, 127
        %v1993 = vpop.permute.xlu0 %1992
        %1994 = vrot.lane.b32.xlu0 %v1802, 127
        %v1995 = vpop.permute.xlu0 %1994
        %v1996 = vsel %vm350, %v1989, %v1993
        %v1997 = vsel %vm350, %v1991, %v1995
        %v1998 = vsel %vm350, %v1985, %v1989
        %v1999 = vsel %vm350, %v1987, %v1991
        %v2000 = vsel %vm350, %v1981, %v1985
        %v2001 = vsel %vm350, %v1983, %v1987
        %v2002 = vsel %vm350, %v1977, %v1981
        %v2003 = vsel %vm350, %v1979, %v1983
        %v2004 = vsel %vm350, %v1993, %v1977
        %v2005 = vsel %vm350, %v1995, %v1979
        %2006 = vst [vmem:[#allocation2 + $0x190] sm:$0xff] %v2002
        %2007 = vst [vmem:[#allocation2 + $0x198] sm:$0xff] %v2000
        %2008 = vst [vmem:[#allocation2 + $0x1a0] sm:$0xff] %v1998
        %2009 = vst [vmem:[#allocation2 + $0x1a8] sm:$0xff] %v1996
        %2010 = vst [vmem:[#allocation2 + $0x1b0] sm:$0xff] %v2004
        %2011 = vst [vmem:[#allocation2 + $0x1b8] sm:$0xff] %v2003
        %2012 = vst [vmem:[#allocation2 + $0x1c0] sm:$0xff] %v2001
        %2013 = vst [vmem:[#allocation2 + $0x1c8] sm:$0xff] %v1999
        %2014 = vst [vmem:[#allocation2 + $0x1d0] sm:$0xff] %v1997
        %2015 = vst [vmem:[#allocation2 + $0x1d8] sm:$0xff] %v2005
        %2016 = vrot.lane.b32.xlu0 %v1793, 103
        %v2017 = vpop.permute.xlu0 %2016
        %2018 = vrot.lane.b32.xlu0 %v1798, 103
        %v2019 = vpop.permute.xlu0 %2018
        %2020 = vrot.lane.b32.xlu0 %v1794, 103
        %v2021 = vpop.permute.xlu0 %2020
        %2022 = vrot.lane.b32.xlu0 %v1799, 103
        %v2023 = vpop.permute.xlu0 %2022
        %2024 = vrot.lane.b32.xlu0 %v1795, 103
        %v2025 = vpop.permute.xlu0 %2024
        %2026 = vrot.lane.b32.xlu0 %v1800, 103
        %v2027 = vpop.permute.xlu0 %2026
        %2028 = vrot.lane.b32.xlu0 %v1796, 103
        %v2029 = vpop.permute.xlu0 %2028
        %2030 = vrot.lane.b32.xlu0 %v1801, 103
        %v2031 = vpop.permute.xlu0 %2030
        %2032 = vrot.lane.b32.xlu0 %v1797, 103
        %v2033 = vpop.permute.xlu0 %2032
        %2034 = vrot.lane.b32.xlu0 %v1802, 103
        %v2035 = vpop.permute.xlu0 %2034
        %v2036 = vsel %vm371, %v2029, %v2033
        %v2037 = vsel %vm371, %v2031, %v2035
        %v2038 = vsel %vm371, %v2025, %v2029
        %v2039 = vsel %vm371, %v2027, %v2031
        %v2040 = vsel %vm371, %v2021, %v2025
        %v2041 = vsel %vm371, %v2023, %v2027
        %v2042 = vsel %vm371, %v2017, %v2021
        %v2043 = vsel %vm371, %v2019, %v2023
        %v2044 = vsel %vm371, %v2033, %v2017
        %v2045 = vsel %vm371, %v2035, %v2019
        %2046 = vst [vmem:[#allocation2 + $0x1e0] sm:$0xff] %v2042
        %2047 = vst [vmem:[#allocation2 + $0x1e8] sm:$0xff] %v2040
        %2048 = vst [vmem:[#allocation2 + $0x1f0] sm:$0xff] %v2038
        %2049 = vst [vmem:[#allocation2 + $0x1f8] sm:$0xff] %v2036
        %2050 = vst [vmem:[#allocation2 + $0x200] sm:$0xff] %v2044
        %2051 = vst [vmem:[#allocation2 + $0x208] sm:$0xff] %v2043
        %2052 = vst [vmem:[#allocation2 + $0x210] sm:$0xff] %v2041
        %2053 = vst [vmem:[#allocation2 + $0x218] sm:$0xff] %v2039
        %2054 = vst [vmem:[#allocation2 + $0x220] sm:$0xff] %v2037
        %2055 = vst [vmem:[#allocation2 + $0x228] sm:$0xff] %v2045
        %2056 = vrot.lane.b32.xlu0 %v1793, 102
        %v2057 = vpop.permute.xlu0 %2056
        %2058 = vrot.lane.b32.xlu0 %v1798, 102
        %v2059 = vpop.permute.xlu0 %2058
        %2060 = vrot.lane.b32.xlu0 %v1794, 102
        %v2061 = vpop.permute.xlu0 %2060
        %2062 = vrot.lane.b32.xlu0 %v1799, 102
        %v2063 = vpop.permute.xlu0 %2062
        %2064 = vrot.lane.b32.xlu0 %v1795, 102
        %v2065 = vpop.permute.xlu0 %2064
        %2066 = vrot.lane.b32.xlu0 %v1800, 102
        %v2067 = vpop.permute.xlu0 %2066
        %2068 = vrot.lane.b32.xlu0 %v1796, 102
        %v2069 = vpop.permute.xlu0 %2068
        %2070 = vrot.lane.b32.xlu0 %v1801, 102
        %v2071 = vpop.permute.xlu0 %2070
        %2072 = vrot.lane.b32.xlu0 %v1797, 102
        %v2073 = vpop.permute.xlu0 %2072
        %2074 = vrot.lane.b32.xlu0 %v1802, 102
        %v2075 = vpop.permute.xlu0 %2074
        %v2076 = vsel %vm392, %v2069, %v2073
        %v2077 = vsel %vm392, %v2071, %v2075
        %v2078 = vsel %vm392, %v2065, %v2069
        %v2079 = vsel %vm392, %v2067, %v2071
        %v2080 = vsel %vm392, %v2061, %v2065
        %v2081 = vsel %vm392, %v2063, %v2067
        %v2082 = vsel %vm392, %v2057, %v2061
        %v2083 = vsel %vm392, %v2059, %v2063
        %v2084 = vsel %vm392, %v2073, %v2057
        %v2085 = vsel %vm392, %v2075, %v2059
        %2086 = vst [vmem:[#allocation2 + $0x230] sm:$0xff] %v2082
        %2087 = vst [vmem:[#allocation2 + $0x238] sm:$0xff] %v2080
        %2088 = vst [vmem:[#allocation2 + $0x240] sm:$0xff] %v2078
        %2089 = vst [vmem:[#allocation2 + $0x248] sm:$0xff] %v2076
        %2090 = vst [vmem:[#allocation2 + $0x250] sm:$0xff] %v2084
        %2091 = vst [vmem:[#allocation2 + $0x258] sm:$0xff] %v2083
        %2092 = vst [vmem:[#allocation2 + $0x260] sm:$0xff] %v2081
        %2093 = vst [vmem:[#allocation2 + $0x268] sm:$0xff] %v2079
        %2094 = vst [vmem:[#allocation2 + $0x270] sm:$0xff] %v2077
        %2095 = vst [vmem:[#allocation2 + $0x278] sm:$0xff] %v2085
        %2096 = vrot.lane.b32.xlu0 %v1793, 101
        %v2097 = vpop.permute.xlu0 %2096
        %2098 = vrot.lane.b32.xlu0 %v1798, 101
        %v2099 = vpop.permute.xlu0 %2098
        %2100 = vrot.lane.b32.xlu0 %v1794, 101
        %v2101 = vpop.permute.xlu0 %2100
        %2102 = vrot.lane.b32.xlu0 %v1799, 101
        %v2103 = vpop.permute.xlu0 %2102
        %2104 = vrot.lane.b32.xlu0 %v1795, 101
        %v2105 = vpop.permute.xlu0 %2104
        %2106 = vrot.lane.b32.xlu0 %v1800, 101
        %v2107 = vpop.permute.xlu0 %2106
        %2108 = vrot.lane.b32.xlu0 %v1796, 101
        %v2109 = vpop.permute.xlu0 %2108
        %2110 = vrot.lane.b32.xlu0 %v1801, 101
        %v2111 = vpop.permute.xlu0 %2110
        %2112 = vrot.lane.b32.xlu0 %v1797, 101
        %v2113 = vpop.permute.xlu0 %2112
        %2114 = vrot.lane.b32.xlu0 %v1802, 101
        %v2115 = vpop.permute.xlu0 %2114
        %v2116 = vsel %vm413, %v2109, %v2113
        %v2117 = vsel %vm413, %v2111, %v2115
        %v2118 = vsel %vm413, %v2105, %v2109
        %v2119 = vsel %vm413, %v2107, %v2111
        %v2120 = vsel %vm413, %v2101, %v2105
        %v2121 = vsel %vm413, %v2103, %v2107
        %v2122 = vsel %vm413, %v2097, %v2101
        %v2123 = vsel %vm413, %v2099, %v2103
        %v2124 = vsel %vm413, %v2113, %v2097
        %v2125 = vsel %vm413, %v2115, %v2099
        %2126 = vst [vmem:[#allocation2 + $0x280] sm:$0xff] %v2122
        %2127 = vst [vmem:[#allocation2 + $0x288] sm:$0xff] %v2120
        %2128 = vst [vmem:[#allocation2 + $0x290] sm:$0xff] %v2118
        %2129 = vst [vmem:[#allocation2 + $0x298] sm:$0xff] %v2116
        %2130 = vst [vmem:[#allocation2 + $0x2a0] sm:$0xff] %v2124
        %2131 = vst [vmem:[#allocation2 + $0x2a8] sm:$0xff] %v2123
        %2132 = vst [vmem:[#allocation2 + $0x2b0] sm:$0xff] %v2121
        %2133 = vst [vmem:[#allocation2 + $0x2b8] sm:$0xff] %v2119
        %2134 = vst [vmem:[#allocation2 + $0x2c0] sm:$0xff] %v2117
        %2135 = vst [vmem:[#allocation2 + $0x2c8] sm:$0xff] %v2125
        %v2136 = vld [vmem:[#allocation2] sm:$0xff]
        %v2137 = vld [vmem:[#allocation2 + $0x8] sm:$0xff]
        %v2138 = vld [vmem:[#allocation2 + $0x10] sm:$0xff]
        %v2139 = vld [vmem:[#allocation2 + $0x18] sm:$0xff]
        %v2140 = vld [vmem:[#allocation2 + $0x20] sm:$0xff]
        %v2141 = vld [vmem:[#allocation2 + $0x28] sm:$0xff]
        %v2142 = vld [vmem:[#allocation2 + $0x30] sm:$0xff]
        %v2143 = vld [vmem:[#allocation2 + $0x38] sm:$0xff]
        %v2144 = vld [vmem:[#allocation2 + $0x40] sm:$0xff]
        %v2145 = vld [vmem:[#allocation2 + $0x48] sm:$0xff]
        %v2146 = vld [vmem:[#allocation2 + $0x50] sm:$0xff]
        %v2147 = vld [vmem:[#allocation2 + $0x58] sm:$0xff]
        %v2148 = vld [vmem:[#allocation2 + $0x60] sm:$0xff]
        %v2149 = vld [vmem:[#allocation2 + $0x68] sm:$0xff]
        %v2150 = vld [vmem:[#allocation2 + $0x70] sm:$0xff]
        %v2151 = vld [vmem:[#allocation2 + $0x78] sm:$0xff]
        %v2152 = vld [vmem:[#allocation2 + $0x80] sm:$0xff]
        %v2153 = vld [vmem:[#allocation2 + $0x88] sm:$0xff]
        %v2154 = vld [vmem:[#allocation2 + $0x90] sm:$0xff]
        %v2155 = vld [vmem:[#allocation2 + $0x98] sm:$0xff]
        %v2156 = vld [vmem:[#allocation2 + $0xa0] sm:$0xff]
        %v2157 = vld [vmem:[#allocation2 + $0xa8] sm:$0xff]
        %v2158 = vld [vmem:[#allocation2 + $0xb0] sm:$0xff]
        %v2159 = vld [vmem:[#allocation2 + $0xb8] sm:$0xff]
        %v2160 = vld [vmem:[#allocation2 + $0xc0] sm:$0xff]
        %v2161 = vld [vmem:[#allocation2 + $0xc8] sm:$0xff]
        %v2162 = vld [vmem:[#allocation2 + $0xd0] sm:$0xff]
        %v2163 = vld [vmem:[#allocation2 + $0xd8] sm:$0xff]
        %v2164 = vld [vmem:[#allocation2 + $0xe0] sm:$0xff]
        %v2165 = vld [vmem:[#allocation2 + $0xe8] sm:$0xff]
        %v2166 = vld [vmem:[#allocation2 + $0xf0] sm:$0xff]
        %v2167 = vld [vmem:[#allocation2 + $0xf8] sm:$0xff]
        %v2168 = vld [vmem:[#allocation2 + $0x100] sm:$0xff]
        %v2169 = vld [vmem:[#allocation2 + $0x108] sm:$0xff]
        %v2170 = vld [vmem:[#allocation2 + $0x110] sm:$0xff]
        %v2171 = vld [vmem:[#allocation2 + $0x118] sm:$0xff]
        %v2172 = vld [vmem:[#allocation2 + $0x120] sm:$0xff]
        %v2173 = vld [vmem:[#allocation2 + $0x128] sm:$0xff]
        %v2174 = vld [vmem:[#allocation2 + $0x130] sm:$0xff]
        %v2175 = vld [vmem:[#allocation2 + $0x138] sm:$0xff]
        %v2176 = vld [vmem:[#allocation2 + $0x140] sm:$0xff]
        %v2177 = vld [vmem:[#allocation2 + $0x148] sm:$0xff]
        %v2178 = vld [vmem:[#allocation2 + $0x150] sm:$0xff]
        %v2179 = vld [vmem:[#allocation2 + $0x158] sm:$0xff]
        %v2180 = vld [vmem:[#allocation2 + $0x160] sm:$0xff]
        %v2181 = vld [vmem:[#allocation2 + $0x168] sm:$0xff]
        %v2182 = vld [vmem:[#allocation2 + $0x170] sm:$0xff]
        %v2183 = vld [vmem:[#allocation2 + $0x178] sm:$0xff]
        %v2184 = vld [vmem:[#allocation2 + $0x180] sm:$0xff]
        %v2185 = vld [vmem:[#allocation2 + $0x188] sm:$0xff]
        %v2186 = vld [vmem:[#allocation2 + $0x190] sm:$0xff]
        %v2187 = vld [vmem:[#allocation2 + $0x198] sm:$0xff]
        %v2188 = vld [vmem:[#allocation2 + $0x1a0] sm:$0xff]
        %v2189 = vld [vmem:[#allocation2 + $0x1a8] sm:$0xff]
        %v2190 = vld [vmem:[#allocation2 + $0x1b0] sm:$0xff]
        %v2191 = vld [vmem:[#allocation2 + $0x1b8] sm:$0xff]
        %v2192 = vld [vmem:[#allocation2 + $0x1c0] sm:$0xff]
        %v2193 = vld [vmem:[#allocation2 + $0x1c8] sm:$0xff]
        %v2194 = vld [vmem:[#allocation2 + $0x1d0] sm:$0xff]
        %v2195 = vld [vmem:[#allocation2 + $0x1d8] sm:$0xff]
        %v2196 = vld [vmem:[#allocation2 + $0x1e0] sm:$0xff]
        %v2197 = vld [vmem:[#allocation2 + $0x1e8] sm:$0xff]
        %v2198 = vld [vmem:[#allocation2 + $0x1f0] sm:$0xff]
        %v2199 = vld [vmem:[#allocation2 + $0x1f8] sm:$0xff]
        %v2200 = vld [vmem:[#allocation2 + $0x200] sm:$0xff]
        %v2201 = vld [vmem:[#allocation2 + $0x208] sm:$0xff]
        %v2202 = vld [vmem:[#allocation2 + $0x210] sm:$0xff]
        %v2203 = vld [vmem:[#allocation2 + $0x218] sm:$0xff]
        %v2204 = vld [vmem:[#allocation2 + $0x220] sm:$0xff]
        %v2205 = vld [vmem:[#allocation2 + $0x228] sm:$0xff]
        %v2206 = vld [vmem:[#allocation2 + $0x230] sm:$0xff]
        %v2207 = vld [vmem:[#allocation2 + $0x238] sm:$0xff]
        %v2208 = vld [vmem:[#allocation2 + $0x240] sm:$0xff]
        %v2209 = vld [vmem:[#allocation2 + $0x248] sm:$0xff]
        %v2210 = vld [vmem:[#allocation2 + $0x250] sm:$0xff]
        %v2211 = vld [vmem:[#allocation2 + $0x258] sm:$0xff]
        %v2212 = vld [vmem:[#allocation2 + $0x260] sm:$0xff]
        %v2213 = vld [vmem:[#allocation2 + $0x268] sm:$0xff]
        %v2214 = vld [vmem:[#allocation2 + $0x270] sm:$0xff]
        %v2215 = vld [vmem:[#allocation2 + $0x278] sm:$0xff]
        %v2216 = vld [vmem:[#allocation2 + $0x280] sm:$0xff]
        %v2217 = vld [vmem:[#allocation2 + $0x288] sm:$0xff]
        %v2218 = vld [vmem:[#allocation2 + $0x290] sm:$0xff]
        %v2219 = vld [vmem:[#allocation2 + $0x298] sm:$0xff]
        %v2220 = vld [vmem:[#allocation2 + $0x2a0] sm:$0xff]
        %v2221 = vld [vmem:[#allocation2 + $0x2a8] sm:$0xff]
        %v2222 = vld [vmem:[#allocation2 + $0x2b0] sm:$0xff]
        %v2223 = vld [vmem:[#allocation2 + $0x2b8] sm:$0xff]
        %v2224 = vld [vmem:[#allocation2 + $0x2c0] sm:$0xff]
        %v2225 = vld [vmem:[#allocation2 + $0x2c8] sm:$0xff]
        %2227 = vset.pattern.permute.xlu0 0
        %2228 = vperm.xlu0 %2227, %v1805
        %v2229 = vpop.permute.xlu0 %2228
        %vm2231 = vcmask 130048
        %v2233 = vsel %vm2231, %v1804, 0
        %2235 = vmatpush.msra.mxu0 %v2211
        %2236 = vmatpush.msra.mxu0 %v2206
        %2237 = vmatpush.msra.mxu0 %v2201
        %2238 = vmatpush.msra.mxu0 %v2196
        %2239 = vmatpush.msra.mxu0 %v2191
        %2240 = vmatpush.msra.mxu0 %v2186
        %2241 = vmatpush.msra.mxu0 %v2181
        %2242 = vmatpush.msra.mxu0 %v2176
        %2243 = vmatpush.msra.mxu0 %v2171
        %2244 = vmatpush.msra.mxu0 %v2166
        %2245 = vmatpush.msra.mxu0 %v2161
        %2246 = vmatpush.msra.mxu0 %v2156
        %2247 = vmatpush.msra.mxu0 %v2151
        %2248 = vmatpush.msra.mxu0 %v2146
        %2249 = vmatpush.msra.mxu0 %v2141
        %2250 = vmatpush.msra.mxu0 %v2136
        %2251 = vmatmul.f32.gmra.mxu0 %v1803
        %v2252 = vpop.f32.mrf.mxu0
        %v2253 = vadd.f32 %v2229, %v2252
        %2254 = vdwg.mxu0
        %2255 = vmatpush.msra.mxu0 0.0
        %2256 = vmatpush.msra.mxu0 0.0
        %2257 = vmatpush.msra.mxu0 0.0
        %2258 = vmatpush.msra.mxu0 0.0
        %2259 = vmatpush.msra.mxu0 0.0
        %2260 = vmatpush.msra.mxu0 0.0
        %2261 = vmatpush.msra.mxu0 0.0
        %2262 = vmatpush.msra.mxu0 0.0
        %2263 = vmatpush.msra.mxu0 0.0
        %2264 = vmatpush.msra.mxu0 0.0
        %2265 = vmatpush.msra.mxu0 0.0
        %2266 = vmatpush.msra.mxu0 0.0
        %2267 = vmatpush.msra.mxu0 0.0
        %2268 = vmatpush.msra.mxu0 0.0
        %2269 = vmatpush.msra.mxu0 %v2221
        %2270 = vmatpush.msra.mxu0 %v2216
        %2271 = vmatmul.f32.gmra.mxu0 %v2233
        %v2272 = vpop.f32.mrf.mxu0
        %v2273 = vadd.f32 %v2253, %v2272
        %2274 = vdwg.mxu0
        %2275 = vmatpush.msra.mxu0 %v2212
        %2276 = vmatpush.msra.mxu0 %v2207
        %2277 = vmatpush.msra.mxu0 %v2202
        %2278 = vmatpush.msra.mxu0 %v2197
        %2279 = vmatpush.msra.mxu0 %v2192
        %2280 = vmatpush.msra.mxu0 %v2187
        %2281 = vmatpush.msra.mxu0 %v2182
        %2282 = vmatpush.msra.mxu0 %v2177
        %2283 = vmatpush.msra.mxu0 %v2172
        %2284 = vmatpush.msra.mxu0 %v2167
        %2285 = vmatpush.msra.mxu0 %v2162
        %2286 = vmatpush.msra.mxu0 %v2157
        %2287 = vmatpush.msra.mxu0 %v2152
        %2288 = vmatpush.msra.mxu0 %v2147
        %2289 = vmatpush.msra.mxu0 %v2142
        %2290 = vmatpush.msra.mxu0 %v2137
        %2291 = vmatmul.f32.gmra.mxu0 %v1803
        %v2292 = vpop.f32.mrf.mxu0
        %v2293 = vadd.f32 %v2229, %v2292
        %2294 = vdwg.mxu0
        %2295 = vmatpush.msra.mxu0 0.0
        %2296 = vmatpush.msra.mxu0 0.0
        %2297 = vmatpush.msra.mxu0 0.0
        %2298 = vmatpush.msra.mxu0 0.0
        %2299 = vmatpush.msra.mxu0 0.0
        %2300 = vmatpush.msra.mxu0 0.0
        %2301 = vmatpush.msra.mxu0 0.0
        %2302 = vmatpush.msra.mxu0 0.0
        %2303 = vmatpush.msra.mxu0 0.0
        %2304 = vmatpush.msra.mxu0 0.0
        %2305 = vmatpush.msra.mxu0 0.0
        %2306 = vmatpush.msra.mxu0 0.0
        %2307 = vmatpush.msra.mxu0 0.0
        %2308 = vmatpush.msra.mxu0 0.0
        %2309 = vmatpush.msra.mxu0 %v2222
        %2310 = vmatpush.msra.mxu0 %v2217
        %2311 = vmatmul.f32.gmra.mxu0 %v2233
        %v2312 = vpop.f32.mrf.mxu0
        %v2313 = vadd.f32 %v2293, %v2312
        %2314 = vdwg.mxu0
        %2315 = vmatpush.msra.mxu0 %v2213
        %2316 = vmatpush.msra.mxu0 %v2208
        %2317 = vmatpush.msra.mxu0 %v2203
        %2318 = vmatpush.msra.mxu0 %v2198
        %2319 = vmatpush.msra.mxu0 %v2193
        %2320 = vmatpush.msra.mxu0 %v2188
        %2321 = vmatpush.msra.mxu0 %v2183
        %2322 = vmatpush.msra.mxu0 %v2178
        %2323 = vmatpush.msra.mxu0 %v2173
        %2324 = vmatpush.msra.mxu0 %v2168
        %2325 = vmatpush.msra.mxu0 %v2163
        %2326 = vmatpush.msra.mxu0 %v2158
        %2327 = vmatpush.msra.mxu0 %v2153
        %2328 = vmatpush.msra.mxu0 %v2148
        %2329 = vmatpush.msra.mxu0 %v2143
        %2330 = vmatpush.msra.mxu0 %v2138
        %2331 = vmatmul.f32.gmra.mxu0 %v1803
        %v2332 = vpop.f32.mrf.mxu0
        %v2333 = vadd.f32 %v2229, %v2332
        %2334 = vdwg.mxu0
        %2335 = vmatpush.msra.mxu0 0.0
        %2336 = vmatpush.msra.mxu0 0.0
        %2337 = vmatpush.msra.mxu0 0.0
        %2338 = vmatpush.msra.mxu0 0.0
        %2339 = vmatpush.msra.mxu0 0.0
        %2340 = vmatpush.msra.mxu0 0.0
        %2341 = vmatpush.msra.mxu0 0.0
        %2342 = vmatpush.msra.mxu0 0.0
        %2343 = vmatpush.msra.mxu0 0.0
        %2344 = vmatpush.msra.mxu0 0.0
        %2345 = vmatpush.msra.mxu0 0.0
        %2346 = vmatpush.msra.mxu0 0.0
        %2347 = vmatpush.msra.mxu0 0.0
        %2348 = vmatpush.msra.mxu0 0.0
        %2349 = vmatpush.msra.mxu0 %v2223
        %2350 = vmatpush.msra.mxu0 %v2218
        %2351 = vmatmul.f32.gmra.mxu0 %v2233
        %v2352 = vpop.f32.mrf.mxu0
        %v2353 = vadd.f32 %v2333, %v2352
        %2354 = vdwg.mxu0
        %2355 = vmatpush.msra.mxu0 %v2214
        %2356 = vmatpush.msra.mxu0 %v2209
        %2357 = vmatpush.msra.mxu0 %v2204
        %2358 = vmatpush.msra.mxu0 %v2199
        %2359 = vmatpush.msra.mxu0 %v2194
        %2360 = vmatpush.msra.mxu0 %v2189
        %2361 = vmatpush.msra.mxu0 %v2184
        %2362 = vmatpush.msra.mxu0 %v2179
        %2363 = vmatpush.msra.mxu0 %v2174
        %2364 = vmatpush.msra.mxu0 %v2169
        %2365 = vmatpush.msra.mxu0 %v2164
        %2366 = vmatpush.msra.mxu0 %v2159
        %2367 = vmatpush.msra.mxu0 %v2154
        %2368 = vmatpush.msra.mxu0 %v2149
        %2369 = vmatpush.msra.mxu0 %v2144
        %2370 = vmatpush.msra.mxu0 %v2139
        %2371 = vmatmul.f32.gmra.mxu0 %v1803
        %v2372 = vpop.f32.mrf.mxu0
        %v2373 = vadd.f32 %v2229, %v2372
        %2374 = vdwg.mxu0
        %2375 = vmatpush.msra.mxu0 0.0
        %2376 = vmatpush.msra.mxu0 0.0
        %2377 = vmatpush.msra.mxu0 0.0
        %2378 = vmatpush.msra.mxu0 0.0
        %2379 = vmatpush.msra.mxu0 0.0
        %2380 = vmatpush.msra.mxu0 0.0
        %2381 = vmatpush.msra.mxu0 0.0
        %2382 = vmatpush.msra.mxu0 0.0
        %2383 = vmatpush.msra.mxu0 0.0
        %2384 = vmatpush.msra.mxu0 0.0
        %2385 = vmatpush.msra.mxu0 0.0
        %2386 = vmatpush.msra.mxu0 0.0
        %2387 = vmatpush.msra.mxu0 0.0
        %2388 = vmatpush.msra.mxu0 0.0
        %2389 = vmatpush.msra.mxu0 %v2224
        %2390 = vmatpush.msra.mxu0 %v2219
        %2391 = vmatmul.f32.gmra.mxu0 %v2233
        %v2392 = vpop.f32.mrf.mxu0
        %v2393 = vadd.f32 %v2373, %v2392
        %2394 = vdwg.mxu0
        %2395 = vmatpush.msra.mxu0 %v2215
        %2396 = vmatpush.msra.mxu0 %v2210
        %2397 = vmatpush.msra.mxu0 %v2205
        %2398 = vmatpush.msra.mxu0 %v2200
        %2399 = vmatpush.msra.mxu0 %v2195
        %2400 = vmatpush.msra.mxu0 %v2190
        %2401 = vmatpush.msra.mxu0 %v2185
        %2402 = vmatpush.msra.mxu0 %v2180
        %2403 = vmatpush.msra.mxu0 %v2175
        %2404 = vmatpush.msra.mxu0 %v2170
        %2405 = vmatpush.msra.mxu0 %v2165
        %2406 = vmatpush.msra.mxu0 %v2160
        %2407 = vmatpush.msra.mxu0 %v2155
        %2408 = vmatpush.msra.mxu0 %v2150
        %2409 = vmatpush.msra.mxu0 %v2145
        %2410 = vmatpush.msra.mxu0 %v2140
        %2411 = vmatmul.f32.gmra.mxu0 %v1803
        %v2412 = vpop.f32.mrf.mxu0
        %v2413 = vadd.f32 %v2229, %v2412
        %2414 = vdwg.mxu0
        %2415 = vmatpush.msra.mxu0 0.0
        %2416 = vmatpush.msra.mxu0 0.0
        %2417 = vmatpush.msra.mxu0 0.0
        %2418 = vmatpush.msra.mxu0 0.0
        %2419 = vmatpush.msra.mxu0 0.0
        %2420 = vmatpush.msra.mxu0 0.0
        %2421 = vmatpush.msra.mxu0 0.0
        %2422 = vmatpush.msra.mxu0 0.0
        %2423 = vmatpush.msra.mxu0 0.0
        %2424 = vmatpush.msra.mxu0 0.0
        %2425 = vmatpush.msra.mxu0 0.0
        %2426 = vmatpush.msra.mxu0 0.0
        %2427 = vmatpush.msra.mxu0 0.0
        %2428 = vmatpush.msra.mxu0 0.0
        %2429 = vmatpush.msra.mxu0 %v2225
        %2430 = vmatpush.msra.mxu0 %v2220
        %2431 = vmatmul.f32.gmra.mxu0 %v2233
        %v2432 = vpop.f32.mrf.mxu0
        %v2433 = vadd.f32 %v2413, %v2432
        %2434 = vdwg.mxu0
        %vm2435 = vcmp.ge.f32.partialorder %v2273, 0.0
        %vm2436 = vcmp.ge.f32.partialorder %v2313, 0.0
        %vm2437 = vcmp.ge.f32.partialorder %v2353, 0.0
        %vm2438 = vcmp.ge.f32.partialorder %v2393, 0.0
        %vm2439 = vcmp.ge.f32.partialorder %v2433, 0.0
        %v2440 = vmul.f32 %v2273, 0.2
        %v2441 = vmul.f32 %v2313, 0.2
        %v2442 = vmul.f32 %v2353, 0.2
        %v2443 = vmul.f32 %v2393, 0.2
        %v2444 = vmul.f32 %v2433, 0.2
        %v2445 = vsel %vm2435, %v2273, %v2440
        %v2446 = vsel %vm2436, %v2313, %v2441
        %v2447 = vsel %vm2437, %v2353, %v2442
        %v2448 = vsel %vm2438, %v2393, %v2443
        %v2449 = vsel %vm2439, %v2433, %v2444
        %v2450 = vmul.f32 %v2445, %v594
        %v2451 = vmul.f32 %v2446, %v595
        %v2452 = vmul.f32 %v2447, %v596
        %v2453 = vmul.f32 %v2448, %v597
        %v2454 = vmul.f32 %v2449, %v598
        %v2455 = vld [vmem:[#allocation4 + $0x90] sm:$0xff]
        %v2456 = vld [vmem:[%s2 + $0x30] sm:$0xff]
        %2457 = vrot.lane.b32.xlu0 %v2450, 81
        %v2458 = vpop.permute.xlu0 %2457
        %2459 = vrot.lane.b32.xlu0 %v2451, 81
        %v2460 = vpop.permute.xlu0 %2459
        %2461 = vrot.lane.b32.xlu0 %v2452, 81
        %v2462 = vpop.permute.xlu0 %2461
        %2463 = vrot.lane.b32.xlu0 %v2453, 81
        %v2464 = vpop.permute.xlu0 %2463
        %2465 = vrot.lane.b32.xlu0 %v2454, 81
        %v2466 = vpop.permute.xlu0 %2465
        %v2467 = vsel %vm1449, %v2464, %v2466
        %v2468 = vsel %vm1449, %v2462, %v2464
        %v2469 = vsel %vm1449, %v2460, %v2462
        %v2470 = vsel %vm1449, %v2458, %v2460
        %v2471 = vsel %vm1449, %v2466, %v2458
        %2472 = vst [vmem:[#allocation2] sm:$0xff] %v2471
        %2473 = vst [vmem:[#allocation2 + $0x8] sm:$0xff] %v2470
        %2474 = vst [vmem:[#allocation2 + $0x10] sm:$0xff] %v2469
        %2475 = vst [vmem:[#allocation2 + $0x18] sm:$0xff] %v2468
        %2476 = vst [vmem:[#allocation2 + $0x20] sm:$0xff] %v2467
        %2477 = vrot.lane.b32.xlu0 %v2450, 78
        %v2478 = vpop.permute.xlu0 %2477
        %2479 = vrot.lane.b32.xlu0 %v2451, 78
        %v2480 = vpop.permute.xlu0 %2479
        %2481 = vrot.lane.b32.xlu0 %v2452, 78
        %v2482 = vpop.permute.xlu0 %2481
        %2483 = vrot.lane.b32.xlu0 %v2453, 78
        %v2484 = vpop.permute.xlu0 %2483
        %2485 = vrot.lane.b32.xlu0 %v2454, 78
        %v2486 = vpop.permute.xlu0 %2485
        %v2487 = vsel %vm1470, %v2484, %v2486
        %v2488 = vsel %vm1470, %v2482, %v2484
        %v2489 = vsel %vm1470, %v2480, %v2482
        %v2490 = vsel %vm1470, %v2478, %v2480
        %v2491 = vsel %vm1470, %v2486, %v2478
        %2492 = vst [vmem:[#allocation2 + $0x28] sm:$0xff] %v2491
        %2493 = vst [vmem:[#allocation2 + $0x30] sm:$0xff] %v2490
        %2494 = vst [vmem:[#allocation2 + $0x38] sm:$0xff] %v2489
        %2495 = vst [vmem:[#allocation2 + $0x40] sm:$0xff] %v2488
        %2496 = vst [vmem:[#allocation2 + $0x48] sm:$0xff] %v2487
        %2497 = vrot.lane.b32.xlu0 %v2450, 75
        %v2498 = vpop.permute.xlu0 %2497
        %2499 = vrot.lane.b32.xlu0 %v2451, 75
        %v2500 = vpop.permute.xlu0 %2499
        %2501 = vrot.lane.b32.xlu0 %v2452, 75
        %v2502 = vpop.permute.xlu0 %2501
        %2503 = vrot.lane.b32.xlu0 %v2453, 75
        %v2504 = vpop.permute.xlu0 %2503
        %2505 = vrot.lane.b32.xlu0 %v2454, 75
        %v2506 = vpop.permute.xlu0 %2505
        %v2507 = vsel %vm1491, %v2504, %v2506
        %v2508 = vsel %vm1491, %v2502, %v2504
        %v2509 = vsel %vm1491, %v2500, %v2502
        %v2510 = vsel %vm1491, %v2498, %v2500
        %v2511 = vsel %vm1491, %v2506, %v2498
        %2512 = vst [vmem:[#allocation2 + $0x50] sm:$0xff] %v2511
        %2513 = vst [vmem:[#allocation2 + $0x58] sm:$0xff] %v2510
        %2514 = vst [vmem:[#allocation2 + $0x60] sm:$0xff] %v2509
        %2515 = vst [vmem:[#allocation2 + $0x68] sm:$0xff] %v2508
        %2516 = vst [vmem:[#allocation2 + $0x70] sm:$0xff] %v2507
        %2517 = vrot.lane.b32.xlu0 %v2450, 3
        %v2518 = vpop.permute.xlu0 %2517
        %2519 = vrot.lane.b32.xlu0 %v2451, 3
        %v2520 = vpop.permute.xlu0 %2519
        %2521 = vrot.lane.b32.xlu0 %v2452, 3
        %v2522 = vpop.permute.xlu0 %2521
        %2523 = vrot.lane.b32.xlu0 %v2453, 3
        %v2524 = vpop.permute.xlu0 %2523
        %2525 = vrot.lane.b32.xlu0 %v2454, 3
        %v2526 = vpop.permute.xlu0 %2525
        %v2527 = vsel %vm1512, %v2524, %v2526
        %v2528 = vsel %vm1512, %v2522, %v2524
        %v2529 = vsel %vm1512, %v2520, %v2522
        %v2530 = vsel %vm1512, %v2518, %v2520
        %v2531 = vsel %vm1512, %v2526, %v2518
        %2532 = vst [vmem:[#allocation2 + $0x78] sm:$0xff] %v2531
        %2533 = vst [vmem:[#allocation2 + $0x80] sm:$0xff] %v2530
        %2534 = vst [vmem:[#allocation2 + $0x88] sm:$0xff] %v2529
        %2535 = vst [vmem:[#allocation2 + $0x90] sm:$0xff] %v2528
        %2536 = vst [vmem:[#allocation2 + $0x98] sm:$0xff] %v2527
        %2537 = vst [vmem:[#allocation2 + $0xa0] sm:$0xff] %v2450
        %2538 = vst [vmem:[#allocation2 + $0xa8] sm:$0xff] %v2451
        %2539 = vst [vmem:[#allocation2 + $0xb0] sm:$0xff] %v2452
        %2540 = vst [vmem:[#allocation2 + $0xb8] sm:$0xff] %v2453
        %2541 = vst [vmem:[#allocation2 + $0xc0] sm:$0xff] %v2454
        %2542 = vrot.lane.b32.xlu0 %v2450, 125
        %v2543 = vpop.permute.xlu0 %2542
        %2544 = vrot.lane.b32.xlu0 %v2451, 125
        %v2545 = vpop.permute.xlu0 %2544
        %2546 = vrot.lane.b32.xlu0 %v2452, 125
        %v2547 = vpop.permute.xlu0 %2546
        %2548 = vrot.lane.b32.xlu0 %v2453, 125
        %v2549 = vpop.permute.xlu0 %2548
        %2550 = vrot.lane.b32.xlu0 %v2454, 125
        %v2551 = vpop.permute.xlu0 %2550
        %v2552 = vsel %vm1538, %v2549, %v2551
        %v2553 = vsel %vm1538, %v2547, %v2549
        %v2554 = vsel %vm1538, %v2545, %v2547
        %v2555 = vsel %vm1538, %v2543, %v2545
        %v2556 = vsel %vm1538, %v2551, %v2543
        %2557 = vst [vmem:[#allocation2 + $0xc8] sm:$0xff] %v2555
        %2558 = vst [vmem:[#allocation2 + $0xd0] sm:$0xff] %v2554
        %2559 = vst [vmem:[#allocation2 + $0xd8] sm:$0xff] %v2553
        %2560 = vst [vmem:[#allocation2 + $0xe0] sm:$0xff] %v2552
        %2561 = vst [vmem:[#allocation2 + $0xe8] sm:$0xff] %v2556
        %2562 = vrot.lane.b32.xlu0 %v2450, 53
        %v2563 = vpop.permute.xlu0 %2562
        %2564 = vrot.lane.b32.xlu0 %v2451, 53
        %v2565 = vpop.permute.xlu0 %2564
        %2566 = vrot.lane.b32.xlu0 %v2452, 53
        %v2567 = vpop.permute.xlu0 %2566
        %2568 = vrot.lane.b32.xlu0 %v2453, 53
        %v2569 = vpop.permute.xlu0 %2568
        %2570 = vrot.lane.b32.xlu0 %v2454, 53
        %v2571 = vpop.permute.xlu0 %2570
        %v2572 = vsel %vm1559, %v2569, %v2571
        %v2573 = vsel %vm1559, %v2567, %v2569
        %v2574 = vsel %vm1559, %v2565, %v2567
        %v2575 = vsel %vm1559, %v2563, %v2565
        %v2576 = vsel %vm1559, %v2571, %v2563
        %2577 = vst [vmem:[#allocation2 + $0xf0] sm:$0xff] %v2575
        %2578 = vst [vmem:[#allocation2 + $0xf8] sm:$0xff] %v2574
        %2579 = vst [vmem:[#allocation2 + $0x100] sm:$0xff] %v2573
        %2580 = vst [vmem:[#allocation2 + $0x108] sm:$0xff] %v2572
        %2581 = vst [vmem:[#allocation2 + $0x110] sm:$0xff] %v2576
        %2582 = vrot.lane.b32.xlu0 %v2450, 50
        %v2583 = vpop.permute.xlu0 %2582
        %2584 = vrot.lane.b32.xlu0 %v2451, 50
        %v2585 = vpop.permute.xlu0 %2584
        %2586 = vrot.lane.b32.xlu0 %v2452, 50
        %v2587 = vpop.permute.xlu0 %2586
        %2588 = vrot.lane.b32.xlu0 %v2453, 50
        %v2589 = vpop.permute.xlu0 %2588
        %2590 = vrot.lane.b32.xlu0 %v2454, 50
        %v2591 = vpop.permute.xlu0 %2590
        %v2592 = vsel %vm1580, %v2589, %v2591
        %v2593 = vsel %vm1580, %v2587, %v2589
        %v2594 = vsel %vm1580, %v2585, %v2587
        %v2595 = vsel %vm1580, %v2583, %v2585
        %v2596 = vsel %vm1580, %v2591, %v2583
        %2597 = vst [vmem:[#allocation2 + $0x118] sm:$0xff] %v2595
        %2598 = vst [vmem:[#allocation2 + $0x120] sm:$0xff] %v2594
        %2599 = vst [vmem:[#allocation2 + $0x128] sm:$0xff] %v2593
        %2600 = vst [vmem:[#allocation2 + $0x130] sm:$0xff] %v2592
        %2601 = vst [vmem:[#allocation2 + $0x138] sm:$0xff] %v2596
        %2602 = vrot.lane.b32.xlu0 %v2450, 47
        %v2603 = vpop.permute.xlu0 %2602
        %2604 = vrot.lane.b32.xlu0 %v2451, 47
        %v2605 = vpop.permute.xlu0 %2604
        %2606 = vrot.lane.b32.xlu0 %v2452, 47
        %v2607 = vpop.permute.xlu0 %2606
        %2608 = vrot.lane.b32.xlu0 %v2453, 47
        %v2609 = vpop.permute.xlu0 %2608
        %2610 = vrot.lane.b32.xlu0 %v2454, 47
        %v2611 = vpop.permute.xlu0 %2610
        %v2612 = vsel %vm1601, %v2609, %v2611
        %v2613 = vsel %vm1601, %v2607, %v2609
        %v2614 = vsel %vm1601, %v2605, %v2607
        %v2615 = vsel %vm1601, %v2603, %v2605
        %v2616 = vsel %vm1601, %v2611, %v2603
        %2617 = vst [vmem:[#allocation2 + $0x140] sm:$0xff] %v2615
        %2618 = vst [vmem:[#allocation2 + $0x148] sm:$0xff] %v2614
        %2619 = vst [vmem:[#allocation2 + $0x150] sm:$0xff] %v2613
        %2620 = vst [vmem:[#allocation2 + $0x158] sm:$0xff] %v2612
        %2621 = vst [vmem:[#allocation2 + $0x160] sm:$0xff] %v2616
        %v2622 = vld [vmem:[#allocation2] sm:$0xff]
        %v2623 = vld [vmem:[#allocation2 + $0x8] sm:$0xff]
        %v2624 = vld [vmem:[#allocation2 + $0x10] sm:$0xff]
        %v2625 = vld [vmem:[#allocation2 + $0x18] sm:$0xff]
        %v2626 = vld [vmem:[#allocation2 + $0x20] sm:$0xff]
        %v2627 = vld [vmem:[#allocation2 + $0x28] sm:$0xff]
        %v2628 = vld [vmem:[#allocation2 + $0x30] sm:$0xff]
        %v2629 = vld [vmem:[#allocation2 + $0x38] sm:$0xff]
        %v2630 = vld [vmem:[#allocation2 + $0x40] sm:$0xff]
        %v2631 = vld [vmem:[#allocation2 + $0x48] sm:$0xff]
        %v2632 = vld [vmem:[#allocation2 + $0x50] sm:$0xff]
        %v2633 = vld [vmem:[#allocation2 + $0x58] sm:$0xff]
        %v2634 = vld [vmem:[#allocation2 + $0x60] sm:$0xff]
        %v2635 = vld [vmem:[#allocation2 + $0x68] sm:$0xff]
        %v2636 = vld [vmem:[#allocation2 + $0x70] sm:$0xff]
        %v2637 = vld [vmem:[#allocation2 + $0x78] sm:$0xff]
        %v2638 = vld [vmem:[#allocation2 + $0x80] sm:$0xff]
        %v2639 = vld [vmem:[#allocation2 + $0x88] sm:$0xff]
        %v2640 = vld [vmem:[#allocation2 + $0x90] sm:$0xff]
        %v2641 = vld [vmem:[#allocation2 + $0x98] sm:$0xff]
        %v2642 = vld [vmem:[#allocation2 + $0xa0] sm:$0xff]
        %v2643 = vld [vmem:[#allocation2 + $0xa8] sm:$0xff]
        %v2644 = vld [vmem:[#allocation2 + $0xb0] sm:$0xff]
        %v2645 = vld [vmem:[#allocation2 + $0xb8] sm:$0xff]
        %v2646 = vld [vmem:[#allocation2 + $0xc0] sm:$0xff]
        %v2647 = vld [vmem:[#allocation2 + $0xc8] sm:$0xff]
        %v2648 = vld [vmem:[#allocation2 + $0xd0] sm:$0xff]
        %v2649 = vld [vmem:[#allocation2 + $0xd8] sm:$0xff]
        %v2650 = vld [vmem:[#allocation2 + $0xe0] sm:$0xff]
        %v2651 = vld [vmem:[#allocation2 + $0xe8] sm:$0xff]
        %v2652 = vld [vmem:[#allocation2 + $0xf0] sm:$0xff]
        %v2653 = vld [vmem:[#allocation2 + $0xf8] sm:$0xff]
        %v2654 = vld [vmem:[#allocation2 + $0x100] sm:$0xff]
        %v2655 = vld [vmem:[#allocation2 + $0x108] sm:$0xff]
        %v2656 = vld [vmem:[#allocation2 + $0x110] sm:$0xff]
        %v2657 = vld [vmem:[#allocation2 + $0x118] sm:$0xff]
        %v2658 = vld [vmem:[#allocation2 + $0x120] sm:$0xff]
        %v2659 = vld [vmem:[#allocation2 + $0x128] sm:$0xff]
        %v2660 = vld [vmem:[#allocation2 + $0x130] sm:$0xff]
        %v2661 = vld [vmem:[#allocation2 + $0x138] sm:$0xff]
        %v2662 = vld [vmem:[#allocation2 + $0x140] sm:$0xff]
        %v2663 = vld [vmem:[#allocation2 + $0x148] sm:$0xff]
        %v2664 = vld [vmem:[#allocation2 + $0x150] sm:$0xff]
        %v2665 = vld [vmem:[#allocation2 + $0x158] sm:$0xff]
        %v2666 = vld [vmem:[#allocation2 + $0x160] sm:$0xff]
        %2668 = vset.pattern.permute.xlu0 0
        %2669 = vperm.xlu0 %2668, %v2456
        %v2670 = vpop.permute.xlu0 %2669
        %v2673 = vsel %vm474, %v2455, 0
        %2675 = vmatpush.msra.mxu0 0.0
        %2676 = vmatpush.msra.mxu0 0.0
        %2677 = vmatpush.msra.mxu0 0.0
        %2678 = vmatpush.msra.mxu0 0.0
        %2679 = vmatpush.msra.mxu0 0.0
        %2680 = vmatpush.msra.mxu0 0.0
        %2681 = vmatpush.msra.mxu0 0.0
        %2682 = vmatpush.msra.mxu0 %v2662
        %2683 = vmatpush.msra.mxu0 %v2657
        %2684 = vmatpush.msra.mxu0 %v2652
        %2685 = vmatpush.msra.mxu0 %v2647
        %2686 = vmatpush.msra.mxu0 %v2642
        %2687 = vmatpush.msra.mxu0 %v2637
        %2688 = vmatpush.msra.mxu0 %v2632
        %2689 = vmatpush.msra.mxu0 %v2627
        %2690 = vmatpush.msra.mxu0 %v2622
        %2691 = vmatmul.f32.gmra.mxu0 %v2673
        %v2692 = vpop.f32.mrf.mxu0
        %v2693 = vadd.f32 %v2670, %v2692
        %2694 = vdwg.mxu0
        %2695 = vmatpush.msra.mxu0 0.0
        %2696 = vmatpush.msra.mxu0 0.0
        %2697 = vmatpush.msra.mxu0 0.0
        %2698 = vmatpush.msra.mxu0 0.0
        %2699 = vmatpush.msra.mxu0 0.0
        %2700 = vmatpush.msra.mxu0 0.0
        %2701 = vmatpush.msra.mxu0 0.0
        %2702 = vmatpush.msra.mxu0 %v2663
        %2703 = vmatpush.msra.mxu0 %v2658
        %2704 = vmatpush.msra.mxu0 %v2653
        %2705 = vmatpush.msra.mxu0 %v2648
        %2706 = vmatpush.msra.mxu0 %v2643
        %2707 = vmatpush.msra.mxu0 %v2638
        %2708 = vmatpush.msra.mxu0 %v2633
        %2709 = vmatpush.msra.mxu0 %v2628
        %2710 = vmatpush.msra.mxu0 %v2623
        %2711 = vmatmul.f32.gmra.mxu0 %v2673
        %v2712 = vpop.f32.mrf.mxu0
        %v2713 = vadd.f32 %v2670, %v2712
        %2714 = vdwg.mxu0
        %2715 = vmatpush.msra.mxu0 0.0
        %2716 = vmatpush.msra.mxu0 0.0
        %2717 = vmatpush.msra.mxu0 0.0
        %2718 = vmatpush.msra.mxu0 0.0
        %2719 = vmatpush.msra.mxu0 0.0
        %2720 = vmatpush.msra.mxu0 0.0
        %2721 = vmatpush.msra.mxu0 0.0
        %2722 = vmatpush.msra.mxu0 %v2664
        %2723 = vmatpush.msra.mxu0 %v2659
        %2724 = vmatpush.msra.mxu0 %v2654
        %2725 = vmatpush.msra.mxu0 %v2649
        %2726 = vmatpush.msra.mxu0 %v2644
        %2727 = vmatpush.msra.mxu0 %v2639
        %2728 = vmatpush.msra.mxu0 %v2634
        %2729 = vmatpush.msra.mxu0 %v2629
        %2730 = vmatpush.msra.mxu0 %v2624
        %2731 = vmatmul.f32.gmra.mxu0 %v2673
        %v2732 = vpop.f32.mrf.mxu0
        %v2733 = vadd.f32 %v2670, %v2732
        %2734 = vdwg.mxu0
        %2735 = vmatpush.msra.mxu0 0.0
        %2736 = vmatpush.msra.mxu0 0.0
        %2737 = vmatpush.msra.mxu0 0.0
        %2738 = vmatpush.msra.mxu0 0.0
        %2739 = vmatpush.msra.mxu0 0.0
        %2740 = vmatpush.msra.mxu0 0.0
        %2741 = vmatpush.msra.mxu0 0.0
        %2742 = vmatpush.msra.mxu0 %v2665
        %2743 = vmatpush.msra.mxu0 %v2660
        %2744 = vmatpush.msra.mxu0 %v2655
        %2745 = vmatpush.msra.mxu0 %v2650
        %2746 = vmatpush.msra.mxu0 %v2645
        %2747 = vmatpush.msra.mxu0 %v2640
        %2748 = vmatpush.msra.mxu0 %v2635
        %2749 = vmatpush.msra.mxu0 %v2630
        %2750 = vmatpush.msra.mxu0 %v2625
        %2751 = vmatmul.f32.gmra.mxu0 %v2673
        %v2752 = vpop.f32.mrf.mxu0
        %v2753 = vadd.f32 %v2670, %v2752
        %2754 = vdwg.mxu0
        %2755 = vmatpush.msra.mxu0 0.0
        %2756 = vmatpush.msra.mxu0 0.0
        %2757 = vmatpush.msra.mxu0 0.0
        %2758 = vmatpush.msra.mxu0 0.0
        %2759 = vmatpush.msra.mxu0 0.0
        %2760 = vmatpush.msra.mxu0 0.0
        %2761 = vmatpush.msra.mxu0 0.0
        %2762 = vmatpush.msra.mxu0 %v2666
        %2763 = vmatpush.msra.mxu0 %v2661
        %2764 = vmatpush.msra.mxu0 %v2656
        %2765 = vmatpush.msra.mxu0 %v2651
        %2766 = vmatpush.msra.mxu0 %v2646
        %2767 = vmatpush.msra.mxu0 %v2641
        %2768 = vmatpush.msra.mxu0 %v2636
        %2769 = vmatpush.msra.mxu0 %v2631
        %2770 = vmatpush.msra.mxu0 %v2626
        %2771 = vmatmul.f32.gmra.mxu0 %v2673
        %v2772 = vpop.f32.mrf.mxu0
        %v2773 = vadd.f32 %v2670, %v2772
        %2774 = vdwg.mxu0
        %v2775 = vrot.slane %v241, 2
        %s2776 = vtos %v2775
        %vm2777 = vcmp.ge.f32.partialorder %v2693, 0.0
        %vm2778 = vcmp.ge.f32.partialorder %v2713, 0.0
        %vm2779 = vcmp.ge.f32.partialorder %v2733, 0.0
        %vm2780 = vcmp.ge.f32.partialorder %v2753, 0.0
        %vm2781 = vcmp.ge.f32.partialorder %v2773, 0.0
        %v2782 = vstv %s2776
        %v2783 = vmul.f32 %v2782, %v2693
        %v2784 = vmul.f32 %v2782, %v2713
        %v2785 = vmul.f32 %v2782, %v2733
        %v2786 = vmul.f32 %v2782, %v2753
        %v2787 = vmul.f32 %v2782, %v2773
        %v2788 = vsel %vm2777, %v2693, %v2783
        %v2789 = vsel %vm2778, %v2713, %v2784
        %v2790 = vsel %vm2779, %v2733, %v2785
        %v2791 = vsel %vm2780, %v2753, %v2786
        %v2792 = vsel %vm2781, %v2773, %v2787
        %v2793 = vmul.f32 %v2788, %v594
        %v2794 = vmul.f32 %v2789, %v595
        %v2795 = vmul.f32 %v2790, %v596
        %v2796 = vmul.f32 %v2791, %v597
        %v2797 = vmul.f32 %v2792, %v598
        %2798 = vst [vmem:[#allocation3 + $0x78] sm:$0xff] %v2793
        %2799 = vst [vmem:[#allocation3 + $0x80] sm:$0xff] %v2794
        %2800 = vst [vmem:[#allocation3 + $0x88] sm:$0xff] %v2795
        %2801 = vst [vmem:[#allocation3 + $0x90] sm:$0xff] %v2796
        %2802 = vst [vmem:[#allocation3 + $0x98] sm:$0xff] %v2797
        %v2803 = vld [vmem:[#allocation3 + $0x28] sm:$0xff]
        %v2804 = vld [vmem:[#allocation3 + $0x30] sm:$0xff]
        %v2805 = vld [vmem:[#allocation3 + $0x38] sm:$0xff]
        %v2806 = vld [vmem:[#allocation3 + $0x40] sm:$0xff]
        %v2807 = vld [vmem:[#allocation3 + $0x48] sm:$0xff]
        %v2808 = vld [vmem:[#allocation3 + $0x50] sm:$0xff]
        %v2809 = vld [vmem:[#allocation3 + $0x58] sm:$0xff]
        %v2810 = vld [vmem:[#allocation3 + $0x60] sm:$0xff]
        %v2811 = vld [vmem:[#allocation3 + $0x68] sm:$0xff]
        %v2812 = vld [vmem:[#allocation3 + $0x70] sm:$0xff]
        %v2813 = vld [vmem:[#allocation3 + $0x78] sm:$0xff]
        %v2814 = vld [vmem:[#allocation3 + $0x80] sm:$0xff]
        %v2815 = vld [vmem:[#allocation3 + $0x88] sm:$0xff]
        %v2816 = vld [vmem:[#allocation3 + $0x90] sm:$0xff]
        %v2817 = vld [vmem:[#allocation3 + $0x98] sm:$0xff]
        %v2818 = vld [vmem:[#allocation4 + $0xa8] sm:$0xff]
        %v2819 = vld [vmem:[#allocation4 + $0xb0] sm:$0xff]
        %v2820 = vld [vmem:[%s2 + $0x38] sm:$0xff]
        %2821 = vrot.lane.b32.xlu0 %v2803, 27
        %v2822 = vpop.permute.xlu0 %2821
        %2823 = vrot.lane.b32.xlu0 %v2808, 27
        %v2824 = vpop.permute.xlu0 %2823
        %2825 = vrot.lane.b32.xlu0 %v2813, 27
        %v2826 = vpop.permute.xlu0 %2825
        %2827 = vrot.lane.b32.xlu0 %v2804, 27
        %v2828 = vpop.permute.xlu0 %2827
        %2829 = vrot.lane.b32.xlu0 %v2809, 27
        %v2830 = vpop.permute.xlu0 %2829
        %2831 = vrot.lane.b32.xlu0 %v2814, 27
        %v2832 = vpop.permute.xlu0 %2831
        %2833 = vrot.lane.b32.xlu0 %v2805, 27
        %v2834 = vpop.permute.xlu0 %2833
        %2835 = vrot.lane.b32.xlu0 %v2810, 27
        %v2836 = vpop.permute.xlu0 %2835
        %2837 = vrot.lane.b32.xlu0 %v2815, 27
        %v2838 = vpop.permute.xlu0 %2837
        %2839 = vrot.lane.b32.xlu0 %v2806, 27
        %v2840 = vpop.permute.xlu0 %2839
        %2841 = vrot.lane.b32.xlu0 %v2811, 27
        %v2842 = vpop.permute.xlu0 %2841
        %2843 = vrot.lane.b32.xlu0 %v2816, 27
        %v2844 = vpop.permute.xlu0 %2843
        %2845 = vrot.lane.b32.xlu0 %v2807, 27
        %v2846 = vpop.permute.xlu0 %2845
        %2847 = vrot.lane.b32.xlu0 %v2812, 27
        %v2848 = vpop.permute.xlu0 %2847
        %2849 = vrot.lane.b32.xlu0 %v2817, 27
        %v2850 = vpop.permute.xlu0 %2849
        %v2851 = vsel %vm261, %v2840, %v2846
        %v2852 = vsel %vm261, %v2842, %v2848
        %v2853 = vsel %vm261, %v2844, %v2850
        %v2854 = vsel %vm261, %v2834, %v2840
        %v2855 = vsel %vm261, %v2836, %v2842
        %v2856 = vsel %vm261, %v2838, %v2844
        %v2857 = vsel %vm261, %v2828, %v2834
        %v2858 = vsel %vm261, %v2830, %v2836
        %v2859 = vsel %vm261, %v2832, %v2838
        %v2860 = vsel %vm261, %v2822, %v2828
        %v2861 = vsel %vm261, %v2824, %v2830
        %v2862 = vsel %vm261, %v2826, %v2832
        %v2863 = vsel %vm261, %v2846, %v2822
        %v2864 = vsel %vm261, %v2848, %v2824
        %v2865 = vsel %vm261, %v2850, %v2826
        %2866 = vst [vmem:[#allocation2] sm:$0xff] %v2863
        %2867 = vst [vmem:[#allocation2 + $0x8] sm:$0xff] %v2860
        %2868 = vst [vmem:[#allocation2 + $0x10] sm:$0xff] %v2857
        %2869 = vst [vmem:[#allocation2 + $0x18] sm:$0xff] %v2854
        %2870 = vst [vmem:[#allocation2 + $0x20] sm:$0xff] %v2851
        %2871 = vst [vmem:[#allocation2 + $0x28] sm:$0xff] %v2864
        %2872 = vst [vmem:[#allocation2 + $0x30] sm:$0xff] %v2861
        %2873 = vst [vmem:[#allocation2 + $0x38] sm:$0xff] %v2858
        %2874 = vst [vmem:[#allocation2 + $0x40] sm:$0xff] %v2855
        %2875 = vst [vmem:[#allocation2 + $0x48] sm:$0xff] %v2852
        %2876 = vst [vmem:[#allocation2 + $0x50] sm:$0xff] %v2865
        %2877 = vst [vmem:[#allocation2 + $0x58] sm:$0xff] %v2862
        %2878 = vst [vmem:[#allocation2 + $0x60] sm:$0xff] %v2859
        %2879 = vst [vmem:[#allocation2 + $0x68] sm:$0xff] %v2856
        %2880 = vst [vmem:[#allocation2 + $0x70] sm:$0xff] %v2853
        %2881 = vrot.lane.b32.xlu0 %v2803, 26
        %v2882 = vpop.permute.xlu0 %2881
        %2883 = vrot.lane.b32.xlu0 %v2808, 26
        %v2884 = vpop.permute.xlu0 %2883
        %2885 = vrot.lane.b32.xlu0 %v2813, 26
        %v2886 = vpop.permute.xlu0 %2885
        %2887 = vrot.lane.b32.xlu0 %v2804, 26
        %v2888 = vpop.permute.xlu0 %2887
        %2889 = vrot.lane.b32.xlu0 %v2809, 26
        %v2890 = vpop.permute.xlu0 %2889
        %2891 = vrot.lane.b32.xlu0 %v2814, 26
        %v2892 = vpop.permute.xlu0 %2891
        %2893 = vrot.lane.b32.xlu0 %v2805, 26
        %v2894 = vpop.permute.xlu0 %2893
        %2895 = vrot.lane.b32.xlu0 %v2810, 26
        %v2896 = vpop.permute.xlu0 %2895
        %2897 = vrot.lane.b32.xlu0 %v2815, 26
        %v2898 = vpop.permute.xlu0 %2897
        %2899 = vrot.lane.b32.xlu0 %v2806, 26
        %v2900 = vpop.permute.xlu0 %2899
        %2901 = vrot.lane.b32.xlu0 %v2811, 26
        %v2902 = vpop.permute.xlu0 %2901
        %2903 = vrot.lane.b32.xlu0 %v2816, 26
        %v2904 = vpop.permute.xlu0 %2903
        %2905 = vrot.lane.b32.xlu0 %v2807, 26
        %v2906 = vpop.permute.xlu0 %2905
        %2907 = vrot.lane.b32.xlu0 %v2812, 26
        %v2908 = vpop.permute.xlu0 %2907
        %2909 = vrot.lane.b32.xlu0 %v2817, 26
        %v2910 = vpop.permute.xlu0 %2909
        %v2911 = vsel %vm282, %v2900, %v2906
        %v2912 = vsel %vm282, %v2902, %v2908
        %v2913 = vsel %vm282, %v2904, %v2910
        %v2914 = vsel %vm282, %v2894, %v2900
        %v2915 = vsel %vm282, %v2896, %v2902
        %v2916 = vsel %vm282, %v2898, %v2904
        %v2917 = vsel %vm282, %v2888, %v2894
        %v2918 = vsel %vm282, %v2890, %v2896
        %v2919 = vsel %vm282, %v2892, %v2898
        %v2920 = vsel %vm282, %v2882, %v2888
        %v2921 = vsel %vm282, %v2884, %v2890
        %v2922 = vsel %vm282, %v2886, %v2892
        %v2923 = vsel %vm282, %v2906, %v2882
        %v2924 = vsel %vm282, %v2908, %v2884
        %v2925 = vsel %vm282, %v2910, %v2886
        %2926 = vst [vmem:[#allocation2 + $0x78] sm:$0xff] %v2923
        %2927 = vst [vmem:[#allocation2 + $0x80] sm:$0xff] %v2920
        %2928 = vst [vmem:[#allocation2 + $0x88] sm:$0xff] %v2917
        %2929 = vst [vmem:[#allocation2 + $0x90] sm:$0xff] %v2914
        %2930 = vst [vmem:[#allocation2 + $0x98] sm:$0xff] %v2911
        %2931 = vst [vmem:[#allocation2 + $0xa0] sm:$0xff] %v2924
        %2932 = vst [vmem:[#allocation2 + $0xa8] sm:$0xff] %v2921
        %2933 = vst [vmem:[#allocation2 + $0xb0] sm:$0xff] %v2918
        %2934 = vst [vmem:[#allocation2 + $0xb8] sm:$0xff] %v2915
        %2935 = vst [vmem:[#allocation2 + $0xc0] sm:$0xff] %v2912
        %2936 = vst [vmem:[#allocation2 + $0xc8] sm:$0xff] %v2925
        %2937 = vst [vmem:[#allocation2 + $0xd0] sm:$0xff] %v2922
        %2938 = vst [vmem:[#allocation2 + $0xd8] sm:$0xff] %v2919
        %2939 = vst [vmem:[#allocation2 + $0xe0] sm:$0xff] %v2916
        %2940 = vst [vmem:[#allocation2 + $0xe8] sm:$0xff] %v2913
        %2941 = vrot.lane.b32.xlu0 %v2803, 25
        %v2942 = vpop.permute.xlu0 %2941
        %2943 = vrot.lane.b32.xlu0 %v2808, 25
        %v2944 = vpop.permute.xlu0 %2943
        %2945 = vrot.lane.b32.xlu0 %v2813, 25
        %v2946 = vpop.permute.xlu0 %2945
        %2947 = vrot.lane.b32.xlu0 %v2804, 25
        %v2948 = vpop.permute.xlu0 %2947
        %2949 = vrot.lane.b32.xlu0 %v2809, 25
        %v2950 = vpop.permute.xlu0 %2949
        %2951 = vrot.lane.b32.xlu0 %v2814, 25
        %v2952 = vpop.permute.xlu0 %2951
        %2953 = vrot.lane.b32.xlu0 %v2805, 25
        %v2954 = vpop.permute.xlu0 %2953
        %2955 = vrot.lane.b32.xlu0 %v2810, 25
        %v2956 = vpop.permute.xlu0 %2955
        %2957 = vrot.lane.b32.xlu0 %v2815, 25
        %v2958 = vpop.permute.xlu0 %2957
        %2959 = vrot.lane.b32.xlu0 %v2806, 25
        %v2960 = vpop.permute.xlu0 %2959
        %2961 = vrot.lane.b32.xlu0 %v2811, 25
        %v2962 = vpop.permute.xlu0 %2961
        %2963 = vrot.lane.b32.xlu0 %v2816, 25
        %v2964 = vpop.permute.xlu0 %2963
        %2965 = vrot.lane.b32.xlu0 %v2807, 25
        %v2966 = vpop.permute.xlu0 %2965
        %2967 = vrot.lane.b32.xlu0 %v2812, 25
        %v2968 = vpop.permute.xlu0 %2967
        %2969 = vrot.lane.b32.xlu0 %v2817, 25
        %v2970 = vpop.permute.xlu0 %2969
        %v2971 = vsel %vm303, %v2960, %v2966
        %v2972 = vsel %vm303, %v2962, %v2968
        %v2973 = vsel %vm303, %v2964, %v2970
        %v2974 = vsel %vm303, %v2954, %v2960
        %v2975 = vsel %vm303, %v2956, %v2962
        %v2976 = vsel %vm303, %v2958, %v2964
        %v2977 = vsel %vm303, %v2948, %v2954
        %v2978 = vsel %vm303, %v2950, %v2956
        %v2979 = vsel %vm303, %v2952, %v2958
        %v2980 = vsel %vm303, %v2942, %v2948
        %v2981 = vsel %vm303, %v2944, %v2950
        %v2982 = vsel %vm303, %v2946, %v2952
        %v2983 = vsel %vm303, %v2966, %v2942
        %v2984 = vsel %vm303, %v2968, %v2944
        %v2985 = vsel %vm303, %v2970, %v2946
        %2986 = vst [vmem:[#allocation2 + $0xf0] sm:$0xff] %v2983
        %2987 = vst [vmem:[#allocation2 + $0xf8] sm:$0xff] %v2980
        %2988 = vst [vmem:[#allocation2 + $0x100] sm:$0xff] %v2977
        %2989 = vst [vmem:[#allocation2 + $0x108] sm:$0xff] %v2974
        %2990 = vst [vmem:[#allocation2 + $0x110] sm:$0xff] %v2971
        %2991 = vst [vmem:[#allocation2 + $0x118] sm:$0xff] %v2984
        %2992 = vst [vmem:[#allocation2 + $0x120] sm:$0xff] %v2981
        %2993 = vst [vmem:[#allocation2 + $0x128] sm:$0xff] %v2978
        %2994 = vst [vmem:[#allocation2 + $0x130] sm:$0xff] %v2975
        %2995 = vst [vmem:[#allocation2 + $0x138] sm:$0xff] %v2972
        %2996 = vst [vmem:[#allocation2 + $0x140] sm:$0xff] %v2985
        %2997 = vst [vmem:[#allocation2 + $0x148] sm:$0xff] %v2982
        %2998 = vst [vmem:[#allocation2 + $0x150] sm:$0xff] %v2979
        %2999 = vst [vmem:[#allocation2 + $0x158] sm:$0xff] %v2976
        %3000 = vst [vmem:[#allocation2 + $0x160] sm:$0xff] %v2973
        %3001 = vrot.lane.b32.xlu0 %v2803, 1
        %v3002 = vpop.permute.xlu0 %3001
        %3003 = vrot.lane.b32.xlu0 %v2808, 1
        %v3004 = vpop.permute.xlu0 %3003
        %3005 = vrot.lane.b32.xlu0 %v2813, 1
        %v3006 = vpop.permute.xlu0 %3005
        %3007 = vrot.lane.b32.xlu0 %v2804, 1
        %v3008 = vpop.permute.xlu0 %3007
        %3009 = vrot.lane.b32.xlu0 %v2809, 1
        %v3010 = vpop.permute.xlu0 %3009
        %3011 = vrot.lane.b32.xlu0 %v2814, 1
        %v3012 = vpop.permute.xlu0 %3011
        %3013 = vrot.lane.b32.xlu0 %v2805, 1
        %v3014 = vpop.permute.xlu0 %3013
        %3015 = vrot.lane.b32.xlu0 %v2810, 1
        %v3016 = vpop.permute.xlu0 %3015
        %3017 = vrot.lane.b32.xlu0 %v2815, 1
        %v3018 = vpop.permute.xlu0 %3017
        %3019 = vrot.lane.b32.xlu0 %v2806, 1
        %v3020 = vpop.permute.xlu0 %3019
        %3021 = vrot.lane.b32.xlu0 %v2811, 1
        %v3022 = vpop.permute.xlu0 %3021
        %3023 = vrot.lane.b32.xlu0 %v2816, 1
        %v3024 = vpop.permute.xlu0 %3023
        %3025 = vrot.lane.b32.xlu0 %v2807, 1
        %v3026 = vpop.permute.xlu0 %3025
        %3027 = vrot.lane.b32.xlu0 %v2812, 1
        %v3028 = vpop.permute.xlu0 %3027
        %3029 = vrot.lane.b32.xlu0 %v2817, 1
        %v3030 = vpop.permute.xlu0 %3029
        %v3031 = vsel %vm324, %v3020, %v3026
        %v3032 = vsel %vm324, %v3022, %v3028
        %v3033 = vsel %vm324, %v3024, %v3030
        %v3034 = vsel %vm324, %v3014, %v3020
        %v3035 = vsel %vm324, %v3016, %v3022
        %v3036 = vsel %vm324, %v3018, %v3024
        %v3037 = vsel %vm324, %v3008, %v3014
        %v3038 = vsel %vm324, %v3010, %v3016
        %v3039 = vsel %vm324, %v3012, %v3018
        %v3040 = vsel %vm324, %v3002, %v3008
        %v3041 = vsel %vm324, %v3004, %v3010
        %v3042 = vsel %vm324, %v3006, %v3012
        %v3043 = vsel %vm324, %v3026, %v3002
        %v3044 = vsel %vm324, %v3028, %v3004
        %v3045 = vsel %vm324, %v3030, %v3006
        %3046 = vst [vmem:[#allocation2 + $0x168] sm:$0xff] %v3043
        %3047 = vst [vmem:[#allocation2 + $0x170] sm:$0xff] %v3040
        %3048 = vst [vmem:[#allocation2 + $0x178] sm:$0xff] %v3037
        %3049 = vst [vmem:[#allocation2 + $0x180] sm:$0xff] %v3034
        %3050 = vst [vmem:[#allocation2 + $0x188] sm:$0xff] %v3031
        %3051 = vst [vmem:[#allocation2 + $0x190] sm:$0xff] %v3044
        %3052 = vst [vmem:[#allocation2 + $0x198] sm:$0xff] %v3041
        %3053 = vst [vmem:[#allocation2 + $0x1a0] sm:$0xff] %v3038
        %3054 = vst [vmem:[#allocation2 + $0x1a8] sm:$0xff] %v3035
        %3055 = vst [vmem:[#allocation2 + $0x1b0] sm:$0xff] %v3032
        %3056 = vst [vmem:[#allocation2 + $0x1b8] sm:$0xff] %v3045
        %3057 = vst [vmem:[#allocation2 + $0x1c0] sm:$0xff] %v3042
        %3058 = vst [vmem:[#allocation2 + $0x1c8] sm:$0xff] %v3039
        %3059 = vst [vmem:[#allocation2 + $0x1d0] sm:$0xff] %v3036
        %3060 = vst [vmem:[#allocation2 + $0x1d8] sm:$0xff] %v3033
        %3061 = vst [vmem:[#allocation2 + $0x1e0] sm:$0xff] %v2803
        %3062 = vst [vmem:[#allocation2 + $0x1e8] sm:$0xff] %v2804
        %3063 = vst [vmem:[#allocation2 + $0x1f0] sm:$0xff] %v2805
        %3064 = vst [vmem:[#allocation2 + $0x1f8] sm:$0xff] %v2806
        %3065 = vst [vmem:[#allocation2 + $0x200] sm:$0xff] %v2807
        %3066 = vst [vmem:[#allocation2 + $0x208] sm:$0xff] %v2808
        %3067 = vst [vmem:[#allocation2 + $0x210] sm:$0xff] %v2809
        %3068 = vst [vmem:[#allocation2 + $0x218] sm:$0xff] %v2810
        %3069 = vst [vmem:[#allocation2 + $0x220] sm:$0xff] %v2811
        %3070 = vst [vmem:[#allocation2 + $0x228] sm:$0xff] %v2812
        %3071 = vst [vmem:[#allocation2 + $0x230] sm:$0xff] %v2813
        %3072 = vst [vmem:[#allocation2 + $0x238] sm:$0xff] %v2814
        %3073 = vst [vmem:[#allocation2 + $0x240] sm:$0xff] %v2815
        %3074 = vst [vmem:[#allocation2 + $0x248] sm:$0xff] %v2816
        %3075 = vst [vmem:[#allocation2 + $0x250] sm:$0xff] %v2817
        %3076 = vrot.lane.b32.xlu0 %v2803, 127
        %v3077 = vpop.permute.xlu0 %3076
        %3078 = vrot.lane.b32.xlu0 %v2808, 127
        %v3079 = vpop.permute.xlu0 %3078
        %3080 = vrot.lane.b32.xlu0 %v2813, 127
        %v3081 = vpop.permute.xlu0 %3080
        %3082 = vrot.lane.b32.xlu0 %v2804, 127
        %v3083 = vpop.permute.xlu0 %3082
        %3084 = vrot.lane.b32.xlu0 %v2809, 127
        %v3085 = vpop.permute.xlu0 %3084
        %3086 = vrot.lane.b32.xlu0 %v2814, 127
        %v3087 = vpop.permute.xlu0 %3086
        %3088 = vrot.lane.b32.xlu0 %v2805, 127
        %v3089 = vpop.permute.xlu0 %3088
        %3090 = vrot.lane.b32.xlu0 %v2810, 127
        %v3091 = vpop.permute.xlu0 %3090
        %3092 = vrot.lane.b32.xlu0 %v2815, 127
        %v3093 = vpop.permute.xlu0 %3092
        %3094 = vrot.lane.b32.xlu0 %v2806, 127
        %v3095 = vpop.permute.xlu0 %3094
        %3096 = vrot.lane.b32.xlu0 %v2811, 127
        %v3097 = vpop.permute.xlu0 %3096
        %3098 = vrot.lane.b32.xlu0 %v2816, 127
        %v3099 = vpop.permute.xlu0 %3098
        %3100 = vrot.lane.b32.xlu0 %v2807, 127
        %v3101 = vpop.permute.xlu0 %3100
        %3102 = vrot.lane.b32.xlu0 %v2812, 127
        %v3103 = vpop.permute.xlu0 %3102
        %3104 = vrot.lane.b32.xlu0 %v2817, 127
        %v3105 = vpop.permute.xlu0 %3104
        %v3106 = vsel %vm350, %v3095, %v3101
        %v3107 = vsel %vm350, %v3097, %v3103
        %v3108 = vsel %vm350, %v3099, %v3105
        %v3109 = vsel %vm350, %v3089, %v3095
        %v3110 = vsel %vm350, %v3091, %v3097
        %v3111 = vsel %vm350, %v3093, %v3099
        %v3112 = vsel %vm350, %v3083, %v3089
        %v3113 = vsel %vm350, %v3085, %v3091
        %v3114 = vsel %vm350, %v3087, %v3093
        %v3115 = vsel %vm350, %v3077, %v3083
        %v3116 = vsel %vm350, %v3079, %v3085
        %v3117 = vsel %vm350, %v3081, %v3087
        %v3118 = vsel %vm350, %v3101, %v3077
        %v3119 = vsel %vm350, %v3103, %v3079
        %v3120 = vsel %vm350, %v3105, %v3081
        %3121 = vst [vmem:[#allocation2 + $0x258] sm:$0xff] %v3115
        %3122 = vst [vmem:[#allocation2 + $0x260] sm:$0xff] %v3112
        %3123 = vst [vmem:[#allocation2 + $0x268] sm:$0xff] %v3109
        %3124 = vst [vmem:[#allocation2 + $0x270] sm:$0xff] %v3106
        %3125 = vst [vmem:[#allocation2 + $0x278] sm:$0xff] %v3118
        %3126 = vst [vmem:[#allocation2 + $0x280] sm:$0xff] %v3116
        %3127 = vst [vmem:[#allocation2 + $0x288] sm:$0xff] %v3113
        %3128 = vst [vmem:[#allocation2 + $0x290] sm:$0xff] %v3110
        %3129 = vst [vmem:[#allocation2 + $0x298] sm:$0xff] %v3107
        %3130 = vst [vmem:[#allocation2 + $0x2a0] sm:$0xff] %v3119
        %3131 = vst [vmem:[#allocation2 + $0x2a8] sm:$0xff] %v3117
        %3132 = vst [vmem:[#allocation2 + $0x2b0] sm:$0xff] %v3114
        %3133 = vst [vmem:[#allocation2 + $0x2b8] sm:$0xff] %v3111
        %3134 = vst [vmem:[#allocation2 + $0x2c0] sm:$0xff] %v3108
        %3135 = vst [vmem:[#allocation2 + $0x2c8] sm:$0xff] %v3120
        %3136 = vrot.lane.b32.xlu0 %v2803, 103
        %v3137 = vpop.permute.xlu0 %3136
        %3138 = vrot.lane.b32.xlu0 %v2808, 103
        %v3139 = vpop.permute.xlu0 %3138
        %3140 = vrot.lane.b32.xlu0 %v2813, 103
        %v3141 = vpop.permute.xlu0 %3140
        %3142 = vrot.lane.b32.xlu0 %v2804, 103
        %v3143 = vpop.permute.xlu0 %3142
        %3144 = vrot.lane.b32.xlu0 %v2809, 103
        %v3145 = vpop.permute.xlu0 %3144
        %3146 = vrot.lane.b32.xlu0 %v2814, 103
        %v3147 = vpop.permute.xlu0 %3146
        %3148 = vrot.lane.b32.xlu0 %v2805, 103
        %v3149 = vpop.permute.xlu0 %3148
        %3150 = vrot.lane.b32.xlu0 %v2810, 103
        %v3151 = vpop.permute.xlu0 %3150
        %3152 = vrot.lane.b32.xlu0 %v2815, 103
        %v3153 = vpop.permute.xlu0 %3152
        %3154 = vrot.lane.b32.xlu0 %v2806, 103
        %v3155 = vpop.permute.xlu0 %3154
        %3156 = vrot.lane.b32.xlu0 %v2811, 103
        %v3157 = vpop.permute.xlu0 %3156
        %3158 = vrot.lane.b32.xlu0 %v2816, 103
        %v3159 = vpop.permute.xlu0 %3158
        %3160 = vrot.lane.b32.xlu0 %v2807, 103
        %v3161 = vpop.permute.xlu0 %3160
        %3162 = vrot.lane.b32.xlu0 %v2812, 103
        %v3163 = vpop.permute.xlu0 %3162
        %3164 = vrot.lane.b32.xlu0 %v2817, 103
        %v3165 = vpop.permute.xlu0 %3164
        %v3166 = vsel %vm371, %v3155, %v3161
        %v3167 = vsel %vm371, %v3157, %v3163
        %v3168 = vsel %vm371, %v3159, %v3165
        %v3169 = vsel %vm371, %v3149, %v3155
        %v3170 = vsel %vm371, %v3151, %v3157
        %v3171 = vsel %vm371, %v3153, %v3159
        %v3172 = vsel %vm371, %v3143, %v3149
        %v3173 = vsel %vm371, %v3145, %v3151
        %v3174 = vsel %vm371, %v3147, %v3153
        %v3175 = vsel %vm371, %v3137, %v3143
        %v3176 = vsel %vm371, %v3139, %v3145
        %v3177 = vsel %vm371, %v3141, %v3147
        %v3178 = vsel %vm371, %v3161, %v3137
        %v3179 = vsel %vm371, %v3163, %v3139
        %v3180 = vsel %vm371, %v3165, %v3141
        %3181 = vst [vmem:[#allocation2 + $0x2d0] sm:$0xff] %v3175
        %3182 = vst [vmem:[#allocation2 + $0x2d8] sm:$0xff] %v3172
        %3183 = vst [vmem:[#allocation2 + $0x2e0] sm:$0xff] %v3169
        %3184 = vst [vmem:[#allocation2 + $0x2e8] sm:$0xff] %v3166
        %3185 = vst [vmem:[#allocation2 + $0x2f0] sm:$0xff] %v3178
        %3186 = vst [vmem:[#allocation2 + $0x2f8] sm:$0xff] %v3176
        %3187 = vst [vmem:[#allocation2 + $0x300] sm:$0xff] %v3173
        %3188 = vst [vmem:[#allocation2 + $0x308] sm:$0xff] %v3170
        %3189 = vst [vmem:[#allocation2 + $0x310] sm:$0xff] %v3167
        %3190 = vst [vmem:[#allocation2 + $0x318] sm:$0xff] %v3179
        %3191 = vst [vmem:[#allocation2 + $0x320] sm:$0xff] %v3177
        %3192 = vst [vmem:[#allocation2 + $0x328] sm:$0xff] %v3174
        %3193 = vst [vmem:[#allocation2 + $0x330] sm:$0xff] %v3171
        %3194 = vst [vmem:[#allocation2 + $0x338] sm:$0xff] %v3168
        %3195 = vst [vmem:[#allocation2 + $0x340] sm:$0xff] %v3180
        %3196 = vrot.lane.b32.xlu0 %v2803, 102
        %v3197 = vpop.permute.xlu0 %3196
        %3198 = vrot.lane.b32.xlu0 %v2808, 102
        %v3199 = vpop.permute.xlu0 %3198
        %3200 = vrot.lane.b32.xlu0 %v2813, 102
        %v3201 = vpop.permute.xlu0 %3200
        %3202 = vrot.lane.b32.xlu0 %v2804, 102
        %v3203 = vpop.permute.xlu0 %3202
        %3204 = vrot.lane.b32.xlu0 %v2809, 102
        %v3205 = vpop.permute.xlu0 %3204
        %3206 = vrot.lane.b32.xlu0 %v2814, 102
        %v3207 = vpop.permute.xlu0 %3206
        %3208 = vrot.lane.b32.xlu0 %v2805, 102
        %v3209 = vpop.permute.xlu0 %3208
        %3210 = vrot.lane.b32.xlu0 %v2810, 102
        %v3211 = vpop.permute.xlu0 %3210
        %3212 = vrot.lane.b32.xlu0 %v2815, 102
        %v3213 = vpop.permute.xlu0 %3212
        %3214 = vrot.lane.b32.xlu0 %v2806, 102
        %v3215 = vpop.permute.xlu0 %3214
        %3216 = vrot.lane.b32.xlu0 %v2811, 102
        %v3217 = vpop.permute.xlu0 %3216
        %3218 = vrot.lane.b32.xlu0 %v2816, 102
        %v3219 = vpop.permute.xlu0 %3218
        %3220 = vrot.lane.b32.xlu0 %v2807, 102
        %v3221 = vpop.permute.xlu0 %3220
        %3222 = vrot.lane.b32.xlu0 %v2812, 102
        %v3223 = vpop.permute.xlu0 %3222
        %3224 = vrot.lane.b32.xlu0 %v2817, 102
        %v3225 = vpop.permute.xlu0 %3224
        %v3226 = vsel %vm392, %v3215, %v3221
        %v3227 = vsel %vm392, %v3217, %v3223
        %v3228 = vsel %vm392, %v3219, %v3225
        %v3229 = vsel %vm392, %v3209, %v3215
        %v3230 = vsel %vm392, %v3211, %v3217
        %v3231 = vsel %vm392, %v3213, %v3219
        %v3232 = vsel %vm392, %v3203, %v3209
        %v3233 = vsel %vm392, %v3205, %v3211
        %v3234 = vsel %vm392, %v3207, %v3213
        %v3235 = vsel %vm392, %v3197, %v3203
        %v3236 = vsel %vm392, %v3199, %v3205
        %v3237 = vsel %vm392, %v3201, %v3207
        %v3238 = vsel %vm392, %v3221, %v3197
        %v3239 = vsel %vm392, %v3223, %v3199
        %v3240 = vsel %vm392, %v3225, %v3201
        %3241 = vst [vmem:[#allocation2 + $0x348] sm:$0xff] %v3235
        %3242 = vst [vmem:[#allocation2 + $0x350] sm:$0xff] %v3232
        %3243 = vst [vmem:[#allocation2 + $0x358] sm:$0xff] %v3229
        %3244 = vst [vmem:[#allocation2 + $0x360] sm:$0xff] %v3226
        %3245 = vst [vmem:[#allocation2 + $0x368] sm:$0xff] %v3238
        %3246 = vst [vmem:[#allocation2 + $0x370] sm:$0xff] %v3236
        %3247 = vst [vmem:[#allocation2 + $0x378] sm:$0xff] %v3233
        %3248 = vst [vmem:[#allocation2 + $0x380] sm:$0xff] %v3230
        %3249 = vst [vmem:[#allocation2 + $0x388] sm:$0xff] %v3227
        %3250 = vst [vmem:[#allocation2 + $0x390] sm:$0xff] %v3239
        %3251 = vst [vmem:[#allocation2 + $0x398] sm:$0xff] %v3237
        %3252 = vst [vmem:[#allocation2 + $0x3a0] sm:$0xff] %v3234
        %3253 = vst [vmem:[#allocation2 + $0x3a8] sm:$0xff] %v3231
        %3254 = vst [vmem:[#allocation2 + $0x3b0] sm:$0xff] %v3228
        %3255 = vst [vmem:[#allocation2 + $0x3b8] sm:$0xff] %v3240
        %3256 = vrot.lane.b32.xlu0 %v2803, 101
        %v3257 = vpop.permute.xlu0 %3256
        %3258 = vrot.lane.b32.xlu0 %v2808, 101
        %v3259 = vpop.permute.xlu0 %3258
        %3260 = vrot.lane.b32.xlu0 %v2813, 101
        %v3261 = vpop.permute.xlu0 %3260
        %3262 = vrot.lane.b32.xlu0 %v2804, 101
        %v3263 = vpop.permute.xlu0 %3262
        %3264 = vrot.lane.b32.xlu0 %v2809, 101
        %v3265 = vpop.permute.xlu0 %3264
        %3266 = vrot.lane.b32.xlu0 %v2814, 101
        %v3267 = vpop.permute.xlu0 %3266
        %3268 = vrot.lane.b32.xlu0 %v2805, 101
        %v3269 = vpop.permute.xlu0 %3268
        %3270 = vrot.lane.b32.xlu0 %v2810, 101
        %v3271 = vpop.permute.xlu0 %3270
        %3272 = vrot.lane.b32.xlu0 %v2815, 101
        %v3273 = vpop.permute.xlu0 %3272
        %3274 = vrot.lane.b32.xlu0 %v2806, 101
        %v3275 = vpop.permute.xlu0 %3274
        %3276 = vrot.lane.b32.xlu0 %v2811, 101
        %v3277 = vpop.permute.xlu0 %3276
        %3278 = vrot.lane.b32.xlu0 %v2816, 101
        %v3279 = vpop.permute.xlu0 %3278
        %3280 = vrot.lane.b32.xlu0 %v2807, 101
        %v3281 = vpop.permute.xlu0 %3280
        %3282 = vrot.lane.b32.xlu0 %v2812, 101
        %v3283 = vpop.permute.xlu0 %3282
        %3284 = vrot.lane.b32.xlu0 %v2817, 101
        %v3285 = vpop.permute.xlu0 %3284
        %v3286 = vsel %vm413, %v3275, %v3281
        %v3287 = vsel %vm413, %v3277, %v3283
        %v3288 = vsel %vm413, %v3279, %v3285
        %v3289 = vsel %vm413, %v3269, %v3275
        %v3290 = vsel %vm413, %v3271, %v3277
        %v3291 = vsel %vm413, %v3273, %v3279
        %v3292 = vsel %vm413, %v3263, %v3269
        %v3293 = vsel %vm413, %v3265, %v3271
        %v3294 = vsel %vm413, %v3267, %v3273
        %v3295 = vsel %vm413, %v3257, %v3263
        %v3296 = vsel %vm413, %v3259, %v3265
        %v3297 = vsel %vm413, %v3261, %v3267
        %v3298 = vsel %vm413, %v3281, %v3257
        %v3299 = vsel %vm413, %v3283, %v3259
        %v3300 = vsel %vm413, %v3285, %v3261
        %3301 = vst [vmem:[#allocation2 + $0x3c0] sm:$0xff] %v3295
        %3302 = vst [vmem:[#allocation2 + $0x3c8] sm:$0xff] %v3292
        %3303 = vst [vmem:[#allocation2 + $0x3d0] sm:$0xff] %v3289
        %3304 = vst [vmem:[#allocation2 + $0x3d8] sm:$0xff] %v3286
        %3305 = vst [vmem:[#allocation2 + $0x3e0] sm:$0xff] %v3298
        %3306 = vst [vmem:[#allocation2 + $0x3e8] sm:$0xff] %v3296
        %3307 = vst [vmem:[#allocation2 + $0x3f0] sm:$0xff] %v3293
        %3308 = vst [vmem:[#allocation2 + $0x3f8] sm:$0xff] %v3290
        %3309 = vst [vmem:[#allocation2 + $0x400] sm:$0xff] %v3287
        %3310 = vst [vmem:[#allocation2 + $0x408] sm:$0xff] %v3299
        %3311 = vst [vmem:[#allocation2 + $0x410] sm:$0xff] %v3297
        %3312 = vst [vmem:[#allocation2 + $0x418] sm:$0xff] %v3294
        %3313 = vst [vmem:[#allocation2 + $0x420] sm:$0xff] %v3291
        %3314 = vst [vmem:[#allocation2 + $0x428] sm:$0xff] %v3288
        %3315 = vst [vmem:[#allocation2 + $0x430] sm:$0xff] %v3300
        %v3316 = vld [vmem:[#allocation2] sm:$0xff]
        %v3317 = vld [vmem:[#allocation2 + $0x8] sm:$0xff]
        %v3318 = vld [vmem:[#allocation2 + $0x10] sm:$0xff]
        %v3319 = vld [vmem:[#allocation2 + $0x18] sm:$0xff]
        %v3320 = vld [vmem:[#allocation2 + $0x20] sm:$0xff]
        %v3321 = vld [vmem:[#allocation2 + $0x28] sm:$0xff]
        %v3322 = vld [vmem:[#allocation2 + $0x30] sm:$0xff]
        %v3323 = vld [vmem:[#allocation2 + $0x38] sm:$0xff]
        %v3324 = vld [vmem:[#allocation2 + $0x40] sm:$0xff]
        %v3325 = vld [vmem:[#allocation2 + $0x48] sm:$0xff]
        %v3326 = vld [vmem:[#allocation2 + $0x50] sm:$0xff]
        %v3327 = vld [vmem:[#allocation2 + $0x58] sm:$0xff]
        %v3328 = vld [vmem:[#allocation2 + $0x60] sm:$0xff]
        %v3329 = vld [vmem:[#allocation2 + $0x68] sm:$0xff]
        %v3330 = vld [vmem:[#allocation2 + $0x70] sm:$0xff]
        %v3331 = vld [vmem:[#allocation2 + $0x78] sm:$0xff]
        %v3332 = vld [vmem:[#allocation2 + $0x80] sm:$0xff]
        %v3333 = vld [vmem:[#allocation2 + $0x88] sm:$0xff]
        %v3334 = vld [vmem:[#allocation2 + $0x90] sm:$0xff]
        %v3335 = vld [vmem:[#allocation2 + $0x98] sm:$0xff]
        %v3336 = vld [vmem:[#allocation2 + $0xa0] sm:$0xff]
        %v3337 = vld [vmem:[#allocation2 + $0xa8] sm:$0xff]
        %v3338 = vld [vmem:[#allocation2 + $0xb0] sm:$0xff]
        %v3339 = vld [vmem:[#allocation2 + $0xb8] sm:$0xff]
        %v3340 = vld [vmem:[#allocation2 + $0xc0] sm:$0xff]
        %v3341 = vld [vmem:[#allocation2 + $0xc8] sm:$0xff]
        %v3342 = vld [vmem:[#allocation2 + $0xd0] sm:$0xff]
        %v3343 = vld [vmem:[#allocation2 + $0xd8] sm:$0xff]
        %v3344 = vld [vmem:[#allocation2 + $0xe0] sm:$0xff]
        %v3345 = vld [vmem:[#allocation2 + $0xe8] sm:$0xff]
        %v3346 = vld [vmem:[#allocation2 + $0xf0] sm:$0xff]
        %v3347 = vld [vmem:[#allocation2 + $0xf8] sm:$0xff]
        %v3348 = vld [vmem:[#allocation2 + $0x100] sm:$0xff]
        %v3349 = vld [vmem:[#allocation2 + $0x108] sm:$0xff]
        %v3350 = vld [vmem:[#allocation2 + $0x110] sm:$0xff]
        %v3351 = vld [vmem:[#allocation2 + $0x118] sm:$0xff]
        %v3352 = vld [vmem:[#allocation2 + $0x120] sm:$0xff]
        %v3353 = vld [vmem:[#allocation2 + $0x128] sm:$0xff]
        %v3354 = vld [vmem:[#allocation2 + $0x130] sm:$0xff]
        %v3355 = vld [vmem:[#allocation2 + $0x138] sm:$0xff]
        %v3356 = vld [vmem:[#allocation2 + $0x140] sm:$0xff]
        %v3357 = vld [vmem:[#allocation2 + $0x148] sm:$0xff]
        %v3358 = vld [vmem:[#allocation2 + $0x150] sm:$0xff]
        %v3359 = vld [vmem:[#allocation2 + $0x158] sm:$0xff]
        %v3360 = vld [vmem:[#allocation2 + $0x160] sm:$0xff]
        %v3361 = vld [vmem:[#allocation2 + $0x168] sm:$0xff]
        %v3362 = vld [vmem:[#allocation2 + $0x170] sm:$0xff]
        %v3363 = vld [vmem:[#allocation2 + $0x178] sm:$0xff]
        %v3364 = vld [vmem:[#allocation2 + $0x180] sm:$0xff]
        %v3365 = vld [vmem:[#allocation2 + $0x188] sm:$0xff]
        %v3366 = vld [vmem:[#allocation2 + $0x190] sm:$0xff]
        %v3367 = vld [vmem:[#allocation2 + $0x198] sm:$0xff]
        %v3368 = vld [vmem:[#allocation2 + $0x1a0] sm:$0xff]
        %v3369 = vld [vmem:[#allocation2 + $0x1a8] sm:$0xff]
        %v3370 = vld [vmem:[#allocation2 + $0x1b0] sm:$0xff]
        %v3371 = vld [vmem:[#allocation2 + $0x1b8] sm:$0xff]
        %v3372 = vld [vmem:[#allocation2 + $0x1c0] sm:$0xff]
        %v3373 = vld [vmem:[#allocation2 + $0x1c8] sm:$0xff]
        %v3374 = vld [vmem:[#allocation2 + $0x1d0] sm:$0xff]
        %v3375 = vld [vmem:[#allocation2 + $0x1d8] sm:$0xff]
        %v3376 = vld [vmem:[#allocation2 + $0x1e0] sm:$0xff]
        %v3377 = vld [vmem:[#allocation2 + $0x1e8] sm:$0xff]
        %v3378 = vld [vmem:[#allocation2 + $0x1f0] sm:$0xff]
        %v3379 = vld [vmem:[#allocation2 + $0x1f8] sm:$0xff]
        %v3380 = vld [vmem:[#allocation2 + $0x200] sm:$0xff]
        %v3381 = vld [vmem:[#allocation2 + $0x208] sm:$0xff]
        %v3382 = vld [vmem:[#allocation2 + $0x210] sm:$0xff]
        %v3383 = vld [vmem:[#allocation2 + $0x218] sm:$0xff]
        %v3384 = vld [vmem:[#allocation2 + $0x220] sm:$0xff]
        %v3385 = vld [vmem:[#allocation2 + $0x228] sm:$0xff]
        %v3386 = vld [vmem:[#allocation2 + $0x230] sm:$0xff]
        %v3387 = vld [vmem:[#allocation2 + $0x238] sm:$0xff]
        %v3388 = vld [vmem:[#allocation2 + $0x240] sm:$0xff]
        %v3389 = vld [vmem:[#allocation2 + $0x248] sm:$0xff]
        %v3390 = vld [vmem:[#allocation2 + $0x250] sm:$0xff]
        %v3391 = vld [vmem:[#allocation2 + $0x258] sm:$0xff]
        %v3392 = vld [vmem:[#allocation2 + $0x260] sm:$0xff]
        %v3393 = vld [vmem:[#allocation2 + $0x268] sm:$0xff]
        %v3394 = vld [vmem:[#allocation2 + $0x270] sm:$0xff]
        %v3395 = vld [vmem:[#allocation2 + $0x278] sm:$0xff]
        %v3396 = vld [vmem:[#allocation2 + $0x280] sm:$0xff]
        %v3397 = vld [vmem:[#allocation2 + $0x288] sm:$0xff]
        %v3398 = vld [vmem:[#allocation2 + $0x290] sm:$0xff]
        %v3399 = vld [vmem:[#allocation2 + $0x298] sm:$0xff]
        %v3400 = vld [vmem:[#allocation2 + $0x2a0] sm:$0xff]
        %v3401 = vld [vmem:[#allocation2 + $0x2a8] sm:$0xff]
        %v3402 = vld [vmem:[#allocation2 + $0x2b0] sm:$0xff]
        %v3403 = vld [vmem:[#allocation2 + $0x2b8] sm:$0xff]
        %v3404 = vld [vmem:[#allocation2 + $0x2c0] sm:$0xff]
        %v3405 = vld [vmem:[#allocation2 + $0x2c8] sm:$0xff]
        %v3406 = vld [vmem:[#allocation2 + $0x2d0] sm:$0xff]
        %v3407 = vld [vmem:[#allocation2 + $0x2d8] sm:$0xff]
        %v3408 = vld [vmem:[#allocation2 + $0x2e0] sm:$0xff]
        %v3409 = vld [vmem:[#allocation2 + $0x2e8] sm:$0xff]
        %v3410 = vld [vmem:[#allocation2 + $0x2f0] sm:$0xff]
        %v3411 = vld [vmem:[#allocation2 + $0x2f8] sm:$0xff]
        %v3412 = vld [vmem:[#allocation2 + $0x300] sm:$0xff]
        %v3413 = vld [vmem:[#allocation2 + $0x308] sm:$0xff]
        %v3414 = vld [vmem:[#allocation2 + $0x310] sm:$0xff]
        %v3415 = vld [vmem:[#allocation2 + $0x318] sm:$0xff]
        %v3416 = vld [vmem:[#allocation2 + $0x320] sm:$0xff]
        %v3417 = vld [vmem:[#allocation2 + $0x328] sm:$0xff]
        %v3418 = vld [vmem:[#allocation2 + $0x330] sm:$0xff]
        %v3419 = vld [vmem:[#allocation2 + $0x338] sm:$0xff]
        %v3420 = vld [vmem:[#allocation2 + $0x340] sm:$0xff]
        %v3421 = vld [vmem:[#allocation2 + $0x348] sm:$0xff]
        %v3422 = vld [vmem:[#allocation2 + $0x350] sm:$0xff]
        %v3423 = vld [vmem:[#allocation2 + $0x358] sm:$0xff]
        %v3424 = vld [vmem:[#allocation2 + $0x360] sm:$0xff]
        %v3425 = vld [vmem:[#allocation2 + $0x368] sm:$0xff]
        %v3426 = vld [vmem:[#allocation2 + $0x370] sm:$0xff]
        %v3427 = vld [vmem:[#allocation2 + $0x378] sm:$0xff]
        %v3428 = vld [vmem:[#allocation2 + $0x380] sm:$0xff]
        %v3429 = vld [vmem:[#allocation2 + $0x388] sm:$0xff]
        %v3430 = vld [vmem:[#allocation2 + $0x390] sm:$0xff]
        %v3431 = vld [vmem:[#allocation2 + $0x398] sm:$0xff]
        %v3432 = vld [vmem:[#allocation2 + $0x3a0] sm:$0xff]
        %v3433 = vld [vmem:[#allocation2 + $0x3a8] sm:$0xff]
        %v3434 = vld [vmem:[#allocation2 + $0x3b0] sm:$0xff]
        %v3435 = vld [vmem:[#allocation2 + $0x3b8] sm:$0xff]
        %v3436 = vld [vmem:[#allocation2 + $0x3c0] sm:$0xff]
        %v3437 = vld [vmem:[#allocation2 + $0x3c8] sm:$0xff]
        %v3438 = vld [vmem:[#allocation2 + $0x3d0] sm:$0xff]
        %v3439 = vld [vmem:[#allocation2 + $0x3d8] sm:$0xff]
        %v3440 = vld [vmem:[#allocation2 + $0x3e0] sm:$0xff]
        %v3441 = vld [vmem:[#allocation2 + $0x3e8] sm:$0xff]
        %v3442 = vld [vmem:[#allocation2 + $0x3f0] sm:$0xff]
        %v3443 = vld [vmem:[#allocation2 + $0x3f8] sm:$0xff]
        %v3444 = vld [vmem:[#allocation2 + $0x400] sm:$0xff]
        %v3445 = vld [vmem:[#allocation2 + $0x408] sm:$0xff]
        %v3446 = vld [vmem:[#allocation2 + $0x410] sm:$0xff]
        %v3447 = vld [vmem:[#allocation2 + $0x418] sm:$0xff]
        %v3448 = vld [vmem:[#allocation2 + $0x420] sm:$0xff]
        %v3449 = vld [vmem:[#allocation2 + $0x428] sm:$0xff]
        %v3450 = vld [vmem:[#allocation2 + $0x430] sm:$0xff]
        %3452 = vset.pattern.permute.xlu0 0
        %3453 = vperm.xlu0 %3452, %v2820
        %v3454 = vpop.permute.xlu0 %3453
        %vm3456 = vcmask 719872
        %v3458 = vsel %vm3456, %v2819, 0
        %3460 = vmatpush.msra.mxu0 %v3391
        %3461 = vmatpush.msra.mxu0 %v3386
        %3462 = vmatpush.msra.mxu0 %v3381
        %3463 = vmatpush.msra.mxu0 %v3376
        %3464 = vmatpush.msra.mxu0 %v3371
        %3465 = vmatpush.msra.mxu0 %v3366
        %3466 = vmatpush.msra.mxu0 %v3361
        %3467 = vmatpush.msra.mxu0 %v3356
        %3468 = vmatpush.msra.mxu0 %v3351
        %3469 = vmatpush.msra.mxu0 %v3346
        %3470 = vmatpush.msra.mxu0 %v3341
        %3471 = vmatpush.msra.mxu0 %v3336
        %3472 = vmatpush.msra.mxu0 %v3331
        %3473 = vmatpush.msra.mxu0 %v3326
        %3474 = vmatpush.msra.mxu0 %v3321
        %3475 = vmatpush.msra.mxu0 %v3316
        %3476 = vmatmul.f32.gmra.mxu0 %v2818
        %v3477 = vpop.f32.mrf.mxu0
        %v3478 = vadd.f32 %v3454, %v3477
        %3479 = vdwg.mxu0
        %3480 = vmatpush.msra.mxu0 0.0
        %3481 = vmatpush.msra.mxu0 0.0
        %3482 = vmatpush.msra.mxu0 0.0
        %3483 = vmatpush.msra.mxu0 0.0
        %3484 = vmatpush.msra.mxu0 0.0
        %3485 = vmatpush.msra.mxu0 %v3446
        %3486 = vmatpush.msra.mxu0 %v3441
        %3487 = vmatpush.msra.mxu0 %v3436
        %3488 = vmatpush.msra.mxu0 %v3431
        %3489 = vmatpush.msra.mxu0 %v3426
        %3490 = vmatpush.msra.mxu0 %v3421
        %3491 = vmatpush.msra.mxu0 %v3416
        %3492 = vmatpush.msra.mxu0 %v3411
        %3493 = vmatpush.msra.mxu0 %v3406
        %3494 = vmatpush.msra.mxu0 %v3401
        %3495 = vmatpush.msra.mxu0 %v3396
        %3496 = vmatmul.f32.gmra.mxu0 %v3458
        %v3497 = vpop.f32.mrf.mxu0
        %v3498 = vadd.f32 %v3478, %v3497
        %3499 = vdwg.mxu0
        %3500 = vmatpush.msra.mxu0 %v3392
        %3501 = vmatpush.msra.mxu0 %v3387
        %3502 = vmatpush.msra.mxu0 %v3382
        %3503 = vmatpush.msra.mxu0 %v3377
        %3504 = vmatpush.msra.mxu0 %v3372
        %3505 = vmatpush.msra.mxu0 %v3367
        %3506 = vmatpush.msra.mxu0 %v3362
        %3507 = vmatpush.msra.mxu0 %v3357
        %3508 = vmatpush.msra.mxu0 %v3352
        %3509 = vmatpush.msra.mxu0 %v3347
        %3510 = vmatpush.msra.mxu0 %v3342
        %3511 = vmatpush.msra.mxu0 %v3337
        %3512 = vmatpush.msra.mxu0 %v3332
        %3513 = vmatpush.msra.mxu0 %v3327
        %3514 = vmatpush.msra.mxu0 %v3322
        %3515 = vmatpush.msra.mxu0 %v3317
        %3516 = vmatmul.f32.gmra.mxu0 %v2818
        %v3517 = vpop.f32.mrf.mxu0
        %v3518 = vadd.f32 %v3454, %v3517
        %3519 = vdwg.mxu0
        %3520 = vmatpush.msra.mxu0 0.0
        %3521 = vmatpush.msra.mxu0 0.0
        %3522 = vmatpush.msra.mxu0 0.0
        %3523 = vmatpush.msra.mxu0 0.0
        %3524 = vmatpush.msra.mxu0 0.0
        %3525 = vmatpush.msra.mxu0 %v3447
        %3526 = vmatpush.msra.mxu0 %v3442
        %3527 = vmatpush.msra.mxu0 %v3437
        %3528 = vmatpush.msra.mxu0 %v3432
        %3529 = vmatpush.msra.mxu0 %v3427
        %3530 = vmatpush.msra.mxu0 %v3422
        %3531 = vmatpush.msra.mxu0 %v3417
        %3532 = vmatpush.msra.mxu0 %v3412
        %3533 = vmatpush.msra.mxu0 %v3407
        %3534 = vmatpush.msra.mxu0 %v3402
        %3535 = vmatpush.msra.mxu0 %v3397
        %3536 = vmatmul.f32.gmra.mxu0 %v3458
        %v3537 = vpop.f32.mrf.mxu0
        %v3538 = vadd.f32 %v3518, %v3537
        %3539 = vdwg.mxu0
        %3540 = vmatpush.msra.mxu0 %v3393
        %3541 = vmatpush.msra.mxu0 %v3388
        %3542 = vmatpush.msra.mxu0 %v3383
        %3543 = vmatpush.msra.mxu0 %v3378
        %3544 = vmatpush.msra.mxu0 %v3373
        %3545 = vmatpush.msra.mxu0 %v3368
        %3546 = vmatpush.msra.mxu0 %v3363
        %3547 = vmatpush.msra.mxu0 %v3358
        %3548 = vmatpush.msra.mxu0 %v3353
        %3549 = vmatpush.msra.mxu0 %v3348
        %3550 = vmatpush.msra.mxu0 %v3343
        %3551 = vmatpush.msra.mxu0 %v3338
        %3552 = vmatpush.msra.mxu0 %v3333
        %3553 = vmatpush.msra.mxu0 %v3328
        %3554 = vmatpush.msra.mxu0 %v3323
        %3555 = vmatpush.msra.mxu0 %v3318
        %3556 = vmatmul.f32.gmra.mxu0 %v2818
        %v3557 = vpop.f32.mrf.mxu0
        %v3558 = vadd.f32 %v3454, %v3557
        %3559 = vdwg.mxu0
        %3560 = vmatpush.msra.mxu0 0.0
        %3561 = vmatpush.msra.mxu0 0.0
        %3562 = vmatpush.msra.mxu0 0.0
        %3563 = vmatpush.msra.mxu0 0.0
        %3564 = vmatpush.msra.mxu0 0.0
        %3565 = vmatpush.msra.mxu0 %v3448
        %3566 = vmatpush.msra.mxu0 %v3443
        %3567 = vmatpush.msra.mxu0 %v3438
        %3568 = vmatpush.msra.mxu0 %v3433
        %3569 = vmatpush.msra.mxu0 %v3428
        %3570 = vmatpush.msra.mxu0 %v3423
        %3571 = vmatpush.msra.mxu0 %v3418
        %3572 = vmatpush.msra.mxu0 %v3413
        %3573 = vmatpush.msra.mxu0 %v3408
        %3574 = vmatpush.msra.mxu0 %v3403
        %3575 = vmatpush.msra.mxu0 %v3398
        %3576 = vmatmul.f32.gmra.mxu0 %v3458
        %v3577 = vpop.f32.mrf.mxu0
        %v3578 = vadd.f32 %v3558, %v3577
        %3579 = vdwg.mxu0
        %3580 = vmatpush.msra.mxu0 %v3394
        %3581 = vmatpush.msra.mxu0 %v3389
        %3582 = vmatpush.msra.mxu0 %v3384
        %3583 = vmatpush.msra.mxu0 %v3379
        %3584 = vmatpush.msra.mxu0 %v3374
        %3585 = vmatpush.msra.mxu0 %v3369
        %3586 = vmatpush.msra.mxu0 %v3364
        %3587 = vmatpush.msra.mxu0 %v3359
        %3588 = vmatpush.msra.mxu0 %v3354
        %3589 = vmatpush.msra.mxu0 %v3349
        %3590 = vmatpush.msra.mxu0 %v3344
        %3591 = vmatpush.msra.mxu0 %v3339
        %3592 = vmatpush.msra.mxu0 %v3334
        %3593 = vmatpush.msra.mxu0 %v3329
        %3594 = vmatpush.msra.mxu0 %v3324
        %3595 = vmatpush.msra.mxu0 %v3319
        %3596 = vmatmul.f32.gmra.mxu0 %v2818
        %v3597 = vpop.f32.mrf.mxu0
        %v3598 = vadd.f32 %v3454, %v3597
        %3599 = vdwg.mxu0
        %3600 = vmatpush.msra.mxu0 0.0
        %3601 = vmatpush.msra.mxu0 0.0
        %3602 = vmatpush.msra.mxu0 0.0
        %3603 = vmatpush.msra.mxu0 0.0
        %3604 = vmatpush.msra.mxu0 0.0
        %3605 = vmatpush.msra.mxu0 %v3449
        %3606 = vmatpush.msra.mxu0 %v3444
        %3607 = vmatpush.msra.mxu0 %v3439
        %3608 = vmatpush.msra.mxu0 %v3434
        %3609 = vmatpush.msra.mxu0 %v3429
        %3610 = vmatpush.msra.mxu0 %v3424
        %3611 = vmatpush.msra.mxu0 %v3419
        %3612 = vmatpush.msra.mxu0 %v3414
        %3613 = vmatpush.msra.mxu0 %v3409
        %3614 = vmatpush.msra.mxu0 %v3404
        %3615 = vmatpush.msra.mxu0 %v3399
        %3616 = vmatmul.f32.gmra.mxu0 %v3458
        %v3617 = vpop.f32.mrf.mxu0
        %v3618 = vadd.f32 %v3598, %v3617
        %3619 = vdwg.mxu0
        %3620 = vmatpush.msra.mxu0 %v3395
        %3621 = vmatpush.msra.mxu0 %v3390
        %3622 = vmatpush.msra.mxu0 %v3385
        %3623 = vmatpush.msra.mxu0 %v3380
        %3624 = vmatpush.msra.mxu0 %v3375
        %3625 = vmatpush.msra.mxu0 %v3370
        %3626 = vmatpush.msra.mxu0 %v3365
        %3627 = vmatpush.msra.mxu0 %v3360
        %3628 = vmatpush.msra.mxu0 %v3355
        %3629 = vmatpush.msra.mxu0 %v3350
        %3630 = vmatpush.msra.mxu0 %v3345
        %3631 = vmatpush.msra.mxu0 %v3340
        %3632 = vmatpush.msra.mxu0 %v3335
        %3633 = vmatpush.msra.mxu0 %v3330
        %3634 = vmatpush.msra.mxu0 %v3325
        %3635 = vmatpush.msra.mxu0 %v3320
        %3636 = vmatmul.f32.gmra.mxu0 %v2818
        %v3637 = vpop.f32.mrf.mxu0
        %v3638 = vadd.f32 %v3454, %v3637
        %3639 = vdwg.mxu0
        %3640 = vmatpush.msra.mxu0 0.0
        %3641 = vmatpush.msra.mxu0 0.0
        %3642 = vmatpush.msra.mxu0 0.0
        %3643 = vmatpush.msra.mxu0 0.0
        %3644 = vmatpush.msra.mxu0 0.0
        %3645 = vmatpush.msra.mxu0 %v3450
        %3646 = vmatpush.msra.mxu0 %v3445
        %3647 = vmatpush.msra.mxu0 %v3440
        %3648 = vmatpush.msra.mxu0 %v3435
        %3649 = vmatpush.msra.mxu0 %v3430
        %3650 = vmatpush.msra.mxu0 %v3425
        %3651 = vmatpush.msra.mxu0 %v3420
        %3652 = vmatpush.msra.mxu0 %v3415
        %3653 = vmatpush.msra.mxu0 %v3410
        %3654 = vmatpush.msra.mxu0 %v3405
        %3655 = vmatpush.msra.mxu0 %v3400
        %3656 = vmatmul.f32.gmra.mxu0 %v3458
        %v3657 = vpop.f32.mrf.mxu0
        %v3658 = vadd.f32 %v3638, %v3657
        %3659 = vdwg.mxu0
        %vm3660 = vcmp.ge.f32.partialorder %v3498, 0.0
        %vm3661 = vcmp.ge.f32.partialorder %v3538, 0.0
        %vm3662 = vcmp.ge.f32.partialorder %v3578, 0.0
        %vm3663 = vcmp.ge.f32.partialorder %v3618, 0.0
        %vm3664 = vcmp.ge.f32.partialorder %v3658, 0.0
        %v3665 = vmul.f32 %v3498, 0.2
        %v3666 = vmul.f32 %v3538, 0.2
        %v3667 = vmul.f32 %v3578, 0.2
        %v3668 = vmul.f32 %v3618, 0.2
        %v3669 = vmul.f32 %v3658, 0.2
        %v3670 = vsel %vm3660, %v3498, %v3665
        %v3671 = vsel %vm3661, %v3538, %v3666
        %v3672 = vsel %vm3662, %v3578, %v3667
        %v3673 = vsel %vm3663, %v3618, %v3668
        %v3674 = vsel %vm3664, %v3658, %v3669
        %v3675 = vmul.f32 %v3670, %v594
        %v3676 = vmul.f32 %v3671, %v595
        %v3677 = vmul.f32 %v3672, %v596
        %v3678 = vmul.f32 %v3673, %v597
        %v3679 = vmul.f32 %v3674, %v598
        %v3680 = vld [vmem:[#allocation4 + $0xc0] sm:$0xff]
        %v3681 = vld [vmem:[%s2 + $0x40] sm:$0xff]
        %3682 = vrot.lane.b32.xlu0 %v3675, 81
        %v3683 = vpop.permute.xlu0 %3682
        %3684 = vrot.lane.b32.xlu0 %v3676, 81
        %v3685 = vpop.permute.xlu0 %3684
        %3686 = vrot.lane.b32.xlu0 %v3677, 81
        %v3687 = vpop.permute.xlu0 %3686
        %3688 = vrot.lane.b32.xlu0 %v3678, 81
        %v3689 = vpop.permute.xlu0 %3688
        %3690 = vrot.lane.b32.xlu0 %v3679, 81
        %v3691 = vpop.permute.xlu0 %3690
        %v3692 = vsel %vm1449, %v3689, %v3691
        %v3693 = vsel %vm1449, %v3687, %v3689
        %v3694 = vsel %vm1449, %v3685, %v3687
        %v3695 = vsel %vm1449, %v3683, %v3685
        %v3696 = vsel %vm1449, %v3691, %v3683
        %3697 = vst [vmem:[#allocation2] sm:$0xff] %v3696
        %3698 = vst [vmem:[#allocation2 + $0x8] sm:$0xff] %v3695
        %3699 = vst [vmem:[#allocation2 + $0x10] sm:$0xff] %v3694
        %3700 = vst [vmem:[#allocation2 + $0x18] sm:$0xff] %v3693
        %3701 = vst [vmem:[#allocation2 + $0x20] sm:$0xff] %v3692
        %3702 = vrot.lane.b32.xlu0 %v3675, 78
        %v3703 = vpop.permute.xlu0 %3702
        %3704 = vrot.lane.b32.xlu0 %v3676, 78
        %v3705 = vpop.permute.xlu0 %3704
        %3706 = vrot.lane.b32.xlu0 %v3677, 78
        %v3707 = vpop.permute.xlu0 %3706
        %3708 = vrot.lane.b32.xlu0 %v3678, 78
        %v3709 = vpop.permute.xlu0 %3708
        %3710 = vrot.lane.b32.xlu0 %v3679, 78
        %v3711 = vpop.permute.xlu0 %3710
        %v3712 = vsel %vm1470, %v3709, %v3711
        %v3713 = vsel %vm1470, %v3707, %v3709
        %v3714 = vsel %vm1470, %v3705, %v3707
        %v3715 = vsel %vm1470, %v3703, %v3705
        %v3716 = vsel %vm1470, %v3711, %v3703
        %3717 = vst [vmem:[#allocation2 + $0x28] sm:$0xff] %v3716
        %3718 = vst [vmem:[#allocation2 + $0x30] sm:$0xff] %v3715
        %3719 = vst [vmem:[#allocation2 + $0x38] sm:$0xff] %v3714
        %3720 = vst [vmem:[#allocation2 + $0x40] sm:$0xff] %v3713
        %3721 = vst [vmem:[#allocation2 + $0x48] sm:$0xff] %v3712
        %3722 = vrot.lane.b32.xlu0 %v3675, 75
        %v3723 = vpop.permute.xlu0 %3722
        %3724 = vrot.lane.b32.xlu0 %v3676, 75
        %v3725 = vpop.permute.xlu0 %3724
        %3726 = vrot.lane.b32.xlu0 %v3677, 75
        %v3727 = vpop.permute.xlu0 %3726
        %3728 = vrot.lane.b32.xlu0 %v3678, 75
        %v3729 = vpop.permute.xlu0 %3728
        %3730 = vrot.lane.b32.xlu0 %v3679, 75
        %v3731 = vpop.permute.xlu0 %3730
        %v3732 = vsel %vm1491, %v3729, %v3731
        %v3733 = vsel %vm1491, %v3727, %v3729
        %v3734 = vsel %vm1491, %v3725, %v3727
        %v3735 = vsel %vm1491, %v3723, %v3725
        %v3736 = vsel %vm1491, %v3731, %v3723
        %3737 = vst [vmem:[#allocation2 + $0x50] sm:$0xff] %v3736
        %3738 = vst [vmem:[#allocation2 + $0x58] sm:$0xff] %v3735
        %3739 = vst [vmem:[#allocation2 + $0x60] sm:$0xff] %v3734
        %3740 = vst [vmem:[#allocation2 + $0x68] sm:$0xff] %v3733
        %3741 = vst [vmem:[#allocation2 + $0x70] sm:$0xff] %v3732
        %3742 = vrot.lane.b32.xlu0 %v3675, 3
        %v3743 = vpop.permute.xlu0 %3742
        %3744 = vrot.lane.b32.xlu0 %v3676, 3
        %v3745 = vpop.permute.xlu0 %3744
        %3746 = vrot.lane.b32.xlu0 %v3677, 3
        %v3747 = vpop.permute.xlu0 %3746
        %3748 = vrot.lane.b32.xlu0 %v3678, 3
        %v3749 = vpop.permute.xlu0 %3748
        %3750 = vrot.lane.b32.xlu0 %v3679, 3
        %v3751 = vpop.permute.xlu0 %3750
        %v3752 = vsel %vm1512, %v3749, %v3751
        %v3753 = vsel %vm1512, %v3747, %v3749
        %v3754 = vsel %vm1512, %v3745, %v3747
        %v3755 = vsel %vm1512, %v3743, %v3745
        %v3756 = vsel %vm1512, %v3751, %v3743
        %3757 = vst [vmem:[#allocation2 + $0x78] sm:$0xff] %v3756
        %3758 = vst [vmem:[#allocation2 + $0x80] sm:$0xff] %v3755
        %3759 = vst [vmem:[#allocation2 + $0x88] sm:$0xff] %v3754
        %3760 = vst [vmem:[#allocation2 + $0x90] sm:$0xff] %v3753
        %3761 = vst [vmem:[#allocation2 + $0x98] sm:$0xff] %v3752
        %3762 = vst [vmem:[#allocation2 + $0xa0] sm:$0xff] %v3675
        %3763 = vst [vmem:[#allocation2 + $0xa8] sm:$0xff] %v3676
        %3764 = vst [vmem:[#allocation2 + $0xb0] sm:$0xff] %v3677
        %3765 = vst [vmem:[#allocation2 + $0xb8] sm:$0xff] %v3678
        %3766 = vst [vmem:[#allocation2 + $0xc0] sm:$0xff] %v3679
        %3767 = vrot.lane.b32.xlu0 %v3675, 125
        %v3768 = vpop.permute.xlu0 %3767
        %3769 = vrot.lane.b32.xlu0 %v3676, 125
        %v3770 = vpop.permute.xlu0 %3769
        %3771 = vrot.lane.b32.xlu0 %v3677, 125
        %v3772 = vpop.permute.xlu0 %3771
        %3773 = vrot.lane.b32.xlu0 %v3678, 125
        %v3774 = vpop.permute.xlu0 %3773
        %3775 = vrot.lane.b32.xlu0 %v3679, 125
        %v3776 = vpop.permute.xlu0 %3775
        %v3777 = vsel %vm1538, %v3774, %v3776
        %v3778 = vsel %vm1538, %v3772, %v3774
        %v3779 = vsel %vm1538, %v3770, %v3772
        %v3780 = vsel %vm1538, %v3768, %v3770
        %v3781 = vsel %vm1538, %v3776, %v3768
        %3782 = vst [vmem:[#allocation2 + $0xc8] sm:$0xff] %v3780
        %3783 = vst [vmem:[#allocation2 + $0xd0] sm:$0xff] %v3779
        %3784 = vst [vmem:[#allocation2 + $0xd8] sm:$0xff] %v3778
        %3785 = vst [vmem:[#allocation2 + $0xe0] sm:$0xff] %v3777
        %3786 = vst [vmem:[#allocation2 + $0xe8] sm:$0xff] %v3781
        %3787 = vrot.lane.b32.xlu0 %v3675, 53
        %v3788 = vpop.permute.xlu0 %3787
        %3789 = vrot.lane.b32.xlu0 %v3676, 53
        %v3790 = vpop.permute.xlu0 %3789
        %3791 = vrot.lane.b32.xlu0 %v3677, 53
        %v3792 = vpop.permute.xlu0 %3791
        %3793 = vrot.lane.b32.xlu0 %v3678, 53
        %v3794 = vpop.permute.xlu0 %3793
        %3795 = vrot.lane.b32.xlu0 %v3679, 53
        %v3796 = vpop.permute.xlu0 %3795
        %v3797 = vsel %vm1559, %v3794, %v3796
        %v3798 = vsel %vm1559, %v3792, %v3794
        %v3799 = vsel %vm1559, %v3790, %v3792
        %v3800 = vsel %vm1559, %v3788, %v3790
        %v3801 = vsel %vm1559, %v3796, %v3788
        %3802 = vst [vmem:[#allocation2 + $0xf0] sm:$0xff] %v3800
        %3803 = vst [vmem:[#allocation2 + $0xf8] sm:$0xff] %v3799
        %3804 = vst [vmem:[#allocation2 + $0x100] sm:$0xff] %v3798
        %3805 = vst [vmem:[#allocation2 + $0x108] sm:$0xff] %v3797
        %3806 = vst [vmem:[#allocation2 + $0x110] sm:$0xff] %v3801
        %3807 = vrot.lane.b32.xlu0 %v3675, 50
        %v3808 = vpop.permute.xlu0 %3807
        %3809 = vrot.lane.b32.xlu0 %v3676, 50
        %v3810 = vpop.permute.xlu0 %3809
        %3811 = vrot.lane.b32.xlu0 %v3677, 50
        %v3812 = vpop.permute.xlu0 %3811
        %3813 = vrot.lane.b32.xlu0 %v3678, 50
        %v3814 = vpop.permute.xlu0 %3813
        %3815 = vrot.lane.b32.xlu0 %v3679, 50
        %v3816 = vpop.permute.xlu0 %3815
        %v3817 = vsel %vm1580, %v3814, %v3816
        %v3818 = vsel %vm1580, %v3812, %v3814
        %v3819 = vsel %vm1580, %v3810, %v3812
        %v3820 = vsel %vm1580, %v3808, %v3810
        %v3821 = vsel %vm1580, %v3816, %v3808
        %3822 = vst [vmem:[#allocation2 + $0x118] sm:$0xff] %v3820
        %3823 = vst [vmem:[#allocation2 + $0x120] sm:$0xff] %v3819
        %3824 = vst [vmem:[#allocation2 + $0x128] sm:$0xff] %v3818
        %3825 = vst [vmem:[#allocation2 + $0x130] sm:$0xff] %v3817
        %3826 = vst [vmem:[#allocation2 + $0x138] sm:$0xff] %v3821
        %3827 = vrot.lane.b32.xlu0 %v3675, 47
        %v3828 = vpop.permute.xlu0 %3827
        %3829 = vrot.lane.b32.xlu0 %v3676, 47
        %v3830 = vpop.permute.xlu0 %3829
        %3831 = vrot.lane.b32.xlu0 %v3677, 47
        %v3832 = vpop.permute.xlu0 %3831
        %3833 = vrot.lane.b32.xlu0 %v3678, 47
        %v3834 = vpop.permute.xlu0 %3833
        %3835 = vrot.lane.b32.xlu0 %v3679, 47
        %v3836 = vpop.permute.xlu0 %3835
        %v3837 = vsel %vm1601, %v3834, %v3836
        %v3838 = vsel %vm1601, %v3832, %v3834
        %v3839 = vsel %vm1601, %v3830, %v3832
        %v3840 = vsel %vm1601, %v3828, %v3830
        %v3841 = vsel %vm1601, %v3836, %v3828
        %3842 = vst [vmem:[#allocation2 + $0x140] sm:$0xff] %v3840
        %3843 = vst [vmem:[#allocation2 + $0x148] sm:$0xff] %v3839
        %3844 = vst [vmem:[#allocation2 + $0x150] sm:$0xff] %v3838
        %3845 = vst [vmem:[#allocation2 + $0x158] sm:$0xff] %v3837
        %3846 = vst [vmem:[#allocation2 + $0x160] sm:$0xff] %v3841
        %v3847 = vld [vmem:[#allocation2] sm:$0xff]
        %v3848 = vld [vmem:[#allocation2 + $0x8] sm:$0xff]
        %v3849 = vld [vmem:[#allocation2 + $0x10] sm:$0xff]
        %v3850 = vld [vmem:[#allocation2 + $0x18] sm:$0xff]
        %v3851 = vld [vmem:[#allocation2 + $0x20] sm:$0xff]
        %v3852 = vld [vmem:[#allocation2 + $0x28] sm:$0xff]
        %v3853 = vld [vmem:[#allocation2 + $0x30] sm:$0xff]
        %v3854 = vld [vmem:[#allocation2 + $0x38] sm:$0xff]
        %v3855 = vld [vmem:[#allocation2 + $0x40] sm:$0xff]
        %v3856 = vld [vmem:[#allocation2 + $0x48] sm:$0xff]
        %v3857 = vld [vmem:[#allocation2 + $0x50] sm:$0xff]
        %v3858 = vld [vmem:[#allocation2 + $0x58] sm:$0xff]
        %v3859 = vld [vmem:[#allocation2 + $0x60] sm:$0xff]
        %v3860 = vld [vmem:[#allocation2 + $0x68] sm:$0xff]
        %v3861 = vld [vmem:[#allocation2 + $0x70] sm:$0xff]
        %v3862 = vld [vmem:[#allocation2 + $0x78] sm:$0xff]
        %v3863 = vld [vmem:[#allocation2 + $0x80] sm:$0xff]
        %v3864 = vld [vmem:[#allocation2 + $0x88] sm:$0xff]
        %v3865 = vld [vmem:[#allocation2 + $0x90] sm:$0xff]
        %v3866 = vld [vmem:[#allocation2 + $0x98] sm:$0xff]
        %v3867 = vld [vmem:[#allocation2 + $0xa0] sm:$0xff]
        %v3868 = vld [vmem:[#allocation2 + $0xa8] sm:$0xff]
        %v3869 = vld [vmem:[#allocation2 + $0xb0] sm:$0xff]
        %v3870 = vld [vmem:[#allocation2 + $0xb8] sm:$0xff]
        %v3871 = vld [vmem:[#allocation2 + $0xc0] sm:$0xff]
        %v3872 = vld [vmem:[#allocation2 + $0xc8] sm:$0xff]
        %v3873 = vld [vmem:[#allocation2 + $0xd0] sm:$0xff]
        %v3874 = vld [vmem:[#allocation2 + $0xd8] sm:$0xff]
        %v3875 = vld [vmem:[#allocation2 + $0xe0] sm:$0xff]
        %v3876 = vld [vmem:[#allocation2 + $0xe8] sm:$0xff]
        %v3877 = vld [vmem:[#allocation2 + $0xf0] sm:$0xff]
        %v3878 = vld [vmem:[#allocation2 + $0xf8] sm:$0xff]
        %v3879 = vld [vmem:[#allocation2 + $0x100] sm:$0xff]
        %v3880 = vld [vmem:[#allocation2 + $0x108] sm:$0xff]
        %v3881 = vld [vmem:[#allocation2 + $0x110] sm:$0xff]
        %v3882 = vld [vmem:[#allocation2 + $0x118] sm:$0xff]
        %v3883 = vld [vmem:[#allocation2 + $0x120] sm:$0xff]
        %v3884 = vld [vmem:[#allocation2 + $0x128] sm:$0xff]
        %v3885 = vld [vmem:[#allocation2 + $0x130] sm:$0xff]
        %v3886 = vld [vmem:[#allocation2 + $0x138] sm:$0xff]
        %v3887 = vld [vmem:[#allocation2 + $0x140] sm:$0xff]
        %v3888 = vld [vmem:[#allocation2 + $0x148] sm:$0xff]
        %v3889 = vld [vmem:[#allocation2 + $0x150] sm:$0xff]
        %v3890 = vld [vmem:[#allocation2 + $0x158] sm:$0xff]
        %v3891 = vld [vmem:[#allocation2 + $0x160] sm:$0xff]
        %3893 = vset.pattern.permute.xlu0 0
        %3894 = vperm.xlu0 %3893, %v3681
        %v3895 = vpop.permute.xlu0 %3894
        %v3898 = vsel %vm474, %v3680, 0
        %3900 = vmatpush.msra.mxu0 0.0
        %3901 = vmatpush.msra.mxu0 0.0
        %3902 = vmatpush.msra.mxu0 0.0
        %3903 = vmatpush.msra.mxu0 0.0
        %3904 = vmatpush.msra.mxu0 0.0
        %3905 = vmatpush.msra.mxu0 0.0
        %3906 = vmatpush.msra.mxu0 0.0
        %3907 = vmatpush.msra.mxu0 %v3887
        %3908 = vmatpush.msra.mxu0 %v3882
        %3909 = vmatpush.msra.mxu0 %v3877
        %3910 = vmatpush.msra.mxu0 %v3872
        %3911 = vmatpush.msra.mxu0 %v3867
        %3912 = vmatpush.msra.mxu0 %v3862
        %3913 = vmatpush.msra.mxu0 %v3857
        %3914 = vmatpush.msra.mxu0 %v3852
        %3915 = vmatpush.msra.mxu0 %v3847
        %3916 = vmatmul.f32.gmra.mxu0 %v3898
        %v3917 = vpop.f32.mrf.mxu0
        %v3918 = vadd.f32 %v3895, %v3917
        %3919 = vdwg.mxu0
        %3920 = vmatpush.msra.mxu0 0.0
        %3921 = vmatpush.msra.mxu0 0.0
        %3922 = vmatpush.msra.mxu0 0.0
        %3923 = vmatpush.msra.mxu0 0.0
        %3924 = vmatpush.msra.mxu0 0.0
        %3925 = vmatpush.msra.mxu0 0.0
        %3926 = vmatpush.msra.mxu0 0.0
        %3927 = vmatpush.msra.mxu0 %v3888
        %3928 = vmatpush.msra.mxu0 %v3883
        %3929 = vmatpush.msra.mxu0 %v3878
        %3930 = vmatpush.msra.mxu0 %v3873
        %3931 = vmatpush.msra.mxu0 %v3868
        %3932 = vmatpush.msra.mxu0 %v3863
        %3933 = vmatpush.msra.mxu0 %v3858
        %3934 = vmatpush.msra.mxu0 %v3853
        %3935 = vmatpush.msra.mxu0 %v3848
        %3936 = vmatmul.f32.gmra.mxu0 %v3898
        %v3937 = vpop.f32.mrf.mxu0
        %v3938 = vadd.f32 %v3895, %v3937
        %3939 = vdwg.mxu0
        %3940 = vmatpush.msra.mxu0 0.0
        %3941 = vmatpush.msra.mxu0 0.0
        %3942 = vmatpush.msra.mxu0 0.0
        %3943 = vmatpush.msra.mxu0 0.0
        %3944 = vmatpush.msra.mxu0 0.0
        %3945 = vmatpush.msra.mxu0 0.0
        %3946 = vmatpush.msra.mxu0 0.0
        %3947 = vmatpush.msra.mxu0 %v3889
        %3948 = vmatpush.msra.mxu0 %v3884
        %3949 = vmatpush.msra.mxu0 %v3879
        %3950 = vmatpush.msra.mxu0 %v3874
        %3951 = vmatpush.msra.mxu0 %v3869
        %3952 = vmatpush.msra.mxu0 %v3864
        %3953 = vmatpush.msra.mxu0 %v3859
        %3954 = vmatpush.msra.mxu0 %v3854
        %3955 = vmatpush.msra.mxu0 %v3849
        %3956 = vmatmul.f32.gmra.mxu0 %v3898
        %v3957 = vpop.f32.mrf.mxu0
        %v3958 = vadd.f32 %v3895, %v3957
        %3959 = vdwg.mxu0
        %3960 = vmatpush.msra.mxu0 0.0
        %3961 = vmatpush.msra.mxu0 0.0
        %3962 = vmatpush.msra.mxu0 0.0
        %3963 = vmatpush.msra.mxu0 0.0
        %3964 = vmatpush.msra.mxu0 0.0
        %3965 = vmatpush.msra.mxu0 0.0
        %3966 = vmatpush.msra.mxu0 0.0
        %3967 = vmatpush.msra.mxu0 %v3890
        %3968 = vmatpush.msra.mxu0 %v3885
        %3969 = vmatpush.msra.mxu0 %v3880
        %3970 = vmatpush.msra.mxu0 %v3875
        %3971 = vmatpush.msra.mxu0 %v3870
        %3972 = vmatpush.msra.mxu0 %v3865
        %3973 = vmatpush.msra.mxu0 %v3860
        %3974 = vmatpush.msra.mxu0 %v3855
        %3975 = vmatpush.msra.mxu0 %v3850
        %3976 = vmatmul.f32.gmra.mxu0 %v3898
        %v3977 = vpop.f32.mrf.mxu0
        %v3978 = vadd.f32 %v3895, %v3977
        %3979 = vdwg.mxu0
        %3980 = vmatpush.msra.mxu0 0.0
        %3981 = vmatpush.msra.mxu0 0.0
        %3982 = vmatpush.msra.mxu0 0.0
        %3983 = vmatpush.msra.mxu0 0.0
        %3984 = vmatpush.msra.mxu0 0.0
        %3985 = vmatpush.msra.mxu0 0.0
        %3986 = vmatpush.msra.mxu0 0.0
        %3987 = vmatpush.msra.mxu0 %v3891
        %3988 = vmatpush.msra.mxu0 %v3886
        %3989 = vmatpush.msra.mxu0 %v3881
        %3990 = vmatpush.msra.mxu0 %v3876
        %3991 = vmatpush.msra.mxu0 %v3871
        %3992 = vmatpush.msra.mxu0 %v3866
        %3993 = vmatpush.msra.mxu0 %v3861
        %3994 = vmatpush.msra.mxu0 %v3856
        %3995 = vmatpush.msra.mxu0 %v3851
        %3996 = vmatmul.f32.gmra.mxu0 %v3898
        %v3997 = vpop.f32.mrf.mxu0
        %v3998 = vadd.f32 %v3895, %v3997
        %3999 = vdwg.mxu0
        %v4000 = vrot.slane %v241, 3
        %s4001 = vtos %v4000
        %vm4002 = vcmp.ge.f32.partialorder %v3918, 0.0
        %vm4003 = vcmp.ge.f32.partialorder %v3938, 0.0
        %vm4004 = vcmp.ge.f32.partialorder %v3958, 0.0
        %vm4005 = vcmp.ge.f32.partialorder %v3978, 0.0
        %vm4006 = vcmp.ge.f32.partialorder %v3998, 0.0
        %v4007 = vstv %s4001
        %v4008 = vmul.f32 %v4007, %v3918
        %v4009 = vmul.f32 %v4007, %v3938
        %v4010 = vmul.f32 %v4007, %v3958
        %v4011 = vmul.f32 %v4007, %v3978
        %v4012 = vmul.f32 %v4007, %v3998
        %v4013 = vsel %vm4002, %v3918, %v4008
        %v4014 = vsel %vm4003, %v3938, %v4009
        %v4015 = vsel %vm4004, %v3958, %v4010
        %v4016 = vsel %vm4005, %v3978, %v4011
        %v4017 = vsel %vm4006, %v3998, %v4012
        %v4018 = vmul.f32 %v4013, %v594
        %v4019 = vmul.f32 %v4014, %v595
        %v4020 = vmul.f32 %v4015, %v596
        %v4021 = vmul.f32 %v4016, %v597
        %v4022 = vmul.f32 %v4017, %v598
        %4023 = vst [vmem:[#allocation3 + $0xa0] sm:$0xff] %v4018
        %4024 = vst [vmem:[#allocation3 + $0xa8] sm:$0xff] %v4019
        %4025 = vst [vmem:[#allocation3 + $0xb0] sm:$0xff] %v4020
        %4026 = vst [vmem:[#allocation3 + $0xb8] sm:$0xff] %v4021
        %4027 = vst [vmem:[#allocation3 + $0xc0] sm:$0xff] %v4022
        %v4028 = vld [vmem:[#allocation3 + $0x28] sm:$0xff]
        %v4029 = vld [vmem:[#allocation3 + $0x30] sm:$0xff]
        %v4030 = vld [vmem:[#allocation3 + $0x38] sm:$0xff]
        %v4031 = vld [vmem:[#allocation3 + $0x40] sm:$0xff]
        %v4032 = vld [vmem:[#allocation3 + $0x48] sm:$0xff]
        %v4033 = vld [vmem:[#allocation3 + $0x50] sm:$0xff]
        %v4034 = vld [vmem:[#allocation3 + $0x58] sm:$0xff]
        %v4035 = vld [vmem:[#allocation3 + $0x60] sm:$0xff]
        %v4036 = vld [vmem:[#allocation3 + $0x68] sm:$0xff]
        %v4037 = vld [vmem:[#allocation3 + $0x70] sm:$0xff]
        %v4038 = vld [vmem:[#allocation3 + $0x78] sm:$0xff]
        %v4039 = vld [vmem:[#allocation3 + $0x80] sm:$0xff]
        %v4040 = vld [vmem:[#allocation3 + $0x88] sm:$0xff]
        %v4041 = vld [vmem:[#allocation3 + $0x90] sm:$0xff]
        %v4042 = vld [vmem:[#allocation3 + $0x98] sm:$0xff]
        %v4043 = vld [vmem:[#allocation3 + $0xa0] sm:$0xff]
        %v4044 = vld [vmem:[#allocation3 + $0xa8] sm:$0xff]
        %v4045 = vld [vmem:[#allocation3 + $0xb0] sm:$0xff]
        %v4046 = vld [vmem:[#allocation3 + $0xb8] sm:$0xff]
        %v4047 = vld [vmem:[#allocation3 + $0xc0] sm:$0xff]
        %v4048 = vld [vmem:[#allocation4 + $0xd8] sm:$0xff]
        %v4049 = vld [vmem:[#allocation4 + $0xe0] sm:$0xff]
        %v4050 = vld [vmem:[#allocation4 + $0xe8] sm:$0xff]
        %v4051 = vld [vmem:[%s2 + $0x48] sm:$0xff]
        %4052 = vrot.lane.b32.xlu0 %v4028, 27
        %v4053 = vpop.permute.xlu0 %4052
        %4054 = vrot.lane.b32.xlu0 %v4033, 27
        %v4055 = vpop.permute.xlu0 %4054
        %4056 = vrot.lane.b32.xlu0 %v4038, 27
        %v4057 = vpop.permute.xlu0 %4056
        %4058 = vrot.lane.b32.xlu0 %v4043, 27
        %v4059 = vpop.permute.xlu0 %4058
        %4060 = vrot.lane.b32.xlu0 %v4029, 27
        %v4061 = vpop.permute.xlu0 %4060
        %4062 = vrot.lane.b32.xlu0 %v4034, 27
        %v4063 = vpop.permute.xlu0 %4062
        %4064 = vrot.lane.b32.xlu0 %v4039, 27
        %v4065 = vpop.permute.xlu0 %4064
        %4066 = vrot.lane.b32.xlu0 %v4044, 27
        %v4067 = vpop.permute.xlu0 %4066
        %4068 = vrot.lane.b32.xlu0 %v4030, 27
        %v4069 = vpop.permute.xlu0 %4068
        %4070 = vrot.lane.b32.xlu0 %v4035, 27
        %v4071 = vpop.permute.xlu0 %4070
        %4072 = vrot.lane.b32.xlu0 %v4040, 27
        %v4073 = vpop.permute.xlu0 %4072
        %4074 = vrot.lane.b32.xlu0 %v4045, 27
        %v4075 = vpop.permute.xlu0 %4074
        %4076 = vrot.lane.b32.xlu0 %v4031, 27
        %v4077 = vpop.permute.xlu0 %4076
        %4078 = vrot.lane.b32.xlu0 %v4036, 27
        %v4079 = vpop.permute.xlu0 %4078
        %4080 = vrot.lane.b32.xlu0 %v4041, 27
        %v4081 = vpop.permute.xlu0 %4080
        %4082 = vrot.lane.b32.xlu0 %v4046, 27
        %v4083 = vpop.permute.xlu0 %4082
        %4084 = vrot.lane.b32.xlu0 %v4032, 27
        %v4085 = vpop.permute.xlu0 %4084
        %4086 = vrot.lane.b32.xlu0 %v4037, 27
        %v4087 = vpop.permute.xlu0 %4086
        %4088 = vrot.lane.b32.xlu0 %v4042, 27
        %v4089 = vpop.permute.xlu0 %4088
        %4090 = vrot.lane.b32.xlu0 %v4047, 27
        %v4091 = vpop.permute.xlu0 %4090
        %v4092 = vsel %vm261, %v4077, %v4085
        %v4093 = vsel %vm261, %v4079, %v4087
        %v4094 = vsel %vm261, %v4081, %v4089
        %v4095 = vsel %vm261, %v4083, %v4091
        %v4096 = vsel %vm261, %v4069, %v4077
        %v4097 = vsel %vm261, %v4071, %v4079
        %v4098 = vsel %vm261, %v4073, %v4081
        %v4099 = vsel %vm261, %v4075, %v4083
        %v4100 = vsel %vm261, %v4061, %v4069
        %v4101 = vsel %vm261, %v4063, %v4071
        %v4102 = vsel %vm261, %v4065, %v4073
        %v4103 = vsel %vm261, %v4067, %v4075
        %v4104 = vsel %vm261, %v4053, %v4061
        %v4105 = vsel %vm261, %v4055, %v4063
        %v4106 = vsel %vm261, %v4057, %v4065
        %v4107 = vsel %vm261, %v4059, %v4067
        %v4108 = vsel %vm261, %v4085, %v4053
        %v4109 = vsel %vm261, %v4087, %v4055
        %v4110 = vsel %vm261, %v4089, %v4057
        %v4111 = vsel %vm261, %v4091, %v4059
        %4112 = vst [vmem:[#allocation2] sm:$0xff] %v4108
        %4113 = vst [vmem:[#allocation2 + $0x8] sm:$0xff] %v4104
        %4114 = vst [vmem:[#allocation2 + $0x10] sm:$0xff] %v4100
        %4115 = vst [vmem:[#allocation2 + $0x18] sm:$0xff] %v4096
        %4116 = vst [vmem:[#allocation2 + $0x20] sm:$0xff] %v4092
        %4117 = vst [vmem:[#allocation2 + $0x28] sm:$0xff] %v4109
        %4118 = vst [vmem:[#allocation2 + $0x30] sm:$0xff] %v4105
        %4119 = vst [vmem:[#allocation2 + $0x38] sm:$0xff] %v4101
        %4120 = vst [vmem:[#allocation2 + $0x40] sm:$0xff] %v4097
        %4121 = vst [vmem:[#allocation2 + $0x48] sm:$0xff] %v4093
        %4122 = vst [vmem:[#allocation2 + $0x50] sm:$0xff] %v4110
        %4123 = vst [vmem:[#allocation2 + $0x58] sm:$0xff] %v4106
        %4124 = vst [vmem:[#allocation2 + $0x60] sm:$0xff] %v4102
        %4125 = vst [vmem:[#allocation2 + $0x68] sm:$0xff] %v4098
        %4126 = vst [vmem:[#allocation2 + $0x70] sm:$0xff] %v4094
        %4127 = vst [vmem:[#allocation2 + $0x78] sm:$0xff] %v4111
        %4128 = vst [vmem:[#allocation2 + $0x80] sm:$0xff] %v4107
        %4129 = vst [vmem:[#allocation2 + $0x88] sm:$0xff] %v4103
        %4130 = vst [vmem:[#allocation2 + $0x90] sm:$0xff] %v4099
        %4131 = vst [vmem:[#allocation2 + $0x98] sm:$0xff] %v4095
        %4132 = vrot.lane.b32.xlu0 %v4028, 26
        %v4133 = vpop.permute.xlu0 %4132
        %4134 = vrot.lane.b32.xlu0 %v4033, 26
        %v4135 = vpop.permute.xlu0 %4134
        %4136 = vrot.lane.b32.xlu0 %v4038, 26
        %v4137 = vpop.permute.xlu0 %4136
        %4138 = vrot.lane.b32.xlu0 %v4043, 26
        %v4139 = vpop.permute.xlu0 %4138
        %4140 = vrot.lane.b32.xlu0 %v4029, 26
        %v4141 = vpop.permute.xlu0 %4140
        %4142 = vrot.lane.b32.xlu0 %v4034, 26
        %v4143 = vpop.permute.xlu0 %4142
        %4144 = vrot.lane.b32.xlu0 %v4039, 26
        %v4145 = vpop.permute.xlu0 %4144
        %4146 = vrot.lane.b32.xlu0 %v4044, 26
        %v4147 = vpop.permute.xlu0 %4146
        %4148 = vrot.lane.b32.xlu0 %v4030, 26
        %v4149 = vpop.permute.xlu0 %4148
        %4150 = vrot.lane.b32.xlu0 %v4035, 26
        %v4151 = vpop.permute.xlu0 %4150
        %4152 = vrot.lane.b32.xlu0 %v4040, 26
        %v4153 = vpop.permute.xlu0 %4152
        %4154 = vrot.lane.b32.xlu0 %v4045, 26
        %v4155 = vpop.permute.xlu0 %4154
        %4156 = vrot.lane.b32.xlu0 %v4031, 26
        %v4157 = vpop.permute.xlu0 %4156
        %4158 = vrot.lane.b32.xlu0 %v4036, 26
        %v4159 = vpop.permute.xlu0 %4158
        %4160 = vrot.lane.b32.xlu0 %v4041, 26
        %v4161 = vpop.permute.xlu0 %4160
        %4162 = vrot.lane.b32.xlu0 %v4046, 26
        %v4163 = vpop.permute.xlu0 %4162
        %4164 = vrot.lane.b32.xlu0 %v4032, 26
        %v4165 = vpop.permute.xlu0 %4164
        %4166 = vrot.lane.b32.xlu0 %v4037, 26
        %v4167 = vpop.permute.xlu0 %4166
        %4168 = vrot.lane.b32.xlu0 %v4042, 26
        %v4169 = vpop.permute.xlu0 %4168
        %4170 = vrot.lane.b32.xlu0 %v4047, 26
        %v4171 = vpop.permute.xlu0 %4170
        %v4172 = vsel %vm282, %v4157, %v4165
        %v4173 = vsel %vm282, %v4159, %v4167
        %v4174 = vsel %vm282, %v4161, %v4169
        %v4175 = vsel %vm282, %v4163, %v4171
        %v4176 = vsel %vm282, %v4149, %v4157
        %v4177 = vsel %vm282, %v4151, %v4159
        %v4178 = vsel %vm282, %v4153, %v4161
        %v4179 = vsel %vm282, %v4155, %v4163
        %v4180 = vsel %vm282, %v4141, %v4149
        %v4181 = vsel %vm282, %v4143, %v4151
        %v4182 = vsel %vm282, %v4145, %v4153
        %v4183 = vsel %vm282, %v4147, %v4155
        %v4184 = vsel %vm282, %v4133, %v4141
        %v4185 = vsel %vm282, %v4135, %v4143
        %v4186 = vsel %vm282, %v4137, %v4145
        %v4187 = vsel %vm282, %v4139, %v4147
        %v4188 = vsel %vm282, %v4165, %v4133
        %v4189 = vsel %vm282, %v4167, %v4135
        %v4190 = vsel %vm282, %v4169, %v4137
        %v4191 = vsel %vm282, %v4171, %v4139
        %4192 = vst [vmem:[#allocation2 + $0xa0] sm:$0xff] %v4188
        %4193 = vst [vmem:[#allocation2 + $0xa8] sm:$0xff] %v4184
        %4194 = vst [vmem:[#allocation2 + $0xb0] sm:$0xff] %v4180
        %4195 = vst [vmem:[#allocation2 + $0xb8] sm:$0xff] %v4176
        %4196 = vst [vmem:[#allocation2 + $0xc0] sm:$0xff] %v4172
        %4197 = vst [vmem:[#allocation2 + $0xc8] sm:$0xff] %v4189
        %4198 = vst [vmem:[#allocation2 + $0xd0] sm:$0xff] %v4185
        %4199 = vst [vmem:[#allocation2 + $0xd8] sm:$0xff] %v4181
        %4200 = vst [vmem:[#allocation2 + $0xe0] sm:$0xff] %v4177
        %4201 = vst [vmem:[#allocation2 + $0xe8] sm:$0xff] %v4173
        %4202 = vst [vmem:[#allocation2 + $0xf0] sm:$0xff] %v4190
        %4203 = vst [vmem:[#allocation2 + $0xf8] sm:$0xff] %v4186
        %4204 = vst [vmem:[#allocation2 + $0x100] sm:$0xff] %v4182
        %4205 = vst [vmem:[#allocation2 + $0x108] sm:$0xff] %v4178
        %4206 = vst [vmem:[#allocation2 + $0x110] sm:$0xff] %v4174
        %4207 = vst [vmem:[#allocation2 + $0x118] sm:$0xff] %v4191
        %4208 = vst [vmem:[#allocation2 + $0x120] sm:$0xff] %v4187
        %4209 = vst [vmem:[#allocation2 + $0x128] sm:$0xff] %v4183
        %4210 = vst [vmem:[#allocation2 + $0x130] sm:$0xff] %v4179
        %4211 = vst [vmem:[#allocation2 + $0x138] sm:$0xff] %v4175
        %4212 = vrot.lane.b32.xlu0 %v4028, 25
        %v4213 = vpop.permute.xlu0 %4212
        %4214 = vrot.lane.b32.xlu0 %v4033, 25
        %v4215 = vpop.permute.xlu0 %4214
        %4216 = vrot.lane.b32.xlu0 %v4038, 25
        %v4217 = vpop.permute.xlu0 %4216
        %4218 = vrot.lane.b32.xlu0 %v4043, 25
        %v4219 = vpop.permute.xlu0 %4218
        %4220 = vrot.lane.b32.xlu0 %v4029, 25
        %v4221 = vpop.permute.xlu0 %4220
        %4222 = vrot.lane.b32.xlu0 %v4034, 25
        %v4223 = vpop.permute.xlu0 %4222
        %4224 = vrot.lane.b32.xlu0 %v4039, 25
        %v4225 = vpop.permute.xlu0 %4224
        %4226 = vrot.lane.b32.xlu0 %v4044, 25
        %v4227 = vpop.permute.xlu0 %4226
        %4228 = vrot.lane.b32.xlu0 %v4030, 25
        %v4229 = vpop.permute.xlu0 %4228
        %4230 = vrot.lane.b32.xlu0 %v4035, 25
        %v4231 = vpop.permute.xlu0 %4230
        %4232 = vrot.lane.b32.xlu0 %v4040, 25
        %v4233 = vpop.permute.xlu0 %4232
        %4234 = vrot.lane.b32.xlu0 %v4045, 25
        %v4235 = vpop.permute.xlu0 %4234
        %4236 = vrot.lane.b32.xlu0 %v4031, 25
        %v4237 = vpop.permute.xlu0 %4236
        %4238 = vrot.lane.b32.xlu0 %v4036, 25
        %v4239 = vpop.permute.xlu0 %4238
        %4240 = vrot.lane.b32.xlu0 %v4041, 25
        %v4241 = vpop.permute.xlu0 %4240
        %4242 = vrot.lane.b32.xlu0 %v4046, 25
        %v4243 = vpop.permute.xlu0 %4242
        %4244 = vrot.lane.b32.xlu0 %v4032, 25
        %v4245 = vpop.permute.xlu0 %4244
        %4246 = vrot.lane.b32.xlu0 %v4037, 25
        %v4247 = vpop.permute.xlu0 %4246
        %4248 = vrot.lane.b32.xlu0 %v4042, 25
        %v4249 = vpop.permute.xlu0 %4248
        %4250 = vrot.lane.b32.xlu0 %v4047, 25
        %v4251 = vpop.permute.xlu0 %4250
        %v4252 = vsel %vm303, %v4237, %v4245
        %v4253 = vsel %vm303, %v4239, %v4247
        %v4254 = vsel %vm303, %v4241, %v4249
        %v4255 = vsel %vm303, %v4243, %v4251
        %v4256 = vsel %vm303, %v4229, %v4237
        %v4257 = vsel %vm303, %v4231, %v4239
        %v4258 = vsel %vm303, %v4233, %v4241
        %v4259 = vsel %vm303, %v4235, %v4243
        %v4260 = vsel %vm303, %v4221, %v4229
        %v4261 = vsel %vm303, %v4223, %v4231
        %v4262 = vsel %vm303, %v4225, %v4233
        %v4263 = vsel %vm303, %v4227, %v4235
        %v4264 = vsel %vm303, %v4213, %v4221
        %v4265 = vsel %vm303, %v4215, %v4223
        %v4266 = vsel %vm303, %v4217, %v4225
        %v4267 = vsel %vm303, %v4219, %v4227
        %v4268 = vsel %vm303, %v4245, %v4213
        %v4269 = vsel %vm303, %v4247, %v4215
        %v4270 = vsel %vm303, %v4249, %v4217
        %v4271 = vsel %vm303, %v4251, %v4219
        %4272 = vst [vmem:[#allocation2 + $0x140] sm:$0xff] %v4268
        %4273 = vst [vmem:[#allocation2 + $0x148] sm:$0xff] %v4264
        %4274 = vst [vmem:[#allocation2 + $0x150] sm:$0xff] %v4260
        %4275 = vst [vmem:[#allocation2 + $0x158] sm:$0xff] %v4256
        %4276 = vst [vmem:[#allocation2 + $0x160] sm:$0xff] %v4252
        %4277 = vst [vmem:[#allocation2 + $0x168] sm:$0xff] %v4269
        %4278 = vst [vmem:[#allocation2 + $0x170] sm:$0xff] %v4265
        %4279 = vst [vmem:[#allocation2 + $0x178] sm:$0xff] %v4261
        %4280 = vst [vmem:[#allocation2 + $0x180] sm:$0xff] %v4257
        %4281 = vst [vmem:[#allocation2 + $0x188] sm:$0xff] %v4253
        %4282 = vst [vmem:[#allocation2 + $0x190] sm:$0xff] %v4270
        %4283 = vst [vmem:[#allocation2 + $0x198] sm:$0xff] %v4266
        %4284 = vst [vmem:[#allocation2 + $0x1a0] sm:$0xff] %v4262
        %4285 = vst [vmem:[#allocation2 + $0x1a8] sm:$0xff] %v4258
        %4286 = vst [vmem:[#allocation2 + $0x1b0] sm:$0xff] %v4254
        %4287 = vst [vmem:[#allocation2 + $0x1b8] sm:$0xff] %v4271
        %4288 = vst [vmem:[#allocation2 + $0x1c0] sm:$0xff] %v4267
        %4289 = vst [vmem:[#allocation2 + $0x1c8] sm:$0xff] %v4263
        %4290 = vst [vmem:[#allocation2 + $0x1d0] sm:$0xff] %v4259
        %4291 = vst [vmem:[#allocation2 + $0x1d8] sm:$0xff] %v4255
        %4292 = vrot.lane.b32.xlu0 %v4028, 1
        %v4293 = vpop.permute.xlu0 %4292
        %4294 = vrot.lane.b32.xlu0 %v4033, 1
        %v4295 = vpop.permute.xlu0 %4294
        %4296 = vrot.lane.b32.xlu0 %v4038, 1
        %v4297 = vpop.permute.xlu0 %4296
        %4298 = vrot.lane.b32.xlu0 %v4043, 1
        %v4299 = vpop.permute.xlu0 %4298
        %4300 = vrot.lane.b32.xlu0 %v4029, 1
        %v4301 = vpop.permute.xlu0 %4300
        %4302 = vrot.lane.b32.xlu0 %v4034, 1
        %v4303 = vpop.permute.xlu0 %4302
        %4304 = vrot.lane.b32.xlu0 %v4039, 1
        %v4305 = vpop.permute.xlu0 %4304
        %4306 = vrot.lane.b32.xlu0 %v4044, 1
        %v4307 = vpop.permute.xlu0 %4306
        %4308 = vrot.lane.b32.xlu0 %v4030, 1
        %v4309 = vpop.permute.xlu0 %4308
        %4310 = vrot.lane.b32.xlu0 %v4035, 1
        %v4311 = vpop.permute.xlu0 %4310
        %4312 = vrot.lane.b32.xlu0 %v4040, 1
        %v4313 = vpop.permute.xlu0 %4312
        %4314 = vrot.lane.b32.xlu0 %v4045, 1
        %v4315 = vpop.permute.xlu0 %4314
        %4316 = vrot.lane.b32.xlu0 %v4031, 1
        %v4317 = vpop.permute.xlu0 %4316
        %4318 = vrot.lane.b32.xlu0 %v4036, 1
        %v4319 = vpop.permute.xlu0 %4318
        %4320 = vrot.lane.b32.xlu0 %v4041, 1
        %v4321 = vpop.permute.xlu0 %4320
        %4322 = vrot.lane.b32.xlu0 %v4046, 1
        %v4323 = vpop.permute.xlu0 %4322
        %4324 = vrot.lane.b32.xlu0 %v4032, 1
        %v4325 = vpop.permute.xlu0 %4324
        %4326 = vrot.lane.b32.xlu0 %v4037, 1
        %v4327 = vpop.permute.xlu0 %4326
        %4328 = vrot.lane.b32.xlu0 %v4042, 1
        %v4329 = vpop.permute.xlu0 %4328
        %4330 = vrot.lane.b32.xlu0 %v4047, 1
        %v4331 = vpop.permute.xlu0 %4330
        %v4332 = vsel %vm324, %v4317, %v4325
        %v4333 = vsel %vm324, %v4319, %v4327
        %v4334 = vsel %vm324, %v4321, %v4329
        %v4335 = vsel %vm324, %v4323, %v4331
        %v4336 = vsel %vm324, %v4309, %v4317
        %v4337 = vsel %vm324, %v4311, %v4319
        %v4338 = vsel %vm324, %v4313, %v4321
        %v4339 = vsel %vm324, %v4315, %v4323
        %v4340 = vsel %vm324, %v4301, %v4309
        %v4341 = vsel %vm324, %v4303, %v4311
        %v4342 = vsel %vm324, %v4305, %v4313
        %v4343 = vsel %vm324, %v4307, %v4315
        %v4344 = vsel %vm324, %v4293, %v4301
        %v4345 = vsel %vm324, %v4295, %v4303
        %v4346 = vsel %vm324, %v4297, %v4305
        %v4347 = vsel %vm324, %v4299, %v4307
        %v4348 = vsel %vm324, %v4325, %v4293
        %v4349 = vsel %vm324, %v4327, %v4295
        %v4350 = vsel %vm324, %v4329, %v4297
        %v4351 = vsel %vm324, %v4331, %v4299
        %4352 = vst [vmem:[#allocation2 + $0x1e0] sm:$0xff] %v4348
        %4353 = vst [vmem:[#allocation2 + $0x1e8] sm:$0xff] %v4344
        %4354 = vst [vmem:[#allocation2 + $0x1f0] sm:$0xff] %v4340
        %4355 = vst [vmem:[#allocation2 + $0x1f8] sm:$0xff] %v4336
        %4356 = vst [vmem:[#allocation2 + $0x200] sm:$0xff] %v4332
        %4357 = vst [vmem:[#allocation2 + $0x208] sm:$0xff] %v4349
        %4358 = vst [vmem:[#allocation2 + $0x210] sm:$0xff] %v4345
        %4359 = vst [vmem:[#allocation2 + $0x218] sm:$0xff] %v4341
        %4360 = vst [vmem:[#allocation2 + $0x220] sm:$0xff] %v4337
        %4361 = vst [vmem:[#allocation2 + $0x228] sm:$0xff] %v4333
        %4362 = vst [vmem:[#allocation2 + $0x230] sm:$0xff] %v4350
        %4363 = vst [vmem:[#allocation2 + $0x238] sm:$0xff] %v4346
        %4364 = vst [vmem:[#allocation2 + $0x240] sm:$0xff] %v4342
        %4365 = vst [vmem:[#allocation2 + $0x248] sm:$0xff] %v4338
        %4366 = vst [vmem:[#allocation2 + $0x250] sm:$0xff] %v4334
        %4367 = vst [vmem:[#allocation2 + $0x258] sm:$0xff] %v4351
        %4368 = vst [vmem:[#allocation2 + $0x260] sm:$0xff] %v4347
        %4369 = vst [vmem:[#allocation2 + $0x268] sm:$0xff] %v4343
        %4370 = vst [vmem:[#allocation2 + $0x270] sm:$0xff] %v4339
        %4371 = vst [vmem:[#allocation2 + $0x278] sm:$0xff] %v4335
        %4372 = vst [vmem:[#allocation2 + $0x280] sm:$0xff] %v4028
        %4373 = vst [vmem:[#allocation2 + $0x288] sm:$0xff] %v4029
        %4374 = vst [vmem:[#allocation2 + $0x290] sm:$0xff] %v4030
        %4375 = vst [vmem:[#allocation2 + $0x298] sm:$0xff] %v4031
        %4376 = vst [vmem:[#allocation2 + $0x2a0] sm:$0xff] %v4032
        %4377 = vst [vmem:[#allocation2 + $0x2a8] sm:$0xff] %v4033
        %4378 = vst [vmem:[#allocation2 + $0x2b0] sm:$0xff] %v4034
        %4379 = vst [vmem:[#allocation2 + $0x2b8] sm:$0xff] %v4035
        %4380 = vst [vmem:[#allocation2 + $0x2c0] sm:$0xff] %v4036
        %4381 = vst [vmem:[#allocation2 + $0x2c8] sm:$0xff] %v4037
        %4382 = vst [vmem:[#allocation2 + $0x2d0] sm:$0xff] %v4038
        %4383 = vst [vmem:[#allocation2 + $0x2d8] sm:$0xff] %v4039
        %4384 = vst [vmem:[#allocation2 + $0x2e0] sm:$0xff] %v4040
        %4385 = vst [vmem:[#allocation2 + $0x2e8] sm:$0xff] %v4041
        %4386 = vst [vmem:[#allocation2 + $0x2f0] sm:$0xff] %v4042
        %4387 = vst [vmem:[#allocation2 + $0x2f8] sm:$0xff] %v4043
        %4388 = vst [vmem:[#allocation2 + $0x300] sm:$0xff] %v4044
        %4389 = vst [vmem:[#allocation2 + $0x308] sm:$0xff] %v4045
        %4390 = vst [vmem:[#allocation2 + $0x310] sm:$0xff] %v4046
        %4391 = vst [vmem:[#allocation2 + $0x318] sm:$0xff] %v4047
        %4392 = vrot.lane.b32.xlu0 %v4028, 127
        %v4393 = vpop.permute.xlu0 %4392
        %4394 = vrot.lane.b32.xlu0 %v4033, 127
        %v4395 = vpop.permute.xlu0 %4394
        %4396 = vrot.lane.b32.xlu0 %v4038, 127
        %v4397 = vpop.permute.xlu0 %4396
        %4398 = vrot.lane.b32.xlu0 %v4043, 127
        %v4399 = vpop.permute.xlu0 %4398
        %4400 = vrot.lane.b32.xlu0 %v4029, 127
        %v4401 = vpop.permute.xlu0 %4400
        %4402 = vrot.lane.b32.xlu0 %v4034, 127
        %v4403 = vpop.permute.xlu0 %4402
        %4404 = vrot.lane.b32.xlu0 %v4039, 127
        %v4405 = vpop.permute.xlu0 %4404
        %4406 = vrot.lane.b32.xlu0 %v4044, 127
        %v4407 = vpop.permute.xlu0 %4406
        %4408 = vrot.lane.b32.xlu0 %v4030, 127
        %v4409 = vpop.permute.xlu0 %4408
        %4410 = vrot.lane.b32.xlu0 %v4035, 127
        %v4411 = vpop.permute.xlu0 %4410
        %4412 = vrot.lane.b32.xlu0 %v4040, 127
        %v4413 = vpop.permute.xlu0 %4412
        %4414 = vrot.lane.b32.xlu0 %v4045, 127
        %v4415 = vpop.permute.xlu0 %4414
        %4416 = vrot.lane.b32.xlu0 %v4031, 127
        %v4417 = vpop.permute.xlu0 %4416
        %4418 = vrot.lane.b32.xlu0 %v4036, 127
        %v4419 = vpop.permute.xlu0 %4418
        %4420 = vrot.lane.b32.xlu0 %v4041, 127
        %v4421 = vpop.permute.xlu0 %4420
        %4422 = vrot.lane.b32.xlu0 %v4046, 127
        %v4423 = vpop.permute.xlu0 %4422
        %4424 = vrot.lane.b32.xlu0 %v4032, 127
        %v4425 = vpop.permute.xlu0 %4424
        %4426 = vrot.lane.b32.xlu0 %v4037, 127
        %v4427 = vpop.permute.xlu0 %4426
        %4428 = vrot.lane.b32.xlu0 %v4042, 127
        %v4429 = vpop.permute.xlu0 %4428
        %4430 = vrot.lane.b32.xlu0 %v4047, 127
        %v4431 = vpop.permute.xlu0 %4430
        %v4432 = vsel %vm350, %v4417, %v4425
        %v4433 = vsel %vm350, %v4419, %v4427
        %v4434 = vsel %vm350, %v4421, %v4429
        %v4435 = vsel %vm350, %v4423, %v4431
        %v4436 = vsel %vm350, %v4409, %v4417
        %v4437 = vsel %vm350, %v4411, %v4419
        %v4438 = vsel %vm350, %v4413, %v4421
        %v4439 = vsel %vm350, %v4415, %v4423
        %v4440 = vsel %vm350, %v4401, %v4409
        %v4441 = vsel %vm350, %v4403, %v4411
        %v4442 = vsel %vm350, %v4405, %v4413
        %v4443 = vsel %vm350, %v4407, %v4415
        %v4444 = vsel %vm350, %v4393, %v4401
        %v4445 = vsel %vm350, %v4395, %v4403
        %v4446 = vsel %vm350, %v4397, %v4405
        %v4447 = vsel %vm350, %v4399, %v4407
        %v4448 = vsel %vm350, %v4425, %v4393
        %v4449 = vsel %vm350, %v4427, %v4395
        %v4450 = vsel %vm350, %v4429, %v4397
        %v4451 = vsel %vm350, %v4431, %v4399
        %4452 = vst [vmem:[#allocation2 + $0x320] sm:$0xff] %v4444
        %4453 = vst [vmem:[#allocation2 + $0x328] sm:$0xff] %v4440
        %4454 = vst [vmem:[#allocation2 + $0x330] sm:$0xff] %v4436
        %4455 = vst [vmem:[#allocation2 + $0x338] sm:$0xff] %v4432
        %4456 = vst [vmem:[#allocation2 + $0x340] sm:$0xff] %v4448
        %4457 = vst [vmem:[#allocation2 + $0x348] sm:$0xff] %v4445
        %4458 = vst [vmem:[#allocation2 + $0x350] sm:$0xff] %v4441
        %4459 = vst [vmem:[#allocation2 + $0x358] sm:$0xff] %v4437
        %4460 = vst [vmem:[#allocation2 + $0x360] sm:$0xff] %v4433
        %4461 = vst [vmem:[#allocation2 + $0x368] sm:$0xff] %v4449
        %4462 = vst [vmem:[#allocation2 + $0x370] sm:$0xff] %v4446
        %4463 = vst [vmem:[#allocation2 + $0x378] sm:$0xff] %v4442
        %4464 = vst [vmem:[#allocation2 + $0x380] sm:$0xff] %v4438
        %4465 = vst [vmem:[#allocation2 + $0x388] sm:$0xff] %v4434
        %4466 = vst [vmem:[#allocation2 + $0x390] sm:$0xff] %v4450
        %4467 = vst [vmem:[#allocation2 + $0x398] sm:$0xff] %v4447
        %4468 = vst [vmem:[#allocation2 + $0x3a0] sm:$0xff] %v4443
        %4469 = vst [vmem:[#allocation2 + $0x3a8] sm:$0xff] %v4439
        %4470 = vst [vmem:[#allocation2 + $0x3b0] sm:$0xff] %v4435
        %4471 = vst [vmem:[#allocation2 + $0x3b8] sm:$0xff] %v4451
        %4472 = vrot.lane.b32.xlu0 %v4028, 103
        %v4473 = vpop.permute.xlu0 %4472
        %4474 = vrot.lane.b32.xlu0 %v4033, 103
        %v4475 = vpop.permute.xlu0 %4474
        %4476 = vrot.lane.b32.xlu0 %v4038, 103
        %v4477 = vpop.permute.xlu0 %4476
        %4478 = vrot.lane.b32.xlu0 %v4043, 103
        %v4479 = vpop.permute.xlu0 %4478
        %4480 = vrot.lane.b32.xlu0 %v4029, 103
        %v4481 = vpop.permute.xlu0 %4480
        %4482 = vrot.lane.b32.xlu0 %v4034, 103
        %v4483 = vpop.permute.xlu0 %4482
        %4484 = vrot.lane.b32.xlu0 %v4039, 103
        %v4485 = vpop.permute.xlu0 %4484
        %4486 = vrot.lane.b32.xlu0 %v4044, 103
        %v4487 = vpop.permute.xlu0 %4486
        %4488 = vrot.lane.b32.xlu0 %v4030, 103
        %v4489 = vpop.permute.xlu0 %4488
        %4490 = vrot.lane.b32.xlu0 %v4035, 103
        %v4491 = vpop.permute.xlu0 %4490
        %4492 = vrot.lane.b32.xlu0 %v4040, 103
        %v4493 = vpop.permute.xlu0 %4492
        %4494 = vrot.lane.b32.xlu0 %v4045, 103
        %v4495 = vpop.permute.xlu0 %4494
        %4496 = vrot.lane.b32.xlu0 %v4031, 103
        %v4497 = vpop.permute.xlu0 %4496
        %4498 = vrot.lane.b32.xlu0 %v4036, 103
        %v4499 = vpop.permute.xlu0 %4498
        %4500 = vrot.lane.b32.xlu0 %v4041, 103
        %v4501 = vpop.permute.xlu0 %4500
        %4502 = vrot.lane.b32.xlu0 %v4046, 103
        %v4503 = vpop.permute.xlu0 %4502
        %4504 = vrot.lane.b32.xlu0 %v4032, 103
        %v4505 = vpop.permute.xlu0 %4504
        %4506 = vrot.lane.b32.xlu0 %v4037, 103
        %v4507 = vpop.permute.xlu0 %4506
        %4508 = vrot.lane.b32.xlu0 %v4042, 103
        %v4509 = vpop.permute.xlu0 %4508
        %4510 = vrot.lane.b32.xlu0 %v4047, 103
        %v4511 = vpop.permute.xlu0 %4510
        %v4512 = vsel %vm371, %v4497, %v4505
        %v4513 = vsel %vm371, %v4499, %v4507
        %v4514 = vsel %vm371, %v4501, %v4509
        %v4515 = vsel %vm371, %v4503, %v4511
        %v4516 = vsel %vm371, %v4489, %v4497
        %v4517 = vsel %vm371, %v4491, %v4499
        %v4518 = vsel %vm371, %v4493, %v4501
        %v4519 = vsel %vm371, %v4495, %v4503
        %v4520 = vsel %vm371, %v4481, %v4489
        %v4521 = vsel %vm371, %v4483, %v4491
        %v4522 = vsel %vm371, %v4485, %v4493
        %v4523 = vsel %vm371, %v4487, %v4495
        %v4524 = vsel %vm371, %v4473, %v4481
        %v4525 = vsel %vm371, %v4475, %v4483
        %v4526 = vsel %vm371, %v4477, %v4485
        %v4527 = vsel %vm371, %v4479, %v4487
        %v4528 = vsel %vm371, %v4505, %v4473
        %v4529 = vsel %vm371, %v4507, %v4475
        %v4530 = vsel %vm371, %v4509, %v4477
        %v4531 = vsel %vm371, %v4511, %v4479
        %4532 = vst [vmem:[#allocation2 + $0x3c0] sm:$0xff] %v4524
        %4533 = vst [vmem:[#allocation2 + $0x3c8] sm:$0xff] %v4520
        %4534 = vst [vmem:[#allocation2 + $0x3d0] sm:$0xff] %v4516
        %4535 = vst [vmem:[#allocation2 + $0x3d8] sm:$0xff] %v4512
        %4536 = vst [vmem:[#allocation2 + $0x3e0] sm:$0xff] %v4528
        %4537 = vst [vmem:[#allocation2 + $0x3e8] sm:$0xff] %v4525
        %4538 = vst [vmem:[#allocation2 + $0x3f0] sm:$0xff] %v4521
        %4539 = vst [vmem:[#allocation2 + $0x3f8] sm:$0xff] %v4517
        %4540 = vst [vmem:[#allocation2 + $0x400] sm:$0xff] %v4513
        %4541 = vst [vmem:[#allocation2 + $0x408] sm:$0xff] %v4529
        %4542 = vst [vmem:[#allocation2 + $0x410] sm:$0xff] %v4526
        %4543 = vst [vmem:[#allocation2 + $0x418] sm:$0xff] %v4522
        %4544 = vst [vmem:[#allocation2 + $0x420] sm:$0xff] %v4518
        %4545 = vst [vmem:[#allocation2 + $0x428] sm:$0xff] %v4514
        %4546 = vst [vmem:[#allocation2 + $0x430] sm:$0xff] %v4530
        %4547 = vst [vmem:[#allocation2 + $0x438] sm:$0xff] %v4527
        %4548 = vst [vmem:[#allocation2 + $0x440] sm:$0xff] %v4523
        %4549 = vst [vmem:[#allocation2 + $0x448] sm:$0xff] %v4519
        %4550 = vst [vmem:[#allocation2 + $0x450] sm:$0xff] %v4515
        %4551 = vst [vmem:[#allocation2 + $0x458] sm:$0xff] %v4531
        %4552 = vrot.lane.b32.xlu0 %v4028, 102
        %v4553 = vpop.permute.xlu0 %4552
        %4554 = vrot.lane.b32.xlu0 %v4033, 102
        %v4555 = vpop.permute.xlu0 %4554
        %4556 = vrot.lane.b32.xlu0 %v4038, 102
        %v4557 = vpop.permute.xlu0 %4556
        %4558 = vrot.lane.b32.xlu0 %v4043, 102
        %v4559 = vpop.permute.xlu0 %4558
        %4560 = vrot.lane.b32.xlu0 %v4029, 102
        %v4561 = vpop.permute.xlu0 %4560
        %4562 = vrot.lane.b32.xlu0 %v4034, 102
        %v4563 = vpop.permute.xlu0 %4562
        %4564 = vrot.lane.b32.xlu0 %v4039, 102
        %v4565 = vpop.permute.xlu0 %4564
        %4566 = vrot.lane.b32.xlu0 %v4044, 102
        %v4567 = vpop.permute.xlu0 %4566
        %4568 = vrot.lane.b32.xlu0 %v4030, 102
        %v4569 = vpop.permute.xlu0 %4568
        %4570 = vrot.lane.b32.xlu0 %v4035, 102
        %v4571 = vpop.permute.xlu0 %4570
        %4572 = vrot.lane.b32.xlu0 %v4040, 102
        %v4573 = vpop.permute.xlu0 %4572
        %4574 = vrot.lane.b32.xlu0 %v4045, 102
        %v4575 = vpop.permute.xlu0 %4574
        %4576 = vrot.lane.b32.xlu0 %v4031, 102
        %v4577 = vpop.permute.xlu0 %4576
        %4578 = vrot.lane.b32.xlu0 %v4036, 102
        %v4579 = vpop.permute.xlu0 %4578
        %4580 = vrot.lane.b32.xlu0 %v4041, 102
        %v4581 = vpop.permute.xlu0 %4580
        %4582 = vrot.lane.b32.xlu0 %v4046, 102
        %v4583 = vpop.permute.xlu0 %4582
        %4584 = vrot.lane.b32.xlu0 %v4032, 102
        %v4585 = vpop.permute.xlu0 %4584
        %4586 = vrot.lane.b32.xlu0 %v4037, 102
        %v4587 = vpop.permute.xlu0 %4586
        %4588 = vrot.lane.b32.xlu0 %v4042, 102
        %v4589 = vpop.permute.xlu0 %4588
        %4590 = vrot.lane.b32.xlu0 %v4047, 102
        %v4591 = vpop.permute.xlu0 %4590
        %v4592 = vsel %vm392, %v4577, %v4585
        %v4593 = vsel %vm392, %v4579, %v4587
        %v4594 = vsel %vm392, %v4581, %v4589
        %v4595 = vsel %vm392, %v4583, %v4591
        %v4596 = vsel %vm392, %v4569, %v4577
        %v4597 = vsel %vm392, %v4571, %v4579
        %v4598 = vsel %vm392, %v4573, %v4581
        %v4599 = vsel %vm392, %v4575, %v4583
        %v4600 = vsel %vm392, %v4561, %v4569
        %v4601 = vsel %vm392, %v4563, %v4571
        %v4602 = vsel %vm392, %v4565, %v4573
        %v4603 = vsel %vm392, %v4567, %v4575
        %v4604 = vsel %vm392, %v4553, %v4561
        %v4605 = vsel %vm392, %v4555, %v4563
        %v4606 = vsel %vm392, %v4557, %v4565
        %v4607 = vsel %vm392, %v4559, %v4567
        %v4608 = vsel %vm392, %v4585, %v4553
        %v4609 = vsel %vm392, %v4587, %v4555
        %v4610 = vsel %vm392, %v4589, %v4557
        %v4611 = vsel %vm392, %v4591, %v4559
        %4612 = vst [vmem:[#allocation2 + $0x460] sm:$0xff] %v4604
        %4613 = vst [vmem:[#allocation2 + $0x468] sm:$0xff] %v4600
        %4614 = vst [vmem:[#allocation2 + $0x470] sm:$0xff] %v4596
        %4615 = vst [vmem:[#allocation2 + $0x478] sm:$0xff] %v4592
        %4616 = vst [vmem:[#allocation2 + $0x480] sm:$0xff] %v4608
        %4617 = vst [vmem:[#allocation2 + $0x488] sm:$0xff] %v4605
        %4618 = vst [vmem:[#allocation2 + $0x490] sm:$0xff] %v4601
        %4619 = vst [vmem:[#allocation2 + $0x498] sm:$0xff] %v4597
        %4620 = vst [vmem:[#allocation2 + $0x4a0] sm:$0xff] %v4593
        %4621 = vst [vmem:[#allocation2 + $0x4a8] sm:$0xff] %v4609
        %4622 = vst [vmem:[#allocation2 + $0x4b0] sm:$0xff] %v4606
        %4623 = vst [vmem:[#allocation2 + $0x4b8] sm:$0xff] %v4602
        %4624 = vst [vmem:[#allocation2 + $0x4c0] sm:$0xff] %v4598
        %4625 = vst [vmem:[#allocation2 + $0x4c8] sm:$0xff] %v4594
        %4626 = vst [vmem:[#allocation2 + $0x4d0] sm:$0xff] %v4610
        %4627 = vst [vmem:[#allocation2 + $0x4d8] sm:$0xff] %v4607
        %4628 = vst [vmem:[#allocation2 + $0x4e0] sm:$0xff] %v4603
        %4629 = vst [vmem:[#allocation2 + $0x4e8] sm:$0xff] %v4599
        %4630 = vst [vmem:[#allocation2 + $0x4f0] sm:$0xff] %v4595
        %4631 = vst [vmem:[#allocation2 + $0x4f8] sm:$0xff] %v4611
        %4632 = vrot.lane.b32.xlu0 %v4028, 101
        %v4633 = vpop.permute.xlu0 %4632
        %4634 = vrot.lane.b32.xlu0 %v4033, 101
        %v4635 = vpop.permute.xlu0 %4634
        %4636 = vrot.lane.b32.xlu0 %v4038, 101
        %v4637 = vpop.permute.xlu0 %4636
        %4638 = vrot.lane.b32.xlu0 %v4043, 101
        %v4639 = vpop.permute.xlu0 %4638
        %4640 = vrot.lane.b32.xlu0 %v4029, 101
        %v4641 = vpop.permute.xlu0 %4640
        %4642 = vrot.lane.b32.xlu0 %v4034, 101
        %v4643 = vpop.permute.xlu0 %4642
        %4644 = vrot.lane.b32.xlu0 %v4039, 101
        %v4645 = vpop.permute.xlu0 %4644
        %4646 = vrot.lane.b32.xlu0 %v4044, 101
        %v4647 = vpop.permute.xlu0 %4646
        %4648 = vrot.lane.b32.xlu0 %v4030, 101
        %v4649 = vpop.permute.xlu0 %4648
        %4650 = vrot.lane.b32.xlu0 %v4035, 101
        %v4651 = vpop.permute.xlu0 %4650
        %4652 = vrot.lane.b32.xlu0 %v4040, 101
        %v4653 = vpop.permute.xlu0 %4652
        %4654 = vrot.lane.b32.xlu0 %v4045, 101
        %v4655 = vpop.permute.xlu0 %4654
        %4656 = vrot.lane.b32.xlu0 %v4031, 101
        %v4657 = vpop.permute.xlu0 %4656
        %4658 = vrot.lane.b32.xlu0 %v4036, 101
        %v4659 = vpop.permute.xlu0 %4658
        %4660 = vrot.lane.b32.xlu0 %v4041, 101
        %v4661 = vpop.permute.xlu0 %4660
        %4662 = vrot.lane.b32.xlu0 %v4046, 101
        %v4663 = vpop.permute.xlu0 %4662
        %4664 = vrot.lane.b32.xlu0 %v4032, 101
        %v4665 = vpop.permute.xlu0 %4664
        %4666 = vrot.lane.b32.xlu0 %v4037, 101
        %v4667 = vpop.permute.xlu0 %4666
        %4668 = vrot.lane.b32.xlu0 %v4042, 101
        %v4669 = vpop.permute.xlu0 %4668
        %4670 = vrot.lane.b32.xlu0 %v4047, 101
        %v4671 = vpop.permute.xlu0 %4670
        %v4672 = vsel %vm413, %v4657, %v4665
        %v4673 = vsel %vm413, %v4659, %v4667
        %v4674 = vsel %vm413, %v4661, %v4669
        %v4675 = vsel %vm413, %v4663, %v4671
        %v4676 = vsel %vm413, %v4649, %v4657
        %v4677 = vsel %vm413, %v4651, %v4659
        %v4678 = vsel %vm413, %v4653, %v4661
        %v4679 = vsel %vm413, %v4655, %v4663
        %v4680 = vsel %vm413, %v4641, %v4649
        %v4681 = vsel %vm413, %v4643, %v4651
        %v4682 = vsel %vm413, %v4645, %v4653
        %v4683 = vsel %vm413, %v4647, %v4655
        %v4684 = vsel %vm413, %v4633, %v4641
        %v4685 = vsel %vm413, %v4635, %v4643
        %v4686 = vsel %vm413, %v4637, %v4645
        %v4687 = vsel %vm413, %v4639, %v4647
        %v4688 = vsel %vm413, %v4665, %v4633
        %v4689 = vsel %vm413, %v4667, %v4635
        %v4690 = vsel %vm413, %v4669, %v4637
        %v4691 = vsel %vm413, %v4671, %v4639
        %4692 = vst [vmem:[#allocation2 + $0x500] sm:$0xff] %v4684
        %4693 = vst [vmem:[#allocation2 + $0x508] sm:$0xff] %v4680
        %4694 = vst [vmem:[#allocation2 + $0x510] sm:$0xff] %v4676
        %4695 = vst [vmem:[#allocation2 + $0x518] sm:$0xff] %v4672
        %4696 = vst [vmem:[#allocation2 + $0x520] sm:$0xff] %v4688
        %4697 = vst [vmem:[#allocation2 + $0x528] sm:$0xff] %v4685
        %4698 = vst [vmem:[#allocation2 + $0x530] sm:$0xff] %v4681
        %4699 = vst [vmem:[#allocation2 + $0x538] sm:$0xff] %v4677
        %4700 = vst [vmem:[#allocation2 + $0x540] sm:$0xff] %v4673
        %4701 = vst [vmem:[#allocation2 + $0x548] sm:$0xff] %v4689
        %4702 = vst [vmem:[#allocation2 + $0x550] sm:$0xff] %v4686
        %4703 = vst [vmem:[#allocation2 + $0x558] sm:$0xff] %v4682
        %4704 = vst [vmem:[#allocation2 + $0x560] sm:$0xff] %v4678
        %4705 = vst [vmem:[#allocation2 + $0x568] sm:$0xff] %v4674
        %4706 = vst [vmem:[#allocation2 + $0x570] sm:$0xff] %v4690
        %4707 = vst [vmem:[#allocation2 + $0x578] sm:$0xff] %v4687
        %4708 = vst [vmem:[#allocation2 + $0x580] sm:$0xff] %v4683
        %4709 = vst [vmem:[#allocation2 + $0x588] sm:$0xff] %v4679
        %4710 = vst [vmem:[#allocation2 + $0x590] sm:$0xff] %v4675
        %4711 = vst [vmem:[#allocation2 + $0x598] sm:$0xff] %v4691
        %v4712 = vld [vmem:[#allocation2] sm:$0xff]
        %v4713 = vld [vmem:[#allocation2 + $0x8] sm:$0xff]
        %v4714 = vld [vmem:[#allocation2 + $0x10] sm:$0xff]
        %v4715 = vld [vmem:[#allocation2 + $0x18] sm:$0xff]
        %v4716 = vld [vmem:[#allocation2 + $0x20] sm:$0xff]
        %v4717 = vld [vmem:[#allocation2 + $0x28] sm:$0xff]
        %v4718 = vld [vmem:[#allocation2 + $0x30] sm:$0xff]
        %v4719 = vld [vmem:[#allocation2 + $0x38] sm:$0xff]
        %v4720 = vld [vmem:[#allocation2 + $0x40] sm:$0xff]
        %v4721 = vld [vmem:[#allocation2 + $0x48] sm:$0xff]
        %v4722 = vld [vmem:[#allocation2 + $0x50] sm:$0xff]
        %v4723 = vld [vmem:[#allocation2 + $0x58] sm:$0xff]
        %v4724 = vld [vmem:[#allocation2 + $0x60] sm:$0xff]
        %v4725 = vld [vmem:[#allocation2 + $0x68] sm:$0xff]
        %v4726 = vld [vmem:[#allocation2 + $0x70] sm:$0xff]
        %v4727 = vld [vmem:[#allocation2 + $0x78] sm:$0xff]
        %v4728 = vld [vmem:[#allocation2 + $0x80] sm:$0xff]
        %v4729 = vld [vmem:[#allocation2 + $0x88] sm:$0xff]
        %v4730 = vld [vmem:[#allocation2 + $0x90] sm:$0xff]
        %v4731 = vld [vmem:[#allocation2 + $0x98] sm:$0xff]
        %v4732 = vld [vmem:[#allocation2 + $0xa0] sm:$0xff]
        %v4733 = vld [vmem:[#allocation2 + $0xa8] sm:$0xff]
        %v4734 = vld [vmem:[#allocation2 + $0xb0] sm:$0xff]
        %v4735 = vld [vmem:[#allocation2 + $0xb8] sm:$0xff]
        %v4736 = vld [vmem:[#allocation2 + $0xc0] sm:$0xff]
        %v4737 = vld [vmem:[#allocation2 + $0xc8] sm:$0xff]
        %v4738 = vld [vmem:[#allocation2 + $0xd0] sm:$0xff]
        %v4739 = vld [vmem:[#allocation2 + $0xd8] sm:$0xff]
        %v4740 = vld [vmem:[#allocation2 + $0xe0] sm:$0xff]
        %v4741 = vld [vmem:[#allocation2 + $0xe8] sm:$0xff]
        %v4742 = vld [vmem:[#allocation2 + $0xf0] sm:$0xff]
        %v4743 = vld [vmem:[#allocation2 + $0xf8] sm:$0xff]
        %v4744 = vld [vmem:[#allocation2 + $0x100] sm:$0xff]
        %v4745 = vld [vmem:[#allocation2 + $0x108] sm:$0xff]
        %v4746 = vld [vmem:[#allocation2 + $0x110] sm:$0xff]
        %v4747 = vld [vmem:[#allocation2 + $0x118] sm:$0xff]
        %v4748 = vld [vmem:[#allocation2 + $0x120] sm:$0xff]
        %v4749 = vld [vmem:[#allocation2 + $0x128] sm:$0xff]
        %v4750 = vld [vmem:[#allocation2 + $0x130] sm:$0xff]
        %v4751 = vld [vmem:[#allocation2 + $0x138] sm:$0xff]
        %v4752 = vld [vmem:[#allocation2 + $0x140] sm:$0xff]
        %v4753 = vld [vmem:[#allocation2 + $0x148] sm:$0xff]
        %v4754 = vld [vmem:[#allocation2 + $0x150] sm:$0xff]
        %v4755 = vld [vmem:[#allocation2 + $0x158] sm:$0xff]
        %v4756 = vld [vmem:[#allocation2 + $0x160] sm:$0xff]
        %v4757 = vld [vmem:[#allocation2 + $0x168] sm:$0xff]
        %v4758 = vld [vmem:[#allocation2 + $0x170] sm:$0xff]
        %v4759 = vld [vmem:[#allocation2 + $0x178] sm:$0xff]
        %v4760 = vld [vmem:[#allocation2 + $0x180] sm:$0xff]
        %v4761 = vld [vmem:[#allocation2 + $0x188] sm:$0xff]
        %v4762 = vld [vmem:[#allocation2 + $0x190] sm:$0xff]
        %v4763 = vld [vmem:[#allocation2 + $0x198] sm:$0xff]
        %v4764 = vld [vmem:[#allocation2 + $0x1a0] sm:$0xff]
        %v4765 = vld [vmem:[#allocation2 + $0x1a8] sm:$0xff]
        %v4766 = vld [vmem:[#allocation2 + $0x1b0] sm:$0xff]
        %v4767 = vld [vmem:[#allocation2 + $0x1b8] sm:$0xff]
        %v4768 = vld [vmem:[#allocation2 + $0x1c0] sm:$0xff]
        %v4769 = vld [vmem:[#allocation2 + $0x1c8] sm:$0xff]
        %v4770 = vld [vmem:[#allocation2 + $0x1d0] sm:$0xff]
        %v4771 = vld [vmem:[#allocation2 + $0x1d8] sm:$0xff]
        %v4772 = vld [vmem:[#allocation2 + $0x1e0] sm:$0xff]
        %v4773 = vld [vmem:[#allocation2 + $0x1e8] sm:$0xff]
        %v4774 = vld [vmem:[#allocation2 + $0x1f0] sm:$0xff]
        %v4775 = vld [vmem:[#allocation2 + $0x1f8] sm:$0xff]
        %v4776 = vld [vmem:[#allocation2 + $0x200] sm:$0xff]
        %v4777 = vld [vmem:[#allocation2 + $0x208] sm:$0xff]
        %v4778 = vld [vmem:[#allocation2 + $0x210] sm:$0xff]
        %v4779 = vld [vmem:[#allocation2 + $0x218] sm:$0xff]
        %v4780 = vld [vmem:[#allocation2 + $0x220] sm:$0xff]
        %v4781 = vld [vmem:[#allocation2 + $0x228] sm:$0xff]
        %v4782 = vld [vmem:[#allocation2 + $0x230] sm:$0xff]
        %v4783 = vld [vmem:[#allocation2 + $0x238] sm:$0xff]
        %v4784 = vld [vmem:[#allocation2 + $0x240] sm:$0xff]
        %v4785 = vld [vmem:[#allocation2 + $0x248] sm:$0xff]
        %v4786 = vld [vmem:[#allocation2 + $0x250] sm:$0xff]
        %v4787 = vld [vmem:[#allocation2 + $0x258] sm:$0xff]
        %v4788 = vld [vmem:[#allocation2 + $0x260] sm:$0xff]
        %v4789 = vld [vmem:[#allocation2 + $0x268] sm:$0xff]
        %v4790 = vld [vmem:[#allocation2 + $0x270] sm:$0xff]
        %v4791 = vld [vmem:[#allocation2 + $0x278] sm:$0xff]
        %v4792 = vld [vmem:[#allocation2 + $0x280] sm:$0xff]
        %v4793 = vld [vmem:[#allocation2 + $0x288] sm:$0xff]
        %v4794 = vld [vmem:[#allocation2 + $0x290] sm:$0xff]
        %v4795 = vld [vmem:[#allocation2 + $0x298] sm:$0xff]
        %v4796 = vld [vmem:[#allocation2 + $0x2a0] sm:$0xff]
        %v4797 = vld [vmem:[#allocation2 + $0x2a8] sm:$0xff]
        %v4798 = vld [vmem:[#allocation2 + $0x2b0] sm:$0xff]
        %v4799 = vld [vmem:[#allocation2 + $0x2b8] sm:$0xff]
        %v4800 = vld [vmem:[#allocation2 + $0x2c0] sm:$0xff]
        %v4801 = vld [vmem:[#allocation2 + $0x2c8] sm:$0xff]
        %v4802 = vld [vmem:[#allocation2 + $0x2d0] sm:$0xff]
        %v4803 = vld [vmem:[#allocation2 + $0x2d8] sm:$0xff]
        %v4804 = vld [vmem:[#allocation2 + $0x2e0] sm:$0xff]
        %v4805 = vld [vmem:[#allocation2 + $0x2e8] sm:$0xff]
        %v4806 = vld [vmem:[#allocation2 + $0x2f0] sm:$0xff]
        %v4807 = vld [vmem:[#allocation2 + $0x2f8] sm:$0xff]
        %v4808 = vld [vmem:[#allocation2 + $0x300] sm:$0xff]
        %v4809 = vld [vmem:[#allocation2 + $0x308] sm:$0xff]
        %v4810 = vld [vmem:[#allocation2 + $0x310] sm:$0xff]
        %v4811 = vld [vmem:[#allocation2 + $0x318] sm:$0xff]
        %v4812 = vld [vmem:[#allocation2 + $0x320] sm:$0xff]
        %v4813 = vld [vmem:[#allocation2 + $0x328] sm:$0xff]
        %v4814 = vld [vmem:[#allocation2 + $0x330] sm:$0xff]
        %v4815 = vld [vmem:[#allocation2 + $0x338] sm:$0xff]
        %v4816 = vld [vmem:[#allocation2 + $0x340] sm:$0xff]
        %v4817 = vld [vmem:[#allocation2 + $0x348] sm:$0xff]
        %v4818 = vld [vmem:[#allocation2 + $0x350] sm:$0xff]
        %v4819 = vld [vmem:[#allocation2 + $0x358] sm:$0xff]
        %v4820 = vld [vmem:[#allocation2 + $0x360] sm:$0xff]
        %v4821 = vld [vmem:[#allocation2 + $0x368] sm:$0xff]
        %v4822 = vld [vmem:[#allocation2 + $0x370] sm:$0xff]
        %v4823 = vld [vmem:[#allocation2 + $0x378] sm:$0xff]
        %v4824 = vld [vmem:[#allocation2 + $0x380] sm:$0xff]
        %v4825 = vld [vmem:[#allocation2 + $0x388] sm:$0xff]
        %v4826 = vld [vmem:[#allocation2 + $0x390] sm:$0xff]
        %v4827 = vld [vmem:[#allocation2 + $0x398] sm:$0xff]
        %v4828 = vld [vmem:[#allocation2 + $0x3a0] sm:$0xff]
        %v4829 = vld [vmem:[#allocation2 + $0x3a8] sm:$0xff]
        %v4830 = vld [vmem:[#allocation2 + $0x3b0] sm:$0xff]
        %v4831 = vld [vmem:[#allocation2 + $0x3b8] sm:$0xff]
        %v4832 = vld [vmem:[#allocation2 + $0x3c0] sm:$0xff]
        %v4833 = vld [vmem:[#allocation2 + $0x3c8] sm:$0xff]
        %v4834 = vld [vmem:[#allocation2 + $0x3d0] sm:$0xff]
        %v4835 = vld [vmem:[#allocation2 + $0x3d8] sm:$0xff]
        %v4836 = vld [vmem:[#allocation2 + $0x3e0] sm:$0xff]
        %v4837 = vld [vmem:[#allocation2 + $0x3e8] sm:$0xff]
        %v4838 = vld [vmem:[#allocation2 + $0x3f0] sm:$0xff]
        %v4839 = vld [vmem:[#allocation2 + $0x3f8] sm:$0xff]
        %v4840 = vld [vmem:[#allocation2 + $0x400] sm:$0xff]
        %v4841 = vld [vmem:[#allocation2 + $0x408] sm:$0xff]
        %v4842 = vld [vmem:[#allocation2 + $0x410] sm:$0xff]
        %v4843 = vld [vmem:[#allocation2 + $0x418] sm:$0xff]
        %v4844 = vld [vmem:[#allocation2 + $0x420] sm:$0xff]
        %v4845 = vld [vmem:[#allocation2 + $0x428] sm:$0xff]
        %v4846 = vld [vmem:[#allocation2 + $0x430] sm:$0xff]
        %v4847 = vld [vmem:[#allocation2 + $0x438] sm:$0xff]
        %v4848 = vld [vmem:[#allocation2 + $0x440] sm:$0xff]
        %v4849 = vld [vmem:[#allocation2 + $0x448] sm:$0xff]
        %v4850 = vld [vmem:[#allocation2 + $0x450] sm:$0xff]
        %v4851 = vld [vmem:[#allocation2 + $0x458] sm:$0xff]
        %v4852 = vld [vmem:[#allocation2 + $0x460] sm:$0xff]
        %v4853 = vld [vmem:[#allocation2 + $0x468] sm:$0xff]
        %v4854 = vld [vmem:[#allocation2 + $0x470] sm:$0xff]
        %v4855 = vld [vmem:[#allocation2 + $0x478] sm:$0xff]
        %v4856 = vld [vmem:[#allocation2 + $0x480] sm:$0xff]
        %v4857 = vld [vmem:[#allocation2 + $0x488] sm:$0xff]
        %v4858 = vld [vmem:[#allocation2 + $0x490] sm:$0xff]
        %v4859 = vld [vmem:[#allocation2 + $0x498] sm:$0xff]
        %v4860 = vld [vmem:[#allocation2 + $0x4a0] sm:$0xff]
        %v4861 = vld [vmem:[#allocation2 + $0x4a8] sm:$0xff]
        %v4862 = vld [vmem:[#allocation2 + $0x4b0] sm:$0xff]
        %v4863 = vld [vmem:[#allocation2 + $0x4b8] sm:$0xff]
        %v4864 = vld [vmem:[#allocation2 + $0x4c0] sm:$0xff]
        %v4865 = vld [vmem:[#allocation2 + $0x4c8] sm:$0xff]
        %v4866 = vld [vmem:[#allocation2 + $0x4d0] sm:$0xff]
        %v4867 = vld [vmem:[#allocation2 + $0x4d8] sm:$0xff]
        %v4868 = vld [vmem:[#allocation2 + $0x4e0] sm:$0xff]
        %v4869 = vld [vmem:[#allocation2 + $0x4e8] sm:$0xff]
        %v4870 = vld [vmem:[#allocation2 + $0x4f0] sm:$0xff]
        %v4871 = vld [vmem:[#allocation2 + $0x4f8] sm:$0xff]
        %v4872 = vld [vmem:[#allocation2 + $0x500] sm:$0xff]
        %v4873 = vld [vmem:[#allocation2 + $0x508] sm:$0xff]
        %v4874 = vld [vmem:[#allocation2 + $0x510] sm:$0xff]
        %v4875 = vld [vmem:[#allocation2 + $0x518] sm:$0xff]
        %v4876 = vld [vmem:[#allocation2 + $0x520] sm:$0xff]
        %v4877 = vld [vmem:[#allocation2 + $0x528] sm:$0xff]
        %v4878 = vld [vmem:[#allocation2 + $0x530] sm:$0xff]
        %v4879 = vld [vmem:[#allocation2 + $0x538] sm:$0xff]
        %v4880 = vld [vmem:[#allocation2 + $0x540] sm:$0xff]
        %v4881 = vld [vmem:[#allocation2 + $0x548] sm:$0xff]
        %v4882 = vld [vmem:[#allocation2 + $0x550] sm:$0xff]
        %v4883 = vld [vmem:[#allocation2 + $0x558] sm:$0xff]
        %v4884 = vld [vmem:[#allocation2 + $0x560] sm:$0xff]
        %v4885 = vld [vmem:[#allocation2 + $0x568] sm:$0xff]
        %v4886 = vld [vmem:[#allocation2 + $0x570] sm:$0xff]
        %v4887 = vld [vmem:[#allocation2 + $0x578] sm:$0xff]
        %v4888 = vld [vmem:[#allocation2 + $0x580] sm:$0xff]
        %v4889 = vld [vmem:[#allocation2 + $0x588] sm:$0xff]
        %v4890 = vld [vmem:[#allocation2 + $0x590] sm:$0xff]
        %v4891 = vld [vmem:[#allocation2 + $0x598] sm:$0xff]
        %4893 = vset.pattern.permute.xlu0 0
        %4894 = vperm.xlu0 %4893, %v4051
        %v4895 = vpop.permute.xlu0 %4894
        %vm4897 = vcmask 261120
        %v4899 = vsel %vm4897, %v4050, 0
        %4901 = vmatpush.msra.mxu0 %v4787
        %4902 = vmatpush.msra.mxu0 %v4782
        %4903 = vmatpush.msra.mxu0 %v4777
        %4904 = vmatpush.msra.mxu0 %v4772
        %4905 = vmatpush.msra.mxu0 %v4767
        %4906 = vmatpush.msra.mxu0 %v4762
        %4907 = vmatpush.msra.mxu0 %v4757
        %4908 = vmatpush.msra.mxu0 %v4752
        %4909 = vmatpush.msra.mxu0 %v4747
        %4910 = vmatpush.msra.mxu0 %v4742
        %4911 = vmatpush.msra.mxu0 %v4737
        %4912 = vmatpush.msra.mxu0 %v4732
        %4913 = vmatpush.msra.mxu0 %v4727
        %4914 = vmatpush.msra.mxu0 %v4722
        %4915 = vmatpush.msra.mxu0 %v4717
        %4916 = vmatpush.msra.mxu0 %v4712
        %4917 = vmatmul.f32.gmra.mxu0 %v4048
        %v4918 = vpop.f32.mrf.mxu0
        %v4919 = vadd.f32 %v4895, %v4918
        %4920 = vdwg.mxu0
        %4921 = vmatpush.msra.mxu0 %v4867
        %4922 = vmatpush.msra.mxu0 %v4862
        %4923 = vmatpush.msra.mxu0 %v4857
        %4924 = vmatpush.msra.mxu0 %v4852
        %4925 = vmatpush.msra.mxu0 %v4847
        %4926 = vmatpush.msra.mxu0 %v4842
        %4927 = vmatpush.msra.mxu0 %v4837
        %4928 = vmatpush.msra.mxu0 %v4832
        %4929 = vmatpush.msra.mxu0 %v4827
        %4930 = vmatpush.msra.mxu0 %v4822
        %4931 = vmatpush.msra.mxu0 %v4817
        %4932 = vmatpush.msra.mxu0 %v4812
        %4933 = vmatpush.msra.mxu0 %v4807
        %4934 = vmatpush.msra.mxu0 %v4802
        %4935 = vmatpush.msra.mxu0 %v4797
        %4936 = vmatpush.msra.mxu0 %v4792
        %4937 = vmatmul.f32.gmra.mxu0 %v4049
        %v4938 = vpop.f32.mrf.mxu0
        %v4939 = vadd.f32 %v4919, %v4938
        %4940 = vdwg.mxu0
        %4941 = vmatpush.msra.mxu0 0.0
        %4942 = vmatpush.msra.mxu0 0.0
        %4943 = vmatpush.msra.mxu0 0.0
        %4944 = vmatpush.msra.mxu0 0.0
        %4945 = vmatpush.msra.mxu0 0.0
        %4946 = vmatpush.msra.mxu0 0.0
        %4947 = vmatpush.msra.mxu0 0.0
        %4948 = vmatpush.msra.mxu0 0.0
        %4949 = vmatpush.msra.mxu0 0.0
        %4950 = vmatpush.msra.mxu0 0.0
        %4951 = vmatpush.msra.mxu0 0.0
        %4952 = vmatpush.msra.mxu0 0.0
        %4953 = vmatpush.msra.mxu0 %v4887
        %4954 = vmatpush.msra.mxu0 %v4882
        %4955 = vmatpush.msra.mxu0 %v4877
        %4956 = vmatpush.msra.mxu0 %v4872
        %4957 = vmatmul.f32.gmra.mxu0 %v4899
        %v4958 = vpop.f32.mrf.mxu0
        %v4959 = vadd.f32 %v4939, %v4958
        %4960 = vdwg.mxu0
        %4961 = vmatpush.msra.mxu0 %v4788
        %4962 = vmatpush.msra.mxu0 %v4783
        %4963 = vmatpush.msra.mxu0 %v4778
        %4964 = vmatpush.msra.mxu0 %v4773
        %4965 = vmatpush.msra.mxu0 %v4768
        %4966 = vmatpush.msra.mxu0 %v4763
        %4967 = vmatpush.msra.mxu0 %v4758
        %4968 = vmatpush.msra.mxu0 %v4753
        %4969 = vmatpush.msra.mxu0 %v4748
        %4970 = vmatpush.msra.mxu0 %v4743
        %4971 = vmatpush.msra.mxu0 %v4738
        %4972 = vmatpush.msra.mxu0 %v4733
        %4973 = vmatpush.msra.mxu0 %v4728
        %4974 = vmatpush.msra.mxu0 %v4723
        %4975 = vmatpush.msra.mxu0 %v4718
        %4976 = vmatpush.msra.mxu0 %v4713
        %4977 = vmatmul.f32.gmra.mxu0 %v4048
        %v4978 = vpop.f32.mrf.mxu0
        %v4979 = vadd.f32 %v4895, %v4978
        %4980 = vdwg.mxu0
        %4981 = vmatpush.msra.mxu0 %v4868
        %4982 = vmatpush.msra.mxu0 %v4863
        %4983 = vmatpush.msra.mxu0 %v4858
        %4984 = vmatpush.msra.mxu0 %v4853
        %4985 = vmatpush.msra.mxu0 %v4848
        %4986 = vmatpush.msra.mxu0 %v4843
        %4987 = vmatpush.msra.mxu0 %v4838
        %4988 = vmatpush.msra.mxu0 %v4833
        %4989 = vmatpush.msra.mxu0 %v4828
        %4990 = vmatpush.msra.mxu0 %v4823
        %4991 = vmatpush.msra.mxu0 %v4818
        %4992 = vmatpush.msra.mxu0 %v4813
        %4993 = vmatpush.msra.mxu0 %v4808
        %4994 = vmatpush.msra.mxu0 %v4803
        %4995 = vmatpush.msra.mxu0 %v4798
        %4996 = vmatpush.msra.mxu0 %v4793
        %4997 = vmatmul.f32.gmra.mxu0 %v4049
        %v4998 = vpop.f32.mrf.mxu0
        %v4999 = vadd.f32 %v4979, %v4998
        %5000 = vdwg.mxu0
        %5001 = vmatpush.msra.mxu0 0.0
        %5002 = vmatpush.msra.mxu0 0.0
        %5003 = vmatpush.msra.mxu0 0.0
        %5004 = vmatpush.msra.mxu0 0.0
        %5005 = vmatpush.msra.mxu0 0.0
        %5006 = vmatpush.msra.mxu0 0.0
        %5007 = vmatpush.msra.mxu0 0.0
        %5008 = vmatpush.msra.mxu0 0.0
        %5009 = vmatpush.msra.mxu0 0.0
        %5010 = vmatpush.msra.mxu0 0.0
        %5011 = vmatpush.msra.mxu0 0.0
        %5012 = vmatpush.msra.mxu0 0.0
        %5013 = vmatpush.msra.mxu0 %v4888
        %5014 = vmatpush.msra.mxu0 %v4883
        %5015 = vmatpush.msra.mxu0 %v4878
        %5016 = vmatpush.msra.mxu0 %v4873
        %5017 = vmatmul.f32.gmra.mxu0 %v4899
        %v5018 = vpop.f32.mrf.mxu0
        %v5019 = vadd.f32 %v4999, %v5018
        %5020 = vdwg.mxu0
        %5021 = vmatpush.msra.mxu0 %v4789
        %5022 = vmatpush.msra.mxu0 %v4784
        %5023 = vmatpush.msra.mxu0 %v4779
        %5024 = vmatpush.msra.mxu0 %v4774
        %5025 = vmatpush.msra.mxu0 %v4769
        %5026 = vmatpush.msra.mxu0 %v4764
        %5027 = vmatpush.msra.mxu0 %v4759
        %5028 = vmatpush.msra.mxu0 %v4754
        %5029 = vmatpush.msra.mxu0 %v4749
        %5030 = vmatpush.msra.mxu0 %v4744
        %5031 = vmatpush.msra.mxu0 %v4739
        %5032 = vmatpush.msra.mxu0 %v4734
        %5033 = vmatpush.msra.mxu0 %v4729
        %5034 = vmatpush.msra.mxu0 %v4724
        %5035 = vmatpush.msra.mxu0 %v4719
        %5036 = vmatpush.msra.mxu0 %v4714
        %5037 = vmatmul.f32.gmra.mxu0 %v4048
        %v5038 = vpop.f32.mrf.mxu0
        %v5039 = vadd.f32 %v4895, %v5038
        %5040 = vdwg.mxu0
        %5041 = vmatpush.msra.mxu0 %v4869
        %5042 = vmatpush.msra.mxu0 %v4864
        %5043 = vmatpush.msra.mxu0 %v4859
        %5044 = vmatpush.msra.mxu0 %v4854
        %5045 = vmatpush.msra.mxu0 %v4849
        %5046 = vmatpush.msra.mxu0 %v4844
        %5047 = vmatpush.msra.mxu0 %v4839
        %5048 = vmatpush.msra.mxu0 %v4834
        %5049 = vmatpush.msra.mxu0 %v4829
        %5050 = vmatpush.msra.mxu0 %v4824
        %5051 = vmatpush.msra.mxu0 %v4819
        %5052 = vmatpush.msra.mxu0 %v4814
        %5053 = vmatpush.msra.mxu0 %v4809
        %5054 = vmatpush.msra.mxu0 %v4804
        %5055 = vmatpush.msra.mxu0 %v4799
        %5056 = vmatpush.msra.mxu0 %v4794
        %5057 = vmatmul.f32.gmra.mxu0 %v4049
        %v5058 = vpop.f32.mrf.mxu0
        %v5059 = vadd.f32 %v5039, %v5058
        %5060 = vdwg.mxu0
        %5061 = vmatpush.msra.mxu0 0.0
        %5062 = vmatpush.msra.mxu0 0.0
        %5063 = vmatpush.msra.mxu0 0.0
        %5064 = vmatpush.msra.mxu0 0.0
        %5065 = vmatpush.msra.mxu0 0.0
        %5066 = vmatpush.msra.mxu0 0.0
        %5067 = vmatpush.msra.mxu0 0.0
        %5068 = vmatpush.msra.mxu0 0.0
        %5069 = vmatpush.msra.mxu0 0.0
        %5070 = vmatpush.msra.mxu0 0.0
        %5071 = vmatpush.msra.mxu0 0.0
        %5072 = vmatpush.msra.mxu0 0.0
        %5073 = vmatpush.msra.mxu0 %v4889
        %5074 = vmatpush.msra.mxu0 %v4884
        %5075 = vmatpush.msra.mxu0 %v4879
        %5076 = vmatpush.msra.mxu0 %v4874
        %5077 = vmatmul.f32.gmra.mxu0 %v4899
        %v5078 = vpop.f32.mrf.mxu0
        %v5079 = vadd.f32 %v5059, %v5078
        %5080 = vdwg.mxu0
        %5081 = vmatpush.msra.mxu0 %v4790
        %5082 = vmatpush.msra.mxu0 %v4785
        %5083 = vmatpush.msra.mxu0 %v4780
        %5084 = vmatpush.msra.mxu0 %v4775
        %5085 = vmatpush.msra.mxu0 %v4770
        %5086 = vmatpush.msra.mxu0 %v4765
        %5087 = vmatpush.msra.mxu0 %v4760
        %5088 = vmatpush.msra.mxu0 %v4755
        %5089 = vmatpush.msra.mxu0 %v4750
        %5090 = vmatpush.msra.mxu0 %v4745
        %5091 = vmatpush.msra.mxu0 %v4740
        %5092 = vmatpush.msra.mxu0 %v4735
        %5093 = vmatpush.msra.mxu0 %v4730
        %5094 = vmatpush.msra.mxu0 %v4725
        %5095 = vmatpush.msra.mxu0 %v4720
        %5096 = vmatpush.msra.mxu0 %v4715
        %5097 = vmatmul.f32.gmra.mxu0 %v4048
        %v5098 = vpop.f32.mrf.mxu0
        %v5099 = vadd.f32 %v4895, %v5098
        %5100 = vdwg.mxu0
        %5101 = vmatpush.msra.mxu0 %v4870
        %5102 = vmatpush.msra.mxu0 %v4865
        %5103 = vmatpush.msra.mxu0 %v4860
        %5104 = vmatpush.msra.mxu0 %v4855
        %5105 = vmatpush.msra.mxu0 %v4850
        %5106 = vmatpush.msra.mxu0 %v4845
        %5107 = vmatpush.msra.mxu0 %v4840
        %5108 = vmatpush.msra.mxu0 %v4835
        %5109 = vmatpush.msra.mxu0 %v4830
        %5110 = vmatpush.msra.mxu0 %v4825
        %5111 = vmatpush.msra.mxu0 %v4820
        %5112 = vmatpush.msra.mxu0 %v4815
        %5113 = vmatpush.msra.mxu0 %v4810
        %5114 = vmatpush.msra.mxu0 %v4805
        %5115 = vmatpush.msra.mxu0 %v4800
        %5116 = vmatpush.msra.mxu0 %v4795
        %5117 = vmatmul.f32.gmra.mxu0 %v4049
        %v5118 = vpop.f32.mrf.mxu0
        %v5119 = vadd.f32 %v5099, %v5118
        %5120 = vdwg.mxu0
        %5121 = vmatpush.msra.mxu0 0.0
        %5122 = vmatpush.msra.mxu0 0.0
        %5123 = vmatpush.msra.mxu0 0.0
        %5124 = vmatpush.msra.mxu0 0.0
        %5125 = vmatpush.msra.mxu0 0.0
        %5126 = vmatpush.msra.mxu0 0.0
        %5127 = vmatpush.msra.mxu0 0.0
        %5128 = vmatpush.msra.mxu0 0.0
        %5129 = vmatpush.msra.mxu0 0.0
        %5130 = vmatpush.msra.mxu0 0.0
        %5131 = vmatpush.msra.mxu0 0.0
        %5132 = vmatpush.msra.mxu0 0.0
        %5133 = vmatpush.msra.mxu0 %v4890
        %5134 = vmatpush.msra.mxu0 %v4885
        %5135 = vmatpush.msra.mxu0 %v4880
        %5136 = vmatpush.msra.mxu0 %v4875
        %5137 = vmatmul.f32.gmra.mxu0 %v4899
        %v5138 = vpop.f32.mrf.mxu0
        %v5139 = vadd.f32 %v5119, %v5138
        %5140 = vdwg.mxu0
        %5141 = vmatpush.msra.mxu0 %v4791
        %5142 = vmatpush.msra.mxu0 %v4786
        %5143 = vmatpush.msra.mxu0 %v4781
        %5144 = vmatpush.msra.mxu0 %v4776
        %5145 = vmatpush.msra.mxu0 %v4771
        %5146 = vmatpush.msra.mxu0 %v4766
        %5147 = vmatpush.msra.mxu0 %v4761
        %5148 = vmatpush.msra.mxu0 %v4756
        %5149 = vmatpush.msra.mxu0 %v4751
        %5150 = vmatpush.msra.mxu0 %v4746
        %5151 = vmatpush.msra.mxu0 %v4741
        %5152 = vmatpush.msra.mxu0 %v4736
        %5153 = vmatpush.msra.mxu0 %v4731
        %5154 = vmatpush.msra.mxu0 %v4726
        %5155 = vmatpush.msra.mxu0 %v4721
        %5156 = vmatpush.msra.mxu0 %v4716
        %5157 = vmatmul.f32.gmra.mxu0 %v4048
        %v5158 = vpop.f32.mrf.mxu0
        %v5159 = vadd.f32 %v4895, %v5158
        %5160 = vdwg.mxu0
        %5161 = vmatpush.msra.mxu0 %v4871
        %5162 = vmatpush.msra.mxu0 %v4866
        %5163 = vmatpush.msra.mxu0 %v4861
        %5164 = vmatpush.msra.mxu0 %v4856
        %5165 = vmatpush.msra.mxu0 %v4851
        %5166 = vmatpush.msra.mxu0 %v4846
        %5167 = vmatpush.msra.mxu0 %v4841
        %5168 = vmatpush.msra.mxu0 %v4836
        %5169 = vmatpush.msra.mxu0 %v4831
        %5170 = vmatpush.msra.mxu0 %v4826
        %5171 = vmatpush.msra.mxu0 %v4821
        %5172 = vmatpush.msra.mxu0 %v4816
        %5173 = vmatpush.msra.mxu0 %v4811
        %5174 = vmatpush.msra.mxu0 %v4806
        %5175 = vmatpush.msra.mxu0 %v4801
        %5176 = vmatpush.msra.mxu0 %v4796
        %5177 = vmatmul.f32.gmra.mxu0 %v4049
        %v5178 = vpop.f32.mrf.mxu0
        %v5179 = vadd.f32 %v5159, %v5178
        %5180 = vdwg.mxu0
        %5181 = vmatpush.msra.mxu0 0.0
        %5182 = vmatpush.msra.mxu0 0.0
        %5183 = vmatpush.msra.mxu0 0.0
        %5184 = vmatpush.msra.mxu0 0.0
        %5185 = vmatpush.msra.mxu0 0.0
        %5186 = vmatpush.msra.mxu0 0.0
        %5187 = vmatpush.msra.mxu0 0.0
        %5188 = vmatpush.msra.mxu0 0.0
        %5189 = vmatpush.msra.mxu0 0.0
        %5190 = vmatpush.msra.mxu0 0.0
        %5191 = vmatpush.msra.mxu0 0.0
        %5192 = vmatpush.msra.mxu0 0.0
        %5193 = vmatpush.msra.mxu0 %v4891
        %5194 = vmatpush.msra.mxu0 %v4886
        %5195 = vmatpush.msra.mxu0 %v4881
        %5196 = vmatpush.msra.mxu0 %v4876
        %5197 = vmatmul.f32.gmra.mxu0 %v4899
        %v5198 = vpop.f32.mrf.mxu0
        %v5199 = vadd.f32 %v5179, %v5198
        %5200 = vdwg.mxu0
        %vm5201 = vcmp.ge.f32.partialorder %v4959, 0.0
        %vm5202 = vcmp.ge.f32.partialorder %v5019, 0.0
        %vm5203 = vcmp.ge.f32.partialorder %v5079, 0.0
        %vm5204 = vcmp.ge.f32.partialorder %v5139, 0.0
        %vm5205 = vcmp.ge.f32.partialorder %v5199, 0.0
        %v5206 = vmul.f32 %v4959, 0.2
        %v5207 = vmul.f32 %v5019, 0.2
        %v5208 = vmul.f32 %v5079, 0.2
        %v5209 = vmul.f32 %v5139, 0.2
        %v5210 = vmul.f32 %v5199, 0.2
        %v5211 = vsel %vm5201, %v4959, %v5206
        %v5212 = vsel %vm5202, %v5019, %v5207
        %v5213 = vsel %vm5203, %v5079, %v5208
        %v5214 = vsel %vm5204, %v5139, %v5209
        %v5215 = vsel %vm5205, %v5199, %v5210
        %v5216 = vmul.f32 %v5211, %v594
        %v5217 = vmul.f32 %v5212, %v595
        %v5218 = vmul.f32 %v5213, %v596
        %v5219 = vmul.f32 %v5214, %v597
        %v5220 = vmul.f32 %v5215, %v598
        %v5221 = vld [vmem:[#allocation4 + $0xf0] sm:$0xff]
        %v5222 = vld [vmem:[%s2 + $0x50] sm:$0xff]
        %5223 = vrot.lane.b32.xlu0 %v5216, 81
        %v5224 = vpop.permute.xlu0 %5223
        %5225 = vrot.lane.b32.xlu0 %v5217, 81
        %v5226 = vpop.permute.xlu0 %5225
        %5227 = vrot.lane.b32.xlu0 %v5218, 81
        %v5228 = vpop.permute.xlu0 %5227
        %5229 = vrot.lane.b32.xlu0 %v5219, 81
        %v5230 = vpop.permute.xlu0 %5229
        %5231 = vrot.lane.b32.xlu0 %v5220, 81
        %v5232 = vpop.permute.xlu0 %5231
        %v5233 = vsel %vm1449, %v5230, %v5232
        %v5234 = vsel %vm1449, %v5228, %v5230
        %v5235 = vsel %vm1449, %v5226, %v5228
        %v5236 = vsel %vm1449, %v5224, %v5226
        %v5237 = vsel %vm1449, %v5232, %v5224
        %5238 = vst [vmem:[#allocation2] sm:$0xff] %v5237
        %5239 = vst [vmem:[#allocation2 + $0x8] sm:$0xff] %v5236
        %5240 = vst [vmem:[#allocation2 + $0x10] sm:$0xff] %v5235
        %5241 = vst [vmem:[#allocation2 + $0x18] sm:$0xff] %v5234
        %5242 = vst [vmem:[#allocation2 + $0x20] sm:$0xff] %v5233
        %5243 = vrot.lane.b32.xlu0 %v5216, 78
        %v5244 = vpop.permute.xlu0 %5243
        %5245 = vrot.lane.b32.xlu0 %v5217, 78
        %v5246 = vpop.permute.xlu0 %5245
        %5247 = vrot.lane.b32.xlu0 %v5218, 78
        %v5248 = vpop.permute.xlu0 %5247
        %5249 = vrot.lane.b32.xlu0 %v5219, 78
        %v5250 = vpop.permute.xlu0 %5249
        %5251 = vrot.lane.b32.xlu0 %v5220, 78
        %v5252 = vpop.permute.xlu0 %5251
        %v5253 = vsel %vm1470, %v5250, %v5252
        %v5254 = vsel %vm1470, %v5248, %v5250
        %v5255 = vsel %vm1470, %v5246, %v5248
        %v5256 = vsel %vm1470, %v5244, %v5246
        %v5257 = vsel %vm1470, %v5252, %v5244
        %5258 = vst [vmem:[#allocation2 + $0x28] sm:$0xff] %v5257
        %5259 = vst [vmem:[#allocation2 + $0x30] sm:$0xff] %v5256
        %5260 = vst [vmem:[#allocation2 + $0x38] sm:$0xff] %v5255
        %5261 = vst [vmem:[#allocation2 + $0x40] sm:$0xff] %v5254
        %5262 = vst [vmem:[#allocation2 + $0x48] sm:$0xff] %v5253
        %5263 = vrot.lane.b32.xlu0 %v5216, 75
        %v5264 = vpop.permute.xlu0 %5263
        %5265 = vrot.lane.b32.xlu0 %v5217, 75
        %v5266 = vpop.permute.xlu0 %5265
        %5267 = vrot.lane.b32.xlu0 %v5218, 75
        %v5268 = vpop.permute.xlu0 %5267
        %5269 = vrot.lane.b32.xlu0 %v5219, 75
        %v5270 = vpop.permute.xlu0 %5269
        %5271 = vrot.lane.b32.xlu0 %v5220, 75
        %v5272 = vpop.permute.xlu0 %5271
        %v5273 = vsel %vm1491, %v5270, %v5272
        %v5274 = vsel %vm1491, %v5268, %v5270
        %v5275 = vsel %vm1491, %v5266, %v5268
        %v5276 = vsel %vm1491, %v5264, %v5266
        %v5277 = vsel %vm1491, %v5272, %v5264
        %5278 = vst [vmem:[#allocation2 + $0x50] sm:$0xff] %v5277
        %5279 = vst [vmem:[#allocation2 + $0x58] sm:$0xff] %v5276
        %5280 = vst [vmem:[#allocation2 + $0x60] sm:$0xff] %v5275
        %5281 = vst [vmem:[#allocation2 + $0x68] sm:$0xff] %v5274
        %5282 = vst [vmem:[#allocation2 + $0x70] sm:$0xff] %v5273
        %5283 = vrot.lane.b32.xlu0 %v5216, 3
        %v5284 = vpop.permute.xlu0 %5283
        %5285 = vrot.lane.b32.xlu0 %v5217, 3
        %v5286 = vpop.permute.xlu0 %5285
        %5287 = vrot.lane.b32.xlu0 %v5218, 3
        %v5288 = vpop.permute.xlu0 %5287
        %5289 = vrot.lane.b32.xlu0 %v5219, 3
        %v5290 = vpop.permute.xlu0 %5289
        %5291 = vrot.lane.b32.xlu0 %v5220, 3
        %v5292 = vpop.permute.xlu0 %5291
        %v5293 = vsel %vm1512, %v5290, %v5292
        %v5294 = vsel %vm1512, %v5288, %v5290
        %v5295 = vsel %vm1512, %v5286, %v5288
        %v5296 = vsel %vm1512, %v5284, %v5286
        %v5297 = vsel %vm1512, %v5292, %v5284
        %5298 = vst [vmem:[#allocation2 + $0x78] sm:$0xff] %v5297
        %5299 = vst [vmem:[#allocation2 + $0x80] sm:$0xff] %v5296
        %5300 = vst [vmem:[#allocation2 + $0x88] sm:$0xff] %v5295
        %5301 = vst [vmem:[#allocation2 + $0x90] sm:$0xff] %v5294
        %5302 = vst [vmem:[#allocation2 + $0x98] sm:$0xff] %v5293
        %5303 = vst [vmem:[#allocation2 + $0xa0] sm:$0xff] %v5216
        %5304 = vst [vmem:[#allocation2 + $0xa8] sm:$0xff] %v5217
        %5305 = vst [vmem:[#allocation2 + $0xb0] sm:$0xff] %v5218
        %5306 = vst [vmem:[#allocation2 + $0xb8] sm:$0xff] %v5219
        %5307 = vst [vmem:[#allocation2 + $0xc0] sm:$0xff] %v5220
        %5308 = vrot.lane.b32.xlu0 %v5216, 125
        %v5309 = vpop.permute.xlu0 %5308
        %5310 = vrot.lane.b32.xlu0 %v5217, 125
        %v5311 = vpop.permute.xlu0 %5310
        %5312 = vrot.lane.b32.xlu0 %v5218, 125
        %v5313 = vpop.permute.xlu0 %5312
        %5314 = vrot.lane.b32.xlu0 %v5219, 125
        %v5315 = vpop.permute.xlu0 %5314
        %5316 = vrot.lane.b32.xlu0 %v5220, 125
        %v5317 = vpop.permute.xlu0 %5316
        %v5318 = vsel %vm1538, %v5315, %v5317
        %v5319 = vsel %vm1538, %v5313, %v5315
        %v5320 = vsel %vm1538, %v5311, %v5313
        %v5321 = vsel %vm1538, %v5309, %v5311
        %v5322 = vsel %vm1538, %v5317, %v5309
        %5323 = vst [vmem:[#allocation2 + $0xc8] sm:$0xff] %v5321
        %5324 = vst [vmem:[#allocation2 + $0xd0] sm:$0xff] %v5320
        %5325 = vst [vmem:[#allocation2 + $0xd8] sm:$0xff] %v5319
        %5326 = vst [vmem:[#allocation2 + $0xe0] sm:$0xff] %v5318
        %5327 = vst [vmem:[#allocation2 + $0xe8] sm:$0xff] %v5322
        %5328 = vrot.lane.b32.xlu0 %v5216, 53
        %v5329 = vpop.permute.xlu0 %5328
        %5330 = vrot.lane.b32.xlu0 %v5217, 53
        %v5331 = vpop.permute.xlu0 %5330
        %5332 = vrot.lane.b32.xlu0 %v5218, 53
        %v5333 = vpop.permute.xlu0 %5332
        %5334 = vrot.lane.b32.xlu0 %v5219, 53
        %v5335 = vpop.permute.xlu0 %5334
        %5336 = vrot.lane.b32.xlu0 %v5220, 53
        %v5337 = vpop.permute.xlu0 %5336
        %v5338 = vsel %vm1559, %v5335, %v5337
        %v5339 = vsel %vm1559, %v5333, %v5335
        %v5340 = vsel %vm1559, %v5331, %v5333
        %v5341 = vsel %vm1559, %v5329, %v5331
        %v5342 = vsel %vm1559, %v5337, %v5329
        %5343 = vst [vmem:[#allocation2 + $0xf0] sm:$0xff] %v5341
        %5344 = vst [vmem:[#allocation2 + $0xf8] sm:$0xff] %v5340
        %5345 = vst [vmem:[#allocation2 + $0x100] sm:$0xff] %v5339
        %5346 = vst [vmem:[#allocation2 + $0x108] sm:$0xff] %v5338
        %5347 = vst [vmem:[#allocation2 + $0x110] sm:$0xff] %v5342
        %5348 = vrot.lane.b32.xlu0 %v5216, 50
        %v5349 = vpop.permute.xlu0 %5348
        %5350 = vrot.lane.b32.xlu0 %v5217, 50
        %v5351 = vpop.permute.xlu0 %5350
        %5352 = vrot.lane.b32.xlu0 %v5218, 50
        %v5353 = vpop.permute.xlu0 %5352
        %5354 = vrot.lane.b32.xlu0 %v5219, 50
        %v5355 = vpop.permute.xlu0 %5354
        %5356 = vrot.lane.b32.xlu0 %v5220, 50
        %v5357 = vpop.permute.xlu0 %5356
        %v5358 = vsel %vm1580, %v5355, %v5357
        %v5359 = vsel %vm1580, %v5353, %v5355
        %v5360 = vsel %vm1580, %v5351, %v5353
        %v5361 = vsel %vm1580, %v5349, %v5351
        %v5362 = vsel %vm1580, %v5357, %v5349
        %5363 = vst [vmem:[#allocation2 + $0x118] sm:$0xff] %v5361
        %5364 = vst [vmem:[#allocation2 + $0x120] sm:$0xff] %v5360
        %5365 = vst [vmem:[#allocation2 + $0x128] sm:$0xff] %v5359
        %5366 = vst [vmem:[#allocation2 + $0x130] sm:$0xff] %v5358
        %5367 = vst [vmem:[#allocation2 + $0x138] sm:$0xff] %v5362
        %5368 = vrot.lane.b32.xlu0 %v5216, 47
        %v5369 = vpop.permute.xlu0 %5368
        %5370 = vrot.lane.b32.xlu0 %v5217, 47
        %v5371 = vpop.permute.xlu0 %5370
        %5372 = vrot.lane.b32.xlu0 %v5218, 47
        %v5373 = vpop.permute.xlu0 %5372
        %5374 = vrot.lane.b32.xlu0 %v5219, 47
        %v5375 = vpop.permute.xlu0 %5374
        %5376 = vrot.lane.b32.xlu0 %v5220, 47
        %v5377 = vpop.permute.xlu0 %5376
        %v5378 = vsel %vm1601, %v5375, %v5377
        %v5379 = vsel %vm1601, %v5373, %v5375
        %v5380 = vsel %vm1601, %v5371, %v5373
        %v5381 = vsel %vm1601, %v5369, %v5371
        %v5382 = vsel %vm1601, %v5377, %v5369
        %5383 = vst [vmem:[#allocation2 + $0x140] sm:$0xff] %v5381
        %5384 = vst [vmem:[#allocation2 + $0x148] sm:$0xff] %v5380
        %5385 = vst [vmem:[#allocation2 + $0x150] sm:$0xff] %v5379
        %5386 = vst [vmem:[#allocation2 + $0x158] sm:$0xff] %v5378
        %5387 = vst [vmem:[#allocation2 + $0x160] sm:$0xff] %v5382
        %v5388 = vld [vmem:[#allocation2] sm:$0xff]
        %v5389 = vld [vmem:[#allocation2 + $0x8] sm:$0xff]
        %v5390 = vld [vmem:[#allocation2 + $0x10] sm:$0xff]
        %v5391 = vld [vmem:[#allocation2 + $0x18] sm:$0xff]
        %v5392 = vld [vmem:[#allocation2 + $0x20] sm:$0xff]
        %v5393 = vld [vmem:[#allocation2 + $0x28] sm:$0xff]
        %v5394 = vld [vmem:[#allocation2 + $0x30] sm:$0xff]
        %v5395 = vld [vmem:[#allocation2 + $0x38] sm:$0xff]
        %v5396 = vld [vmem:[#allocation2 + $0x40] sm:$0xff]
        %v5397 = vld [vmem:[#allocation2 + $0x48] sm:$0xff]
        %v5398 = vld [vmem:[#allocation2 + $0x50] sm:$0xff]
        %v5399 = vld [vmem:[#allocation2 + $0x58] sm:$0xff]
        %v5400 = vld [vmem:[#allocation2 + $0x60] sm:$0xff]
        %v5401 = vld [vmem:[#allocation2 + $0x68] sm:$0xff]
        %v5402 = vld [vmem:[#allocation2 + $0x70] sm:$0xff]
        %v5403 = vld [vmem:[#allocation2 + $0x78] sm:$0xff]
        %v5404 = vld [vmem:[#allocation2 + $0x80] sm:$0xff]
        %v5405 = vld [vmem:[#allocation2 + $0x88] sm:$0xff]
        %v5406 = vld [vmem:[#allocation2 + $0x90] sm:$0xff]
        %v5407 = vld [vmem:[#allocation2 + $0x98] sm:$0xff]
        %v5408 = vld [vmem:[#allocation2 + $0xa0] sm:$0xff]
        %v5409 = vld [vmem:[#allocation2 + $0xa8] sm:$0xff]
        %v5410 = vld [vmem:[#allocation2 + $0xb0] sm:$0xff]
        %v5411 = vld [vmem:[#allocation2 + $0xb8] sm:$0xff]
        %v5412 = vld [vmem:[#allocation2 + $0xc0] sm:$0xff]
        %v5413 = vld [vmem:[#allocation2 + $0xc8] sm:$0xff]
        %v5414 = vld [vmem:[#allocation2 + $0xd0] sm:$0xff]
        %v5415 = vld [vmem:[#allocation2 + $0xd8] sm:$0xff]
        %v5416 = vld [vmem:[#allocation2 + $0xe0] sm:$0xff]
        %v5417 = vld [vmem:[#allocation2 + $0xe8] sm:$0xff]
        %v5418 = vld [vmem:[#allocation2 + $0xf0] sm:$0xff]
        %v5419 = vld [vmem:[#allocation2 + $0xf8] sm:$0xff]
        %v5420 = vld [vmem:[#allocation2 + $0x100] sm:$0xff]
        %v5421 = vld [vmem:[#allocation2 + $0x108] sm:$0xff]
        %v5422 = vld [vmem:[#allocation2 + $0x110] sm:$0xff]
        %v5423 = vld [vmem:[#allocation2 + $0x118] sm:$0xff]
        %v5424 = vld [vmem:[#allocation2 + $0x120] sm:$0xff]
        %v5425 = vld [vmem:[#allocation2 + $0x128] sm:$0xff]
        %v5426 = vld [vmem:[#allocation2 + $0x130] sm:$0xff]
        %v5427 = vld [vmem:[#allocation2 + $0x138] sm:$0xff]
        %v5428 = vld [vmem:[#allocation2 + $0x140] sm:$0xff]
        %v5429 = vld [vmem:[#allocation2 + $0x148] sm:$0xff]
        %v5430 = vld [vmem:[#allocation2 + $0x150] sm:$0xff]
        %v5431 = vld [vmem:[#allocation2 + $0x158] sm:$0xff]
        %v5432 = vld [vmem:[#allocation2 + $0x160] sm:$0xff]
        %5434 = vset.pattern.permute.xlu0 0
        %5435 = vperm.xlu0 %5434, %v5222
        %v5436 = vpop.permute.xlu0 %5435
        %v5439 = vsel %vm474, %v5221, 0
        %5441 = vmatpush.msra.mxu0 0.0
        %5442 = vmatpush.msra.mxu0 0.0
        %5443 = vmatpush.msra.mxu0 0.0
        %5444 = vmatpush.msra.mxu0 0.0
        %5445 = vmatpush.msra.mxu0 0.0
        %5446 = vmatpush.msra.mxu0 0.0
        %5447 = vmatpush.msra.mxu0 0.0
        %5448 = vmatpush.msra.mxu0 %v5428
        %5449 = vmatpush.msra.mxu0 %v5423
        %5450 = vmatpush.msra.mxu0 %v5418
        %5451 = vmatpush.msra.mxu0 %v5413
        %5452 = vmatpush.msra.mxu0 %v5408
        %5453 = vmatpush.msra.mxu0 %v5403
        %5454 = vmatpush.msra.mxu0 %v5398
        %5455 = vmatpush.msra.mxu0 %v5393
        %5456 = vmatpush.msra.mxu0 %v5388
        %5457 = vmatmul.f32.gmra.mxu0 %v5439
        %v5458 = vpop.f32.mrf.mxu0
        %v5459 = vadd.f32 %v5436, %v5458
        %5460 = vdwg.mxu0
        %5461 = vmatpush.msra.mxu0 0.0
        %5462 = vmatpush.msra.mxu0 0.0
        %5463 = vmatpush.msra.mxu0 0.0
        %5464 = vmatpush.msra.mxu0 0.0
        %5465 = vmatpush.msra.mxu0 0.0
        %5466 = vmatpush.msra.mxu0 0.0
        %5467 = vmatpush.msra.mxu0 0.0
        %5468 = vmatpush.msra.mxu0 %v5429
        %5469 = vmatpush.msra.mxu0 %v5424
        %5470 = vmatpush.msra.mxu0 %v5419
        %5471 = vmatpush.msra.mxu0 %v5414
        %5472 = vmatpush.msra.mxu0 %v5409
        %5473 = vmatpush.msra.mxu0 %v5404
        %5474 = vmatpush.msra.mxu0 %v5399
        %5475 = vmatpush.msra.mxu0 %v5394
        %5476 = vmatpush.msra.mxu0 %v5389
        %5477 = vmatmul.f32.gmra.mxu0 %v5439
        %v5478 = vpop.f32.mrf.mxu0
        %v5479 = vadd.f32 %v5436, %v5478
        %5480 = vdwg.mxu0
        %5481 = vmatpush.msra.mxu0 0.0
        %5482 = vmatpush.msra.mxu0 0.0
        %5483 = vmatpush.msra.mxu0 0.0
        %5484 = vmatpush.msra.mxu0 0.0
        %5485 = vmatpush.msra.mxu0 0.0
        %5486 = vmatpush.msra.mxu0 0.0
        %5487 = vmatpush.msra.mxu0 0.0
        %5488 = vmatpush.msra.mxu0 %v5430
        %5489 = vmatpush.msra.mxu0 %v5425
        %5490 = vmatpush.msra.mxu0 %v5420
        %5491 = vmatpush.msra.mxu0 %v5415
        %5492 = vmatpush.msra.mxu0 %v5410
        %5493 = vmatpush.msra.mxu0 %v5405
        %5494 = vmatpush.msra.mxu0 %v5400
        %5495 = vmatpush.msra.mxu0 %v5395
        %5496 = vmatpush.msra.mxu0 %v5390
        %5497 = vmatmul.f32.gmra.mxu0 %v5439
        %v5498 = vpop.f32.mrf.mxu0
        %v5499 = vadd.f32 %v5436, %v5498
        %5500 = vdwg.mxu0
        %5501 = vmatpush.msra.mxu0 0.0
        %5502 = vmatpush.msra.mxu0 0.0
        %5503 = vmatpush.msra.mxu0 0.0
        %5504 = vmatpush.msra.mxu0 0.0
        %5505 = vmatpush.msra.mxu0 0.0
        %5506 = vmatpush.msra.mxu0 0.0
        %5507 = vmatpush.msra.mxu0 0.0
        %5508 = vmatpush.msra.mxu0 %v5431
        %5509 = vmatpush.msra.mxu0 %v5426
        %5510 = vmatpush.msra.mxu0 %v5421
        %5511 = vmatpush.msra.mxu0 %v5416
        %5512 = vmatpush.msra.mxu0 %v5411
        %5513 = vmatpush.msra.mxu0 %v5406
        %5514 = vmatpush.msra.mxu0 %v5401
        %5515 = vmatpush.msra.mxu0 %v5396
        %5516 = vmatpush.msra.mxu0 %v5391
        %5517 = vmatmul.f32.gmra.mxu0 %v5439
        %v5518 = vpop.f32.mrf.mxu0
        %v5519 = vadd.f32 %v5436, %v5518
        %5520 = vdwg.mxu0
        %5521 = vmatpush.msra.mxu0 0.0
        %5522 = vmatpush.msra.mxu0 0.0
        %5523 = vmatpush.msra.mxu0 0.0
        %5524 = vmatpush.msra.mxu0 0.0
        %5525 = vmatpush.msra.mxu0 0.0
        %5526 = vmatpush.msra.mxu0 0.0
        %5527 = vmatpush.msra.mxu0 0.0
        %5528 = vmatpush.msra.mxu0 %v5432
        %5529 = vmatpush.msra.mxu0 %v5427
        %5530 = vmatpush.msra.mxu0 %v5422
        %5531 = vmatpush.msra.mxu0 %v5417
        %5532 = vmatpush.msra.mxu0 %v5412
        %5533 = vmatpush.msra.mxu0 %v5407
        %5534 = vmatpush.msra.mxu0 %v5402
        %5535 = vmatpush.msra.mxu0 %v5397
        %5536 = vmatpush.msra.mxu0 %v5392
        %5537 = vmatmul.f32.gmra.mxu0 %v5439
        %v5538 = vpop.f32.mrf.mxu0
        %v5539 = vadd.f32 %v5436, %v5538
        %5540 = vdwg.mxu0
        %v5541 = vrot.slane %v241, 4
        %s5542 = vtos %v5541
        %vm5543 = vcmp.ge.f32.partialorder %v5459, 0.0
        %vm5544 = vcmp.ge.f32.partialorder %v5479, 0.0
        %vm5545 = vcmp.ge.f32.partialorder %v5499, 0.0
        %vm5546 = vcmp.ge.f32.partialorder %v5519, 0.0
        %vm5547 = vcmp.ge.f32.partialorder %v5539, 0.0
        %v5548 = vstv %s5542
        %v5549 = vmul.f32 %v5548, %v5459
        %v5550 = vmul.f32 %v5548, %v5479
        %v5551 = vmul.f32 %v5548, %v5499
        %v5552 = vmul.f32 %v5548, %v5519
        %v5553 = vmul.f32 %v5548, %v5539
        %v5554 = vsel %vm5543, %v5459, %v5549
        %v5555 = vsel %vm5544, %v5479, %v5550
        %v5556 = vsel %vm5545, %v5499, %v5551
        %v5557 = vsel %vm5546, %v5519, %v5552
        %v5558 = vsel %vm5547, %v5539, %v5553
        %v5559 = vmul.f32 %v5554, %v594
        %v5560 = vmul.f32 %v5555, %v595
        %v5561 = vmul.f32 %v5556, %v596
        %v5562 = vmul.f32 %v5557, %v597
        %v5563 = vmul.f32 %v5558, %v598
        %5564 = vst [vmem:[#allocation3 + $0xc8] sm:$0xff] %v5559
        %5565 = vst [vmem:[#allocation3 + $0xd0] sm:$0xff] %v5560
        %5566 = vst [vmem:[#allocation3 + $0xd8] sm:$0xff] %v5561
        %5567 = vst [vmem:[#allocation3 + $0xe0] sm:$0xff] %v5562
        %5568 = vst [vmem:[#allocation3 + $0xe8] sm:$0xff] %v5563
        %v5569 = vld [vmem:[#allocation4 + $0x108] sm:$0xff]
        %v5570 = vld [vmem:[#allocation4 + $0x110] sm:$0xff]
        %v5571 = vld [vmem:[%s2 + $0x58] sm:$0xff]
        %5572 = vrot.lane.b32.xlu0 %v604, 54
        %v5573 = vpop.permute.xlu0 %5572
        %5574 = vrot.lane.b32.xlu0 %v605, 54
        %v5575 = vpop.permute.xlu0 %5574
        %5576 = vrot.lane.b32.xlu0 %v606, 54
        %v5577 = vpop.permute.xlu0 %5576
        %5578 = vrot.lane.b32.xlu0 %v607, 54
        %v5579 = vpop.permute.xlu0 %5578
        %5580 = vrot.lane.b32.xlu0 %v608, 54
        %v5581 = vpop.permute.xlu0 %5580
        %vm5582 = vcmp.lt.s32.totalorder %v260, 54
        %v5583 = vsel %vm5582, %v5579, %v5581
        %v5584 = vsel %vm5582, %v5577, %v5579
        %v5585 = vsel %vm5582, %v5575, %v5577
        %v5586 = vsel %vm5582, %v5573, %v5575
        %v5587 = vsel %vm5582, %v5581, %v5573
        %5588 = vst [vmem:[#allocation2] sm:$0xff] %v5587
        %5589 = vst [vmem:[#allocation2 + $0x8] sm:$0xff] %v5586
        %5590 = vst [vmem:[#allocation2 + $0x10] sm:$0xff] %v5585
        %5591 = vst [vmem:[#allocation2 + $0x18] sm:$0xff] %v5584
        %5592 = vst [vmem:[#allocation2 + $0x20] sm:$0xff] %v5583
        %5593 = vrot.lane.b32.xlu0 %v604, 53
        %v5594 = vpop.permute.xlu0 %5593
        %5595 = vrot.lane.b32.xlu0 %v605, 53
        %v5596 = vpop.permute.xlu0 %5595
        %5597 = vrot.lane.b32.xlu0 %v606, 53
        %v5598 = vpop.permute.xlu0 %5597
        %5599 = vrot.lane.b32.xlu0 %v607, 53
        %v5600 = vpop.permute.xlu0 %5599
        %5601 = vrot.lane.b32.xlu0 %v608, 53
        %v5602 = vpop.permute.xlu0 %5601
        %v5603 = vsel %vm1559, %v5600, %v5602
        %v5604 = vsel %vm1559, %v5598, %v5600
        %v5605 = vsel %vm1559, %v5596, %v5598
        %v5606 = vsel %vm1559, %v5594, %v5596
        %v5607 = vsel %vm1559, %v5602, %v5594
        %5608 = vst [vmem:[#allocation2 + $0x28] sm:$0xff] %v5607
        %5609 = vst [vmem:[#allocation2 + $0x30] sm:$0xff] %v5606
        %5610 = vst [vmem:[#allocation2 + $0x38] sm:$0xff] %v5605
        %5611 = vst [vmem:[#allocation2 + $0x40] sm:$0xff] %v5604
        %5612 = vst [vmem:[#allocation2 + $0x48] sm:$0xff] %v5603
        %5613 = vrot.lane.b32.xlu0 %v604, 52
        %v5614 = vpop.permute.xlu0 %5613
        %5615 = vrot.lane.b32.xlu0 %v605, 52
        %v5616 = vpop.permute.xlu0 %5615
        %5617 = vrot.lane.b32.xlu0 %v606, 52
        %v5618 = vpop.permute.xlu0 %5617
        %5619 = vrot.lane.b32.xlu0 %v607, 52
        %v5620 = vpop.permute.xlu0 %5619
        %5621 = vrot.lane.b32.xlu0 %v608, 52
        %v5622 = vpop.permute.xlu0 %5621
        %vm5623 = vcmp.lt.s32.totalorder %v260, 52
        %v5624 = vsel %vm5623, %v5620, %v5622
        %v5625 = vsel %vm5623, %v5618, %v5620
        %v5626 = vsel %vm5623, %v5616, %v5618
        %v5627 = vsel %vm5623, %v5614, %v5616
        %v5628 = vsel %vm5623, %v5622, %v5614
        %5629 = vst [vmem:[#allocation2 + $0x50] sm:$0xff] %v5628
        %5630 = vst [vmem:[#allocation2 + $0x58] sm:$0xff] %v5627
        %5631 = vst [vmem:[#allocation2 + $0x60] sm:$0xff] %v5626
        %5632 = vst [vmem:[#allocation2 + $0x68] sm:$0xff] %v5625
        %5633 = vst [vmem:[#allocation2 + $0x70] sm:$0xff] %v5624
        %5634 = vrot.lane.b32.xlu0 %v604, 51
        %v5635 = vpop.permute.xlu0 %5634
        %5636 = vrot.lane.b32.xlu0 %v605, 51
        %v5637 = vpop.permute.xlu0 %5636
        %5638 = vrot.lane.b32.xlu0 %v606, 51
        %v5639 = vpop.permute.xlu0 %5638
        %5640 = vrot.lane.b32.xlu0 %v607, 51
        %v5641 = vpop.permute.xlu0 %5640
        %5642 = vrot.lane.b32.xlu0 %v608, 51
        %v5643 = vpop.permute.xlu0 %5642
        %vm5644 = vcmp.lt.s32.totalorder %v260, 51
        %v5645 = vsel %vm5644, %v5641, %v5643
        %v5646 = vsel %vm5644, %v5639, %v5641
        %v5647 = vsel %vm5644, %v5637, %v5639
        %v5648 = vsel %vm5644, %v5635, %v5637
        %v5649 = vsel %vm5644, %v5643, %v5635
        %5650 = vst [vmem:[#allocation2 + $0x78] sm:$0xff] %v5649
        %5651 = vst [vmem:[#allocation2 + $0x80] sm:$0xff] %v5648
        %5652 = vst [vmem:[#allocation2 + $0x88] sm:$0xff] %v5647
        %5653 = vst [vmem:[#allocation2 + $0x90] sm:$0xff] %v5646
        %5654 = vst [vmem:[#allocation2 + $0x98] sm:$0xff] %v5645
        %5655 = vrot.lane.b32.xlu0 %v604, 50
        %v5656 = vpop.permute.xlu0 %5655
        %5657 = vrot.lane.b32.xlu0 %v605, 50
        %v5658 = vpop.permute.xlu0 %5657
        %5659 = vrot.lane.b32.xlu0 %v606, 50
        %v5660 = vpop.permute.xlu0 %5659
        %5661 = vrot.lane.b32.xlu0 %v607, 50
        %v5662 = vpop.permute.xlu0 %5661
        %5663 = vrot.lane.b32.xlu0 %v608, 50
        %v5664 = vpop.permute.xlu0 %5663
        %v5665 = vsel %vm1580, %v5662, %v5664
        %v5666 = vsel %vm1580, %v5660, %v5662
        %v5667 = vsel %vm1580, %v5658, %v5660
        %v5668 = vsel %vm1580, %v5656, %v5658
        %v5669 = vsel %vm1580, %v5664, %v5656
        %5670 = vst [vmem:[#allocation2 + $0xa0] sm:$0xff] %v5669
        %5671 = vst [vmem:[#allocation2 + $0xa8] sm:$0xff] %v5668
        %5672 = vst [vmem:[#allocation2 + $0xb0] sm:$0xff] %v5667
        %5673 = vst [vmem:[#allocation2 + $0xb8] sm:$0xff] %v5666
        %5674 = vst [vmem:[#allocation2 + $0xc0] sm:$0xff] %v5665
        %5675 = vrot.lane.b32.xlu0 %v604, 28
        %v5676 = vpop.permute.xlu0 %5675
        %5677 = vrot.lane.b32.xlu0 %v605, 28
        %v5678 = vpop.permute.xlu0 %5677
        %5679 = vrot.lane.b32.xlu0 %v606, 28
        %v5680 = vpop.permute.xlu0 %5679
        %5681 = vrot.lane.b32.xlu0 %v607, 28
        %v5682 = vpop.permute.xlu0 %5681
        %5683 = vrot.lane.b32.xlu0 %v608, 28
        %v5684 = vpop.permute.xlu0 %5683
        %vm5685 = vcmp.lt.s32.totalorder %v260, 28
        %v5686 = vsel %vm5685, %v5682, %v5684
        %v5687 = vsel %vm5685, %v5680, %v5682
        %v5688 = vsel %vm5685, %v5678, %v5680
        %v5689 = vsel %vm5685, %v5676, %v5678
        %v5690 = vsel %vm5685, %v5684, %v5676
        %5691 = vst [vmem:[#allocation2 + $0xc8] sm:$0xff] %v5690
        %5692 = vst [vmem:[#allocation2 + $0xd0] sm:$0xff] %v5689
        %5693 = vst [vmem:[#allocation2 + $0xd8] sm:$0xff] %v5688
        %5694 = vst [vmem:[#allocation2 + $0xe0] sm:$0xff] %v5687
        %5695 = vst [vmem:[#allocation2 + $0xe8] sm:$0xff] %v5686
        %5696 = vrot.lane.b32.xlu0 %v604, 27
        %v5697 = vpop.permute.xlu0 %5696
        %5698 = vrot.lane.b32.xlu0 %v605, 27
        %v5699 = vpop.permute.xlu0 %5698
        %5700 = vrot.lane.b32.xlu0 %v606, 27
        %v5701 = vpop.permute.xlu0 %5700
        %5702 = vrot.lane.b32.xlu0 %v607, 27
        %v5703 = vpop.permute.xlu0 %5702
        %5704 = vrot.lane.b32.xlu0 %v608, 27
        %v5705 = vpop.permute.xlu0 %5704
        %v5706 = vsel %vm261, %v5703, %v5705
        %v5707 = vsel %vm261, %v5701, %v5703
        %v5708 = vsel %vm261, %v5699, %v5701
        %v5709 = vsel %vm261, %v5697, %v5699
        %v5710 = vsel %vm261, %v5705, %v5697
        %5711 = vst [vmem:[#allocation2 + $0xf0] sm:$0xff] %v5710
        %5712 = vst [vmem:[#allocation2 + $0xf8] sm:$0xff] %v5709
        %5713 = vst [vmem:[#allocation2 + $0x100] sm:$0xff] %v5708
        %5714 = vst [vmem:[#allocation2 + $0x108] sm:$0xff] %v5707
        %5715 = vst [vmem:[#allocation2 + $0x110] sm:$0xff] %v5706
        %5716 = vrot.lane.b32.xlu0 %v604, 26
        %v5717 = vpop.permute.xlu0 %5716
        %5718 = vrot.lane.b32.xlu0 %v605, 26
        %v5719 = vpop.permute.xlu0 %5718
        %5720 = vrot.lane.b32.xlu0 %v606, 26
        %v5721 = vpop.permute.xlu0 %5720
        %5722 = vrot.lane.b32.xlu0 %v607, 26
        %v5723 = vpop.permute.xlu0 %5722
        %5724 = vrot.lane.b32.xlu0 %v608, 26
        %v5725 = vpop.permute.xlu0 %5724
        %v5726 = vsel %vm282, %v5723, %v5725
        %v5727 = vsel %vm282, %v5721, %v5723
        %v5728 = vsel %vm282, %v5719, %v5721
        %v5729 = vsel %vm282, %v5717, %v5719
        %v5730 = vsel %vm282, %v5725, %v5717
        %5731 = vst [vmem:[#allocation2 + $0x118] sm:$0xff] %v5730
        %5732 = vst [vmem:[#allocation2 + $0x120] sm:$0xff] %v5729
        %5733 = vst [vmem:[#allocation2 + $0x128] sm:$0xff] %v5728
        %5734 = vst [vmem:[#allocation2 + $0x130] sm:$0xff] %v5727
        %5735 = vst [vmem:[#allocation2 + $0x138] sm:$0xff] %v5726
        %5736 = vrot.lane.b32.xlu0 %v604, 25
        %v5737 = vpop.permute.xlu0 %5736
        %5738 = vrot.lane.b32.xlu0 %v605, 25
        %v5739 = vpop.permute.xlu0 %5738
        %5740 = vrot.lane.b32.xlu0 %v606, 25
        %v5741 = vpop.permute.xlu0 %5740
        %5742 = vrot.lane.b32.xlu0 %v607, 25
        %v5743 = vpop.permute.xlu0 %5742
        %5744 = vrot.lane.b32.xlu0 %v608, 25
        %v5745 = vpop.permute.xlu0 %5744
        %v5746 = vsel %vm303, %v5743, %v5745
        %v5747 = vsel %vm303, %v5741, %v5743
        %v5748 = vsel %vm303, %v5739, %v5741
        %v5749 = vsel %vm303, %v5737, %v5739
        %v5750 = vsel %vm303, %v5745, %v5737
        %5751 = vst [vmem:[#allocation2 + $0x140] sm:$0xff] %v5750
        %5752 = vst [vmem:[#allocation2 + $0x148] sm:$0xff] %v5749
        %5753 = vst [vmem:[#allocation2 + $0x150] sm:$0xff] %v5748
        %5754 = vst [vmem:[#allocation2 + $0x158] sm:$0xff] %v5747
        %5755 = vst [vmem:[#allocation2 + $0x160] sm:$0xff] %v5746
        %5756 = vrot.lane.b32.xlu0 %v604, 24
        %v5757 = vpop.permute.xlu0 %5756
        %5758 = vrot.lane.b32.xlu0 %v605, 24
        %v5759 = vpop.permute.xlu0 %5758
        %5760 = vrot.lane.b32.xlu0 %v606, 24
        %v5761 = vpop.permute.xlu0 %5760
        %5762 = vrot.lane.b32.xlu0 %v607, 24
        %v5763 = vpop.permute.xlu0 %5762
        %5764 = vrot.lane.b32.xlu0 %v608, 24
        %v5765 = vpop.permute.xlu0 %5764
        %vm5766 = vcmp.lt.s32.totalorder %v260, 24
        %v5767 = vsel %vm5766, %v5763, %v5765
        %v5768 = vsel %vm5766, %v5761, %v5763
        %v5769 = vsel %vm5766, %v5759, %v5761
        %v5770 = vsel %vm5766, %v5757, %v5759
        %v5771 = vsel %vm5766, %v5765, %v5757
        %5772 = vst [vmem:[#allocation2 + $0x168] sm:$0xff] %v5771
        %5773 = vst [vmem:[#allocation2 + $0x170] sm:$0xff] %v5770
        %5774 = vst [vmem:[#allocation2 + $0x178] sm:$0xff] %v5769
        %5775 = vst [vmem:[#allocation2 + $0x180] sm:$0xff] %v5768
        %5776 = vst [vmem:[#allocation2 + $0x188] sm:$0xff] %v5767
        %5777 = vrot.lane.b32.xlu0 %v604, 2
        %v5778 = vpop.permute.xlu0 %5777
        %5779 = vrot.lane.b32.xlu0 %v605, 2
        %v5780 = vpop.permute.xlu0 %5779
        %5781 = vrot.lane.b32.xlu0 %v606, 2
        %v5782 = vpop.permute.xlu0 %5781
        %5783 = vrot.lane.b32.xlu0 %v607, 2
        %v5784 = vpop.permute.xlu0 %5783
        %5785 = vrot.lane.b32.xlu0 %v608, 2
        %v5786 = vpop.permute.xlu0 %5785
        %vm5787 = vcmp.lt.s32.totalorder %v260, 2
        %v5788 = vsel %vm5787, %v5784, %v5786
        %v5789 = vsel %vm5787, %v5782, %v5784
        %v5790 = vsel %vm5787, %v5780, %v5782
        %v5791 = vsel %vm5787, %v5778, %v5780
        %v5792 = vsel %vm5787, %v5786, %v5778
        %5793 = vst [vmem:[#allocation2 + $0x190] sm:$0xff] %v5792
        %5794 = vst [vmem:[#allocation2 + $0x198] sm:$0xff] %v5791
        %5795 = vst [vmem:[#allocation2 + $0x1a0] sm:$0xff] %v5790
        %5796 = vst [vmem:[#allocation2 + $0x1a8] sm:$0xff] %v5789
        %5797 = vst [vmem:[#allocation2 + $0x1b0] sm:$0xff] %v5788
        %5798 = vrot.lane.b32.xlu0 %v604, 1
        %v5799 = vpop.permute.xlu0 %5798
        %5800 = vrot.lane.b32.xlu0 %v605, 1
        %v5801 = vpop.permute.xlu0 %5800
        %5802 = vrot.lane.b32.xlu0 %v606, 1
        %v5803 = vpop.permute.xlu0 %5802
        %5804 = vrot.lane.b32.xlu0 %v607, 1
        %v5805 = vpop.permute.xlu0 %5804
        %5806 = vrot.lane.b32.xlu0 %v608, 1
        %v5807 = vpop.permute.xlu0 %5806
        %v5808 = vsel %vm324, %v5805, %v5807
        %v5809 = vsel %vm324, %v5803, %v5805
        %v5810 = vsel %vm324, %v5801, %v5803
        %v5811 = vsel %vm324, %v5799, %v5801
        %v5812 = vsel %vm324, %v5807, %v5799
        %5813 = vst [vmem:[#allocation2 + $0x1b8] sm:$0xff] %v5812
        %5814 = vst [vmem:[#allocation2 + $0x1c0] sm:$0xff] %v5811
        %5815 = vst [vmem:[#allocation2 + $0x1c8] sm:$0xff] %v5810
        %5816 = vst [vmem:[#allocation2 + $0x1d0] sm:$0xff] %v5809
        %5817 = vst [vmem:[#allocation2 + $0x1d8] sm:$0xff] %v5808
        %5818 = vst [vmem:[#allocation2 + $0x1e0] sm:$0xff] %v604
        %5819 = vst [vmem:[#allocation2 + $0x1e8] sm:$0xff] %v605
        %5820 = vst [vmem:[#allocation2 + $0x1f0] sm:$0xff] %v606
        %5821 = vst [vmem:[#allocation2 + $0x1f8] sm:$0xff] %v607
        %5822 = vst [vmem:[#allocation2 + $0x200] sm:$0xff] %v608
        %5823 = vrot.lane.b32.xlu0 %v604, 127
        %v5824 = vpop.permute.xlu0 %5823
        %5825 = vrot.lane.b32.xlu0 %v605, 127
        %v5826 = vpop.permute.xlu0 %5825
        %5827 = vrot.lane.b32.xlu0 %v606, 127
        %v5828 = vpop.permute.xlu0 %5827
        %5829 = vrot.lane.b32.xlu0 %v607, 127
        %v5830 = vpop.permute.xlu0 %5829
        %5831 = vrot.lane.b32.xlu0 %v608, 127
        %v5832 = vpop.permute.xlu0 %5831
        %v5833 = vsel %vm350, %v5830, %v5832
        %v5834 = vsel %vm350, %v5828, %v5830
        %v5835 = vsel %vm350, %v5826, %v5828
        %v5836 = vsel %vm350, %v5824, %v5826
        %v5837 = vsel %vm350, %v5832, %v5824
        %5838 = vst [vmem:[#allocation2 + $0x208] sm:$0xff] %v5836
        %5839 = vst [vmem:[#allocation2 + $0x210] sm:$0xff] %v5835
        %5840 = vst [vmem:[#allocation2 + $0x218] sm:$0xff] %v5834
        %5841 = vst [vmem:[#allocation2 + $0x220] sm:$0xff] %v5833
        %5842 = vst [vmem:[#allocation2 + $0x228] sm:$0xff] %v5837
        %5843 = vrot.lane.b32.xlu0 %v604, 126
        %v5844 = vpop.permute.xlu0 %5843
        %5845 = vrot.lane.b32.xlu0 %v605, 126
        %v5846 = vpop.permute.xlu0 %5845
        %5847 = vrot.lane.b32.xlu0 %v606, 126
        %v5848 = vpop.permute.xlu0 %5847
        %5849 = vrot.lane.b32.xlu0 %v607, 126
        %v5850 = vpop.permute.xlu0 %5849
        %5851 = vrot.lane.b32.xlu0 %v608, 126
        %v5852 = vpop.permute.xlu0 %5851
        %vm5853 = vcmp.lt.s32.totalorder %v260, 126
        %v5854 = vsel %vm5853, %v5850, %v5852
        %v5855 = vsel %vm5853, %v5848, %v5850
        %v5856 = vsel %vm5853, %v5846, %v5848
        %v5857 = vsel %vm5853, %v5844, %v5846
        %v5858 = vsel %vm5853, %v5852, %v5844
        %5859 = vst [vmem:[#allocation2 + $0x230] sm:$0xff] %v5857
        %5860 = vst [vmem:[#allocation2 + $0x238] sm:$0xff] %v5856
        %5861 = vst [vmem:[#allocation2 + $0x240] sm:$0xff] %v5855
        %5862 = vst [vmem:[#allocation2 + $0x248] sm:$0xff] %v5854
        %5863 = vst [vmem:[#allocation2 + $0x250] sm:$0xff] %v5858
        %5864 = vrot.lane.b32.xlu0 %v604, 104
        %v5865 = vpop.permute.xlu0 %5864
        %5866 = vrot.lane.b32.xlu0 %v605, 104
        %v5867 = vpop.permute.xlu0 %5866
        %5868 = vrot.lane.b32.xlu0 %v606, 104
        %v5869 = vpop.permute.xlu0 %5868
        %5870 = vrot.lane.b32.xlu0 %v607, 104
        %v5871 = vpop.permute.xlu0 %5870
        %5872 = vrot.lane.b32.xlu0 %v608, 104
        %v5873 = vpop.permute.xlu0 %5872
        %vm5874 = vcmp.lt.s32.totalorder %v260, 104
        %v5875 = vsel %vm5874, %v5871, %v5873
        %v5876 = vsel %vm5874, %v5869, %v5871
        %v5877 = vsel %vm5874, %v5867, %v5869
        %v5878 = vsel %vm5874, %v5865, %v5867
        %v5879 = vsel %vm5874, %v5873, %v5865
        %5880 = vst [vmem:[#allocation2 + $0x258] sm:$0xff] %v5878
        %5881 = vst [vmem:[#allocation2 + $0x260] sm:$0xff] %v5877
        %5882 = vst [vmem:[#allocation2 + $0x268] sm:$0xff] %v5876
        %5883 = vst [vmem:[#allocation2 + $0x270] sm:$0xff] %v5875
        %5884 = vst [vmem:[#allocation2 + $0x278] sm:$0xff] %v5879
        %5885 = vrot.lane.b32.xlu0 %v604, 103
        %v5886 = vpop.permute.xlu0 %5885
        %5887 = vrot.lane.b32.xlu0 %v605, 103
        %v5888 = vpop.permute.xlu0 %5887
        %5889 = vrot.lane.b32.xlu0 %v606, 103
        %v5890 = vpop.permute.xlu0 %5889
        %5891 = vrot.lane.b32.xlu0 %v607, 103
        %v5892 = vpop.permute.xlu0 %5891
        %5893 = vrot.lane.b32.xlu0 %v608, 103
        %v5894 = vpop.permute.xlu0 %5893
        %v5895 = vsel %vm371, %v5892, %v5894
        %v5896 = vsel %vm371, %v5890, %v5892
        %v5897 = vsel %vm371, %v5888, %v5890
        %v5898 = vsel %vm371, %v5886, %v5888
        %v5899 = vsel %vm371, %v5894, %v5886
        %5900 = vst [vmem:[#allocation2 + $0x280] sm:$0xff] %v5898
        %5901 = vst [vmem:[#allocation2 + $0x288] sm:$0xff] %v5897
        %5902 = vst [vmem:[#allocation2 + $0x290] sm:$0xff] %v5896
        %5903 = vst [vmem:[#allocation2 + $0x298] sm:$0xff] %v5895
        %5904 = vst [vmem:[#allocation2 + $0x2a0] sm:$0xff] %v5899
        %5905 = vrot.lane.b32.xlu0 %v604, 102
        %v5906 = vpop.permute.xlu0 %5905
        %5907 = vrot.lane.b32.xlu0 %v605, 102
        %v5908 = vpop.permute.xlu0 %5907
        %5909 = vrot.lane.b32.xlu0 %v606, 102
        %v5910 = vpop.permute.xlu0 %5909
        %5911 = vrot.lane.b32.xlu0 %v607, 102
        %v5912 = vpop.permute.xlu0 %5911
        %5913 = vrot.lane.b32.xlu0 %v608, 102
        %v5914 = vpop.permute.xlu0 %5913
        %v5915 = vsel %vm392, %v5912, %v5914
        %v5916 = vsel %vm392, %v5910, %v5912
        %v5917 = vsel %vm392, %v5908, %v5910
        %v5918 = vsel %vm392, %v5906, %v5908
        %v5919 = vsel %vm392, %v5914, %v5906
        %5920 = vst [vmem:[#allocation2 + $0x2a8] sm:$0xff] %v5918
        %5921 = vst [vmem:[#allocation2 + $0x2b0] sm:$0xff] %v5917
        %5922 = vst [vmem:[#allocation2 + $0x2b8] sm:$0xff] %v5916
        %5923 = vst [vmem:[#allocation2 + $0x2c0] sm:$0xff] %v5915
        %5924 = vst [vmem:[#allocation2 + $0x2c8] sm:$0xff] %v5919
        %5925 = vrot.lane.b32.xlu0 %v604, 101
        %v5926 = vpop.permute.xlu0 %5925
        %5927 = vrot.lane.b32.xlu0 %v605, 101
        %v5928 = vpop.permute.xlu0 %5927
        %5929 = vrot.lane.b32.xlu0 %v606, 101
        %v5930 = vpop.permute.xlu0 %5929
        %5931 = vrot.lane.b32.xlu0 %v607, 101
        %v5932 = vpop.permute.xlu0 %5931
        %5933 = vrot.lane.b32.xlu0 %v608, 101
        %v5934 = vpop.permute.xlu0 %5933
        %v5935 = vsel %vm413, %v5932, %v5934
        %v5936 = vsel %vm413, %v5930, %v5932
        %v5937 = vsel %vm413, %v5928, %v5930
        %v5938 = vsel %vm413, %v5926, %v5928
        %v5939 = vsel %vm413, %v5934, %v5926
        %5940 = vst [vmem:[#allocation2 + $0x2d0] sm:$0xff] %v5938
        %5941 = vst [vmem:[#allocation2 + $0x2d8] sm:$0xff] %v5937
        %5942 = vst [vmem:[#allocation2 + $0x2e0] sm:$0xff] %v5936
        %5943 = vst [vmem:[#allocation2 + $0x2e8] sm:$0xff] %v5935
        %5944 = vst [vmem:[#allocation2 + $0x2f0] sm:$0xff] %v5939
        %5945 = vrot.lane.b32.xlu0 %v604, 100
        %v5946 = vpop.permute.xlu0 %5945
        %5947 = vrot.lane.b32.xlu0 %v605, 100
        %v5948 = vpop.permute.xlu0 %5947
        %5949 = vrot.lane.b32.xlu0 %v606, 100
        %v5950 = vpop.permute.xlu0 %5949
        %5951 = vrot.lane.b32.xlu0 %v607, 100
        %v5952 = vpop.permute.xlu0 %5951
        %5953 = vrot.lane.b32.xlu0 %v608, 100
        %v5954 = vpop.permute.xlu0 %5953
        %vm5955 = vcmp.lt.s32.totalorder %v260, 100
        %v5956 = vsel %vm5955, %v5952, %v5954
        %v5957 = vsel %vm5955, %v5950, %v5952
        %v5958 = vsel %vm5955, %v5948, %v5950
        %v5959 = vsel %vm5955, %v5946, %v5948
        %v5960 = vsel %vm5955, %v5954, %v5946
        %5961 = vst [vmem:[#allocation2 + $0x2f8] sm:$0xff] %v5959
        %5962 = vst [vmem:[#allocation2 + $0x300] sm:$0xff] %v5958
        %5963 = vst [vmem:[#allocation2 + $0x308] sm:$0xff] %v5957
        %5964 = vst [vmem:[#allocation2 + $0x310] sm:$0xff] %v5956
        %5965 = vst [vmem:[#allocation2 + $0x318] sm:$0xff] %v5960
        %5966 = vrot.lane.b32.xlu0 %v604, 78
        %v5967 = vpop.permute.xlu0 %5966
        %5968 = vrot.lane.b32.xlu0 %v605, 78
        %v5969 = vpop.permute.xlu0 %5968
        %5970 = vrot.lane.b32.xlu0 %v606, 78
        %v5971 = vpop.permute.xlu0 %5970
        %5972 = vrot.lane.b32.xlu0 %v607, 78
        %v5973 = vpop.permute.xlu0 %5972
        %5974 = vrot.lane.b32.xlu0 %v608, 78
        %v5975 = vpop.permute.xlu0 %5974
        %v5976 = vsel %vm1470, %v5973, %v5975
        %v5977 = vsel %vm1470, %v5971, %v5973
        %v5978 = vsel %vm1470, %v5969, %v5971
        %v5979 = vsel %vm1470, %v5967, %v5969
        %v5980 = vsel %vm1470, %v5975, %v5967
        %5981 = vst [vmem:[#allocation2 + $0x320] sm:$0xff] %v5979
        %5982 = vst [vmem:[#allocation2 + $0x328] sm:$0xff] %v5978
        %5983 = vst [vmem:[#allocation2 + $0x330] sm:$0xff] %v5977
        %5984 = vst [vmem:[#allocation2 + $0x338] sm:$0xff] %v5976
        %5985 = vst [vmem:[#allocation2 + $0x340] sm:$0xff] %v5980
        %5986 = vrot.lane.b32.xlu0 %v604, 77
        %v5987 = vpop.permute.xlu0 %5986
        %5988 = vrot.lane.b32.xlu0 %v605, 77
        %v5989 = vpop.permute.xlu0 %5988
        %5990 = vrot.lane.b32.xlu0 %v606, 77
        %v5991 = vpop.permute.xlu0 %5990
        %5992 = vrot.lane.b32.xlu0 %v607, 77
        %v5993 = vpop.permute.xlu0 %5992
        %5994 = vrot.lane.b32.xlu0 %v608, 77
        %v5995 = vpop.permute.xlu0 %5994
        %vm5996 = vcmp.lt.s32.totalorder %v260, 77
        %v5997 = vsel %vm5996, %v5993, %v5995
        %v5998 = vsel %vm5996, %v5991, %v5993
        %v5999 = vsel %vm5996, %v5989, %v5991
        %v6000 = vsel %vm5996, %v5987, %v5989
        %v6001 = vsel %vm5996, %v5995, %v5987
        %6002 = vst [vmem:[#allocation2 + $0x348] sm:$0xff] %v6000
        %6003 = vst [vmem:[#allocation2 + $0x350] sm:$0xff] %v5999
        %6004 = vst [vmem:[#allocation2 + $0x358] sm:$0xff] %v5998
        %6005 = vst [vmem:[#allocation2 + $0x360] sm:$0xff] %v5997
        %6006 = vst [vmem:[#allocation2 + $0x368] sm:$0xff] %v6001
        %6007 = vrot.lane.b32.xlu0 %v604, 76
        %v6008 = vpop.permute.xlu0 %6007
        %6009 = vrot.lane.b32.xlu0 %v605, 76
        %v6010 = vpop.permute.xlu0 %6009
        %6011 = vrot.lane.b32.xlu0 %v606, 76
        %v6012 = vpop.permute.xlu0 %6011
        %6013 = vrot.lane.b32.xlu0 %v607, 76
        %v6014 = vpop.permute.xlu0 %6013
        %6015 = vrot.lane.b32.xlu0 %v608, 76
        %v6016 = vpop.permute.xlu0 %6015
        %vm6017 = vcmp.lt.s32.totalorder %v260, 76
        %v6018 = vsel %vm6017, %v6014, %v6016
        %v6019 = vsel %vm6017, %v6012, %v6014
        %v6020 = vsel %vm6017, %v6010, %v6012
        %v6021 = vsel %vm6017, %v6008, %v6010
        %v6022 = vsel %vm6017, %v6016, %v6008
        %6023 = vst [vmem:[#allocation2 + $0x370] sm:$0xff] %v6021
        %6024 = vst [vmem:[#allocation2 + $0x378] sm:$0xff] %v6020
        %6025 = vst [vmem:[#allocation2 + $0x380] sm:$0xff] %v6019
        %6026 = vst [vmem:[#allocation2 + $0x388] sm:$0xff] %v6018
        %6027 = vst [vmem:[#allocation2 + $0x390] sm:$0xff] %v6022
        %6028 = vrot.lane.b32.xlu0 %v604, 75
        %v6029 = vpop.permute.xlu0 %6028
        %6030 = vrot.lane.b32.xlu0 %v605, 75
        %v6031 = vpop.permute.xlu0 %6030
        %6032 = vrot.lane.b32.xlu0 %v606, 75
        %v6033 = vpop.permute.xlu0 %6032
        %6034 = vrot.lane.b32.xlu0 %v607, 75
        %v6035 = vpop.permute.xlu0 %6034
        %6036 = vrot.lane.b32.xlu0 %v608, 75
        %v6037 = vpop.permute.xlu0 %6036
        %v6038 = vsel %vm1491, %v6035, %v6037
        %v6039 = vsel %vm1491, %v6033, %v6035
        %v6040 = vsel %vm1491, %v6031, %v6033
        %v6041 = vsel %vm1491, %v6029, %v6031
        %v6042 = vsel %vm1491, %v6037, %v6029
        %6043 = vst [vmem:[#allocation2 + $0x398] sm:$0xff] %v6041
        %6044 = vst [vmem:[#allocation2 + $0x3a0] sm:$0xff] %v6040
        %6045 = vst [vmem:[#allocation2 + $0x3a8] sm:$0xff] %v6039
        %6046 = vst [vmem:[#allocation2 + $0x3b0] sm:$0xff] %v6038
        %6047 = vst [vmem:[#allocation2 + $0x3b8] sm:$0xff] %v6042
        %6048 = vrot.lane.b32.xlu0 %v604, 74
        %v6049 = vpop.permute.xlu0 %6048
        %6050 = vrot.lane.b32.xlu0 %v605, 74
        %v6051 = vpop.permute.xlu0 %6050
        %6052 = vrot.lane.b32.xlu0 %v606, 74
        %v6053 = vpop.permute.xlu0 %6052
        %6054 = vrot.lane.b32.xlu0 %v607, 74
        %v6055 = vpop.permute.xlu0 %6054
        %6056 = vrot.lane.b32.xlu0 %v608, 74
        %v6057 = vpop.permute.xlu0 %6056
        %vm6058 = vcmp.lt.s32.totalorder %v260, 74
        %v6059 = vsel %vm6058, %v6055, %v6057
        %v6060 = vsel %vm6058, %v6053, %v6055
        %v6061 = vsel %vm6058, %v6051, %v6053
        %v6062 = vsel %vm6058, %v6049, %v6051
        %v6063 = vsel %vm6058, %v6057, %v6049
        %6064 = vst [vmem:[#allocation2 + $0x3c0] sm:$0xff] %v6062
        %6065 = vst [vmem:[#allocation2 + $0x3c8] sm:$0xff] %v6061
        %6066 = vst [vmem:[#allocation2 + $0x3d0] sm:$0xff] %v6060
        %6067 = vst [vmem:[#allocation2 + $0x3d8] sm:$0xff] %v6059
        %6068 = vst [vmem:[#allocation2 + $0x3e0] sm:$0xff] %v6063
        %v6069 = vld [vmem:[#allocation2] sm:$0xff]
        %v6070 = vld [vmem:[#allocation2 + $0x8] sm:$0xff]
        %v6071 = vld [vmem:[#allocation2 + $0x10] sm:$0xff]
        %v6072 = vld [vmem:[#allocation2 + $0x18] sm:$0xff]
        %v6073 = vld [vmem:[#allocation2 + $0x20] sm:$0xff]
        %v6074 = vld [vmem:[#allocation2 + $0x28] sm:$0xff]
        %v6075 = vld [vmem:[#allocation2 + $0x30] sm:$0xff]
        %v6076 = vld [vmem:[#allocation2 + $0x38] sm:$0xff]
        %v6077 = vld [vmem:[#allocation2 + $0x40] sm:$0xff]
        %v6078 = vld [vmem:[#allocation2 + $0x48] sm:$0xff]
        %v6079 = vld [vmem:[#allocation2 + $0x50] sm:$0xff]
        %v6080 = vld [vmem:[#allocation2 + $0x58] sm:$0xff]
        %v6081 = vld [vmem:[#allocation2 + $0x60] sm:$0xff]
        %v6082 = vld [vmem:[#allocation2 + $0x68] sm:$0xff]
        %v6083 = vld [vmem:[#allocation2 + $0x70] sm:$0xff]
        %v6084 = vld [vmem:[#allocation2 + $0x78] sm:$0xff]
        %v6085 = vld [vmem:[#allocation2 + $0x80] sm:$0xff]
        %v6086 = vld [vmem:[#allocation2 + $0x88] sm:$0xff]
        %v6087 = vld [vmem:[#allocation2 + $0x90] sm:$0xff]
        %v6088 = vld [vmem:[#allocation2 + $0x98] sm:$0xff]
        %v6089 = vld [vmem:[#allocation2 + $0xa0] sm:$0xff]
        %v6090 = vld [vmem:[#allocation2 + $0xa8] sm:$0xff]
        %v6091 = vld [vmem:[#allocation2 + $0xb0] sm:$0xff]
        %v6092 = vld [vmem:[#allocation2 + $0xb8] sm:$0xff]
        %v6093 = vld [vmem:[#allocation2 + $0xc0] sm:$0xff]
        %v6094 = vld [vmem:[#allocation2 + $0xc8] sm:$0xff]
        %v6095 = vld [vmem:[#allocation2 + $0xd0] sm:$0xff]
        %v6096 = vld [vmem:[#allocation2 + $0xd8] sm:$0xff]
        %v6097 = vld [vmem:[#allocation2 + $0xe0] sm:$0xff]
        %v6098 = vld [vmem:[#allocation2 + $0xe8] sm:$0xff]
        %v6099 = vld [vmem:[#allocation2 + $0xf0] sm:$0xff]
        %v6100 = vld [vmem:[#allocation2 + $0xf8] sm:$0xff]
        %v6101 = vld [vmem:[#allocation2 + $0x100] sm:$0xff]
        %v6102 = vld [vmem:[#allocation2 + $0x108] sm:$0xff]
        %v6103 = vld [vmem:[#allocation2 + $0x110] sm:$0xff]
        %v6104 = vld [vmem:[#allocation2 + $0x118] sm:$0xff]
        %v6105 = vld [vmem:[#allocation2 + $0x120] sm:$0xff]
        %v6106 = vld [vmem:[#allocation2 + $0x128] sm:$0xff]
        %v6107 = vld [vmem:[#allocation2 + $0x130] sm:$0xff]
        %v6108 = vld [vmem:[#allocation2 + $0x138] sm:$0xff]
        %v6109 = vld [vmem:[#allocation2 + $0x140] sm:$0xff]
        %v6110 = vld [vmem:[#allocation2 + $0x148] sm:$0xff]
        %v6111 = vld [vmem:[#allocation2 + $0x150] sm:$0xff]
        %v6112 = vld [vmem:[#allocation2 + $0x158] sm:$0xff]
        %v6113 = vld [vmem:[#allocation2 + $0x160] sm:$0xff]
        %v6114 = vld [vmem:[#allocation2 + $0x168] sm:$0xff]
        %v6115 = vld [vmem:[#allocation2 + $0x170] sm:$0xff]
        %v6116 = vld [vmem:[#allocation2 + $0x178] sm:$0xff]
        %v6117 = vld [vmem:[#allocation2 + $0x180] sm:$0xff]
        %v6118 = vld [vmem:[#allocation2 + $0x188] sm:$0xff]
        %v6119 = vld [vmem:[#allocation2 + $0x190] sm:$0xff]
        %v6120 = vld [vmem:[#allocation2 + $0x198] sm:$0xff]
        %v6121 = vld [vmem:[#allocation2 + $0x1a0] sm:$0xff]
        %v6122 = vld [vmem:[#allocation2 + $0x1a8] sm:$0xff]
        %v6123 = vld [vmem:[#allocation2 + $0x1b0] sm:$0xff]
        %v6124 = vld [vmem:[#allocation2 + $0x1b8] sm:$0xff]
        %v6125 = vld [vmem:[#allocation2 + $0x1c0] sm:$0xff]
        %v6126 = vld [vmem:[#allocation2 + $0x1c8] sm:$0xff]
        %v6127 = vld [vmem:[#allocation2 + $0x1d0] sm:$0xff]
        %v6128 = vld [vmem:[#allocation2 + $0x1d8] sm:$0xff]
        %v6129 = vld [vmem:[#allocation2 + $0x1e0] sm:$0xff]
        %v6130 = vld [vmem:[#allocation2 + $0x1e8] sm:$0xff]
        %v6131 = vld [vmem:[#allocation2 + $0x1f0] sm:$0xff]
        %v6132 = vld [vmem:[#allocation2 + $0x1f8] sm:$0xff]
        %v6133 = vld [vmem:[#allocation2 + $0x200] sm:$0xff]
        %v6134 = vld [vmem:[#allocation2 + $0x208] sm:$0xff]
        %v6135 = vld [vmem:[#allocation2 + $0x210] sm:$0xff]
        %v6136 = vld [vmem:[#allocation2 + $0x218] sm:$0xff]
        %v6137 = vld [vmem:[#allocation2 + $0x220] sm:$0xff]
        %v6138 = vld [vmem:[#allocation2 + $0x228] sm:$0xff]
        %v6139 = vld [vmem:[#allocation2 + $0x230] sm:$0xff]
        %v6140 = vld [vmem:[#allocation2 + $0x238] sm:$0xff]
        %v6141 = vld [vmem:[#allocation2 + $0x240] sm:$0xff]
        %v6142 = vld [vmem:[#allocation2 + $0x248] sm:$0xff]
        %v6143 = vld [vmem:[#allocation2 + $0x250] sm:$0xff]
        %v6144 = vld [vmem:[#allocation2 + $0x258] sm:$0xff]
        %v6145 = vld [vmem:[#allocation2 + $0x260] sm:$0xff]
        %v6146 = vld [vmem:[#allocation2 + $0x268] sm:$0xff]
        %v6147 = vld [vmem:[#allocation2 + $0x270] sm:$0xff]
        %v6148 = vld [vmem:[#allocation2 + $0x278] sm:$0xff]
        %v6149 = vld [vmem:[#allocation2 + $0x280] sm:$0xff]
        %v6150 = vld [vmem:[#allocation2 + $0x288] sm:$0xff]
        %v6151 = vld [vmem:[#allocation2 + $0x290] sm:$0xff]
        %v6152 = vld [vmem:[#allocation2 + $0x298] sm:$0xff]
        %v6153 = vld [vmem:[#allocation2 + $0x2a0] sm:$0xff]
        %v6154 = vld [vmem:[#allocation2 + $0x2a8] sm:$0xff]
        %v6155 = vld [vmem:[#allocation2 + $0x2b0] sm:$0xff]
        %v6156 = vld [vmem:[#allocation2 + $0x2b8] sm:$0xff]
        %v6157 = vld [vmem:[#allocation2 + $0x2c0] sm:$0xff]
        %v6158 = vld [vmem:[#allocation2 + $0x2c8] sm:$0xff]
        %v6159 = vld [vmem:[#allocation2 + $0x2d0] sm:$0xff]
        %v6160 = vld [vmem:[#allocation2 + $0x2d8] sm:$0xff]
        %v6161 = vld [vmem:[#allocation2 + $0x2e0] sm:$0xff]
        %v6162 = vld [vmem:[#allocation2 + $0x2e8] sm:$0xff]
        %v6163 = vld [vmem:[#allocation2 + $0x2f0] sm:$0xff]
        %v6164 = vld [vmem:[#allocation2 + $0x2f8] sm:$0xff]
        %v6165 = vld [vmem:[#allocation2 + $0x300] sm:$0xff]
        %v6166 = vld [vmem:[#allocation2 + $0x308] sm:$0xff]
        %v6167 = vld [vmem:[#allocation2 + $0x310] sm:$0xff]
        %v6168 = vld [vmem:[#allocation2 + $0x318] sm:$0xff]
        %v6169 = vld [vmem:[#allocation2 + $0x320] sm:$0xff]
        %v6170 = vld [vmem:[#allocation2 + $0x328] sm:$0xff]
        %v6171 = vld [vmem:[#allocation2 + $0x330] sm:$0xff]
        %v6172 = vld [vmem:[#allocation2 + $0x338] sm:$0xff]
        %v6173 = vld [vmem:[#allocation2 + $0x340] sm:$0xff]
        %v6174 = vld [vmem:[#allocation2 + $0x348] sm:$0xff]
        %v6175 = vld [vmem:[#allocation2 + $0x350] sm:$0xff]
        %v6176 = vld [vmem:[#allocation2 + $0x358] sm:$0xff]
        %v6177 = vld [vmem:[#allocation2 + $0x360] sm:$0xff]
        %v6178 = vld [vmem:[#allocation2 + $0x368] sm:$0xff]
        %v6179 = vld [vmem:[#allocation2 + $0x370] sm:$0xff]
        %v6180 = vld [vmem:[#allocation2 + $0x378] sm:$0xff]
        %v6181 = vld [vmem:[#allocation2 + $0x380] sm:$0xff]
        %v6182 = vld [vmem:[#allocation2 + $0x388] sm:$0xff]
        %v6183 = vld [vmem:[#allocation2 + $0x390] sm:$0xff]
        %v6184 = vld [vmem:[#allocation2 + $0x398] sm:$0xff]
        %v6185 = vld [vmem:[#allocation2 + $0x3a0] sm:$0xff]
        %v6186 = vld [vmem:[#allocation2 + $0x3a8] sm:$0xff]
        %v6187 = vld [vmem:[#allocation2 + $0x3b0] sm:$0xff]
        %v6188 = vld [vmem:[#allocation2 + $0x3b8] sm:$0xff]
        %v6189 = vld [vmem:[#allocation2 + $0x3c0] sm:$0xff]
        %v6190 = vld [vmem:[#allocation2 + $0x3c8] sm:$0xff]
        %v6191 = vld [vmem:[#allocation2 + $0x3d0] sm:$0xff]
        %v6192 = vld [vmem:[#allocation2 + $0x3d8] sm:$0xff]
        %v6193 = vld [vmem:[#allocation2 + $0x3e0] sm:$0xff]
        %6195 = vset.pattern.permute.xlu0 0
        %6196 = vperm.xlu0 %6195, %v5571
        %v6197 = vpop.permute.xlu0 %6196
        %v6200 = vsel %vm474, %v5570, 0
        %6202 = vmatpush.msra.mxu0 %v6144
        %6203 = vmatpush.msra.mxu0 %v6139
        %6204 = vmatpush.msra.mxu0 %v6134
        %6205 = vmatpush.msra.mxu0 %v6129
        %6206 = vmatpush.msra.mxu0 %v6124
        %6207 = vmatpush.msra.mxu0 %v6119
        %6208 = vmatpush.msra.mxu0 %v6114
        %6209 = vmatpush.msra.mxu0 %v6109
        %6210 = vmatpush.msra.mxu0 %v6104
        %6211 = vmatpush.msra.mxu0 %v6099
        %6212 = vmatpush.msra.mxu0 %v6094
        %6213 = vmatpush.msra.mxu0 %v6089
        %6214 = vmatpush.msra.mxu0 %v6084
        %6215 = vmatpush.msra.mxu0 %v6079
        %6216 = vmatpush.msra.mxu0 %v6074
        %6217 = vmatpush.msra.mxu0 %v6069
        %6218 = vmatmul.f32.gmra.mxu0 %v5569
        %v6219 = vpop.f32.mrf.mxu0
        %v6220 = vadd.f32 %v6197, %v6219
        %6221 = vdwg.mxu0
        %6222 = vmatpush.msra.mxu0 0.0
        %6223 = vmatpush.msra.mxu0 0.0
        %6224 = vmatpush.msra.mxu0 0.0
        %6225 = vmatpush.msra.mxu0 0.0
        %6226 = vmatpush.msra.mxu0 0.0
        %6227 = vmatpush.msra.mxu0 0.0
        %6228 = vmatpush.msra.mxu0 0.0
        %6229 = vmatpush.msra.mxu0 %v6189
        %6230 = vmatpush.msra.mxu0 %v6184
        %6231 = vmatpush.msra.mxu0 %v6179
        %6232 = vmatpush.msra.mxu0 %v6174
        %6233 = vmatpush.msra.mxu0 %v6169
        %6234 = vmatpush.msra.mxu0 %v6164
        %6235 = vmatpush.msra.mxu0 %v6159
        %6236 = vmatpush.msra.mxu0 %v6154
        %6237 = vmatpush.msra.mxu0 %v6149
        %6238 = vmatmul.f32.gmra.mxu0 %v6200
        %v6239 = vpop.f32.mrf.mxu0
        %v6240 = vadd.f32 %v6220, %v6239
        %6241 = vdwg.mxu0
        %6242 = vmatpush.msra.mxu0 %v6145
        %6243 = vmatpush.msra.mxu0 %v6140
        %6244 = vmatpush.msra.mxu0 %v6135
        %6245 = vmatpush.msra.mxu0 %v6130
        %6246 = vmatpush.msra.mxu0 %v6125
        %6247 = vmatpush.msra.mxu0 %v6120
        %6248 = vmatpush.msra.mxu0 %v6115
        %6249 = vmatpush.msra.mxu0 %v6110
        %6250 = vmatpush.msra.mxu0 %v6105
        %6251 = vmatpush.msra.mxu0 %v6100
        %6252 = vmatpush.msra.mxu0 %v6095
        %6253 = vmatpush.msra.mxu0 %v6090
        %6254 = vmatpush.msra.mxu0 %v6085
        %6255 = vmatpush.msra.mxu0 %v6080
        %6256 = vmatpush.msra.mxu0 %v6075
        %6257 = vmatpush.msra.mxu0 %v6070
        %6258 = vmatmul.f32.gmra.mxu0 %v5569
        %v6259 = vpop.f32.mrf.mxu0
        %v6260 = vadd.f32 %v6197, %v6259
        %6261 = vdwg.mxu0
        %6262 = vmatpush.msra.mxu0 0.0
        %6263 = vmatpush.msra.mxu0 0.0
        %6264 = vmatpush.msra.mxu0 0.0
        %6265 = vmatpush.msra.mxu0 0.0
        %6266 = vmatpush.msra.mxu0 0.0
        %6267 = vmatpush.msra.mxu0 0.0
        %6268 = vmatpush.msra.mxu0 0.0
        %6269 = vmatpush.msra.mxu0 %v6190
        %6270 = vmatpush.msra.mxu0 %v6185
        %6271 = vmatpush.msra.mxu0 %v6180
        %6272 = vmatpush.msra.mxu0 %v6175
        %6273 = vmatpush.msra.mxu0 %v6170
        %6274 = vmatpush.msra.mxu0 %v6165
        %6275 = vmatpush.msra.mxu0 %v6160
        %6276 = vmatpush.msra.mxu0 %v6155
        %6277 = vmatpush.msra.mxu0 %v6150
        %6278 = vmatmul.f32.gmra.mxu0 %v6200
        %v6279 = vpop.f32.mrf.mxu0
        %v6280 = vadd.f32 %v6260, %v6279
        %6281 = vdwg.mxu0
        %6282 = vmatpush.msra.mxu0 %v6146
        %6283 = vmatpush.msra.mxu0 %v6141
        %6284 = vmatpush.msra.mxu0 %v6136
        %6285 = vmatpush.msra.mxu0 %v6131
        %6286 = vmatpush.msra.mxu0 %v6126
        %6287 = vmatpush.msra.mxu0 %v6121
        %6288 = vmatpush.msra.mxu0 %v6116
        %6289 = vmatpush.msra.mxu0 %v6111
        %6290 = vmatpush.msra.mxu0 %v6106
        %6291 = vmatpush.msra.mxu0 %v6101
        %6292 = vmatpush.msra.mxu0 %v6096
        %6293 = vmatpush.msra.mxu0 %v6091
        %6294 = vmatpush.msra.mxu0 %v6086
        %6295 = vmatpush.msra.mxu0 %v6081
        %6296 = vmatpush.msra.mxu0 %v6076
        %6297 = vmatpush.msra.mxu0 %v6071
        %6298 = vmatmul.f32.gmra.mxu0 %v5569
        %v6299 = vpop.f32.mrf.mxu0
        %v6300 = vadd.f32 %v6197, %v6299
        %6301 = vdwg.mxu0
        %6302 = vmatpush.msra.mxu0 0.0
        %6303 = vmatpush.msra.mxu0 0.0
        %6304 = vmatpush.msra.mxu0 0.0
        %6305 = vmatpush.msra.mxu0 0.0
        %6306 = vmatpush.msra.mxu0 0.0
        %6307 = vmatpush.msra.mxu0 0.0
        %6308 = vmatpush.msra.mxu0 0.0
        %6309 = vmatpush.msra.mxu0 %v6191
        %6310 = vmatpush.msra.mxu0 %v6186
        %6311 = vmatpush.msra.mxu0 %v6181
        %6312 = vmatpush.msra.mxu0 %v6176
        %6313 = vmatpush.msra.mxu0 %v6171
        %6314 = vmatpush.msra.mxu0 %v6166
        %6315 = vmatpush.msra.mxu0 %v6161
        %6316 = vmatpush.msra.mxu0 %v6156
        %6317 = vmatpush.msra.mxu0 %v6151
        %6318 = vmatmul.f32.gmra.mxu0 %v6200
        %v6319 = vpop.f32.mrf.mxu0
        %v6320 = vadd.f32 %v6300, %v6319
        %6321 = vdwg.mxu0
        %6322 = vmatpush.msra.mxu0 %v6147
        %6323 = vmatpush.msra.mxu0 %v6142
        %6324 = vmatpush.msra.mxu0 %v6137
        %6325 = vmatpush.msra.mxu0 %v6132
        %6326 = vmatpush.msra.mxu0 %v6127
        %6327 = vmatpush.msra.mxu0 %v6122
        %6328 = vmatpush.msra.mxu0 %v6117
        %6329 = vmatpush.msra.mxu0 %v6112
        %6330 = vmatpush.msra.mxu0 %v6107
        %6331 = vmatpush.msra.mxu0 %v6102
        %6332 = vmatpush.msra.mxu0 %v6097
        %6333 = vmatpush.msra.mxu0 %v6092
        %6334 = vmatpush.msra.mxu0 %v6087
        %6335 = vmatpush.msra.mxu0 %v6082
        %6336 = vmatpush.msra.mxu0 %v6077
        %6337 = vmatpush.msra.mxu0 %v6072
        %6338 = vmatmul.f32.gmra.mxu0 %v5569
        %v6339 = vpop.f32.mrf.mxu0
        %v6340 = vadd.f32 %v6197, %v6339
        %6341 = vdwg.mxu0
        %6342 = vmatpush.msra.mxu0 0.0
        %6343 = vmatpush.msra.mxu0 0.0
        %6344 = vmatpush.msra.mxu0 0.0
        %6345 = vmatpush.msra.mxu0 0.0
        %6346 = vmatpush.msra.mxu0 0.0
        %6347 = vmatpush.msra.mxu0 0.0
        %6348 = vmatpush.msra.mxu0 0.0
        %6349 = vmatpush.msra.mxu0 %v6192
        %6350 = vmatpush.msra.mxu0 %v6187
        %6351 = vmatpush.msra.mxu0 %v6182
        %6352 = vmatpush.msra.mxu0 %v6177
        %6353 = vmatpush.msra.mxu0 %v6172
        %6354 = vmatpush.msra.mxu0 %v6167
        %6355 = vmatpush.msra.mxu0 %v6162
        %6356 = vmatpush.msra.mxu0 %v6157
        %6357 = vmatpush.msra.mxu0 %v6152
        %6358 = vmatmul.f32.gmra.mxu0 %v6200
        %v6359 = vpop.f32.mrf.mxu0
        %v6360 = vadd.f32 %v6340, %v6359
        %6361 = vdwg.mxu0
        %6362 = vmatpush.msra.mxu0 %v6148
        %6363 = vmatpush.msra.mxu0 %v6143
        %6364 = vmatpush.msra.mxu0 %v6138
        %6365 = vmatpush.msra.mxu0 %v6133
        %6366 = vmatpush.msra.mxu0 %v6128
        %6367 = vmatpush.msra.mxu0 %v6123
        %6368 = vmatpush.msra.mxu0 %v6118
        %6369 = vmatpush.msra.mxu0 %v6113
        %6370 = vmatpush.msra.mxu0 %v6108
        %6371 = vmatpush.msra.mxu0 %v6103
        %6372 = vmatpush.msra.mxu0 %v6098
        %6373 = vmatpush.msra.mxu0 %v6093
        %6374 = vmatpush.msra.mxu0 %v6088
        %6375 = vmatpush.msra.mxu0 %v6083
        %6376 = vmatpush.msra.mxu0 %v6078
        %6377 = vmatpush.msra.mxu0 %v6073
        %6378 = vmatmul.f32.gmra.mxu0 %v5569
        %v6379 = vpop.f32.mrf.mxu0
        %v6380 = vadd.f32 %v6197, %v6379
        %6381 = vdwg.mxu0
        %6382 = vmatpush.msra.mxu0 0.0
        %6383 = vmatpush.msra.mxu0 0.0
        %6384 = vmatpush.msra.mxu0 0.0
        %6385 = vmatpush.msra.mxu0 0.0
        %6386 = vmatpush.msra.mxu0 0.0
        %6387 = vmatpush.msra.mxu0 0.0
        %6388 = vmatpush.msra.mxu0 0.0
        %6389 = vmatpush.msra.mxu0 %v6193
        %6390 = vmatpush.msra.mxu0 %v6188
        %6391 = vmatpush.msra.mxu0 %v6183
        %6392 = vmatpush.msra.mxu0 %v6178
        %6393 = vmatpush.msra.mxu0 %v6173
        %6394 = vmatpush.msra.mxu0 %v6168
        %6395 = vmatpush.msra.mxu0 %v6163
        %6396 = vmatpush.msra.mxu0 %v6158
        %6397 = vmatpush.msra.mxu0 %v6153
        %6398 = vmatmul.f32.gmra.mxu0 %v6200
        %v6399 = vpop.f32.mrf.mxu0
        %v6400 = vadd.f32 %v6380, %v6399
        %6401 = vdwg.mxu0
        %vm6402 = vcmp.ge.f32.partialorder %v6240, 0.0
        %vm6403 = vcmp.ge.f32.partialorder %v6280, 0.0
        %vm6404 = vcmp.ge.f32.partialorder %v6320, 0.0
        %vm6405 = vcmp.ge.f32.partialorder %v6360, 0.0
        %vm6406 = vcmp.ge.f32.partialorder %v6400, 0.0
        %v6407 = vmul.f32 %v6240, 0.2
        %v6408 = vmul.f32 %v6280, 0.2
        %v6409 = vmul.f32 %v6320, 0.2
        %v6410 = vmul.f32 %v6360, 0.2
        %v6411 = vmul.f32 %v6400, 0.2
        %v6412 = vsel %vm6402, %v6240, %v6407
        %v6413 = vsel %vm6403, %v6280, %v6408
        %v6414 = vsel %vm6404, %v6320, %v6409
        %v6415 = vsel %vm6405, %v6360, %v6410
        %v6416 = vsel %vm6406, %v6400, %v6411
        %v6417 = vmul.f32 %v6412, %v594
        %v6418 = vmul.f32 %v6413, %v595
        %v6419 = vmul.f32 %v6414, %v596
        %v6420 = vmul.f32 %v6415, %v597
        %v6421 = vmul.f32 %v6416, %v598
        %v6422 = vld [vmem:[#allocation4 + $0x120] sm:$0xff]
        %v6423 = vld [vmem:[%s2 + $0x60] sm:$0xff]
        %6424 = vrot.lane.b32.xlu0 %v6417, 7
        %v6425 = vpop.permute.xlu0 %6424
        %6426 = vrot.lane.b32.xlu0 %v6418, 7
        %v6427 = vpop.permute.xlu0 %6426
        %6428 = vrot.lane.b32.xlu0 %v6419, 7
        %v6429 = vpop.permute.xlu0 %6428
        %6430 = vrot.lane.b32.xlu0 %v6420, 7
        %v6431 = vpop.permute.xlu0 %6430
        %6432 = vrot.lane.b32.xlu0 %v6421, 7
        %v6433 = vpop.permute.xlu0 %6432
        %vm6434 = vcmp.lt.s32.totalorder %v260, 7
        %v6435 = vsel %vm6434, %v6431, %v6433
        %v6436 = vsel %vm6434, %v6429, %v6431
        %v6437 = vsel %vm6434, %v6427, %v6429
        %v6438 = vsel %vm6434, %v6425, %v6427
        %v6439 = vsel %vm6434, %v6433, %v6425
        %6440 = vst [vmem:[#allocation2] sm:$0xff] %v6435
        %6441 = vst [vmem:[#allocation2 + $0x8] sm:$0xff] %v6439
        %6442 = vst [vmem:[#allocation2 + $0x10] sm:$0xff] %v6438
        %6443 = vst [vmem:[#allocation2 + $0x18] sm:$0xff] %v6437
        %6444 = vst [vmem:[#allocation2 + $0x20] sm:$0xff] %v6436
        %6445 = vrot.lane.b32.xlu0 %v6417, 2
        %v6446 = vpop.permute.xlu0 %6445
        %6447 = vrot.lane.b32.xlu0 %v6418, 2
        %v6448 = vpop.permute.xlu0 %6447
        %6449 = vrot.lane.b32.xlu0 %v6419, 2
        %v6450 = vpop.permute.xlu0 %6449
        %6451 = vrot.lane.b32.xlu0 %v6420, 2
        %v6452 = vpop.permute.xlu0 %6451
        %6453 = vrot.lane.b32.xlu0 %v6421, 2
        %v6454 = vpop.permute.xlu0 %6453
        %v6455 = vsel %vm5787, %v6452, %v6454
        %v6456 = vsel %vm5787, %v6450, %v6452
        %v6457 = vsel %vm5787, %v6448, %v6450
        %v6458 = vsel %vm5787, %v6446, %v6448
        %v6459 = vsel %vm5787, %v6454, %v6446
        %6460 = vst [vmem:[#allocation2 + $0x28] sm:$0xff] %v6455
        %6461 = vst [vmem:[#allocation2 + $0x30] sm:$0xff] %v6459
        %6462 = vst [vmem:[#allocation2 + $0x38] sm:$0xff] %v6458
        %6463 = vst [vmem:[#allocation2 + $0x40] sm:$0xff] %v6457
        %6464 = vst [vmem:[#allocation2 + $0x48] sm:$0xff] %v6456
        %6465 = vrot.lane.b32.xlu0 %v6417, 125
        %v6466 = vpop.permute.xlu0 %6465
        %6467 = vrot.lane.b32.xlu0 %v6418, 125
        %v6468 = vpop.permute.xlu0 %6467
        %6469 = vrot.lane.b32.xlu0 %v6419, 125
        %v6470 = vpop.permute.xlu0 %6469
        %6471 = vrot.lane.b32.xlu0 %v6420, 125
        %v6472 = vpop.permute.xlu0 %6471
        %6473 = vrot.lane.b32.xlu0 %v6421, 125
        %v6474 = vpop.permute.xlu0 %6473
        %v6475 = vsel %vm1538, %v6472, %v6474
        %v6476 = vsel %vm1538, %v6470, %v6472
        %v6477 = vsel %vm1538, %v6468, %v6470
        %v6478 = vsel %vm1538, %v6466, %v6468
        %v6479 = vsel %vm1538, %v6474, %v6466
        %6480 = vst [vmem:[#allocation2 + $0x50] sm:$0xff] %v6479
        %6481 = vst [vmem:[#allocation2 + $0x58] sm:$0xff] %v6478
        %6482 = vst [vmem:[#allocation2 + $0x60] sm:$0xff] %v6477
        %6483 = vst [vmem:[#allocation2 + $0x68] sm:$0xff] %v6476
        %6484 = vst [vmem:[#allocation2 + $0x70] sm:$0xff] %v6475
        %6485 = vrot.lane.b32.xlu0 %v6417, 5
        %v6486 = vpop.permute.xlu0 %6485
        %6487 = vrot.lane.b32.xlu0 %v6418, 5
        %v6488 = vpop.permute.xlu0 %6487
        %6489 = vrot.lane.b32.xlu0 %v6419, 5
        %v6490 = vpop.permute.xlu0 %6489
        %6491 = vrot.lane.b32.xlu0 %v6420, 5
        %v6492 = vpop.permute.xlu0 %6491
        %6493 = vrot.lane.b32.xlu0 %v6421, 5
        %v6494 = vpop.permute.xlu0 %6493
        %vm6495 = vcmp.lt.s32.totalorder %v260, 5
        %v6496 = vsel %vm6495, %v6492, %v6494
        %v6497 = vsel %vm6495, %v6490, %v6492
        %v6498 = vsel %vm6495, %v6488, %v6490
        %v6499 = vsel %vm6495, %v6486, %v6488
        %v6500 = vsel %vm6495, %v6494, %v6486
        %6501 = vst [vmem:[#allocation2 + $0x78] sm:$0xff] %v6500
        %6502 = vst [vmem:[#allocation2 + $0x80] sm:$0xff] %v6499
        %6503 = vst [vmem:[#allocation2 + $0x88] sm:$0xff] %v6498
        %6504 = vst [vmem:[#allocation2 + $0x90] sm:$0xff] %v6497
        %6505 = vst [vmem:[#allocation2 + $0x98] sm:$0xff] %v6496
        %6506 = vst [vmem:[#allocation2 + $0xa0] sm:$0xff] %v6417
        %6507 = vst [vmem:[#allocation2 + $0xa8] sm:$0xff] %v6418
        %6508 = vst [vmem:[#allocation2 + $0xb0] sm:$0xff] %v6419
        %6509 = vst [vmem:[#allocation2 + $0xb8] sm:$0xff] %v6420
        %6510 = vst [vmem:[#allocation2 + $0xc0] sm:$0xff] %v6421
        %6511 = vrot.lane.b32.xlu0 %v6417, 123
        %v6512 = vpop.permute.xlu0 %6511
        %6513 = vrot.lane.b32.xlu0 %v6418, 123
        %v6514 = vpop.permute.xlu0 %6513
        %6515 = vrot.lane.b32.xlu0 %v6419, 123
        %v6516 = vpop.permute.xlu0 %6515
        %6517 = vrot.lane.b32.xlu0 %v6420, 123
        %v6518 = vpop.permute.xlu0 %6517
        %6519 = vrot.lane.b32.xlu0 %v6421, 123
        %v6520 = vpop.permute.xlu0 %6519
        %vm6521 = vcmp.lt.s32.totalorder %v260, 123
        %v6522 = vsel %vm6521, %v6518, %v6520
        %v6523 = vsel %vm6521, %v6516, %v6518
        %v6524 = vsel %vm6521, %v6514, %v6516
        %v6525 = vsel %vm6521, %v6512, %v6514
        %v6526 = vsel %vm6521, %v6520, %v6512
        %6527 = vst [vmem:[#allocation2 + $0xc8] sm:$0xff] %v6525
        %6528 = vst [vmem:[#allocation2 + $0xd0] sm:$0xff] %v6524
        %6529 = vst [vmem:[#allocation2 + $0xd8] sm:$0xff] %v6523
        %6530 = vst [vmem:[#allocation2 + $0xe0] sm:$0xff] %v6522
        %6531 = vst [vmem:[#allocation2 + $0xe8] sm:$0xff] %v6526
        %6532 = vrot.lane.b32.xlu0 %v6417, 3
        %v6533 = vpop.permute.xlu0 %6532
        %6534 = vrot.lane.b32.xlu0 %v6418, 3
        %v6535 = vpop.permute.xlu0 %6534
        %6536 = vrot.lane.b32.xlu0 %v6419, 3
        %v6537 = vpop.permute.xlu0 %6536
        %6538 = vrot.lane.b32.xlu0 %v6420, 3
        %v6539 = vpop.permute.xlu0 %6538
        %6540 = vrot.lane.b32.xlu0 %v6421, 3
        %v6541 = vpop.permute.xlu0 %6540
        %v6542 = vsel %vm1512, %v6539, %v6541
        %v6543 = vsel %vm1512, %v6537, %v6539
        %v6544 = vsel %vm1512, %v6535, %v6537
        %v6545 = vsel %vm1512, %v6533, %v6535
        %v6546 = vsel %vm1512, %v6541, %v6533
        %6547 = vst [vmem:[#allocation2 + $0xf0] sm:$0xff] %v6545
        %6548 = vst [vmem:[#allocation2 + $0xf8] sm:$0xff] %v6544
        %6549 = vst [vmem:[#allocation2 + $0x100] sm:$0xff] %v6543
        %6550 = vst [vmem:[#allocation2 + $0x108] sm:$0xff] %v6542
        %6551 = vst [vmem:[#allocation2 + $0x110] sm:$0xff] %v6546
        %6552 = vrot.lane.b32.xlu0 %v6417, 126
        %v6553 = vpop.permute.xlu0 %6552
        %6554 = vrot.lane.b32.xlu0 %v6418, 126
        %v6555 = vpop.permute.xlu0 %6554
        %6556 = vrot.lane.b32.xlu0 %v6419, 126
        %v6557 = vpop.permute.xlu0 %6556
        %6558 = vrot.lane.b32.xlu0 %v6420, 126
        %v6559 = vpop.permute.xlu0 %6558
        %6560 = vrot.lane.b32.xlu0 %v6421, 126
        %v6561 = vpop.permute.xlu0 %6560
        %v6562 = vsel %vm5853, %v6559, %v6561
        %v6563 = vsel %vm5853, %v6557, %v6559
        %v6564 = vsel %vm5853, %v6555, %v6557
        %v6565 = vsel %vm5853, %v6553, %v6555
        %v6566 = vsel %vm5853, %v6561, %v6553
        %6567 = vst [vmem:[#allocation2 + $0x118] sm:$0xff] %v6564
        %6568 = vst [vmem:[#allocation2 + $0x120] sm:$0xff] %v6563
        %6569 = vst [vmem:[#allocation2 + $0x128] sm:$0xff] %v6562
        %6570 = vst [vmem:[#allocation2 + $0x130] sm:$0xff] %v6566
        %6571 = vst [vmem:[#allocation2 + $0x138] sm:$0xff] %v6565
        %6572 = vrot.lane.b32.xlu0 %v6417, 121
        %v6573 = vpop.permute.xlu0 %6572
        %6574 = vrot.lane.b32.xlu0 %v6418, 121
        %v6575 = vpop.permute.xlu0 %6574
        %6576 = vrot.lane.b32.xlu0 %v6419, 121
        %v6577 = vpop.permute.xlu0 %6576
        %6578 = vrot.lane.b32.xlu0 %v6420, 121
        %v6579 = vpop.permute.xlu0 %6578
        %6580 = vrot.lane.b32.xlu0 %v6421, 121
        %v6581 = vpop.permute.xlu0 %6580
        %vm6582 = vcmp.lt.s32.totalorder %v260, 121
        %v6583 = vsel %vm6582, %v6579, %v6581
        %v6584 = vsel %vm6582, %v6577, %v6579
        %v6585 = vsel %vm6582, %v6575, %v6577
        %v6586 = vsel %vm6582, %v6573, %v6575
        %v6587 = vsel %vm6582, %v6581, %v6573
        %6588 = vst [vmem:[#allocation2 + $0x140] sm:$0xff] %v6585
        %6589 = vst [vmem:[#allocation2 + $0x148] sm:$0xff] %v6584
        %6590 = vst [vmem:[#allocation2 + $0x150] sm:$0xff] %v6583
        %6591 = vst [vmem:[#allocation2 + $0x158] sm:$0xff] %v6587
        %6592 = vst [vmem:[#allocation2 + $0x160] sm:$0xff] %v6586
        %v6593 = vld [vmem:[#allocation2] sm:$0xff]
        %v6594 = vld [vmem:[#allocation2 + $0x8] sm:$0xff]
        %v6595 = vld [vmem:[#allocation2 + $0x10] sm:$0xff]
        %v6596 = vld [vmem:[#allocation2 + $0x18] sm:$0xff]
        %v6597 = vld [vmem:[#allocation2 + $0x20] sm:$0xff]
        %v6598 = vld [vmem:[#allocation2 + $0x28] sm:$0xff]
        %v6599 = vld [vmem:[#allocation2 + $0x30] sm:$0xff]
        %v6600 = vld [vmem:[#allocation2 + $0x38] sm:$0xff]
        %v6601 = vld [vmem:[#allocation2 + $0x40] sm:$0xff]
        %v6602 = vld [vmem:[#allocation2 + $0x48] sm:$0xff]
        %v6603 = vld [vmem:[#allocation2 + $0x50] sm:$0xff]
        %v6604 = vld [vmem:[#allocation2 + $0x58] sm:$0xff]
        %v6605 = vld [vmem:[#allocation2 + $0x60] sm:$0xff]
        %v6606 = vld [vmem:[#allocation2 + $0x68] sm:$0xff]
        %v6607 = vld [vmem:[#allocation2 + $0x70] sm:$0xff]
        %v6608 = vld [vmem:[#allocation2 + $0x78] sm:$0xff]
        %v6609 = vld [vmem:[#allocation2 + $0x80] sm:$0xff]
        %v6610 = vld [vmem:[#allocation2 + $0x88] sm:$0xff]
        %v6611 = vld [vmem:[#allocation2 + $0x90] sm:$0xff]
        %v6612 = vld [vmem:[#allocation2 + $0x98] sm:$0xff]
        %v6613 = vld [vmem:[#allocation2 + $0xa0] sm:$0xff]
        %v6614 = vld [vmem:[#allocation2 + $0xa8] sm:$0xff]
        %v6615 = vld [vmem:[#allocation2 + $0xb0] sm:$0xff]
        %v6616 = vld [vmem:[#allocation2 + $0xb8] sm:$0xff]
        %v6617 = vld [vmem:[#allocation2 + $0xc0] sm:$0xff]
        %v6618 = vld [vmem:[#allocation2 + $0xc8] sm:$0xff]
        %v6619 = vld [vmem:[#allocation2 + $0xd0] sm:$0xff]
        %v6620 = vld [vmem:[#allocation2 + $0xd8] sm:$0xff]
        %v6621 = vld [vmem:[#allocation2 + $0xe0] sm:$0xff]
        %v6622 = vld [vmem:[#allocation2 + $0xe8] sm:$0xff]
        %v6623 = vld [vmem:[#allocation2 + $0xf0] sm:$0xff]
        %v6624 = vld [vmem:[#allocation2 + $0xf8] sm:$0xff]
        %v6625 = vld [vmem:[#allocation2 + $0x100] sm:$0xff]
        %v6626 = vld [vmem:[#allocation2 + $0x108] sm:$0xff]
        %v6627 = vld [vmem:[#allocation2 + $0x110] sm:$0xff]
        %v6628 = vld [vmem:[#allocation2 + $0x118] sm:$0xff]
        %v6629 = vld [vmem:[#allocation2 + $0x120] sm:$0xff]
        %v6630 = vld [vmem:[#allocation2 + $0x128] sm:$0xff]
        %v6631 = vld [vmem:[#allocation2 + $0x130] sm:$0xff]
        %v6632 = vld [vmem:[#allocation2 + $0x138] sm:$0xff]
        %v6633 = vld [vmem:[#allocation2 + $0x140] sm:$0xff]
        %v6634 = vld [vmem:[#allocation2 + $0x148] sm:$0xff]
        %v6635 = vld [vmem:[#allocation2 + $0x150] sm:$0xff]
        %v6636 = vld [vmem:[#allocation2 + $0x158] sm:$0xff]
        %v6637 = vld [vmem:[#allocation2 + $0x160] sm:$0xff]
        %6639 = vset.pattern.permute.xlu0 0
        %6640 = vperm.xlu0 %6639, %v6423
        %v6641 = vpop.permute.xlu0 %6640
        %v6644 = vsel %vm474, %v6422, 0
        %6646 = vmatpush.msra.mxu0 0.0
        %6647 = vmatpush.msra.mxu0 0.0
        %6648 = vmatpush.msra.mxu0 0.0
        %6649 = vmatpush.msra.mxu0 0.0
        %6650 = vmatpush.msra.mxu0 0.0
        %6651 = vmatpush.msra.mxu0 0.0
        %6652 = vmatpush.msra.mxu0 0.0
        %6653 = vmatpush.msra.mxu0 %v6633
        %6654 = vmatpush.msra.mxu0 %v6628
        %6655 = vmatpush.msra.mxu0 %v6623
        %6656 = vmatpush.msra.mxu0 %v6618
        %6657 = vmatpush.msra.mxu0 %v6613
        %6658 = vmatpush.msra.mxu0 %v6608
        %6659 = vmatpush.msra.mxu0 %v6603
        %6660 = vmatpush.msra.mxu0 %v6598
        %6661 = vmatpush.msra.mxu0 %v6593
        %6662 = vmatmul.f32.gmra.mxu0 %v6644
        %v6663 = vpop.f32.mrf.mxu0
        %v6664 = vadd.f32 %v6641, %v6663
        %6665 = vdwg.mxu0
        %6666 = vmatpush.msra.mxu0 0.0
        %6667 = vmatpush.msra.mxu0 0.0
        %6668 = vmatpush.msra.mxu0 0.0
        %6669 = vmatpush.msra.mxu0 0.0
        %6670 = vmatpush.msra.mxu0 0.0
        %6671 = vmatpush.msra.mxu0 0.0
        %6672 = vmatpush.msra.mxu0 0.0
        %6673 = vmatpush.msra.mxu0 %v6634
        %6674 = vmatpush.msra.mxu0 %v6629
        %6675 = vmatpush.msra.mxu0 %v6624
        %6676 = vmatpush.msra.mxu0 %v6619
        %6677 = vmatpush.msra.mxu0 %v6614
        %6678 = vmatpush.msra.mxu0 %v6609
        %6679 = vmatpush.msra.mxu0 %v6604
        %6680 = vmatpush.msra.mxu0 %v6599
        %6681 = vmatpush.msra.mxu0 %v6594
        %6682 = vmatmul.f32.gmra.mxu0 %v6644
        %v6683 = vpop.f32.mrf.mxu0
        %v6684 = vadd.f32 %v6641, %v6683
        %6685 = vdwg.mxu0
        %6686 = vmatpush.msra.mxu0 0.0
        %6687 = vmatpush.msra.mxu0 0.0
        %6688 = vmatpush.msra.mxu0 0.0
        %6689 = vmatpush.msra.mxu0 0.0
        %6690 = vmatpush.msra.mxu0 0.0
        %6691 = vmatpush.msra.mxu0 0.0
        %6692 = vmatpush.msra.mxu0 0.0
        %6693 = vmatpush.msra.mxu0 %v6635
        %6694 = vmatpush.msra.mxu0 %v6630
        %6695 = vmatpush.msra.mxu0 %v6625
        %6696 = vmatpush.msra.mxu0 %v6620
        %6697 = vmatpush.msra.mxu0 %v6615
        %6698 = vmatpush.msra.mxu0 %v6610
        %6699 = vmatpush.msra.mxu0 %v6605
        %6700 = vmatpush.msra.mxu0 %v6600
        %6701 = vmatpush.msra.mxu0 %v6595
        %6702 = vmatmul.f32.gmra.mxu0 %v6644
        %v6703 = vpop.f32.mrf.mxu0
        %v6704 = vadd.f32 %v6641, %v6703
        %6705 = vdwg.mxu0
        %6706 = vmatpush.msra.mxu0 0.0
        %6707 = vmatpush.msra.mxu0 0.0
        %6708 = vmatpush.msra.mxu0 0.0
        %6709 = vmatpush.msra.mxu0 0.0
        %6710 = vmatpush.msra.mxu0 0.0
        %6711 = vmatpush.msra.mxu0 0.0
        %6712 = vmatpush.msra.mxu0 0.0
        %6713 = vmatpush.msra.mxu0 %v6636
        %6714 = vmatpush.msra.mxu0 %v6631
        %6715 = vmatpush.msra.mxu0 %v6626
        %6716 = vmatpush.msra.mxu0 %v6621
        %6717 = vmatpush.msra.mxu0 %v6616
        %6718 = vmatpush.msra.mxu0 %v6611
        %6719 = vmatpush.msra.mxu0 %v6606
        %6720 = vmatpush.msra.mxu0 %v6601
        %6721 = vmatpush.msra.mxu0 %v6596
        %6722 = vmatmul.f32.gmra.mxu0 %v6644
        %v6723 = vpop.f32.mrf.mxu0
        %v6724 = vadd.f32 %v6641, %v6723
        %6725 = vdwg.mxu0
        %6726 = vmatpush.msra.mxu0 0.0
        %6727 = vmatpush.msra.mxu0 0.0
        %6728 = vmatpush.msra.mxu0 0.0
        %6729 = vmatpush.msra.mxu0 0.0
        %6730 = vmatpush.msra.mxu0 0.0
        %6731 = vmatpush.msra.mxu0 0.0
        %6732 = vmatpush.msra.mxu0 0.0
        %6733 = vmatpush.msra.mxu0 %v6637
        %6734 = vmatpush.msra.mxu0 %v6632
        %6735 = vmatpush.msra.mxu0 %v6627
        %6736 = vmatpush.msra.mxu0 %v6622
        %6737 = vmatpush.msra.mxu0 %v6617
        %6738 = vmatpush.msra.mxu0 %v6612
        %6739 = vmatpush.msra.mxu0 %v6607
        %6740 = vmatpush.msra.mxu0 %v6602
        %6741 = vmatpush.msra.mxu0 %v6597
        %6742 = vmatmul.f32.gmra.mxu0 %v6644
        %v6743 = vpop.f32.mrf.mxu0
        %v6744 = vadd.f32 %v6641, %v6743
        %6745 = vdwg.mxu0
        %v6746 = vrot.slane %v241, 5
        %s6747 = vtos %v6746
        %vm6748 = vcmp.ge.f32.partialorder %v6664, 0.0
        %vm6749 = vcmp.ge.f32.partialorder %v6684, 0.0
        %vm6750 = vcmp.ge.f32.partialorder %v6704, 0.0
        %vm6751 = vcmp.ge.f32.partialorder %v6724, 0.0
        %vm6752 = vcmp.ge.f32.partialorder %v6744, 0.0
        %v6753 = vstv %s6747
        %v6754 = vmul.f32 %v6753, %v6664
        %v6755 = vmul.f32 %v6753, %v6684
        %v6756 = vmul.f32 %v6753, %v6704
        %v6757 = vmul.f32 %v6753, %v6724
        %v6758 = vmul.f32 %v6753, %v6744
        %v6759 = vsel %vm6748, %v6664, %v6754
        %v6760 = vsel %vm6749, %v6684, %v6755
        %v6761 = vsel %vm6750, %v6704, %v6756
        %v6762 = vsel %vm6751, %v6724, %v6757
        %v6763 = vsel %vm6752, %v6744, %v6758
        %v6764 = vmul.f32 %v6759, %v594
        %v6765 = vmul.f32 %v6760, %v595
        %v6766 = vmul.f32 %v6761, %v596
        %v6767 = vmul.f32 %v6762, %v597
        %v6768 = vmul.f32 %v6763, %v598
        %6769 = vst [vmem:[#allocation3 + $0xf0] sm:$0xff] %v6764
        %6770 = vst [vmem:[#allocation3 + $0xf8] sm:$0xff] %v6765
        %6771 = vst [vmem:[#allocation3 + $0x100] sm:$0xff] %v6766
        %6772 = vst [vmem:[#allocation3 + $0x108] sm:$0xff] %v6767
        %6773 = vst [vmem:[#allocation3 + $0x110] sm:$0xff] %v6768
        %v6774 = vld [vmem:[#allocation3] sm:$0xff]
        %v6775 = vld [vmem:[#allocation3 + $0x8] sm:$0xff]
        %v6776 = vld [vmem:[#allocation3 + $0x10] sm:$0xff]
        %v6777 = vld [vmem:[#allocation3 + $0x18] sm:$0xff]
        %v6778 = vld [vmem:[#allocation3 + $0x20] sm:$0xff]
        %v6779 = vld [vmem:[#allocation3 + $0x28] sm:$0xff]
        %v6780 = vld [vmem:[#allocation3 + $0x30] sm:$0xff]
        %v6781 = vld [vmem:[#allocation3 + $0x38] sm:$0xff]
        %v6782 = vld [vmem:[#allocation3 + $0x40] sm:$0xff]
        %v6783 = vld [vmem:[#allocation3 + $0x48] sm:$0xff]
        %v6784 = vld [vmem:[#allocation3 + $0x50] sm:$0xff]
        %v6785 = vld [vmem:[#allocation3 + $0x58] sm:$0xff]
        %v6786 = vld [vmem:[#allocation3 + $0x60] sm:$0xff]
        %v6787 = vld [vmem:[#allocation3 + $0x68] sm:$0xff]
        %v6788 = vld [vmem:[#allocation3 + $0x70] sm:$0xff]
        %v6789 = vld [vmem:[#allocation3 + $0x78] sm:$0xff]
        %v6790 = vld [vmem:[#allocation3 + $0x80] sm:$0xff]
        %v6791 = vld [vmem:[#allocation3 + $0x88] sm:$0xff]
        %v6792 = vld [vmem:[#allocation3 + $0x90] sm:$0xff]
        %v6793 = vld [vmem:[#allocation3 + $0x98] sm:$0xff]
        %v6794 = vld [vmem:[#allocation3 + $0xa0] sm:$0xff]
        %v6795 = vld [vmem:[#allocation3 + $0xa8] sm:$0xff]
        %v6796 = vld [vmem:[#allocation3 + $0xb0] sm:$0xff]
        %v6797 = vld [vmem:[#allocation3 + $0xb8] sm:$0xff]
        %v6798 = vld [vmem:[#allocation3 + $0xc0] sm:$0xff]
        %v6799 = vld [vmem:[#allocation3 + $0xc8] sm:$0xff]
        %v6800 = vld [vmem:[#allocation3 + $0xd0] sm:$0xff]
        %v6801 = vld [vmem:[#allocation3 + $0xd8] sm:$0xff]
        %v6802 = vld [vmem:[#allocation3 + $0xe0] sm:$0xff]
        %v6803 = vld [vmem:[#allocation3 + $0xe8] sm:$0xff]
        %v6804 = vld [vmem:[#allocation3 + $0xf0] sm:$0xff]
        %v6805 = vld [vmem:[#allocation3 + $0xf8] sm:$0xff]
        %v6806 = vld [vmem:[#allocation3 + $0x100] sm:$0xff]
        %v6807 = vld [vmem:[#allocation3 + $0x108] sm:$0xff]
        %v6808 = vld [vmem:[#allocation3 + $0x110] sm:$0xff]
        %v6809 = vld [vmem:[#allocation4 + $0x138] sm:$0xff]
        %v6810 = vld [vmem:[%s2 + $0x68] sm:$0xff]
        %6812 = vset.pattern.permute.xlu0 0
        %6813 = vperm.xlu0 %6812, %v6810
        %v6814 = vpop.permute.xlu0 %6813
        %vm6816 = vcmask 457728
        %v6818 = vsel %vm6816, %v6809, 0
        %6820 = vmatpush.msra.mxu0 0.0
        %6821 = vmatpush.msra.mxu0 0.0
        %6822 = vmatpush.msra.mxu0 0.0
        %6823 = vmatpush.msra.mxu0 0.0
        %6824 = vmatpush.msra.mxu0 0.0
        %6825 = vmatpush.msra.mxu0 0.0
        %6826 = vmatpush.msra.mxu0 0.0
        %6827 = vmatpush.msra.mxu0 0.0
        %6828 = vmatpush.msra.mxu0 0.0
        %6829 = vmatpush.msra.mxu0 %v6804
        %6830 = vmatpush.msra.mxu0 %v6799
        %6831 = vmatpush.msra.mxu0 %v6794
        %6832 = vmatpush.msra.mxu0 %v6789
        %6833 = vmatpush.msra.mxu0 %v6784
        %6834 = vmatpush.msra.mxu0 %v6779
        %6835 = vmatpush.msra.mxu0 %v6774
        %6836 = vmatmul.f32.gmra.mxu0 %v6818
        %v6837 = vpop.f32.mrf.mxu0
        %v6838 = vadd.f32 %v6814, %v6837
        %6839 = vdwg.mxu0
        %6840 = vmatpush.msra.mxu0 0.0
        %6841 = vmatpush.msra.mxu0 0.0
        %6842 = vmatpush.msra.mxu0 0.0
        %6843 = vmatpush.msra.mxu0 0.0
        %6844 = vmatpush.msra.mxu0 0.0
        %6845 = vmatpush.msra.mxu0 0.0
        %6846 = vmatpush.msra.mxu0 0.0
        %6847 = vmatpush.msra.mxu0 0.0
        %6848 = vmatpush.msra.mxu0 0.0
        %6849 = vmatpush.msra.mxu0 %v6805
        %6850 = vmatpush.msra.mxu0 %v6800
        %6851 = vmatpush.msra.mxu0 %v6795
        %6852 = vmatpush.msra.mxu0 %v6790
        %6853 = vmatpush.msra.mxu0 %v6785
        %6854 = vmatpush.msra.mxu0 %v6780
        %6855 = vmatpush.msra.mxu0 %v6775
        %6856 = vmatmul.f32.gmra.mxu0 %v6818
        %v6857 = vpop.f32.mrf.mxu0
        %v6858 = vadd.f32 %v6814, %v6857
        %6859 = vdwg.mxu0
        %6860 = vmatpush.msra.mxu0 0.0
        %6861 = vmatpush.msra.mxu0 0.0
        %6862 = vmatpush.msra.mxu0 0.0
        %6863 = vmatpush.msra.mxu0 0.0
        %6864 = vmatpush.msra.mxu0 0.0
        %6865 = vmatpush.msra.mxu0 0.0
        %6866 = vmatpush.msra.mxu0 0.0
        %6867 = vmatpush.msra.mxu0 0.0
        %6868 = vmatpush.msra.mxu0 0.0
        %6869 = vmatpush.msra.mxu0 %v6806
        %6870 = vmatpush.msra.mxu0 %v6801
        %6871 = vmatpush.msra.mxu0 %v6796
        %6872 = vmatpush.msra.mxu0 %v6791
        %6873 = vmatpush.msra.mxu0 %v6786
        %6874 = vmatpush.msra.mxu0 %v6781
        %6875 = vmatpush.msra.mxu0 %v6776
        %6876 = vmatmul.f32.gmra.mxu0 %v6818
        %v6877 = vpop.f32.mrf.mxu0
        %v6878 = vadd.f32 %v6814, %v6877
        %6879 = vdwg.mxu0
        %6880 = vmatpush.msra.mxu0 0.0
        %6881 = vmatpush.msra.mxu0 0.0
        %6882 = vmatpush.msra.mxu0 0.0
        %6883 = vmatpush.msra.mxu0 0.0
        %6884 = vmatpush.msra.mxu0 0.0
        %6885 = vmatpush.msra.mxu0 0.0
        %6886 = vmatpush.msra.mxu0 0.0
        %6887 = vmatpush.msra.mxu0 0.0
        %6888 = vmatpush.msra.mxu0 0.0
        %6889 = vmatpush.msra.mxu0 %v6807
        %6890 = vmatpush.msra.mxu0 %v6802
        %6891 = vmatpush.msra.mxu0 %v6797
        %6892 = vmatpush.msra.mxu0 %v6792
        %6893 = vmatpush.msra.mxu0 %v6787
        %6894 = vmatpush.msra.mxu0 %v6782
        %6895 = vmatpush.msra.mxu0 %v6777
        %6896 = vmatmul.f32.gmra.mxu0 %v6818
        %v6897 = vpop.f32.mrf.mxu0
        %v6898 = vadd.f32 %v6814, %v6897
        %6899 = vdwg.mxu0
        %6900 = vmatpush.msra.mxu0 0.0
        %6901 = vmatpush.msra.mxu0 0.0
        %6902 = vmatpush.msra.mxu0 0.0
        %6903 = vmatpush.msra.mxu0 0.0
        %6904 = vmatpush.msra.mxu0 0.0
        %6905 = vmatpush.msra.mxu0 0.0
        %6906 = vmatpush.msra.mxu0 0.0
        %6907 = vmatpush.msra.mxu0 0.0
        %6908 = vmatpush.msra.mxu0 0.0
        %6909 = vmatpush.msra.mxu0 %v6808
        %6910 = vmatpush.msra.mxu0 %v6803
        %6911 = vmatpush.msra.mxu0 %v6798
        %6912 = vmatpush.msra.mxu0 %v6793
        %6913 = vmatpush.msra.mxu0 %v6788
        %6914 = vmatpush.msra.mxu0 %v6783
        %6915 = vmatpush.msra.mxu0 %v6778
        %6916 = vmatmul.f32.gmra.mxu0 %v6818
        %v6917 = vpop.f32.mrf.mxu0
        %v6918 = vadd.f32 %v6814, %v6917
        %6919 = vdwg.mxu0
        %vm6920 = vcmp.ge.f32.partialorder %v6838, 0.0
        %vm6921 = vcmp.ge.f32.partialorder %v6858, 0.0
        %vm6922 = vcmp.ge.f32.partialorder %v6878, 0.0
        %vm6923 = vcmp.ge.f32.partialorder %v6898, 0.0
        %vm6924 = vcmp.ge.f32.partialorder %v6918, 0.0
        %v6925 = vmul.f32 %v6838, 0.2
        %v6926 = vmul.f32 %v6858, 0.2
        %v6927 = vmul.f32 %v6878, 0.2
        %v6928 = vmul.f32 %v6898, 0.2
        %v6929 = vmul.f32 %v6918, 0.2
        %v6930 = vsel %vm6920, %v6838, %v6925
        %v6931 = vsel %vm6921, %v6858, %v6926
        %v6932 = vsel %vm6922, %v6878, %v6927
        %v6933 = vsel %vm6923, %v6898, %v6928
        %v6934 = vsel %vm6924, %v6918, %v6929
        %v6935 = vadd.f32 %v6930, %v242
        %v6936 = vadd.f32 %v6931, %v243
        %v6937 = vadd.f32 %v6932, %v244
        %v6938 = vadd.f32 %v6933, %v245
        %v6939 = vadd.f32 %v6934, %v246
        %6940 = vst [vmem:[%s234] sm:$0xff] %v6935
        %6941 = vst [vmem:[%s234 + $0x8] sm:$0xff] %v6936
        %6942 = vst [vmem:[%s234 + $0x10] sm:$0xff] %v6937
        %6943 = vst [vmem:[%s234 + $0x18] sm:$0xff] %v6938
        %6944 = vst [vmem:[%s234 + $0x20] sm:$0xff] %v6939
        %s6945 = sand.u32 %s138, 1
        %s6946 = scalar_lea.sflag [#allocation6], %s6945
        %s6947 = sand.u32 %s138, 1
        %s6948 = smul.addr %s6947, 40
        %s6949 = scalar_lea.vmem [#allocation7], %s6948
        // Predicated region
        $region45: #{tpu_custom_call.1} parent=39 // pred_check
          %p6950 = pneg %p148
        $region46: #{tpu_custom_call.1} parent=39 // pred_check_branch
          %6952 = sbr.rel (%p6950) target = $region48
        $region47: #{tpu_custom_call.1} parent=39 // pred_region
          %6954 = vsyncadd %s6946, 0
          %s6955 = smul.addr %s20, 5
          %s6956 = smul.addr %s6955, 8
          %s6957 = scalar_lea.hbm %s5, %s6956
          %s6959 = sshll.u32 %s6949, 4
          %s6960 = int_to_ptr.vmem [resolvable:$true] %s6959
          %s6961 = sshll.u32 %s6957, 4
          %s6962 = int_to_ptr.hbm [resolvable:$true] %s6961
          %6964 = dma.vmem_to_hbm [thread:$0]  %s6960, 640, %s6962, %s6946
        $region48: #{tpu_custom_call.1} parent=39 // pred_fallthru
          _
      $region40: #{tpu_custom_call.1} parent=5 // pred_fallthru
        _
      %p6965 = scmp.le.s32.totalorder 2, %s15
      // Predicated region
      $region49: #{tpu_custom_call.1} parent=5 // pred_check
        %p6966 = pneg %p6965
      $region50: #{tpu_custom_call.1} parent=5 // pred_check_branch
        %6968 = sbr.rel (%p6966) target = $region52
      $region51: #{tpu_custom_call.1} parent=5 // pred_region
        %s6969 = ssub.s32 %s15, 2
        // Predicated region
        $region53: #{tpu_custom_call.1} parent=51 // pred_check
          %p6970 = pneg %p154
        $region54: #{tpu_custom_call.1} parent=51 // pred_check_branch
          %6972 = sbr.rel (%p6970) target = $region56
        $region55: #{tpu_custom_call.1} parent=51 // pred_region
          %s6973 = sand.u32 %s139, 1
          %s6974 = scalar_lea.sflag [#allocation6], %s6973
          %s6975 = sand.u32 %s139, 1
          %s6976 = smul.addr %s6975, 40
          %s6977 = scalar_lea.vmem [#allocation7], %s6976
          %6979 = dma.done %s6974, 640
        $region56: #{tpu_custom_call.1} parent=51 // pred_fallthru
          _
      $region52: #{tpu_custom_call.1} parent=5 // pred_fallthru
        _
    $region6: #{tpu_custom_call.1} parent=1 // loop_footer
      %s19 = sadd.s32 1, %s15
    $region7: #{tpu_custom_call.1} parent=1 // loop_footer_branch
      %14 = sbr.rel target = $region3
    $region8: #{tpu_custom_call.1} parent=1 // loop_exit
      _
    %6980 = vsyncpa [#allocation5], 1
    %s6981 = scalar_lea.sflag [#allocation5], 1
    %6982 = vsyncpa %s6981, 1
    %6983 = vsyncpa [#allocation6], 1
    %s6984 = scalar_lea.sflag [#allocation6], 1
    %6985 = vsyncpa %s6984, 1

</llo_original>
